<compile_context>
chip_gen: v5e
topology: v5e:2x2
jax: 0.10.0
libtpu: 0.0.40
codegen_flags: <defaults>
</compile_context>

<pallas_src>
import jax
import jax.numpy as jnp
import numpy as np
from jax import lax
from jax.experimental import pallas as pl
from jax.experimental.pallas import tpu as pltpu

BN_EPS = 1e-5


def basic_block_kernel(x_ref, w1_ref, s1_ref, b1_ref, w2_ref, s2_ref, b2_ref,
                       out_ref, pad_ref, patch_ref):
    # x_ref    : (1, H, W, C)   f32  unpadded input (also the residual)
    # w*_ref   : (9*C, C)       bf16 conv taps flattened in (dy, dx, cin) order
    # s*/b*_ref: (1, C)         f32  folded BatchNorm scale / bias
    # out_ref  : (1, H, W, C)   f32
    # pad_ref  : (H+2, W+2, C)  bf16 VMEM scratch (zero halo + activation)
    # patch_ref: (H*W, 9*C)     bf16 VMEM scratch (im2col patch)
    _, H, W, C = x_ref.shape
    cdt = pad_ref.dtype

    # Re-zero only the 1-pixel halo border; the interior is fully rewritten
    # below.  Done every step (not @pl.when(program_id==0)) so the kernel is
    # correct when the parallel batch axis is sharded across TensorCores.
    pad_ref[0:1, :, :] = jnp.zeros((1, W + 2, C), cdt)
    pad_ref[H + 1:H + 2, :, :] = jnp.zeros((1, W + 2, C), cdt)
    pad_ref[:, 0:1, :] = jnp.zeros((H + 2, 1, C), cdt)
    pad_ref[:, W + 1:W + 2, :] = jnp.zeros((H + 2, 1, C), cdt)

    x = x_ref[0]                                        # (H, W, C) f32, aligned

    def conv3x3_bn(w_ref, s_ref, b_ref):
        # Build the im2col patch once: column band t = dy*3+dx holds the
        # channels of tap (dy, dx).  With C a multiple of 128 these band
        # stores are lane-aligned and unmasked.
        for dy in range(3):
            for dx in range(3):
                t = dy * 3 + dx
                tap = pad_ref[dy:dy + H, dx:dx + W, :]            # (H, W, C) bf16
                patch_ref[:, t * C:(t + 1) * C] = tap.reshape(H * W, C)
        # Single fused-K MXU matmul: (H*W, 9C) @ (9C, C), bf16 in, f32 accum.
        acc = jnp.dot(patch_ref[...], w_ref[...],
                      preferred_element_type=jnp.float32)
        return acc * s_ref[...] + b_ref[...]                      # (H*W, C) f32

    # conv1 -> bn1 -> relu
    pad_ref[1:H + 1, 1:W + 1, :] = x.astype(cdt)
    out1 = jnp.maximum(conv3x3_bn(w1_ref, s1_ref, b1_ref), 0.0)

    # conv2 -> bn2  (reuse the padded scratch; its border is still zero)
    pad_ref[1:H + 1, 1:W + 1, :] = out1.reshape(H, W, C).astype(cdt)
    out2 = conv3x3_bn(w2_ref, s2_ref, b2_ref)

    # identity residual + relu (f32 epilogue)
    out_ref[0] = jnp.maximum(out2.reshape(H, W, C) + x, 0.0)


def basic_block(x_nchw, w1, bn1, w2, bn2, eps=BN_EPS):
    """x_nchw: (N, C, H, W); w*: PyTorch conv weights (Cout, Cin, 3, 3);
    bn* = (gamma, beta, running_mean, running_var)."""
    N, Cin, H, W = x_nchw.shape
    Cout = w1.shape[0]
    assert Cin == Cout, "identity residual requires planes == inplanes"

    x = jnp.transpose(x_nchw, (0, 2, 3, 1)).astype(jnp.float32)       # NHWC

    def prep_w(w):
        # (Cout, Cin, 3, 3) -> HWIO -> (9*Cin, Cout) in (dy, dx, cin) order,
        # bf16 for the MXU (accumulation stays f32 in the kernel).
        return (jnp.transpose(w, (2, 3, 1, 0))
                .reshape(9 * Cin, Cout).astype(jnp.bfloat16))

    w1k, w2k = prep_w(w1), prep_w(w2)

    def fold(bn):
        g, b, m, v = (a.astype(jnp.float32) for a in bn)
        s = g / jnp.sqrt(v + eps)
        return s.reshape(1, -1), (b - m * s).reshape(1, -1)

    s1, b1 = fold(bn1)
    s2, b2 = fold(bn2)

    flops = N * 2 * (2 * H * W * (9 * Cin) * Cout)                    # 2 convs
    bytes_accessed = ((x.size + N * H * W * Cout) * 4                 # act in/out
                      + (w1k.size + w2k.size) * 2                     # bf16 weights
                      + 4 * Cout * 4)                                 # scale/bias

    out_nhwc = pl.pallas_call(
        basic_block_kernel,
        out_shape=jax.ShapeDtypeStruct((N, H, W, Cout), jnp.float32),
        grid_spec=pltpu.PrefetchScalarGridSpec(
            num_scalar_prefetch=0,
            grid=(N,),
            in_specs=[
                pl.BlockSpec((1, H, W, Cin), lambda n: (n, 0, 0, 0)),
                pl.BlockSpec((9 * Cin, Cout), lambda n: (0, 0)),
                pl.BlockSpec((1, Cout), lambda n: (0, 0)),
                pl.BlockSpec((1, Cout), lambda n: (0, 0)),
                pl.BlockSpec((9 * Cin, Cout), lambda n: (0, 0)),
                pl.BlockSpec((1, Cout), lambda n: (0, 0)),
                pl.BlockSpec((1, Cout), lambda n: (0, 0)),
            ],
            out_specs=pl.BlockSpec((1, H, W, Cout), lambda n: (n, 0, 0, 0)),
            scratch_shapes=[
                pltpu.VMEM((H + 2, W + 2, Cin), jnp.bfloat16),   # padded activation
                pltpu.VMEM((H * W, 9 * Cin), jnp.bfloat16),      # im2col patch
            ],
        ),
        compiler_params=pltpu.CompilerParams(dimension_semantics=("parallel",)),
        cost_estimate=pl.CostEstimate(flops=flops, transcendentals=0,
                                      bytes_accessed=bytes_accessed),
    )(x, w1k, s1, b1, w2k, s2, b2)

    return jnp.transpose(out_nhwc, (0, 3, 1, 2))                      # NCHW


# ----------------------------- references ---------------------------------
def _conv_bn_ref(x, w, bn, eps, cast_bf16):
    if cast_bf16:  # emulate the kernel's bf16 MXU operands (f32 accumulation)
        x = x.astype(jnp.bfloat16).astype(jnp.float32)
        w = w.astype(jnp.bfloat16).astype(jnp.float32)
    y = lax.conv_general_dilated(
        x, w, window_strides=(1, 1), padding=((1, 1), (1, 1)),
        dimension_numbers=("NCHW", "OIHW", "NCHW"),
        precision=lax.Precision.HIGHEST)
    g, b, m, v = (a.astype(jnp.float32) for a in bn)
    s = g / jnp.sqrt(v + eps)
    return y * s[None, :, None, None] + (b - m * s)[None, :, None, None]


def basic_block_reference(x, w1, bn1, w2, bn2, eps=BN_EPS, cast_bf16=False):
    out = jax.nn.relu(_conv_bn_ref(x, w1, bn1, eps, cast_bf16))
    out = _conv_bn_ref(out, w2, bn2, eps, cast_bf16)
    return jax.nn.relu(out + x)


if __name__ == "__main__":
    # BasicBlock(inplanes=128, planes=128, stride=1): a real ResNet-18/34
    # width; C=128 keeps the channel (lane) axis fully dense on TPU.
    N, C, H, W = 2, 128, 16, 16
    key = jax.random.PRNGKey(0)
    ks = jax.random.split(key, 5)

    x = jax.random.normal(ks[0], (N, C, H, W), dtype=jnp.float32)
    w_std = (2.0 / (9 * C)) ** 0.5                                    # He init
    w1 = w_std * jax.random.normal(ks[1], (C, C, 3, 3), dtype=jnp.float32)
    w2 = w_std * jax.random.normal(ks[2], (C, C, 3, 3), dtype=jnp.float32)

    def rand_bn(k):
        k1, k2, k3, k4 = jax.random.split(k, 4)
        return (jax.random.uniform(k1, (C,), minval=0.8, maxval=1.25),
                0.1 * jax.random.normal(k2, (C,)),
                0.1 * jax.random.normal(k3, (C,)),
                jax.random.uniform(k4, (C,), minval=0.8, maxval=1.25))

    bn1, bn2 = rand_bn(ks[3]), rand_bn(ks[4])

    out = jax.block_until_ready(jax.jit(basic_block)(x, w1, bn1, w2, bn2))
    assert out.shape == (N, C, H, W)

    # Tight check: same bf16 operand rounding as the kernel, f32 accumulation.
    ref_bf16 = basic_block_reference(x, w1, bn1, w2, bn2, cast_bf16=True)
    np.testing.assert_allclose(np.asarray(out), np.asarray(ref_bf16),
                               rtol=5e-3, atol=5e-3)

    # Fidelity check vs. the pure-f32 module semantics; tolerance sized for
    # bf16 MXU operands across two chained 3x3 convs.
    ref_f32 = basic_block_reference(x, w1, bn1, w2, bn2, cast_bf16=False)
    np.testing.assert_allclose(np.asarray(out), np.asarray(ref_f32),
                               rtol=5e-2, atol=5e-2)

    print("KERNEL_OK")
</pallas_src>

<mosaic_0001>
module attributes {stable_mosaic.version = 11 : i64} {
  func.func @basic_block_kernel(%arg0: i32, %arg1: memref<1x16x16x128xf32, #tpu.memory_space<vmem>>, %arg2: memref<1152x128xbf16, #tpu.memory_space<vmem>>, %arg3: memref<1x128xf32, #tpu.memory_space<vmem>>, %arg4: memref<1x128xf32, #tpu.memory_space<vmem>>, %arg5: memref<1152x128xbf16, #tpu.memory_space<vmem>>, %arg6: memref<1x128xf32, #tpu.memory_space<vmem>>, %arg7: memref<1x128xf32, #tpu.memory_space<vmem>>, %arg8: memref<1x16x16x128xf32, #tpu.memory_space<vmem>>, %arg9: memref<18x18x128xbf16, #tpu.memory_space<vmem>>, %arg10: memref<256x1152xbf16, #tpu.memory_space<vmem>>) attributes {dimension_semantics = [#tpu.dimension_semantics<parallel>], iteration_bounds = array<i64: 2>, scalar_prefetch = 0 : i64, scratch_operands = 2 : i64, tpu.core_type = #tpu.core_type<tc>, window_params = [{transform_indices = @transform_0, window_bounds = array<i64: 1, 16, 16, 128>}, {pipeline_mode = #tpu.pipeline_mode<synchronous>, transform_indices = @transform_1, window_bounds = array<i64: 1152, 128>}, {pipeline_mode = #tpu.pipeline_mode<synchronous>, transform_indices = @transform_2, window_bounds = array<i64: 1, 128>}, {pipeline_mode = #tpu.pipeline_mode<synchronous>, transform_indices = @transform_3, window_bounds = array<i64: 1, 128>}, {pipeline_mode = #tpu.pipeline_mode<synchronous>, transform_indices = @transform_4, window_bounds = array<i64: 1152, 128>}, {pipeline_mode = #tpu.pipeline_mode<synchronous>, transform_indices = @transform_5, window_bounds = array<i64: 1, 128>}, {pipeline_mode = #tpu.pipeline_mode<synchronous>, transform_indices = @transform_6, window_bounds = array<i64: 1, 128>}, {transform_indices = @transform_7, window_bounds = array<i64: 1, 16, 16, 128>}]} {
    %cst = arith.constant 0.000000e+00 : bf16
    %0 = vector.broadcast %cst : bf16 to vector<1x18x128xbf16>
    %c0 = arith.constant 0 : index
    %c0_0 = arith.constant 0 : index
    %c0_1 = arith.constant 0 : index
    %1 = vector.load %arg9[%c0, %c0_0, %c0_1] : memref<18x18x128xbf16, #tpu.memory_space<vmem>>, vector<1x18x128xbf16>
    tpu.vector_store %arg9[%c0, %c0_0, %c0_1], %0 {strides = array<i32>} : memref<18x18x128xbf16, #tpu.memory_space<vmem>>, vector<1x18x128xbf16>,
    %cst_2 = arith.constant 0.000000e+00 : bf16
    %2 = vector.broadcast %cst_2 : bf16 to vector<1x18x128xbf16>
    %c17 = arith.constant 17 : index
    %c0_3 = arith.constant 0 : index
    %c0_4 = arith.constant 0 : index
    %3 = vector.load %arg9[%c17, %c0_3, %c0_4] : memref<18x18x128xbf16, #tpu.memory_space<vmem>>, vector<1x18x128xbf16>
    tpu.vector_store %arg9[%c17, %c0_3, %c0_4], %2 {strides = array<i32>} : memref<18x18x128xbf16, #tpu.memory_space<vmem>>, vector<1x18x128xbf16>,
    %cst_5 = arith.constant 0.000000e+00 : bf16
    %4 = vector.broadcast %cst_5 : bf16 to vector<18x1x128xbf16>
    %c0_6 = arith.constant 0 : index
    %c0_7 = arith.constant 0 : index
    %c0_8 = arith.constant 0 : index
    %5 = vector.load %arg9[%c0_6, %c0_7, %c0_8] : memref<18x18x128xbf16, #tpu.memory_space<vmem>>, vector<18x1x128xbf16>
    tpu.vector_store %arg9[%c0_6, %c0_7, %c0_8], %4 {strides = array<i32>} : memref<18x18x128xbf16, #tpu.memory_space<vmem>>, vector<18x1x128xbf16>,
    %cst_9 = arith.constant 0.000000e+00 : bf16
    %6 = vector.broadcast %cst_9 : bf16 to vector<18x1x128xbf16>
    %c0_10 = arith.constant 0 : index
    %c17_11 = arith.constant 17 : index
    %c0_12 = arith.constant 0 : index
    %7 = vector.load %arg9[%c0_10, %c17_11, %c0_12] : memref<18x18x128xbf16, #tpu.memory_space<vmem>>, vector<18x1x128xbf16>
    tpu.vector_store %arg9[%c0_10, %c17_11, %c0_12], %6 {strides = array<i32>} : memref<18x18x128xbf16, #tpu.memory_space<vmem>>, vector<18x1x128xbf16>,
    %c0_13 = arith.constant 0 : index
    %c0_14 = arith.constant 0 : index
    %c0_15 = arith.constant 0 : index
    %c0_16 = arith.constant 0 : index
    %8 = vector.load %arg1[%c0_13, %c0_14, %c0_15, %c0_16] : memref<1x16x16x128xf32, #tpu.memory_space<vmem>>, vector<1x16x16x128xf32>
    %9 = vector.shape_cast %8 : vector<1x16x16x128xf32> to vector<16x16x128xf32>
    %10 = arith.truncf %9 : vector<16x16x128xf32> to vector<16x16x128xbf16>
    %c1 = arith.constant 1 : index
    %c1_17 = arith.constant 1 : index
    %c0_18 = arith.constant 0 : index
    %11 = vector.load %arg9[%c1, %c1_17, %c0_18] : memref<18x18x128xbf16, #tpu.memory_space<vmem>>, vector<16x16x128xbf16>
    tpu.vector_store %arg9[%c1, %c1_17, %c0_18], %10 {strides = array<i32>} : memref<18x18x128xbf16, #tpu.memory_space<vmem>>, vector<16x16x128xbf16>,
    %c0_19 = arith.constant 0 : index
    %c0_20 = arith.constant 0 : index
    %c0_21 = arith.constant 0 : index
    %12 = vector.load %arg9[%c0_19, %c0_20, %c0_21] : memref<18x18x128xbf16, #tpu.memory_space<vmem>>, vector<16x16x128xbf16>
    %13 = vector.shape_cast %12 : vector<16x16x128xbf16> to vector<256x128xbf16>
    %c0_22 = arith.constant 0 : index
    %c0_23 = arith.constant 0 : index
    %14 = vector.load %arg10[%c0_22, %c0_23] : memref<256x1152xbf16, #tpu.memory_space<vmem>>, vector<256x128xbf16>
    tpu.vector_store %arg10[%c0_22, %c0_23], %13 {strides = array<i32>} : memref<256x1152xbf16, #tpu.memory_space<vmem>>, vector<256x128xbf16>,
    %c0_24 = arith.constant 0 : index
    %c1_25 = arith.constant 1 : index
    %c0_26 = arith.constant 0 : index
    %15 = vector.load %arg9[%c0_24, %c1_25, %c0_26] : memref<18x18x128xbf16, #tpu.memory_space<vmem>>, vector<16x16x128xbf16>
    %16 = vector.shape_cast %15 : vector<16x16x128xbf16> to vector<256x128xbf16>
    %c0_27 = arith.constant 0 : index
    %c128 = arith.constant 128 : index
    %17 = vector.load %arg10[%c0_27, %c128] : memref<256x1152xbf16, #tpu.memory_space<vmem>>, vector<256x128xbf16>
    tpu.vector_store %arg10[%c0_27, %c128], %16 {strides = array<i32>} : memref<256x1152xbf16, #tpu.memory_space<vmem>>, vector<256x128xbf16>,
    %c0_28 = arith.constant 0 : index
    %c2 = arith.constant 2 : index
    %c0_29 = arith.constant 0 : index
    %18 = vector.load %arg9[%c0_28, %c2, %c0_29] : memref<18x18x128xbf16, #tpu.memory_space<vmem>>, vector<16x16x128xbf16>
    %19 = vector.shape_cast %18 : vector<16x16x128xbf16> to vector<256x128xbf16>
    %c0_30 = arith.constant 0 : index
    %c256 = arith.constant 256 : index
    %20 = vector.load %arg10[%c0_30, %c256] : memref<256x1152xbf16, #tpu.memory_space<vmem>>, vector<256x128xbf16>
    tpu.vector_store %arg10[%c0_30, %c256], %19 {strides = array<i32>} : memref<256x1152xbf16, #tpu.memory_space<vmem>>, vector<256x128xbf16>,
    %c1_31 = arith.constant 1 : index
    %c0_32 = arith.constant 0 : index
    %c0_33 = arith.constant 0 : index
    %21 = vector.load %arg9[%c1_31, %c0_32, %c0_33] : memref<18x18x128xbf16, #tpu.memory_space<vmem>>, vector<16x16x128xbf16>
    %22 = vector.shape_cast %21 : vector<16x16x128xbf16> to vector<256x128xbf16>
    %c0_34 = arith.constant 0 : index
    %c384 = arith.constant 384 : index
    %23 = vector.load %arg10[%c0_34, %c384] : memref<256x1152xbf16, #tpu.memory_space<vmem>>, vector<256x128xbf16>
    tpu.vector_store %arg10[%c0_34, %c384], %22 {strides = array<i32>} : memref<256x1152xbf16, #tpu.memory_space<vmem>>, vector<256x128xbf16>,
    %c1_35 = arith.constant 1 : index
    %c1_36 = arith.constant 1 : index
    %c0_37 = arith.constant 0 : index
    %24 = vector.load %arg9[%c1_35, %c1_36, %c0_37] : memref<18x18x128xbf16, #tpu.memory_space<vmem>>, vector<16x16x128xbf16>
    %25 = vector.shape_cast %24 : vector<16x16x128xbf16> to vector<256x128xbf16>
    %c0_38 = arith.constant 0 : index
    %c512 = arith.constant 512 : index
    %26 = vector.load %arg10[%c0_38, %c512] : memref<256x1152xbf16, #tpu.memory_space<vmem>>, vector<256x128xbf16>
    tpu.vector_store %arg10[%c0_38, %c512], %25 {strides = array<i32>} : memref<256x1152xbf16, #tpu.memory_space<vmem>>, vector<256x128xbf16>,
    %c1_39 = arith.constant 1 : index
    %c2_40 = arith.constant 2 : index
    %c0_41 = arith.constant 0 : index
    %27 = vector.load %arg9[%c1_39, %c2_40, %c0_41] : memref<18x18x128xbf16, #tpu.memory_space<vmem>>, vector<16x16x128xbf16>
    %28 = vector.shape_cast %27 : vector<16x16x128xbf16> to vector<256x128xbf16>
    %c0_42 = arith.constant 0 : index
    %c640 = arith.constant 640 : index
    %29 = vector.load %arg10[%c0_42, %c640] : memref<256x1152xbf16, #tpu.memory_space<vmem>>, vector<256x128xbf16>
    tpu.vector_store %arg10[%c0_42, %c640], %28 {strides = array<i32>} : memref<256x1152xbf16, #tpu.memory_space<vmem>>, vector<256x128xbf16>,
    %c2_43 = arith.constant 2 : index
    %c0_44 = arith.constant 0 : index
    %c0_45 = arith.constant 0 : index
    %30 = vector.load %arg9[%c2_43, %c0_44, %c0_45] : memref<18x18x128xbf16, #tpu.memory_space<vmem>>, vector<16x16x128xbf16>
    %31 = vector.shape_cast %30 : vector<16x16x128xbf16> to vector<256x128xbf16>
    %c0_46 = arith.constant 0 : index
    %c768 = arith.constant 768 : index
    %32 = vector.load %arg10[%c0_46, %c768] : memref<256x1152xbf16, #tpu.memory_space<vmem>>, vector<256x128xbf16>
    tpu.vector_store %arg10[%c0_46, %c768], %31 {strides = array<i32>} : memref<256x1152xbf16, #tpu.memory_space<vmem>>, vector<256x128xbf16>,
    %c2_47 = arith.constant 2 : index
    %c1_48 = arith.constant 1 : index
    %c0_49 = arith.constant 0 : index
    %33 = vector.load %arg9[%c2_47, %c1_48, %c0_49] : memref<18x18x128xbf16, #tpu.memory_space<vmem>>, vector<16x16x128xbf16>
    %34 = vector.shape_cast %33 : vector<16x16x128xbf16> to vector<256x128xbf16>
    %c0_50 = arith.constant 0 : index
    %c896 = arith.constant 896 : index
    %35 = vector.load %arg10[%c0_50, %c896] : memref<256x1152xbf16, #tpu.memory_space<vmem>>, vector<256x128xbf16>
    tpu.vector_store %arg10[%c0_50, %c896], %34 {strides = array<i32>} : memref<256x1152xbf16, #tpu.memory_space<vmem>>, vector<256x128xbf16>,
    %c2_51 = arith.constant 2 : index
    %c2_52 = arith.constant 2 : index
    %c0_53 = arith.constant 0 : index
    %36 = vector.load %arg9[%c2_51, %c2_52, %c0_53] : memref<18x18x128xbf16, #tpu.memory_space<vmem>>, vector<16x16x128xbf16>
    %37 = vector.shape_cast %36 : vector<16x16x128xbf16> to vector<256x128xbf16>
    %c0_54 = arith.constant 0 : index
    %c1024 = arith.constant 1024 : index
    %38 = vector.load %arg10[%c0_54, %c1024] : memref<256x1152xbf16, #tpu.memory_space<vmem>>, vector<256x128xbf16>
    tpu.vector_store %arg10[%c0_54, %c1024], %37 {strides = array<i32>} : memref<256x1152xbf16, #tpu.memory_space<vmem>>, vector<256x128xbf16>,
    %c0_55 = arith.constant 0 : index
    %c0_56 = arith.constant 0 : index
    %39 = vector.load %arg10[%c0_55, %c0_56] : memref<256x1152xbf16, #tpu.memory_space<vmem>>, vector<256x1152xbf16>
    %c0_57 = arith.constant 0 : index
    %c0_58 = arith.constant 0 : index
    %40 = vector.load %arg2[%c0_57, %c0_58] : memref<1152x128xbf16, #tpu.memory_space<vmem>>, vector<1152x128xbf16>
    %cst_59 = arith.constant dense<0.000000e+00> : vector<256x128xf32>
    %41 = tpu.matmul %39, %40, %cst_59 {dimension_numbers = #tpu.dot_dimension_numbers<[1], [0], [0], [1], [0, 0, 1, 1], [], []>} : vector<256x1152xbf16>, vector<1152x128xbf16>, vector<256x128xf32> -> vector<256x128xf32>
    %c0_60 = arith.constant 0 : index
    %c0_61 = arith.constant 0 : index
    %42 = vector.load %arg3[%c0_60, %c0_61] : memref<1x128xf32, #tpu.memory_space<vmem>>, vector<1x128xf32>
    %43 = vector.broadcast %42 : vector<1x128xf32> to vector<256x128xf32>
    %44 = arith.mulf %41, %43 : vector<256x128xf32>
    %c0_62 = arith.constant 0 : index
    %c0_63 = arith.constant 0 : index
    %45 = vector.load %arg4[%c0_62, %c0_63] : memref<1x128xf32, #tpu.memory_space<vmem>>, vector<1x128xf32>
    %46 = vector.broadcast %45 : vector<1x128xf32> to vector<256x128xf32>
    %47 = arith.addf %44, %46 : vector<256x128xf32>
    %cst_64 = arith.constant 0.000000e+00 : f32
    %48 = vector.broadcast %cst_64 : f32 to vector<256x128xf32>
    %49 = arith.maximumf %47, %48 : vector<256x128xf32>
    %50 = vector.shape_cast %49 : vector<256x128xf32> to vector<16x16x128xf32>
    %51 = arith.truncf %50 : vector<16x16x128xf32> to vector<16x16x128xbf16>
    %c1_65 = arith.constant 1 : index
    %c1_66 = arith.constant 1 : index
    %c0_67 = arith.constant 0 : index
    %52 = vector.load %arg9[%c1_65, %c1_66, %c0_67] : memref<18x18x128xbf16, #tpu.memory_space<vmem>>, vector<16x16x128xbf16>
    tpu.vector_store %arg9[%c1_65, %c1_66, %c0_67], %51 {strides = array<i32>} : memref<18x18x128xbf16, #tpu.memory_space<vmem>>, vector<16x16x128xbf16>,
    %c0_68 = arith.constant 0 : index
    %c0_69 = arith.constant 0 : index
    %c0_70 = arith.constant 0 : index
    %53 = vector.load %arg9[%c0_68, %c0_69, %c0_70] : memref<18x18x128xbf16, #tpu.memory_space<vmem>>, vector<16x16x128xbf16>
    %54 = vector.shape_cast %53 : vector<16x16x128xbf16> to vector<256x128xbf16>
    %c0_71 = arith.constant 0 : index
    %c0_72 = arith.constant 0 : index
    %55 = vector.load %arg10[%c0_71, %c0_72] : memref<256x1152xbf16, #tpu.memory_space<vmem>>, vector<256x128xbf16>
    tpu.vector_store %arg10[%c0_71, %c0_72], %54 {strides = array<i32>} : memref<256x1152xbf16, #tpu.memory_space<vmem>>, vector<256x128xbf16>,
    %c0_73 = arith.constant 0 : index
    %c1_74 = arith.constant 1 : index
    %c0_75 = arith.constant 0 : index
    %56 = vector.load %arg9[%c0_73, %c1_74, %c0_75] : memref<18x18x128xbf16, #tpu.memory_space<vmem>>, vector<16x16x128xbf16>
    %57 = vector.shape_cast %56 : vector<16x16x128xbf16> to vector<256x128xbf16>
    %c0_76 = arith.constant 0 : index
    %c128_77 = arith.constant 128 : index
    %58 = vector.load %arg10[%c0_76, %c128_77] : memref<256x1152xbf16, #tpu.memory_space<vmem>>, vector<256x128xbf16>
    tpu.vector_store %arg10[%c0_76, %c128_77], %57 {strides = array<i32>} : memref<256x1152xbf16, #tpu.memory_space<vmem>>, vector<256x128xbf16>,
    %c0_78 = arith.constant 0 : index
    %c2_79 = arith.constant 2 : index
    %c0_80 = arith.constant 0 : index
    %59 = vector.load %arg9[%c0_78, %c2_79, %c0_80] : memref<18x18x128xbf16, #tpu.memory_space<vmem>>, vector<16x16x128xbf16>
    %60 = vector.shape_cast %59 : vector<16x16x128xbf16> to vector<256x128xbf16>
    %c0_81 = arith.constant 0 : index
    %c256_82 = arith.constant 256 : index
    %61 = vector.load %arg10[%c0_81, %c256_82] : memref<256x1152xbf16, #tpu.memory_space<vmem>>, vector<256x128xbf16>
    tpu.vector_store %arg10[%c0_81, %c256_82], %60 {strides = array<i32>} : memref<256x1152xbf16, #tpu.memory_space<vmem>>, vector<256x128xbf16>,
    %c1_83 = arith.constant 1 : index
    %c0_84 = arith.constant 0 : index
    %c0_85 = arith.constant 0 : index
    %62 = vector.load %arg9[%c1_83, %c0_84, %c0_85] : memref<18x18x128xbf16, #tpu.memory_space<vmem>>, vector<16x16x128xbf16>
    %63 = vector.shape_cast %62 : vector<16x16x128xbf16> to vector<256x128xbf16>
    %c0_86 = arith.constant 0 : index
    %c384_87 = arith.constant 384 : index
    %64 = vector.load %arg10[%c0_86, %c384_87] : memref<256x1152xbf16, #tpu.memory_space<vmem>>, vector<256x128xbf16>
    tpu.vector_store %arg10[%c0_86, %c384_87], %63 {strides = array<i32>} : memref<256x1152xbf16, #tpu.memory_space<vmem>>, vector<256x128xbf16>,
    %c1_88 = arith.constant 1 : index
    %c1_89 = arith.constant 1 : index
    %c0_90 = arith.constant 0 : index
    %65 = vector.load %arg9[%c1_88, %c1_89, %c0_90] : memref<18x18x128xbf16, #tpu.memory_space<vmem>>, vector<16x16x128xbf16>
    %66 = vector.shape_cast %65 : vector<16x16x128xbf16> to vector<256x128xbf16>
    %c0_91 = arith.constant 0 : index
    %c512_92 = arith.constant 512 : index
    %67 = vector.load %arg10[%c0_91, %c512_92] : memref<256x1152xbf16, #tpu.memory_space<vmem>>, vector<256x128xbf16>
    tpu.vector_store %arg10[%c0_91, %c512_92], %66 {strides = array<i32>} : memref<256x1152xbf16, #tpu.memory_space<vmem>>, vector<256x128xbf16>,
    %c1_93 = arith.constant 1 : index
    %c2_94 = arith.constant 2 : index
    %c0_95 = arith.constant 0 : index
    %68 = vector.load %arg9[%c1_93, %c2_94, %c0_95] : memref<18x18x128xbf16, #tpu.memory_space<vmem>>, vector<16x16x128xbf16>
    %69 = vector.shape_cast %68 : vector<16x16x128xbf16> to vector<256x128xbf16>
    %c0_96 = arith.constant 0 : index
    %c640_97 = arith.constant 640 : index
    %70 = vector.load %arg10[%c0_96, %c640_97] : memref<256x1152xbf16, #tpu.memory_space<vmem>>, vector<256x128xbf16>
    tpu.vector_store %arg10[%c0_96, %c640_97], %69 {strides = array<i32>} : memref<256x1152xbf16, #tpu.memory_space<vmem>>, vector<256x128xbf16>,
    %c2_98 = arith.constant 2 : index
    %c0_99 = arith.constant 0 : index
    %c0_100 = arith.constant 0 : index
    %71 = vector.load %arg9[%c2_98, %c0_99, %c0_100] : memref<18x18x128xbf16, #tpu.memory_space<vmem>>, vector<16x16x128xbf16>
    %72 = vector.shape_cast %71 : vector<16x16x128xbf16> to vector<256x128xbf16>
    %c0_101 = arith.constant 0 : index
    %c768_102 = arith.constant 768 : index
    %73 = vector.load %arg10[%c0_101, %c768_102] : memref<256x1152xbf16, #tpu.memory_space<vmem>>, vector<256x128xbf16>
    tpu.vector_store %arg10[%c0_101, %c768_102], %72 {strides = array<i32>} : memref<256x1152xbf16, #tpu.memory_space<vmem>>, vector<256x128xbf16>,
    %c2_103 = arith.constant 2 : index
    %c1_104 = arith.constant 1 : index
    %c0_105 = arith.constant 0 : index
    %74 = vector.load %arg9[%c2_103, %c1_104, %c0_105] : memref<18x18x128xbf16, #tpu.memory_space<vmem>>, vector<16x16x128xbf16>
    %75 = vector.shape_cast %74 : vector<16x16x128xbf16> to vector<256x128xbf16>
    %c0_106 = arith.constant 0 : index
    %c896_107 = arith.constant 896 : index
    %76 = vector.load %arg10[%c0_106, %c896_107] : memref<256x1152xbf16, #tpu.memory_space<vmem>>, vector<256x128xbf16>
    tpu.vector_store %arg10[%c0_106, %c896_107], %75 {strides = array<i32>} : memref<256x1152xbf16, #tpu.memory_space<vmem>>, vector<256x128xbf16>,
    %c2_108 = arith.constant 2 : index
    %c2_109 = arith.constant 2 : index
    %c0_110 = arith.constant 0 : index
    %77 = vector.load %arg9[%c2_108, %c2_109, %c0_110] : memref<18x18x128xbf16, #tpu.memory_space<vmem>>, vector<16x16x128xbf16>
    %78 = vector.shape_cast %77 : vector<16x16x128xbf16> to vector<256x128xbf16>
    %c0_111 = arith.constant 0 : index
    %c1024_112 = arith.constant 1024 : index
    %79 = vector.load %arg10[%c0_111, %c1024_112] : memref<256x1152xbf16, #tpu.memory_space<vmem>>, vector<256x128xbf16>
    tpu.vector_store %arg10[%c0_111, %c1024_112], %78 {strides = array<i32>} : memref<256x1152xbf16, #tpu.memory_space<vmem>>, vector<256x128xbf16>,
    %c0_113 = arith.constant 0 : index
    %c0_114 = arith.constant 0 : index
    %80 = vector.load %arg10[%c0_113, %c0_114] : memref<256x1152xbf16, #tpu.memory_space<vmem>>, vector<256x1152xbf16>
    %c0_115 = arith.constant 0 : index
    %c0_116 = arith.constant 0 : index
    %81 = vector.load %arg5[%c0_115, %c0_116] : memref<1152x128xbf16, #tpu.memory_space<vmem>>, vector<1152x128xbf16>
    %cst_117 = arith.constant dense<0.000000e+00> : vector<256x128xf32>
    %82 = tpu.matmul %80, %81, %cst_117 {dimension_numbers = #tpu.dot_dimension_numbers<[1], [0], [0], [1], [0, 0, 1, 1], [], []>} : vector<256x1152xbf16>, vector<1152x128xbf16>, vector<256x128xf32> -> vector<256x128xf32>
    %c0_118 = arith.constant 0 : index
    %c0_119 = arith.constant 0 : index
    %83 = vector.load %arg6[%c0_118, %c0_119] : memref<1x128xf32, #tpu.memory_space<vmem>>, vector<1x128xf32>
    %84 = vector.broadcast %83 : vector<1x128xf32> to vector<256x128xf32>
    %85 = arith.mulf %82, %84 : vector<256x128xf32>
    %c0_120 = arith.constant 0 : index
    %c0_121 = arith.constant 0 : index
    %86 = vector.load %arg7[%c0_120, %c0_121] : memref<1x128xf32, #tpu.memory_space<vmem>>, vector<1x128xf32>
    %87 = vector.broadcast %86 : vector<1x128xf32> to vector<256x128xf32>
    %88 = arith.addf %85, %87 : vector<256x128xf32>
    %89 = vector.shape_cast %88 : vector<256x128xf32> to vector<16x16x128xf32>
    %90 = arith.addf %89, %9 : vector<16x16x128xf32>
    %cst_122 = arith.constant 0.000000e+00 : f32
    %91 = vector.broadcast %cst_122 : f32 to vector<16x16x128xf32>
    %92 = arith.maximumf %90, %91 : vector<16x16x128xf32>
    %c0_123 = arith.constant 0 : index
    %c0_124 = arith.constant 0 : index
    %c0_125 = arith.constant 0 : index
    %c0_126 = arith.constant 0 : index
    %93 = vector.load %arg8[%c0_123, %c0_124, %c0_125, %c0_126] : memref<1x16x16x128xf32, #tpu.memory_space<vmem>>, vector<1x16x16x128xf32>
    %94 = vector.shape_cast %93 : vector<1x16x16x128xf32> to vector<16x16x128xf32>
    %95 = vector.shape_cast %92 : vector<16x16x128xf32> to vector<1x16x16x128xf32>
    tpu.vector_store %arg8[%c0_123, %c0_124, %c0_125, %c0_126], %95 {strides = array<i32>} : memref<1x16x16x128xf32, #tpu.memory_space<vmem>>, vector<1x16x16x128xf32>,
    return
  }
  func.func @transform_0(%arg0: i32) -> (i32, i32, i32, i32) {
    %c0_i32 = arith.constant 0 : i32
    %c0_i32_0 = arith.constant 0 : i32
    %c0_i32_1 = arith.constant 0 : i32
    %c0_i32_2 = arith.constant 0 : i32
    return %arg0, %c0_i32, %c0_i32_0, %c0_i32_1 : i32, i32, i32, i32
  }
  func.func @transform_1(%arg0: i32) -> (i32, i32) {
    %c0_i32 = arith.constant 0 : i32
    %c0_i32_0 = arith.constant 0 : i32
    %c0_i32_1 = arith.constant 0 : i32
    return %c0_i32, %c0_i32_0 : i32, i32
  }
  func.func @transform_2(%arg0: i32) -> (i32, i32) {
    %c0_i32 = arith.constant 0 : i32
    %c0_i32_0 = arith.constant 0 : i32
    %c0_i32_1 = arith.constant 0 : i32
    return %c0_i32, %c0_i32_0 : i32, i32
  }
  func.func @transform_3(%arg0: i32) -> (i32, i32) {
    %c0_i32 = arith.constant 0 : i32
    %c0_i32_0 = arith.constant 0 : i32
    %c0_i32_1 = arith.constant 0 : i32
    return %c0_i32, %c0_i32_0 : i32, i32
  }
  func.func @transform_4(%arg0: i32) -> (i32, i32) {
    %c0_i32 = arith.constant 0 : i32
    %c0_i32_0 = arith.constant 0 : i32
    %c0_i32_1 = arith.constant 0 : i32
    return %c0_i32, %c0_i32_0 : i32, i32
  }
  func.func @transform_5(%arg0: i32) -> (i32, i32) {
    %c0_i32 = arith.constant 0 : i32
    %c0_i32_0 = arith.constant 0 : i32
    %c0_i32_1 = arith.constant 0 : i32
    return %c0_i32, %c0_i32_0 : i32, i32
  }
  func.func @transform_6(%arg0: i32) -> (i32, i32) {
    %c0_i32 = arith.constant 0 : i32
    %c0_i32_0 = arith.constant 0 : i32
    %c0_i32_1 = arith.constant 0 : i32
    return %c0_i32, %c0_i32_0 : i32, i32
  }
  func.func @transform_7(%arg0: i32) -> (i32, i32, i32, i32) {
    %c0_i32 = arith.constant 0 : i32
    %c0_i32_0 = arith.constant 0 : i32
    %c0_i32_1 = arith.constant 0 : i32
    %c0_i32_2 = arith.constant 0 : i32
    return %arg0, %c0_i32, %c0_i32_0, %c0_i32_1 : i32, i32, i32, i32
  }
}

</mosaic_0001>

<llo_original>
// kernel: basic_block.1
$region0: #{basic_block.1}
  #allocation0 [shape = 'u32[]', space=smem, size = 0x4, offset = 0x4, fixed_abs, tag = 'smem constant byte address 0x4 - core index']
  #allocation1 [shape = 'u32[72,128]{1,0:T(1,128)}', space=vmem, size = 0x9000, scoped, tag = 'internal scratch']
  #allocation2 [shape = 'bf16[18,18,128]{2,1,0:T(8,128)(2,1)}', space=vmem, size = 0x1b000, scoped, tag = 'scratch operand']
  #allocation3 [shape = 'bf16[256,1152]{1,0:T(8,128)(2,1)}', space=vmem, size = 0x90000, scoped, tag = 'scratch operand']
  %s0 = inlined_call_operand.vmem [shape: f32[2,16,16,128], index: 0, kind: input, shape index: {}]
  %s1 = inlined_call_operand.vmem [shape: bf16[1152,128], index: 1, kind: input, shape index: {}]
  %s2 = inlined_call_operand.vmem [shape: f32[1,128], index: 2, kind: input, shape index: {}]
  %s3 = inlined_call_operand.vmem [shape: f32[1,128], index: 3, kind: input, shape index: {}]
  %s4 = inlined_call_operand.vmem [shape: bf16[1152,128], index: 4, kind: input, shape index: {}]
  %s5 = inlined_call_operand.vmem [shape: f32[1,128], index: 5, kind: input, shape index: {}]
  %s6 = inlined_call_operand.vmem [shape: f32[1,128], index: 6, kind: input, shape index: {}]
  %s7 = inlined_call_operand.hbm [shape: f32[2,16,16,128], index: 7, kind: output, shape index: {}]
  %s8 = sld [smem:[#allocation0]]
  $region61: #{basic_block.1} parent=0
    _
  %s10 = ssub.s32 1, %s8
  %s11 = scalar_select 0, %s10, %s8
  $region1: #{basic_block.1} parent=0
    #allocation4 [shape = 'u8[262144]{0}', space=vmem, size = 0x40000, scoped, tag = 'output window, operand 0']
    #allocation5 [shape = 's32[2]{0}', space=sflag, size = 0x8, scoped, tag = 'scoped memory for basic_block.1']
    %12 = vsyncpa [#allocation5], 0
    %s13 = scalar_lea.sflag [#allocation5], 1
    %14 = vsyncpa %s13, 0
    loop: start=0, step=1, limit=4
    $region2: #{basic_block.1} parent=1 // loop_pre_header
      _
    $region3: #{basic_block.1} parent=1 // loop_header
      %s16 = sphi 0, %s20
      %p17 = scmp.ge.s32.totalorder %s16, 4
      %s26 = sphi 0, %s28
      %s29 = sphi 0, %s26
      %s30 = sphi 0, %s29
      %s46 = sphi 0, %s30
      %s50 = sphi 0, %s50
      %s52 = sphi 0, %s50
      %s53 = sphi 0, %s52
      %s67 = sphi 0, %s53
      %s71 = sphi 0, %s71
      %s73 = sphi 0, %s71
      %s74 = sphi 0, %s73
      %s88 = sphi 0, %s74
      %s92 = sphi 0, %s92
      %s94 = sphi 0, %s92
      %s95 = sphi 0, %s94
      %s109 = sphi 0, %s95
      %s113 = sphi 0, %s113
      %s115 = sphi 0, %s113
      %s116 = sphi 0, %s115
      %s130 = sphi 0, %s116
      %s134 = sphi 0, %s134
      %s136 = sphi 0, %s134
      %s137 = sphi 0, %s136
      %s151 = sphi 0, %s137
      %s155 = sphi 0, %s155
      %s157 = sphi 0, %s155
      %s158 = sphi 0, %s157
      %s172 = sphi 0, %s158
      %s178 = sphi 0, %s180
      %s181 = sphi 0, %s178
      %s182 = sphi 0, %s181
      %s198 = sphi 0, %s182
    $region4: #{basic_block.1} parent=1 // loop_header_branch
      %19 = sbr.rel (%p17) target = $region8
    $region5: #{basic_block.1} parent=1 // loop_body
      %s21 = ssub.s32 %s16, 1
      %s22 = ssub.s32 %s16, 2
      %s23 = sadd.s32 %s16, 1
      %s24 = ssub.s32 %s16, %s23
      %p25 = scmp.eq.s32.totalorder %s24, 0
      %s27 = sadd.s32 %s26, 1
      %s28 = scalar_select %p25, %s26, %s27
      %p31 = pneg %p25
      %p32 = scmp.eq.s32.totalorder %s16, 1
      %p33 = por %p31, %p32
      %p34 = scmp.ne.s32.totalorder %s26, %s29
      %p35 = scmp.eq.s32.totalorder %s16, 0
      %p36 = por %p34, %p35
      %p37 = scmp.ne.s32.totalorder %s26, %s29
      %p38 = scmp.eq.s32.totalorder %s21, 1
      %p39 = por %p37, %p38
      %p40 = scmp.ne.s32.totalorder %s29, %s30
      %p41 = scmp.eq.s32.totalorder %s21, 0
      %p42 = por %p40, %p41
      %p43 = scmp.ne.s32.totalorder %s29, %s30
      %p44 = scmp.eq.s32.totalorder %s22, 1
      %p45 = por %p43, %p44
      %p47 = scmp.ne.s32.totalorder %s30, %s46
      %p48 = scmp.eq.s32.totalorder %s22, 0
      %p49 = por %p47, %p48
      %s51 = sadd.s32 %s50, 1
      %p54 = scmp.eq.s32.totalorder %s16, 1
      %p55 = scmp.ne.s32.totalorder %s50, %s52
      %p56 = scmp.eq.s32.totalorder %s16, 0
      %p57 = por %p55, %p56
      %p58 = scmp.ne.s32.totalorder %s50, %s52
      %p59 = scmp.eq.s32.totalorder %s21, 1
      %p60 = por %p58, %p59
      %p61 = scmp.ne.s32.totalorder %s52, %s53
      %p62 = scmp.eq.s32.totalorder %s21, 0
      %p63 = por %p61, %p62
      %p64 = scmp.ne.s32.totalorder %s52, %s53
      %p65 = scmp.eq.s32.totalorder %s22, 1
      %p66 = por %p64, %p65
      %p68 = scmp.ne.s32.totalorder %s53, %s67
      %p69 = scmp.eq.s32.totalorder %s22, 0
      %p70 = por %p68, %p69
      %s72 = sadd.s32 %s71, 1
      %p75 = scmp.eq.s32.totalorder %s16, 1
      %p76 = scmp.ne.s32.totalorder %s71, %s73
      %p77 = scmp.eq.s32.totalorder %s16, 0
      %p78 = por %p76, %p77
      %p79 = scmp.ne.s32.totalorder %s71, %s73
      %p80 = scmp.eq.s32.totalorder %s21, 1
      %p81 = por %p79, %p80
      %p82 = scmp.ne.s32.totalorder %s73, %s74
      %p83 = scmp.eq.s32.totalorder %s21, 0
      %p84 = por %p82, %p83
      %p85 = scmp.ne.s32.totalorder %s73, %s74
      %p86 = scmp.eq.s32.totalorder %s22, 1
      %p87 = por %p85, %p86
      %p89 = scmp.ne.s32.totalorder %s74, %s88
      %p90 = scmp.eq.s32.totalorder %s22, 0
      %p91 = por %p89, %p90
      %s93 = sadd.s32 %s92, 1
      %p96 = scmp.eq.s32.totalorder %s16, 1
      %p97 = scmp.ne.s32.totalorder %s92, %s94
      %p98 = scmp.eq.s32.totalorder %s16, 0
      %p99 = por %p97, %p98
      %p100 = scmp.ne.s32.totalorder %s92, %s94
      %p101 = scmp.eq.s32.totalorder %s21, 1
      %p102 = por %p100, %p101
      %p103 = scmp.ne.s32.totalorder %s94, %s95
      %p104 = scmp.eq.s32.totalorder %s21, 0
      %p105 = por %p103, %p104
      %p106 = scmp.ne.s32.totalorder %s94, %s95
      %p107 = scmp.eq.s32.totalorder %s22, 1
      %p108 = por %p106, %p107
      %p110 = scmp.ne.s32.totalorder %s95, %s109
      %p111 = scmp.eq.s32.totalorder %s22, 0
      %p112 = por %p110, %p111
      %s114 = sadd.s32 %s113, 1
      %p117 = scmp.eq.s32.totalorder %s16, 1
      %p118 = scmp.ne.s32.totalorder %s113, %s115
      %p119 = scmp.eq.s32.totalorder %s16, 0
      %p120 = por %p118, %p119
      %p121 = scmp.ne.s32.totalorder %s113, %s115
      %p122 = scmp.eq.s32.totalorder %s21, 1
      %p123 = por %p121, %p122
      %p124 = scmp.ne.s32.totalorder %s115, %s116
      %p125 = scmp.eq.s32.totalorder %s21, 0
      %p126 = por %p124, %p125
      %p127 = scmp.ne.s32.totalorder %s115, %s116
      %p128 = scmp.eq.s32.totalorder %s22, 1
      %p129 = por %p127, %p128
      %p131 = scmp.ne.s32.totalorder %s116, %s130
      %p132 = scmp.eq.s32.totalorder %s22, 0
      %p133 = por %p131, %p132
      %s135 = sadd.s32 %s134, 1
      %p138 = scmp.eq.s32.totalorder %s16, 1
      %p139 = scmp.ne.s32.totalorder %s134, %s136
      %p140 = scmp.eq.s32.totalorder %s16, 0
      %p141 = por %p139, %p140
      %p142 = scmp.ne.s32.totalorder %s134, %s136
      %p143 = scmp.eq.s32.totalorder %s21, 1
      %p144 = por %p142, %p143
      %p145 = scmp.ne.s32.totalorder %s136, %s137
      %p146 = scmp.eq.s32.totalorder %s21, 0
      %p147 = por %p145, %p146
      %p148 = scmp.ne.s32.totalorder %s136, %s137
      %p149 = scmp.eq.s32.totalorder %s22, 1
      %p150 = por %p148, %p149
      %p152 = scmp.ne.s32.totalorder %s137, %s151
      %p153 = scmp.eq.s32.totalorder %s22, 0
      %p154 = por %p152, %p153
      %s156 = sadd.s32 %s155, 1
      %p159 = scmp.eq.s32.totalorder %s16, 1
      %p160 = scmp.ne.s32.totalorder %s155, %s157
      %p161 = scmp.eq.s32.totalorder %s16, 0
      %p162 = por %p160, %p161
      %p163 = scmp.ne.s32.totalorder %s155, %s157
      %p164 = scmp.eq.s32.totalorder %s21, 1
      %p165 = por %p163, %p164
      %p166 = scmp.ne.s32.totalorder %s157, %s158
      %p167 = scmp.eq.s32.totalorder %s21, 0
      %p168 = por %p166, %p167
      %p169 = scmp.ne.s32.totalorder %s157, %s158
      %p170 = scmp.eq.s32.totalorder %s22, 1
      %p171 = por %p169, %p170
      %p173 = scmp.ne.s32.totalorder %s158, %s172
      %p174 = scmp.eq.s32.totalorder %s22, 0
      %p175 = por %p173, %p174
      %s176 = ssub.s32 %s16, %s23
      %p177 = scmp.eq.s32.totalorder %s176, 0
      %s179 = sadd.s32 %s178, 1
      %s180 = scalar_select %p177, %s178, %s179
      %p183 = pneg %p177
      %p184 = scmp.eq.s32.totalorder %s16, 1
      %p185 = por %p183, %p184
      %p186 = scmp.ne.s32.totalorder %s178, %s181
      %p187 = scmp.eq.s32.totalorder %s16, 0
      %p188 = por %p186, %p187
      %p189 = scmp.ne.s32.totalorder %s178, %s181
      %p190 = scmp.eq.s32.totalorder %s21, 1
      %p191 = por %p189, %p190
      %p192 = scmp.ne.s32.totalorder %s181, %s182
      %p193 = scmp.eq.s32.totalorder %s21, 0
      %p194 = por %p192, %p193
      %p195 = scmp.ne.s32.totalorder %s181, %s182
      %p196 = scmp.eq.s32.totalorder %s22, 1
      %p197 = por %p195, %p196
      %p199 = scmp.ne.s32.totalorder %s182, %s198
      %p200 = scmp.eq.s32.totalorder %s22, 0
      %p201 = por %p199, %p200
      %p202 = scmp.le.s32.totalorder 1, %s16
      %p203 = scmp.lt.s32.totalorder %s16, 3
      %p204 = pnand %p202, %p203
      %p205 = pneg %p204
      // Predicated region
      $region9: #{basic_block.1} parent=5 // pred_check
        _
      $region10: #{basic_block.1} parent=5 // pred_check_branch
        %207 = sbr.rel (%p204) target = $region12
      $region11: #{basic_block.1} parent=5 // pred_region
        %s208 = ssub.s32 %s16, 1
        // Predicated region
        $region13: #{basic_block.1} parent=11 // pred_check
          %p209 = pneg %p63
        $region14: #{basic_block.1} parent=11 // pred_check_branch
          %211 = sbr.rel (%p209) target = $region16
        $region15: #{basic_block.1} parent=11 // pred_region
          _
        $region16: #{basic_block.1} parent=11 // pred_fallthru
          _
        // Predicated region
        $region17: #{basic_block.1} parent=11 // pred_check
          %p212 = pneg %p84
        $region18: #{basic_block.1} parent=11 // pred_check_branch
          %214 = sbr.rel (%p212) target = $region20
        $region19: #{basic_block.1} parent=11 // pred_region
          _
        $region20: #{basic_block.1} parent=11 // pred_fallthru
          _
        // Predicated region
        $region21: #{basic_block.1} parent=11 // pred_check
          %p215 = pneg %p105
        $region22: #{basic_block.1} parent=11 // pred_check_branch
          %217 = sbr.rel (%p215) target = $region24
        $region23: #{basic_block.1} parent=11 // pred_region
          _
        $region24: #{basic_block.1} parent=11 // pred_fallthru
          _
        // Predicated region
        $region25: #{basic_block.1} parent=11 // pred_check
          %p218 = pneg %p126
        $region26: #{basic_block.1} parent=11 // pred_check_branch
          %220 = sbr.rel (%p218) target = $region28
        $region27: #{basic_block.1} parent=11 // pred_region
          _
        $region28: #{basic_block.1} parent=11 // pred_fallthru
          _
        // Predicated region
        $region29: #{basic_block.1} parent=11 // pred_check
          %p221 = pneg %p147
        $region30: #{basic_block.1} parent=11 // pred_check_branch
          %223 = sbr.rel (%p221) target = $region32
        $region31: #{basic_block.1} parent=11 // pred_region
          _
        $region32: #{basic_block.1} parent=11 // pred_fallthru
          _
        // Predicated region
        $region33: #{basic_block.1} parent=11 // pred_check
          %p224 = pneg %p168
        $region34: #{basic_block.1} parent=11 // pred_check_branch
          %226 = sbr.rel (%p224) target = $region36
        $region35: #{basic_block.1} parent=11 // pred_region
          _
        $region36: #{basic_block.1} parent=11 // pred_fallthru
          _
      $region12: #{basic_block.1} parent=5 // pred_fallthru
        _
      %p227 = scmp.lt.s32.totalorder %s16, 2
      // Predicated region
      $region37: #{basic_block.1} parent=5 // pred_check
        %p228 = pneg %p227
      $region38: #{basic_block.1} parent=5 // pred_check_branch
        %230 = sbr.rel (%p228) target = $region40
      $region39: #{basic_block.1} parent=5 // pred_region
        // Predicated region
        $region41: #{basic_block.1} parent=39 // pred_check
          %p231 = pneg %p36
        $region42: #{basic_block.1} parent=39 // pred_check_branch
          %233 = sbr.rel (%p231) target = $region44
        $region43: #{basic_block.1} parent=39 // pred_region
          %p234 = scmp.lt.s32.totalorder %s16, 1
          %s235 = scalar_select %p234, %s16, 1
          %s236 = smul.addr %s235, 32
          %s237 = smul.addr %s236, 8
          %s238 = scalar_lea.vmem %s0, %s237
        $region44: #{basic_block.1} parent=39 // pred_fallthru
          _
      $region40: #{basic_block.1} parent=5 // pred_fallthru
        _
      %p239 = scmp.le.s32.totalorder 1, %s16
      %p240 = scmp.lt.s32.totalorder %s16, 3
      %p241 = pnand %p239, %p240
      %p242 = pneg %p241
      // Predicated region
      $region45: #{basic_block.1} parent=5 // pred_check
        _
      $region46: #{basic_block.1} parent=5 // pred_check_branch
        %244 = sbr.rel (%p241) target = $region48
      $region47: #{basic_block.1} parent=5 // pred_region
        %s245 = ssub.s32 %s16, 1
        %p246 = scmp.lt.s32.totalorder %s21, 1
        %s247 = scalar_select %p246, %s21, 1
        %s248 = smul.addr %s247, 32
        %s249 = smul.addr %s248, 8
        %s250 = scalar_lea.vmem %s0, %s249
        %p251 = pneg %p42
        %p252 = pneg %p39
        %p253 = pneg %p63
        %p254 = pneg %p60
        %p255 = pneg %p84
        %p256 = pneg %p81
        %p257 = pneg %p105
        %p258 = pneg %p102
        %p259 = pneg %p126
        %p260 = pneg %p123
        %p261 = pneg %p147
        %p262 = pneg %p144
        %p263 = pneg %p168
        %p264 = pneg %p165
        %p265 = pneg %p194
        %p266 = pneg %p191
        %s267 = sand.u32 %s181, 1
        %s268 = scalar_lea.sflag [#allocation5], %s267
        %s269 = sand.u32 %s181, 1
        %s270 = smul.addr %s269, 256
        %s271 = scalar_lea.vmem [#allocation4], %s270
        %p272 = scmp.lt.s32.totalorder %s21, 1
        %s273 = scalar_select %p272, %s21, 1
        %s274 = smul.addr %s273, 32
        %s275 = smul.addr %s274, 8
        %s276 = scalar_lea.vmem %s0, %s275
        %278 = vst [vmem:[#allocation2] sm:$0xf] 0
        %279 = vst [vmem:[#allocation2 + $0x4] sm:$0xf] 0
        %280 = vst [vmem:[#allocation2 + $0x8] sm:$0x1] 0
        %s281 = scalar_lea.vmem [#allocation2], 204
        %282 = vst [vmem:[%s281] sm:$0xf] 0
        %283 = vst [vmem:[%s281 + $0x4] sm:$0xf] 0
        %284 = vst [vmem:[%s281 + $0x8] sm:$0x1] 0
        %vm285 = vcmask 1040384
        %vm286 = vsmask.f32 256
        %vm287 = vmand %vm285, %vm286
        %v288 = vld [vmem:[#allocation2] sm:$0x1]
        %v289 = vsel %vm287, 0, %v288
        %290 = vst [vmem:[#allocation2] sm:$0x1] %v289
        %v291 = vld [vmem:[#allocation2 + $0xc] sm:$0x1]
        %v292 = vsel %vm287, 0, %v291
        %293 = vst [vmem:[#allocation2 + $0xc] sm:$0x1] %v292
        %v294 = vld [vmem:[#allocation2 + $0x18] sm:$0x1]
        %v295 = vsel %vm287, 0, %v294
        %296 = vst [vmem:[#allocation2 + $0x18] sm:$0x1] %v295
        %v297 = vld [vmem:[#allocation2 + $0x24] sm:$0x1]
        %v298 = vsel %vm287, 0, %v297
        %299 = vst [vmem:[#allocation2 + $0x24] sm:$0x1] %v298
        %v300 = vld [vmem:[#allocation2 + $0x30] sm:$0x1]
        %v301 = vsel %vm287, 0, %v300
        %302 = vst [vmem:[#allocation2 + $0x30] sm:$0x1] %v301
        %v303 = vld [vmem:[#allocation2 + $0x3c] sm:$0x1]
        %v304 = vsel %vm287, 0, %v303
        %305 = vst [vmem:[#allocation2 + $0x3c] sm:$0x1] %v304
        %v306 = vld [vmem:[#allocation2 + $0x48] sm:$0x1]
        %v307 = vsel %vm287, 0, %v306
        %308 = vst [vmem:[#allocation2 + $0x48] sm:$0x1] %v307
        %v309 = vld [vmem:[#allocation2 + $0x54] sm:$0x1]
        %v310 = vsel %vm287, 0, %v309
        %311 = vst [vmem:[#allocation2 + $0x54] sm:$0x1] %v310
        %v312 = vld [vmem:[#allocation2 + $0x60] sm:$0x1]
        %v313 = vsel %vm287, 0, %v312
        %314 = vst [vmem:[#allocation2 + $0x60] sm:$0x1] %v313
        %v315 = vld [vmem:[#allocation2 + $0x6c] sm:$0x1]
        %v316 = vsel %vm287, 0, %v315
        %317 = vst [vmem:[#allocation2 + $0x6c] sm:$0x1] %v316
        %v318 = vld [vmem:[#allocation2 + $0x78] sm:$0x1]
        %v319 = vsel %vm287, 0, %v318
        %320 = vst [vmem:[#allocation2 + $0x78] sm:$0x1] %v319
        %v321 = vld [vmem:[#allocation2 + $0x84] sm:$0x1]
        %v322 = vsel %vm287, 0, %v321
        %323 = vst [vmem:[#allocation2 + $0x84] sm:$0x1] %v322
        %v324 = vld [vmem:[#allocation2 + $0x90] sm:$0x1]
        %v325 = vsel %vm287, 0, %v324
        %326 = vst [vmem:[#allocation2 + $0x90] sm:$0x1] %v325
        %v327 = vld [vmem:[#allocation2 + $0x9c] sm:$0x1]
        %v328 = vsel %vm287, 0, %v327
        %329 = vst [vmem:[#allocation2 + $0x9c] sm:$0x1] %v328
        %v330 = vld [vmem:[#allocation2 + $0xa8] sm:$0x1]
        %v331 = vsel %vm287, 0, %v330
        %332 = vst [vmem:[#allocation2 + $0xa8] sm:$0x1] %v331
        %v333 = vld [vmem:[#allocation2 + $0xb4] sm:$0x1]
        %v334 = vsel %vm287, 0, %v333
        %335 = vst [vmem:[#allocation2 + $0xb4] sm:$0x1] %v334
        %v336 = vld [vmem:[#allocation2 + $0xc0] sm:$0x1]
        %v337 = vsel %vm287, 0, %v336
        %338 = vst [vmem:[#allocation2 + $0xc0] sm:$0x1] %v337
        %v339 = vld [vmem:[#allocation2 + $0xcc] sm:$0x1]
        %v340 = vsel %vm287, 0, %v339
        %341 = vst [vmem:[#allocation2 + $0xcc] sm:$0x1] %v340
        %vm342 = vsmask.f32 7938
        %vm343 = vmand %vm285, %vm342
        %v344 = vld [vmem:[#allocation2 + $0x8] sm:$0x1]
        %v345 = vsel %vm343, 0, %v344
        %346 = vst [vmem:[#allocation2 + $0x8] sm:$0x1] %v345
        %v347 = vld [vmem:[#allocation2 + $0x14] sm:$0x1]
        %v348 = vsel %vm343, 0, %v347
        %349 = vst [vmem:[#allocation2 + $0x14] sm:$0x1] %v348
        %v350 = vld [vmem:[#allocation2 + $0x20] sm:$0x1]
        %v351 = vsel %vm343, 0, %v350
        %352 = vst [vmem:[#allocation2 + $0x20] sm:$0x1] %v351
        %v353 = vld [vmem:[#allocation2 + $0x2c] sm:$0x1]
        %v354 = vsel %vm343, 0, %v353
        %355 = vst [vmem:[#allocation2 + $0x2c] sm:$0x1] %v354
        %v356 = vld [vmem:[#allocation2 + $0x38] sm:$0x1]
        %v357 = vsel %vm343, 0, %v356
        %358 = vst [vmem:[#allocation2 + $0x38] sm:$0x1] %v357
        %v359 = vld [vmem:[#allocation2 + $0x44] sm:$0x1]
        %v360 = vsel %vm343, 0, %v359
        %361 = vst [vmem:[#allocation2 + $0x44] sm:$0x1] %v360
        %v362 = vld [vmem:[#allocation2 + $0x50] sm:$0x1]
        %v363 = vsel %vm343, 0, %v362
        %364 = vst [vmem:[#allocation2 + $0x50] sm:$0x1] %v363
        %v365 = vld [vmem:[#allocation2 + $0x5c] sm:$0x1]
        %v366 = vsel %vm343, 0, %v365
        %367 = vst [vmem:[#allocation2 + $0x5c] sm:$0x1] %v366
        %v368 = vld [vmem:[#allocation2 + $0x68] sm:$0x1]
        %v369 = vsel %vm343, 0, %v368
        %370 = vst [vmem:[#allocation2 + $0x68] sm:$0x1] %v369
        %v371 = vld [vmem:[#allocation2 + $0x74] sm:$0x1]
        %v372 = vsel %vm343, 0, %v371
        %373 = vst [vmem:[#allocation2 + $0x74] sm:$0x1] %v372
        %v374 = vld [vmem:[#allocation2 + $0x80] sm:$0x1]
        %v375 = vsel %vm343, 0, %v374
        %376 = vst [vmem:[#allocation2 + $0x80] sm:$0x1] %v375
        %v377 = vld [vmem:[#allocation2 + $0x8c] sm:$0x1]
        %v378 = vsel %vm343, 0, %v377
        %379 = vst [vmem:[#allocation2 + $0x8c] sm:$0x1] %v378
        %v380 = vld [vmem:[#allocation2 + $0x98] sm:$0x1]
        %v381 = vsel %vm343, 0, %v380
        %382 = vst [vmem:[#allocation2 + $0x98] sm:$0x1] %v381
        %v383 = vld [vmem:[#allocation2 + $0xa4] sm:$0x1]
        %v384 = vsel %vm343, 0, %v383
        %385 = vst [vmem:[#allocation2 + $0xa4] sm:$0x1] %v384
        %v386 = vld [vmem:[#allocation2 + $0xb0] sm:$0x1]
        %v387 = vsel %vm343, 0, %v386
        %388 = vst [vmem:[#allocation2 + $0xb0] sm:$0x1] %v387
        %v389 = vld [vmem:[#allocation2 + $0xbc] sm:$0x1]
        %v390 = vsel %vm343, 0, %v389
        %391 = vst [vmem:[#allocation2 + $0xbc] sm:$0x1] %v390
        %v392 = vld [vmem:[#allocation2 + $0xc8] sm:$0x1]
        %v393 = vsel %vm343, 0, %v392
        %394 = vst [vmem:[#allocation2 + $0xc8] sm:$0x1] %v393
        %v395 = vld [vmem:[#allocation2 + $0xd4] sm:$0x1]
        %v396 = vsel %vm343, 0, %v395
        %397 = vst [vmem:[#allocation2 + $0xd4] sm:$0x1] %v396
        %v398 = vld [vmem:[%s276] sm:$0xff]
        %v399 = vld [vmem:[%s276 + $0x8] sm:$0xff]
        %v400 = vld [vmem:[%s276 + $0x10] sm:$0xff]
        %v401 = vld [vmem:[%s276 + $0x18] sm:$0xff]
        %v402 = vld [vmem:[%s276 + $0x20] sm:$0xff]
        %v403 = vld [vmem:[%s276 + $0x28] sm:$0xff]
        %v404 = vld [vmem:[%s276 + $0x30] sm:$0xff]
        %v405 = vld [vmem:[%s276 + $0x38] sm:$0xff]
        %v406 = vld [vmem:[%s276 + $0x40] sm:$0xff]
        %v407 = vld [vmem:[%s276 + $0x48] sm:$0xff]
        %v408 = vld [vmem:[%s276 + $0x50] sm:$0xff]
        %v409 = vld [vmem:[%s276 + $0x58] sm:$0xff]
        %v410 = vld [vmem:[%s276 + $0x60] sm:$0xff]
        %v411 = vld [vmem:[%s276 + $0x68] sm:$0xff]
        %v412 = vld [vmem:[%s276 + $0x70] sm:$0xff]
        %v413 = vld [vmem:[%s276 + $0x78] sm:$0xff]
        %v414 = vld [vmem:[%s276 + $0x80] sm:$0xff]
        %v415 = vld [vmem:[%s276 + $0x88] sm:$0xff]
        %v416 = vld [vmem:[%s276 + $0x90] sm:$0xff]
        %v417 = vld [vmem:[%s276 + $0x98] sm:$0xff]
        %v418 = vld [vmem:[%s276 + $0xa0] sm:$0xff]
        %v419 = vld [vmem:[%s276 + $0xa8] sm:$0xff]
        %v420 = vld [vmem:[%s276 + $0xb0] sm:$0xff]
        %v421 = vld [vmem:[%s276 + $0xb8] sm:$0xff]
        %v422 = vld [vmem:[%s276 + $0xc0] sm:$0xff]
        %v423 = vld [vmem:[%s276 + $0xc8] sm:$0xff]
        %v424 = vld [vmem:[%s276 + $0xd0] sm:$0xff]
        %v425 = vld [vmem:[%s276 + $0xd8] sm:$0xff]
        %v426 = vld [vmem:[%s276 + $0xe0] sm:$0xff]
        %v427 = vld [vmem:[%s276 + $0xe8] sm:$0xff]
        %v428 = vld [vmem:[%s276 + $0xf0] sm:$0xff]
        %v429 = vld [vmem:[%s276 + $0xf8] sm:$0xff]
        %v430 = vpack.c.bf16 %v398, %v398
        %v431 = vpack.c.bf16 %v399, %v399
        %v432 = vpack.c.bf16 %v400, %v400
        %v433 = vpack.c.bf16 %v401, %v401
        %v434 = vpack.c.bf16 %v402, %v402
        %v435 = vpack.c.bf16 %v403, %v403
        %v436 = vpack.c.bf16 %v404, %v404
        %v437 = vpack.c.bf16 %v405, %v405
        %v438 = vpack.c.bf16 %v406, %v406
        %v439 = vpack.c.bf16 %v407, %v407
        %v440 = vpack.c.bf16 %v408, %v408
        %v441 = vpack.c.bf16 %v409, %v409
        %v442 = vpack.c.bf16 %v410, %v410
        %v443 = vpack.c.bf16 %v411, %v411
        %v444 = vpack.c.bf16 %v412, %v412
        %v445 = vpack.c.bf16 %v413, %v413
        %v446 = vpack.c.bf16 %v414, %v414
        %v447 = vpack.c.bf16 %v415, %v415
        %v448 = vpack.c.bf16 %v416, %v416
        %v449 = vpack.c.bf16 %v417, %v417
        %v450 = vpack.c.bf16 %v418, %v418
        %v451 = vpack.c.bf16 %v419, %v419
        %v452 = vpack.c.bf16 %v420, %v420
        %v453 = vpack.c.bf16 %v421, %v421
        %v454 = vpack.c.bf16 %v422, %v422
        %v455 = vpack.c.bf16 %v423, %v423
        %v456 = vpack.c.bf16 %v424, %v424
        %v457 = vpack.c.bf16 %v425, %v425
        %v458 = vpack.c.bf16 %v426, %v426
        %v459 = vpack.c.bf16 %v427, %v427
        %v460 = vpack.c.bf16 %v428, %v428
        %v461 = vpack.c.bf16 %v429, %v429
        %vm462 = vsmask.f32 4368
        %vm463 = vmor %vm286, %vm462
        %v465 = vshrl.u32 %v430, 16
        %v467 = vrot.slane %v465, 7
        %v468 = vshll.u32 %v430, 16
        %v470 = vor.u32 %v467, %v468
        %v471 = vrot.slane %v467, 4
        %v473 = vshrl.u32 %v431, 16
        %v475 = vrot.slane %v473, 7
        %v476 = vshll.u32 %v431, 16
        %v478 = vor.u32 %v475, %v476
        %v479 = vsel %vm463, %v471, %v478
        %v480 = vrot.slane %v475, 4
        %v482 = vshrl.u32 %v432, 16
        %v484 = vrot.slane %v482, 7
        %v485 = vshll.u32 %v432, 16
        %v487 = vor.u32 %v484, %v485
        %v488 = vrot.slane %v484, 4
        %v490 = vshrl.u32 %v433, 16
        %v492 = vrot.slane %v490, 7
        %v493 = vshll.u32 %v433, 16
        %v495 = vor.u32 %v492, %v493
        %v496 = vsel %vm463, %v488, %v495
        %v497 = vrot.slane %v492, 4
        %v499 = vshrl.u32 %v434, 16
        %v501 = vrot.slane %v499, 7
        %v502 = vshll.u32 %v434, 16
        %v504 = vor.u32 %v501, %v502
        %v505 = vrot.slane %v501, 4
        %v507 = vshrl.u32 %v435, 16
        %v509 = vrot.slane %v507, 7
        %v510 = vshll.u32 %v435, 16
        %v512 = vor.u32 %v509, %v510
        %v513 = vsel %vm463, %v505, %v512
        %v514 = vrot.slane %v509, 4
        %v516 = vshrl.u32 %v436, 16
        %v518 = vrot.slane %v516, 7
        %v519 = vshll.u32 %v436, 16
        %v521 = vor.u32 %v518, %v519
        %v522 = vrot.slane %v518, 4
        %v524 = vshrl.u32 %v437, 16
        %v526 = vrot.slane %v524, 7
        %v527 = vshll.u32 %v437, 16
        %v529 = vor.u32 %v526, %v527
        %v530 = vsel %vm463, %v522, %v529
        %v531 = vrot.slane %v526, 4
        %v533 = vshrl.u32 %v438, 16
        %v535 = vrot.slane %v533, 7
        %v536 = vshll.u32 %v438, 16
        %v538 = vor.u32 %v535, %v536
        %v539 = vrot.slane %v535, 4
        %v541 = vshrl.u32 %v439, 16
        %v543 = vrot.slane %v541, 7
        %v544 = vshll.u32 %v439, 16
        %v546 = vor.u32 %v543, %v544
        %v547 = vsel %vm463, %v539, %v546
        %v548 = vrot.slane %v543, 4
        %v550 = vshrl.u32 %v440, 16
        %v552 = vrot.slane %v550, 7
        %v553 = vshll.u32 %v440, 16
        %v555 = vor.u32 %v552, %v553
        %v556 = vrot.slane %v552, 4
        %v558 = vshrl.u32 %v441, 16
        %v560 = vrot.slane %v558, 7
        %v561 = vshll.u32 %v441, 16
        %v563 = vor.u32 %v560, %v561
        %v564 = vsel %vm463, %v556, %v563
        %v565 = vrot.slane %v560, 4
        %v567 = vshrl.u32 %v442, 16
        %v569 = vrot.slane %v567, 7
        %v570 = vshll.u32 %v442, 16
        %v572 = vor.u32 %v569, %v570
        %v573 = vrot.slane %v569, 4
        %v575 = vshrl.u32 %v443, 16
        %v577 = vrot.slane %v575, 7
        %v578 = vshll.u32 %v443, 16
        %v580 = vor.u32 %v577, %v578
        %v581 = vsel %vm463, %v573, %v580
        %v582 = vrot.slane %v577, 4
        %v584 = vshrl.u32 %v444, 16
        %v586 = vrot.slane %v584, 7
        %v587 = vshll.u32 %v444, 16
        %v589 = vor.u32 %v586, %v587
        %v590 = vrot.slane %v586, 4
        %v592 = vshrl.u32 %v445, 16
        %v594 = vrot.slane %v592, 7
        %v595 = vshll.u32 %v445, 16
        %v597 = vor.u32 %v594, %v595
        %v598 = vsel %vm463, %v590, %v597
        %v599 = vrot.slane %v594, 4
        %v601 = vshrl.u32 %v446, 16
        %v603 = vrot.slane %v601, 7
        %v604 = vshll.u32 %v446, 16
        %v606 = vor.u32 %v603, %v604
        %v607 = vrot.slane %v603, 4
        %v609 = vshrl.u32 %v447, 16
        %v611 = vrot.slane %v609, 7
        %v612 = vshll.u32 %v447, 16
        %v614 = vor.u32 %v611, %v612
        %v615 = vsel %vm463, %v607, %v614
        %v616 = vrot.slane %v611, 4
        %v618 = vshrl.u32 %v448, 16
        %v620 = vrot.slane %v618, 7
        %v621 = vshll.u32 %v448, 16
        %v623 = vor.u32 %v620, %v621
        %v624 = vrot.slane %v620, 4
        %v626 = vshrl.u32 %v449, 16
        %v628 = vrot.slane %v626, 7
        %v629 = vshll.u32 %v449, 16
        %v631 = vor.u32 %v628, %v629
        %v632 = vsel %vm463, %v624, %v631
        %v633 = vrot.slane %v628, 4
        %v635 = vshrl.u32 %v450, 16
        %v637 = vrot.slane %v635, 7
        %v638 = vshll.u32 %v450, 16
        %v640 = vor.u32 %v637, %v638
        %v641 = vrot.slane %v637, 4
        %v643 = vshrl.u32 %v451, 16
        %v645 = vrot.slane %v643, 7
        %v646 = vshll.u32 %v451, 16
        %v648 = vor.u32 %v645, %v646
        %v649 = vsel %vm463, %v641, %v648
        %v650 = vrot.slane %v645, 4
        %v652 = vshrl.u32 %v452, 16
        %v654 = vrot.slane %v652, 7
        %v655 = vshll.u32 %v452, 16
        %v657 = vor.u32 %v654, %v655
        %v658 = vrot.slane %v654, 4
        %v660 = vshrl.u32 %v453, 16
        %v662 = vrot.slane %v660, 7
        %v663 = vshll.u32 %v453, 16
        %v665 = vor.u32 %v662, %v663
        %v666 = vsel %vm463, %v658, %v665
        %v667 = vrot.slane %v662, 4
        %v669 = vshrl.u32 %v454, 16
        %v671 = vrot.slane %v669, 7
        %v672 = vshll.u32 %v454, 16
        %v674 = vor.u32 %v671, %v672
        %v675 = vrot.slane %v671, 4
        %v677 = vshrl.u32 %v455, 16
        %v679 = vrot.slane %v677, 7
        %v680 = vshll.u32 %v455, 16
        %v682 = vor.u32 %v679, %v680
        %v683 = vsel %vm463, %v675, %v682
        %v684 = vrot.slane %v679, 4
        %v686 = vshrl.u32 %v456, 16
        %v688 = vrot.slane %v686, 7
        %v689 = vshll.u32 %v456, 16
        %v691 = vor.u32 %v688, %v689
        %v692 = vrot.slane %v688, 4
        %v694 = vshrl.u32 %v457, 16
        %v696 = vrot.slane %v694, 7
        %v697 = vshll.u32 %v457, 16
        %v699 = vor.u32 %v696, %v697
        %v700 = vsel %vm463, %v692, %v699
        %v701 = vrot.slane %v696, 4
        %v703 = vshrl.u32 %v458, 16
        %v705 = vrot.slane %v703, 7
        %v706 = vshll.u32 %v458, 16
        %v708 = vor.u32 %v705, %v706
        %v709 = vrot.slane %v705, 4
        %v711 = vshrl.u32 %v459, 16
        %v713 = vrot.slane %v711, 7
        %v714 = vshll.u32 %v459, 16
        %v716 = vor.u32 %v713, %v714
        %v717 = vsel %vm463, %v709, %v716
        %v718 = vrot.slane %v713, 4
        %v720 = vshrl.u32 %v460, 16
        %v722 = vrot.slane %v720, 7
        %v723 = vshll.u32 %v460, 16
        %v725 = vor.u32 %v722, %v723
        %v726 = vrot.slane %v722, 4
        %v728 = vshrl.u32 %v461, 16
        %v730 = vrot.slane %v728, 7
        %v731 = vshll.u32 %v461, 16
        %v733 = vor.u32 %v730, %v731
        %v734 = vsel %vm463, %v726, %v733
        %v735 = vrot.slane %v730, 4
        %s784 = scalar_lea.vmem [#allocation2], 12
        %vm785 = vcmask 1043456
        %vm786 = vmand %vm785, %vm342
        %v787 = vld [vmem:[%s784] sm:$0xf]
        %v788 = vsel %vm786, %v470, %v787
        %789 = vst [vmem:[%s784] sm:$0xf] %v788
        %790 = vst [vmem:[%s784 + $0x4] sm:$0xf] %v479
        %v791 = vld [vmem:[%s784 + $0x8] sm:$0x1]
        %v792 = vsel %vm287, %v480, %v791
        %793 = vst [vmem:[%s784 + $0x8] sm:$0x1] %v792
        %v794 = vld [vmem:[%s784 + $0xc] sm:$0xf]
        %v795 = vsel %vm786, %v487, %v794
        %796 = vst [vmem:[%s784 + $0xc] sm:$0xf] %v795
        %797 = vst [vmem:[%s784 + $0x10] sm:$0xf] %v496
        %v798 = vld [vmem:[%s784 + $0x14] sm:$0x1]
        %v799 = vsel %vm287, %v497, %v798
        %800 = vst [vmem:[%s784 + $0x14] sm:$0x1] %v799
        %v801 = vld [vmem:[%s784 + $0x18] sm:$0xf]
        %v802 = vsel %vm786, %v504, %v801
        %803 = vst [vmem:[%s784 + $0x18] sm:$0xf] %v802
        %804 = vst [vmem:[%s784 + $0x1c] sm:$0xf] %v513
        %v805 = vld [vmem:[%s784 + $0x20] sm:$0x1]
        %v806 = vsel %vm287, %v514, %v805
        %807 = vst [vmem:[%s784 + $0x20] sm:$0x1] %v806
        %v808 = vld [vmem:[%s784 + $0x24] sm:$0xf]
        %v809 = vsel %vm786, %v521, %v808
        %810 = vst [vmem:[%s784 + $0x24] sm:$0xf] %v809
        %811 = vst [vmem:[%s784 + $0x28] sm:$0xf] %v530
        %v812 = vld [vmem:[%s784 + $0x2c] sm:$0x1]
        %v813 = vsel %vm287, %v531, %v812
        %814 = vst [vmem:[%s784 + $0x2c] sm:$0x1] %v813
        %v815 = vld [vmem:[%s784 + $0x30] sm:$0xf]
        %v816 = vsel %vm786, %v538, %v815
        %817 = vst [vmem:[%s784 + $0x30] sm:$0xf] %v816
        %818 = vst [vmem:[%s784 + $0x34] sm:$0xf] %v547
        %v819 = vld [vmem:[%s784 + $0x38] sm:$0x1]
        %v820 = vsel %vm287, %v548, %v819
        %821 = vst [vmem:[%s784 + $0x38] sm:$0x1] %v820
        %v822 = vld [vmem:[%s784 + $0x3c] sm:$0xf]
        %v823 = vsel %vm786, %v555, %v822
        %824 = vst [vmem:[%s784 + $0x3c] sm:$0xf] %v823
        %825 = vst [vmem:[%s784 + $0x40] sm:$0xf] %v564
        %v826 = vld [vmem:[%s784 + $0x44] sm:$0x1]
        %v827 = vsel %vm287, %v565, %v826
        %828 = vst [vmem:[%s784 + $0x44] sm:$0x1] %v827
        %v829 = vld [vmem:[%s784 + $0x48] sm:$0xf]
        %v830 = vsel %vm786, %v572, %v829
        %831 = vst [vmem:[%s784 + $0x48] sm:$0xf] %v830
        %832 = vst [vmem:[%s784 + $0x4c] sm:$0xf] %v581
        %v833 = vld [vmem:[%s784 + $0x50] sm:$0x1]
        %v834 = vsel %vm287, %v582, %v833
        %835 = vst [vmem:[%s784 + $0x50] sm:$0x1] %v834
        %v836 = vld [vmem:[%s784 + $0x54] sm:$0xf]
        %v837 = vsel %vm786, %v589, %v836
        %838 = vst [vmem:[%s784 + $0x54] sm:$0xf] %v837
        %839 = vst [vmem:[%s784 + $0x58] sm:$0xf] %v598
        %v840 = vld [vmem:[%s784 + $0x5c] sm:$0x1]
        %v841 = vsel %vm287, %v599, %v840
        %842 = vst [vmem:[%s784 + $0x5c] sm:$0x1] %v841
        %v843 = vld [vmem:[%s784 + $0x60] sm:$0xf]
        %v844 = vsel %vm786, %v606, %v843
        %845 = vst [vmem:[%s784 + $0x60] sm:$0xf] %v844
        %846 = vst [vmem:[%s784 + $0x64] sm:$0xf] %v615
        %v847 = vld [vmem:[%s784 + $0x68] sm:$0x1]
        %v848 = vsel %vm287, %v616, %v847
        %849 = vst [vmem:[%s784 + $0x68] sm:$0x1] %v848
        %v850 = vld [vmem:[%s784 + $0x6c] sm:$0xf]
        %v851 = vsel %vm786, %v623, %v850
        %852 = vst [vmem:[%s784 + $0x6c] sm:$0xf] %v851
        %853 = vst [vmem:[%s784 + $0x70] sm:$0xf] %v632
        %v854 = vld [vmem:[%s784 + $0x74] sm:$0x1]
        %v855 = vsel %vm287, %v633, %v854
        %856 = vst [vmem:[%s784 + $0x74] sm:$0x1] %v855
        %v857 = vld [vmem:[%s784 + $0x78] sm:$0xf]
        %v858 = vsel %vm786, %v640, %v857
        %859 = vst [vmem:[%s784 + $0x78] sm:$0xf] %v858
        %860 = vst [vmem:[%s784 + $0x7c] sm:$0xf] %v649
        %v861 = vld [vmem:[%s784 + $0x80] sm:$0x1]
        %v862 = vsel %vm287, %v650, %v861
        %863 = vst [vmem:[%s784 + $0x80] sm:$0x1] %v862
        %v864 = vld [vmem:[%s784 + $0x84] sm:$0xf]
        %v865 = vsel %vm786, %v657, %v864
        %866 = vst [vmem:[%s784 + $0x84] sm:$0xf] %v865
        %867 = vst [vmem:[%s784 + $0x88] sm:$0xf] %v666
        %v868 = vld [vmem:[%s784 + $0x8c] sm:$0x1]
        %v869 = vsel %vm287, %v667, %v868
        %870 = vst [vmem:[%s784 + $0x8c] sm:$0x1] %v869
        %v871 = vld [vmem:[%s784 + $0x90] sm:$0xf]
        %v872 = vsel %vm786, %v674, %v871
        %873 = vst [vmem:[%s784 + $0x90] sm:$0xf] %v872
        %874 = vst [vmem:[%s784 + $0x94] sm:$0xf] %v683
        %v875 = vld [vmem:[%s784 + $0x98] sm:$0x1]
        %v876 = vsel %vm287, %v684, %v875
        %877 = vst [vmem:[%s784 + $0x98] sm:$0x1] %v876
        %v878 = vld [vmem:[%s784 + $0x9c] sm:$0xf]
        %v879 = vsel %vm786, %v691, %v878
        %880 = vst [vmem:[%s784 + $0x9c] sm:$0xf] %v879
        %881 = vst [vmem:[%s784 + $0xa0] sm:$0xf] %v700
        %v882 = vld [vmem:[%s784 + $0xa4] sm:$0x1]
        %v883 = vsel %vm287, %v701, %v882
        %884 = vst [vmem:[%s784 + $0xa4] sm:$0x1] %v883
        %v885 = vld [vmem:[%s784 + $0xa8] sm:$0xf]
        %v886 = vsel %vm786, %v708, %v885
        %887 = vst [vmem:[%s784 + $0xa8] sm:$0xf] %v886
        %888 = vst [vmem:[%s784 + $0xac] sm:$0xf] %v717
        %v889 = vld [vmem:[%s784 + $0xb0] sm:$0x1]
        %v890 = vsel %vm287, %v718, %v889
        %891 = vst [vmem:[%s784 + $0xb0] sm:$0x1] %v890
        %v892 = vld [vmem:[%s784 + $0xb4] sm:$0xf]
        %v893 = vsel %vm786, %v725, %v892
        %894 = vst [vmem:[%s784 + $0xb4] sm:$0xf] %v893
        %895 = vst [vmem:[%s784 + $0xb8] sm:$0xf] %v734
        %v896 = vld [vmem:[%s784 + $0xbc] sm:$0x1]
        %v897 = vsel %vm287, %v735, %v896
        %898 = vst [vmem:[%s784 + $0xbc] sm:$0x1] %v897
        %v899 = vld [vmem:[#allocation2] sm:$0xf]
        %v900 = vld [vmem:[#allocation2 + $0x4] sm:$0xf]
        %v901 = vld [vmem:[#allocation2 + $0xc] sm:$0xf]
        %v902 = vld [vmem:[#allocation2 + $0x10] sm:$0xf]
        %v903 = vld [vmem:[#allocation2 + $0x18] sm:$0xf]
        %v904 = vld [vmem:[#allocation2 + $0x1c] sm:$0xf]
        %v905 = vld [vmem:[#allocation2 + $0x24] sm:$0xf]
        %v906 = vld [vmem:[#allocation2 + $0x28] sm:$0xf]
        %v907 = vld [vmem:[#allocation2 + $0x30] sm:$0xf]
        %v908 = vld [vmem:[#allocation2 + $0x34] sm:$0xf]
        %v909 = vld [vmem:[#allocation2 + $0x3c] sm:$0xf]
        %v910 = vld [vmem:[#allocation2 + $0x40] sm:$0xf]
        %v911 = vld [vmem:[#allocation2 + $0x48] sm:$0xf]
        %v912 = vld [vmem:[#allocation2 + $0x4c] sm:$0xf]
        %v913 = vld [vmem:[#allocation2 + $0x54] sm:$0xf]
        %v914 = vld [vmem:[#allocation2 + $0x58] sm:$0xf]
        %v915 = vld [vmem:[#allocation2 + $0x60] sm:$0xf]
        %v916 = vld [vmem:[#allocation2 + $0x64] sm:$0xf]
        %v917 = vld [vmem:[#allocation2 + $0x6c] sm:$0xf]
        %v918 = vld [vmem:[#allocation2 + $0x70] sm:$0xf]
        %v919 = vld [vmem:[#allocation2 + $0x78] sm:$0xf]
        %v920 = vld [vmem:[#allocation2 + $0x7c] sm:$0xf]
        %v921 = vld [vmem:[#allocation2 + $0x84] sm:$0xf]
        %v922 = vld [vmem:[#allocation2 + $0x88] sm:$0xf]
        %v923 = vld [vmem:[#allocation2 + $0x90] sm:$0xf]
        %v924 = vld [vmem:[#allocation2 + $0x94] sm:$0xf]
        %v925 = vld [vmem:[#allocation2 + $0x9c] sm:$0xf]
        %v926 = vld [vmem:[#allocation2 + $0xa0] sm:$0xf]
        %v927 = vld [vmem:[#allocation2 + $0xa8] sm:$0xf]
        %v928 = vld [vmem:[#allocation2 + $0xac] sm:$0xf]
        %v929 = vld [vmem:[#allocation2 + $0xb4] sm:$0xf]
        %v930 = vld [vmem:[#allocation2 + $0xb8] sm:$0xf]
        %931 = vst [vmem:[#allocation3] sm:$0xf] %v899
        %932 = vst [vmem:[#allocation3 + $0x24] sm:$0xf] %v900
        %933 = vst [vmem:[#allocation3 + $0x48] sm:$0xf] %v901
        %934 = vst [vmem:[#allocation3 + $0x6c] sm:$0xf] %v902
        %935 = vst [vmem:[#allocation3 + $0x90] sm:$0xf] %v903
        %936 = vst [vmem:[#allocation3 + $0xb4] sm:$0xf] %v904
        %937 = vst [vmem:[#allocation3 + $0xd8] sm:$0xf] %v905
        %938 = vst [vmem:[#allocation3 + $0xfc] sm:$0xf] %v906
        %939 = vst [vmem:[#allocation3 + $0x120] sm:$0xf] %v907
        %940 = vst [vmem:[#allocation3 + $0x144] sm:$0xf] %v908
        %941 = vst [vmem:[#allocation3 + $0x168] sm:$0xf] %v909
        %942 = vst [vmem:[#allocation3 + $0x18c] sm:$0xf] %v910
        %943 = vst [vmem:[#allocation3 + $0x1b0] sm:$0xf] %v911
        %944 = vst [vmem:[#allocation3 + $0x1d4] sm:$0xf] %v912
        %945 = vst [vmem:[#allocation3 + $0x1f8] sm:$0xf] %v913
        %946 = vst [vmem:[#allocation3 + $0x21c] sm:$0xf] %v914
        %947 = vst [vmem:[#allocation3 + $0x240] sm:$0xf] %v915
        %948 = vst [vmem:[#allocation3 + $0x264] sm:$0xf] %v916
        %949 = vst [vmem:[#allocation3 + $0x288] sm:$0xf] %v917
        %950 = vst [vmem:[#allocation3 + $0x2ac] sm:$0xf] %v918
        %951 = vst [vmem:[#allocation3 + $0x2d0] sm:$0xf] %v919
        %952 = vst [vmem:[#allocation3 + $0x2f4] sm:$0xf] %v920
        %953 = vst [vmem:[#allocation3 + $0x318] sm:$0xf] %v921
        %954 = vst [vmem:[#allocation3 + $0x33c] sm:$0xf] %v922
        %955 = vst [vmem:[#allocation3 + $0x360] sm:$0xf] %v923
        %956 = vst [vmem:[#allocation3 + $0x384] sm:$0xf] %v924
        %957 = vst [vmem:[#allocation3 + $0x3a8] sm:$0xf] %v925
        %958 = vst [vmem:[#allocation3 + $0x3cc] sm:$0xf] %v926
        %959 = vst [vmem:[#allocation3 + $0x3f0] sm:$0xf] %v927
        %960 = vst [vmem:[#allocation3 + $0x414] sm:$0xf] %v928
        %961 = vst [vmem:[#allocation3 + $0x438] sm:$0xf] %v929
        %962 = vst [vmem:[#allocation3 + $0x45c] sm:$0xf] %v930
        %v963 = vld [vmem:[#allocation2] sm:$0xf]
        %v964 = vld [vmem:[#allocation2 + $0x4] sm:$0xf]
        %v965 = vld [vmem:[#allocation2 + $0x8] sm:$0x1]
        %v966 = vld [vmem:[#allocation2 + $0xc] sm:$0xf]
        %v967 = vld [vmem:[#allocation2 + $0x10] sm:$0xf]
        %v968 = vld [vmem:[#allocation2 + $0x14] sm:$0x1]
        %v969 = vld [vmem:[#allocation2 + $0x18] sm:$0xf]
        %v970 = vld [vmem:[#allocation2 + $0x1c] sm:$0xf]
        %v971 = vld [vmem:[#allocation2 + $0x20] sm:$0x1]
        %v972 = vld [vmem:[#allocation2 + $0x24] sm:$0xf]
        %v973 = vld [vmem:[#allocation2 + $0x28] sm:$0xf]
        %v974 = vld [vmem:[#allocation2 + $0x2c] sm:$0x1]
        %v975 = vld [vmem:[#allocation2 + $0x30] sm:$0xf]
        %v976 = vld [vmem:[#allocation2 + $0x34] sm:$0xf]
        %v977 = vld [vmem:[#allocation2 + $0x38] sm:$0x1]
        %v978 = vld [vmem:[#allocation2 + $0x3c] sm:$0xf]
        %v979 = vld [vmem:[#allocation2 + $0x40] sm:$0xf]
        %v980 = vld [vmem:[#allocation2 + $0x44] sm:$0x1]
        %v981 = vld [vmem:[#allocation2 + $0x48] sm:$0xf]
        %v982 = vld [vmem:[#allocation2 + $0x4c] sm:$0xf]
        %v983 = vld [vmem:[#allocation2 + $0x50] sm:$0x1]
        %v984 = vld [vmem:[#allocation2 + $0x54] sm:$0xf]
        %v985 = vld [vmem:[#allocation2 + $0x58] sm:$0xf]
        %v986 = vld [vmem:[#allocation2 + $0x5c] sm:$0x1]
        %v987 = vld [vmem:[#allocation2 + $0x60] sm:$0xf]
        %v988 = vld [vmem:[#allocation2 + $0x64] sm:$0xf]
        %v989 = vld [vmem:[#allocation2 + $0x68] sm:$0x1]
        %v990 = vld [vmem:[#allocation2 + $0x6c] sm:$0xf]
        %v991 = vld [vmem:[#allocation2 + $0x70] sm:$0xf]
        %v992 = vld [vmem:[#allocation2 + $0x74] sm:$0x1]
        %v993 = vld [vmem:[#allocation2 + $0x78] sm:$0xf]
        %v994 = vld [vmem:[#allocation2 + $0x7c] sm:$0xf]
        %v995 = vld [vmem:[#allocation2 + $0x80] sm:$0x1]
        %v996 = vld [vmem:[#allocation2 + $0x84] sm:$0xf]
        %v997 = vld [vmem:[#allocation2 + $0x88] sm:$0xf]
        %v998 = vld [vmem:[#allocation2 + $0x8c] sm:$0x1]
        %v999 = vld [vmem:[#allocation2 + $0x90] sm:$0xf]
        %v1000 = vld [vmem:[#allocation2 + $0x94] sm:$0xf]
        %v1001 = vld [vmem:[#allocation2 + $0x98] sm:$0x1]
        %v1002 = vld [vmem:[#allocation2 + $0x9c] sm:$0xf]
        %v1003 = vld [vmem:[#allocation2 + $0xa0] sm:$0xf]
        %v1004 = vld [vmem:[#allocation2 + $0xa4] sm:$0x1]
        %v1005 = vld [vmem:[#allocation2 + $0xa8] sm:$0xf]
        %v1006 = vld [vmem:[#allocation2 + $0xac] sm:$0xf]
        %v1007 = vld [vmem:[#allocation2 + $0xb0] sm:$0x1]
        %v1008 = vld [vmem:[#allocation2 + $0xb4] sm:$0xf]
        %v1009 = vld [vmem:[#allocation2 + $0xb8] sm:$0xf]
        %v1010 = vld [vmem:[#allocation2 + $0xbc] sm:$0x1]
        %vm1011 = vsmask.f32 3328
        %vm1012 = vsmask.f32 7440
        %vm1013 = vmor %vm1011, %vm1012
        %v1015 = vshrl.u32 %v963, 16
        %v1017 = vrot.slane %v1015, 4
        %v1018 = vshll.u32 %v963, 16
        %v1020 = vrot.slane %v1018, 5
        %v1021 = vor.u32 %v1017, %v1020
        %v1022 = vrot.slane %v1021, 4
        %v1024 = vshll.u32 %v964, 16
        %v1026 = vrot.slane %v1024, 5
        %v1027 = vsel %vm1013, %v1022, %v1026
        %v1028 = vshrl.u32 %v964, 16
        %v1030 = vrot.slane %v1028, 4
        %v1031 = vor.u32 %v1030, %v1026
        %v1032 = vrot.slane %v1031, 4
        %v1034 = vshll.u32 %v965, 16
        %v1036 = vrot.slane %v1034, 5
        %v1037 = vsel %vm1013, %v1032, %v1036
        %v1039 = vshrl.u32 %v966, 16
        %v1041 = vrot.slane %v1039, 4
        %v1042 = vshll.u32 %v966, 16
        %v1044 = vrot.slane %v1042, 5
        %v1045 = vor.u32 %v1041, %v1044
        %v1046 = vrot.slane %v1045, 4
        %v1048 = vshll.u32 %v967, 16
        %v1050 = vrot.slane %v1048, 5
        %v1051 = vsel %vm1013, %v1046, %v1050
        %v1052 = vshrl.u32 %v967, 16
        %v1054 = vrot.slane %v1052, 4
        %v1055 = vor.u32 %v1054, %v1050
        %v1056 = vrot.slane %v1055, 4
        %v1058 = vshll.u32 %v968, 16
        %v1060 = vrot.slane %v1058, 5
        %v1061 = vsel %vm1013, %v1056, %v1060
        %v1063 = vshrl.u32 %v969, 16
        %v1065 = vrot.slane %v1063, 4
        %v1066 = vshll.u32 %v969, 16
        %v1068 = vrot.slane %v1066, 5
        %v1069 = vor.u32 %v1065, %v1068
        %v1070 = vrot.slane %v1069, 4
        %v1072 = vshll.u32 %v970, 16
        %v1074 = vrot.slane %v1072, 5
        %v1075 = vsel %vm1013, %v1070, %v1074
        %v1076 = vshrl.u32 %v970, 16
        %v1078 = vrot.slane %v1076, 4
        %v1079 = vor.u32 %v1078, %v1074
        %v1080 = vrot.slane %v1079, 4
        %v1082 = vshll.u32 %v971, 16
        %v1084 = vrot.slane %v1082, 5
        %v1085 = vsel %vm1013, %v1080, %v1084
        %v1087 = vshrl.u32 %v972, 16
        %v1089 = vrot.slane %v1087, 4
        %v1090 = vshll.u32 %v972, 16
        %v1092 = vrot.slane %v1090, 5
        %v1093 = vor.u32 %v1089, %v1092
        %v1094 = vrot.slane %v1093, 4
        %v1096 = vshll.u32 %v973, 16
        %v1098 = vrot.slane %v1096, 5
        %v1099 = vsel %vm1013, %v1094, %v1098
        %v1100 = vshrl.u32 %v973, 16
        %v1102 = vrot.slane %v1100, 4
        %v1103 = vor.u32 %v1102, %v1098
        %v1104 = vrot.slane %v1103, 4
        %v1106 = vshll.u32 %v974, 16
        %v1108 = vrot.slane %v1106, 5
        %v1109 = vsel %vm1013, %v1104, %v1108
        %v1111 = vshrl.u32 %v975, 16
        %v1113 = vrot.slane %v1111, 4
        %v1114 = vshll.u32 %v975, 16
        %v1116 = vrot.slane %v1114, 5
        %v1117 = vor.u32 %v1113, %v1116
        %v1118 = vrot.slane %v1117, 4
        %v1120 = vshll.u32 %v976, 16
        %v1122 = vrot.slane %v1120, 5
        %v1123 = vsel %vm1013, %v1118, %v1122
        %v1124 = vshrl.u32 %v976, 16
        %v1126 = vrot.slane %v1124, 4
        %v1127 = vor.u32 %v1126, %v1122
        %v1128 = vrot.slane %v1127, 4
        %v1130 = vshll.u32 %v977, 16
        %v1132 = vrot.slane %v1130, 5
        %v1133 = vsel %vm1013, %v1128, %v1132
        %v1135 = vshrl.u32 %v978, 16
        %v1137 = vrot.slane %v1135, 4
        %v1138 = vshll.u32 %v978, 16
        %v1140 = vrot.slane %v1138, 5
        %v1141 = vor.u32 %v1137, %v1140
        %v1142 = vrot.slane %v1141, 4
        %v1144 = vshll.u32 %v979, 16
        %v1146 = vrot.slane %v1144, 5
        %v1147 = vsel %vm1013, %v1142, %v1146
        %v1148 = vshrl.u32 %v979, 16
        %v1150 = vrot.slane %v1148, 4
        %v1151 = vor.u32 %v1150, %v1146
        %v1152 = vrot.slane %v1151, 4
        %v1154 = vshll.u32 %v980, 16
        %v1156 = vrot.slane %v1154, 5
        %v1157 = vsel %vm1013, %v1152, %v1156
        %v1159 = vshrl.u32 %v981, 16
        %v1161 = vrot.slane %v1159, 4
        %v1162 = vshll.u32 %v981, 16
        %v1164 = vrot.slane %v1162, 5
        %v1165 = vor.u32 %v1161, %v1164
        %v1166 = vrot.slane %v1165, 4
        %v1168 = vshll.u32 %v982, 16
        %v1170 = vrot.slane %v1168, 5
        %v1171 = vsel %vm1013, %v1166, %v1170
        %v1172 = vshrl.u32 %v982, 16
        %v1174 = vrot.slane %v1172, 4
        %v1175 = vor.u32 %v1174, %v1170
        %v1176 = vrot.slane %v1175, 4
        %v1178 = vshll.u32 %v983, 16
        %v1180 = vrot.slane %v1178, 5
        %v1181 = vsel %vm1013, %v1176, %v1180
        %v1183 = vshrl.u32 %v984, 16
        %v1185 = vrot.slane %v1183, 4
        %v1186 = vshll.u32 %v984, 16
        %v1188 = vrot.slane %v1186, 5
        %v1189 = vor.u32 %v1185, %v1188
        %v1190 = vrot.slane %v1189, 4
        %v1192 = vshll.u32 %v985, 16
        %v1194 = vrot.slane %v1192, 5
        %v1195 = vsel %vm1013, %v1190, %v1194
        %v1196 = vshrl.u32 %v985, 16
        %v1198 = vrot.slane %v1196, 4
        %v1199 = vor.u32 %v1198, %v1194
        %v1200 = vrot.slane %v1199, 4
        %v1202 = vshll.u32 %v986, 16
        %v1204 = vrot.slane %v1202, 5
        %v1205 = vsel %vm1013, %v1200, %v1204
        %v1207 = vshrl.u32 %v987, 16
        %v1209 = vrot.slane %v1207, 4
        %v1210 = vshll.u32 %v987, 16
        %v1212 = vrot.slane %v1210, 5
        %v1213 = vor.u32 %v1209, %v1212
        %v1214 = vrot.slane %v1213, 4
        %v1216 = vshll.u32 %v988, 16
        %v1218 = vrot.slane %v1216, 5
        %v1219 = vsel %vm1013, %v1214, %v1218
        %v1220 = vshrl.u32 %v988, 16
        %v1222 = vrot.slane %v1220, 4
        %v1223 = vor.u32 %v1222, %v1218
        %v1224 = vrot.slane %v1223, 4
        %v1226 = vshll.u32 %v989, 16
        %v1228 = vrot.slane %v1226, 5
        %v1229 = vsel %vm1013, %v1224, %v1228
        %v1231 = vshrl.u32 %v990, 16
        %v1233 = vrot.slane %v1231, 4
        %v1234 = vshll.u32 %v990, 16
        %v1236 = vrot.slane %v1234, 5
        %v1237 = vor.u32 %v1233, %v1236
        %v1238 = vrot.slane %v1237, 4
        %v1240 = vshll.u32 %v991, 16
        %v1242 = vrot.slane %v1240, 5
        %v1243 = vsel %vm1013, %v1238, %v1242
        %v1244 = vshrl.u32 %v991, 16
        %v1246 = vrot.slane %v1244, 4
        %v1247 = vor.u32 %v1246, %v1242
        %v1248 = vrot.slane %v1247, 4
        %v1250 = vshll.u32 %v992, 16
        %v1252 = vrot.slane %v1250, 5
        %v1253 = vsel %vm1013, %v1248, %v1252
        %v1255 = vshrl.u32 %v993, 16
        %v1257 = vrot.slane %v1255, 4
        %v1258 = vshll.u32 %v993, 16
        %v1260 = vrot.slane %v1258, 5
        %v1261 = vor.u32 %v1257, %v1260
        %v1262 = vrot.slane %v1261, 4
        %v1264 = vshll.u32 %v994, 16
        %v1266 = vrot.slane %v1264, 5
        %v1267 = vsel %vm1013, %v1262, %v1266
        %v1268 = vshrl.u32 %v994, 16
        %v1270 = vrot.slane %v1268, 4
        %v1271 = vor.u32 %v1270, %v1266
        %v1272 = vrot.slane %v1271, 4
        %v1274 = vshll.u32 %v995, 16
        %v1276 = vrot.slane %v1274, 5
        %v1277 = vsel %vm1013, %v1272, %v1276
        %v1279 = vshrl.u32 %v996, 16
        %v1281 = vrot.slane %v1279, 4
        %v1282 = vshll.u32 %v996, 16
        %v1284 = vrot.slane %v1282, 5
        %v1285 = vor.u32 %v1281, %v1284
        %v1286 = vrot.slane %v1285, 4
        %v1288 = vshll.u32 %v997, 16
        %v1290 = vrot.slane %v1288, 5
        %v1291 = vsel %vm1013, %v1286, %v1290
        %v1292 = vshrl.u32 %v997, 16
        %v1294 = vrot.slane %v1292, 4
        %v1295 = vor.u32 %v1294, %v1290
        %v1296 = vrot.slane %v1295, 4
        %v1298 = vshll.u32 %v998, 16
        %v1300 = vrot.slane %v1298, 5
        %v1301 = vsel %vm1013, %v1296, %v1300
        %v1303 = vshrl.u32 %v999, 16
        %v1305 = vrot.slane %v1303, 4
        %v1306 = vshll.u32 %v999, 16
        %v1308 = vrot.slane %v1306, 5
        %v1309 = vor.u32 %v1305, %v1308
        %v1310 = vrot.slane %v1309, 4
        %v1312 = vshll.u32 %v1000, 16
        %v1314 = vrot.slane %v1312, 5
        %v1315 = vsel %vm1013, %v1310, %v1314
        %v1316 = vshrl.u32 %v1000, 16
        %v1318 = vrot.slane %v1316, 4
        %v1319 = vor.u32 %v1318, %v1314
        %v1320 = vrot.slane %v1319, 4
        %v1322 = vshll.u32 %v1001, 16
        %v1324 = vrot.slane %v1322, 5
        %v1325 = vsel %vm1013, %v1320, %v1324
        %v1327 = vshrl.u32 %v1002, 16
        %v1329 = vrot.slane %v1327, 4
        %v1330 = vshll.u32 %v1002, 16
        %v1332 = vrot.slane %v1330, 5
        %v1333 = vor.u32 %v1329, %v1332
        %v1334 = vrot.slane %v1333, 4
        %v1336 = vshll.u32 %v1003, 16
        %v1338 = vrot.slane %v1336, 5
        %v1339 = vsel %vm1013, %v1334, %v1338
        %v1340 = vshrl.u32 %v1003, 16
        %v1342 = vrot.slane %v1340, 4
        %v1343 = vor.u32 %v1342, %v1338
        %v1344 = vrot.slane %v1343, 4
        %v1346 = vshll.u32 %v1004, 16
        %v1348 = vrot.slane %v1346, 5
        %v1349 = vsel %vm1013, %v1344, %v1348
        %v1351 = vshrl.u32 %v1005, 16
        %v1353 = vrot.slane %v1351, 4
        %v1354 = vshll.u32 %v1005, 16
        %v1356 = vrot.slane %v1354, 5
        %v1357 = vor.u32 %v1353, %v1356
        %v1358 = vrot.slane %v1357, 4
        %v1360 = vshll.u32 %v1006, 16
        %v1362 = vrot.slane %v1360, 5
        %v1363 = vsel %vm1013, %v1358, %v1362
        %v1364 = vshrl.u32 %v1006, 16
        %v1366 = vrot.slane %v1364, 4
        %v1367 = vor.u32 %v1366, %v1362
        %v1368 = vrot.slane %v1367, 4
        %v1370 = vshll.u32 %v1007, 16
        %v1372 = vrot.slane %v1370, 5
        %v1373 = vsel %vm1013, %v1368, %v1372
        %v1375 = vshrl.u32 %v1008, 16
        %v1377 = vrot.slane %v1375, 4
        %v1378 = vshll.u32 %v1008, 16
        %v1380 = vrot.slane %v1378, 5
        %v1381 = vor.u32 %v1377, %v1380
        %v1382 = vrot.slane %v1381, 4
        %v1384 = vshll.u32 %v1009, 16
        %v1386 = vrot.slane %v1384, 5
        %v1387 = vsel %vm1013, %v1382, %v1386
        %v1388 = vshrl.u32 %v1009, 16
        %v1390 = vrot.slane %v1388, 4
        %v1391 = vor.u32 %v1390, %v1386
        %v1392 = vrot.slane %v1391, 4
        %v1394 = vshll.u32 %v1010, 16
        %v1396 = vrot.slane %v1394, 5
        %v1397 = vsel %vm1013, %v1392, %v1396
        %1430 = vst [vmem:[#allocation3 + $0x4] sm:$0xf] %v1027
        %1431 = vst [vmem:[#allocation3 + $0x28] sm:$0xf] %v1037
        %1432 = vst [vmem:[#allocation3 + $0x4c] sm:$0xf] %v1051
        %1433 = vst [vmem:[#allocation3 + $0x70] sm:$0xf] %v1061
        %1434 = vst [vmem:[#allocation3 + $0x94] sm:$0xf] %v1075
        %1435 = vst [vmem:[#allocation3 + $0xb8] sm:$0xf] %v1085
        %1436 = vst [vmem:[#allocation3 + $0xdc] sm:$0xf] %v1099
        %1437 = vst [vmem:[#allocation3 + $0x100] sm:$0xf] %v1109
        %1438 = vst [vmem:[#allocation3 + $0x124] sm:$0xf] %v1123
        %1439 = vst [vmem:[#allocation3 + $0x148] sm:$0xf] %v1133
        %1440 = vst [vmem:[#allocation3 + $0x16c] sm:$0xf] %v1147
        %1441 = vst [vmem:[#allocation3 + $0x190] sm:$0xf] %v1157
        %1442 = vst [vmem:[#allocation3 + $0x1b4] sm:$0xf] %v1171
        %1443 = vst [vmem:[#allocation3 + $0x1d8] sm:$0xf] %v1181
        %1444 = vst [vmem:[#allocation3 + $0x1fc] sm:$0xf] %v1195
        %1445 = vst [vmem:[#allocation3 + $0x220] sm:$0xf] %v1205
        %1446 = vst [vmem:[#allocation3 + $0x244] sm:$0xf] %v1219
        %1447 = vst [vmem:[#allocation3 + $0x268] sm:$0xf] %v1229
        %1448 = vst [vmem:[#allocation3 + $0x28c] sm:$0xf] %v1243
        %1449 = vst [vmem:[#allocation3 + $0x2b0] sm:$0xf] %v1253
        %1450 = vst [vmem:[#allocation3 + $0x2d4] sm:$0xf] %v1267
        %1451 = vst [vmem:[#allocation3 + $0x2f8] sm:$0xf] %v1277
        %1452 = vst [vmem:[#allocation3 + $0x31c] sm:$0xf] %v1291
        %1453 = vst [vmem:[#allocation3 + $0x340] sm:$0xf] %v1301
        %1454 = vst [vmem:[#allocation3 + $0x364] sm:$0xf] %v1315
        %1455 = vst [vmem:[#allocation3 + $0x388] sm:$0xf] %v1325
        %1456 = vst [vmem:[#allocation3 + $0x3ac] sm:$0xf] %v1339
        %1457 = vst [vmem:[#allocation3 + $0x3d0] sm:$0xf] %v1349
        %1458 = vst [vmem:[#allocation3 + $0x3f4] sm:$0xf] %v1363
        %1459 = vst [vmem:[#allocation3 + $0x418] sm:$0xf] %v1373
        %1460 = vst [vmem:[#allocation3 + $0x43c] sm:$0xf] %v1387
        %1461 = vst [vmem:[#allocation3 + $0x460] sm:$0xf] %v1397
        %v1462 = vld [vmem:[#allocation2] sm:$0xe]
        %v1463 = vld [vmem:[#allocation2 + $0x4] sm:$0xf]
        %v1464 = vld [vmem:[#allocation2 + $0x8] sm:$0x1]
        %v1465 = vld [vmem:[#allocation2 + $0xc] sm:$0xe]
        %v1466 = vld [vmem:[#allocation2 + $0x10] sm:$0xf]
        %v1467 = vld [vmem:[#allocation2 + $0x14] sm:$0x1]
        %v1468 = vld [vmem:[#allocation2 + $0x18] sm:$0xe]
        %v1469 = vld [vmem:[#allocation2 + $0x1c] sm:$0xf]
        %v1470 = vld [vmem:[#allocation2 + $0x20] sm:$0x1]
        %v1471 = vld [vmem:[#allocation2 + $0x24] sm:$0xe]
        %v1472 = vld [vmem:[#allocation2 + $0x28] sm:$0xf]
        %v1473 = vld [vmem:[#allocation2 + $0x2c] sm:$0x1]
        %v1474 = vld [vmem:[#allocation2 + $0x30] sm:$0xe]
        %v1475 = vld [vmem:[#allocation2 + $0x34] sm:$0xf]
        %v1476 = vld [vmem:[#allocation2 + $0x38] sm:$0x1]
        %v1477 = vld [vmem:[#allocation2 + $0x3c] sm:$0xe]
        %v1478 = vld [vmem:[#allocation2 + $0x40] sm:$0xf]
        %v1479 = vld [vmem:[#allocation2 + $0x44] sm:$0x1]
        %v1480 = vld [vmem:[#allocation2 + $0x48] sm:$0xe]
        %v1481 = vld [vmem:[#allocation2 + $0x4c] sm:$0xf]
        %v1482 = vld [vmem:[#allocation2 + $0x50] sm:$0x1]
        %v1483 = vld [vmem:[#allocation2 + $0x54] sm:$0xe]
        %v1484 = vld [vmem:[#allocation2 + $0x58] sm:$0xf]
        %v1485 = vld [vmem:[#allocation2 + $0x5c] sm:$0x1]
        %v1486 = vld [vmem:[#allocation2 + $0x60] sm:$0xe]
        %v1487 = vld [vmem:[#allocation2 + $0x64] sm:$0xf]
        %v1488 = vld [vmem:[#allocation2 + $0x68] sm:$0x1]
        %v1489 = vld [vmem:[#allocation2 + $0x6c] sm:$0xe]
        %v1490 = vld [vmem:[#allocation2 + $0x70] sm:$0xf]
        %v1491 = vld [vmem:[#allocation2 + $0x74] sm:$0x1]
        %v1492 = vld [vmem:[#allocation2 + $0x78] sm:$0xe]
        %v1493 = vld [vmem:[#allocation2 + $0x7c] sm:$0xf]
        %v1494 = vld [vmem:[#allocation2 + $0x80] sm:$0x1]
        %v1495 = vld [vmem:[#allocation2 + $0x84] sm:$0xe]
        %v1496 = vld [vmem:[#allocation2 + $0x88] sm:$0xf]
        %v1497 = vld [vmem:[#allocation2 + $0x8c] sm:$0x1]
        %v1498 = vld [vmem:[#allocation2 + $0x90] sm:$0xe]
        %v1499 = vld [vmem:[#allocation2 + $0x94] sm:$0xf]
        %v1500 = vld [vmem:[#allocation2 + $0x98] sm:$0x1]
        %v1501 = vld [vmem:[#allocation2 + $0x9c] sm:$0xe]
        %v1502 = vld [vmem:[#allocation2 + $0xa0] sm:$0xf]
        %v1503 = vld [vmem:[#allocation2 + $0xa4] sm:$0x1]
        %v1504 = vld [vmem:[#allocation2 + $0xa8] sm:$0xe]
        %v1505 = vld [vmem:[#allocation2 + $0xac] sm:$0xf]
        %v1506 = vld [vmem:[#allocation2 + $0xb0] sm:$0x1]
        %v1507 = vld [vmem:[#allocation2 + $0xb4] sm:$0xe]
        %v1508 = vld [vmem:[#allocation2 + $0xb8] sm:$0xf]
        %v1509 = vld [vmem:[#allocation2 + $0xbc] sm:$0x1]
        %vm1558 = vcmask 1042432
        %vm1559 = vcmask 1046532
        %vm1560 = vmor %vm1558, %vm1559
        %v1561 = vrot.slane %v1462, 5
        %v1562 = vrot.slane %v1561, 4
        %v1563 = vrot.slane %v1463, 5
        %v1564 = vsel %vm1560, %v1562, %v1563
        %v1565 = vrot.slane %v1563, 4
        %v1566 = vrot.slane %v1464, 5
        %v1567 = vsel %vm1560, %v1565, %v1566
        %v1568 = vrot.slane %v1465, 5
        %v1569 = vrot.slane %v1568, 4
        %v1570 = vrot.slane %v1466, 5
        %v1571 = vsel %vm1560, %v1569, %v1570
        %v1572 = vrot.slane %v1570, 4
        %v1573 = vrot.slane %v1467, 5
        %v1574 = vsel %vm1560, %v1572, %v1573
        %v1575 = vrot.slane %v1468, 5
        %v1576 = vrot.slane %v1575, 4
        %v1577 = vrot.slane %v1469, 5
        %v1578 = vsel %vm1560, %v1576, %v1577
        %v1579 = vrot.slane %v1577, 4
        %v1580 = vrot.slane %v1470, 5
        %v1581 = vsel %vm1560, %v1579, %v1580
        %v1582 = vrot.slane %v1471, 5
        %v1583 = vrot.slane %v1582, 4
        %v1584 = vrot.slane %v1472, 5
        %v1585 = vsel %vm1560, %v1583, %v1584
        %v1586 = vrot.slane %v1584, 4
        %v1587 = vrot.slane %v1473, 5
        %v1588 = vsel %vm1560, %v1586, %v1587
        %v1589 = vrot.slane %v1474, 5
        %v1590 = vrot.slane %v1589, 4
        %v1591 = vrot.slane %v1475, 5
        %v1592 = vsel %vm1560, %v1590, %v1591
        %v1593 = vrot.slane %v1591, 4
        %v1594 = vrot.slane %v1476, 5
        %v1595 = vsel %vm1560, %v1593, %v1594
        %v1596 = vrot.slane %v1477, 5
        %v1597 = vrot.slane %v1596, 4
        %v1598 = vrot.slane %v1478, 5
        %v1599 = vsel %vm1560, %v1597, %v1598
        %v1600 = vrot.slane %v1598, 4
        %v1601 = vrot.slane %v1479, 5
        %v1602 = vsel %vm1560, %v1600, %v1601
        %v1603 = vrot.slane %v1480, 5
        %v1604 = vrot.slane %v1603, 4
        %v1605 = vrot.slane %v1481, 5
        %v1606 = vsel %vm1560, %v1604, %v1605
        %v1607 = vrot.slane %v1605, 4
        %v1608 = vrot.slane %v1482, 5
        %v1609 = vsel %vm1560, %v1607, %v1608
        %v1610 = vrot.slane %v1483, 5
        %v1611 = vrot.slane %v1610, 4
        %v1612 = vrot.slane %v1484, 5
        %v1613 = vsel %vm1560, %v1611, %v1612
        %v1614 = vrot.slane %v1612, 4
        %v1615 = vrot.slane %v1485, 5
        %v1616 = vsel %vm1560, %v1614, %v1615
        %v1617 = vrot.slane %v1486, 5
        %v1618 = vrot.slane %v1617, 4
        %v1619 = vrot.slane %v1487, 5
        %v1620 = vsel %vm1560, %v1618, %v1619
        %v1621 = vrot.slane %v1619, 4
        %v1622 = vrot.slane %v1488, 5
        %v1623 = vsel %vm1560, %v1621, %v1622
        %v1624 = vrot.slane %v1489, 5
        %v1625 = vrot.slane %v1624, 4
        %v1626 = vrot.slane %v1490, 5
        %v1627 = vsel %vm1560, %v1625, %v1626
        %v1628 = vrot.slane %v1626, 4
        %v1629 = vrot.slane %v1491, 5
        %v1630 = vsel %vm1560, %v1628, %v1629
        %v1631 = vrot.slane %v1492, 5
        %v1632 = vrot.slane %v1631, 4
        %v1633 = vrot.slane %v1493, 5
        %v1634 = vsel %vm1560, %v1632, %v1633
        %v1635 = vrot.slane %v1633, 4
        %v1636 = vrot.slane %v1494, 5
        %v1637 = vsel %vm1560, %v1635, %v1636
        %v1638 = vrot.slane %v1495, 5
        %v1639 = vrot.slane %v1638, 4
        %v1640 = vrot.slane %v1496, 5
        %v1641 = vsel %vm1560, %v1639, %v1640
        %v1642 = vrot.slane %v1640, 4
        %v1643 = vrot.slane %v1497, 5
        %v1644 = vsel %vm1560, %v1642, %v1643
        %v1645 = vrot.slane %v1498, 5
        %v1646 = vrot.slane %v1645, 4
        %v1647 = vrot.slane %v1499, 5
        %v1648 = vsel %vm1560, %v1646, %v1647
        %v1649 = vrot.slane %v1647, 4
        %v1650 = vrot.slane %v1500, 5
        %v1651 = vsel %vm1560, %v1649, %v1650
        %v1652 = vrot.slane %v1501, 5
        %v1653 = vrot.slane %v1652, 4
        %v1654 = vrot.slane %v1502, 5
        %v1655 = vsel %vm1560, %v1653, %v1654
        %v1656 = vrot.slane %v1654, 4
        %v1657 = vrot.slane %v1503, 5
        %v1658 = vsel %vm1560, %v1656, %v1657
        %v1659 = vrot.slane %v1504, 5
        %v1660 = vrot.slane %v1659, 4
        %v1661 = vrot.slane %v1505, 5
        %v1662 = vsel %vm1560, %v1660, %v1661
        %v1663 = vrot.slane %v1661, 4
        %v1664 = vrot.slane %v1506, 5
        %v1665 = vsel %vm1560, %v1663, %v1664
        %v1666 = vrot.slane %v1507, 5
        %v1667 = vrot.slane %v1666, 4
        %v1668 = vrot.slane %v1508, 5
        %v1669 = vsel %vm1560, %v1667, %v1668
        %v1670 = vrot.slane %v1668, 4
        %v1671 = vrot.slane %v1509, 5
        %v1672 = vsel %vm1560, %v1670, %v1671
        %1705 = vst [vmem:[#allocation3 + $0x8] sm:$0xf] %v1564
        %1706 = vst [vmem:[#allocation3 + $0x2c] sm:$0xf] %v1567
        %1707 = vst [vmem:[#allocation3 + $0x50] sm:$0xf] %v1571
        %1708 = vst [vmem:[#allocation3 + $0x74] sm:$0xf] %v1574
        %1709 = vst [vmem:[#allocation3 + $0x98] sm:$0xf] %v1578
        %1710 = vst [vmem:[#allocation3 + $0xbc] sm:$0xf] %v1581
        %1711 = vst [vmem:[#allocation3 + $0xe0] sm:$0xf] %v1585
        %1712 = vst [vmem:[#allocation3 + $0x104] sm:$0xf] %v1588
        %1713 = vst [vmem:[#allocation3 + $0x128] sm:$0xf] %v1592
        %1714 = vst [vmem:[#allocation3 + $0x14c] sm:$0xf] %v1595
        %1715 = vst [vmem:[#allocation3 + $0x170] sm:$0xf] %v1599
        %1716 = vst [vmem:[#allocation3 + $0x194] sm:$0xf] %v1602
        %1717 = vst [vmem:[#allocation3 + $0x1b8] sm:$0xf] %v1606
        %1718 = vst [vmem:[#allocation3 + $0x1dc] sm:$0xf] %v1609
        %1719 = vst [vmem:[#allocation3 + $0x200] sm:$0xf] %v1613
        %1720 = vst [vmem:[#allocation3 + $0x224] sm:$0xf] %v1616
        %1721 = vst [vmem:[#allocation3 + $0x248] sm:$0xf] %v1620
        %1722 = vst [vmem:[#allocation3 + $0x26c] sm:$0xf] %v1623
        %1723 = vst [vmem:[#allocation3 + $0x290] sm:$0xf] %v1627
        %1724 = vst [vmem:[#allocation3 + $0x2b4] sm:$0xf] %v1630
        %1725 = vst [vmem:[#allocation3 + $0x2d8] sm:$0xf] %v1634
        %1726 = vst [vmem:[#allocation3 + $0x2fc] sm:$0xf] %v1637
        %1727 = vst [vmem:[#allocation3 + $0x320] sm:$0xf] %v1641
        %1728 = vst [vmem:[#allocation3 + $0x344] sm:$0xf] %v1644
        %1729 = vst [vmem:[#allocation3 + $0x368] sm:$0xf] %v1648
        %1730 = vst [vmem:[#allocation3 + $0x38c] sm:$0xf] %v1651
        %1731 = vst [vmem:[#allocation3 + $0x3b0] sm:$0xf] %v1655
        %1732 = vst [vmem:[#allocation3 + $0x3d4] sm:$0xf] %v1658
        %1733 = vst [vmem:[#allocation3 + $0x3f8] sm:$0xf] %v1662
        %1734 = vst [vmem:[#allocation3 + $0x41c] sm:$0xf] %v1665
        %1735 = vst [vmem:[#allocation3 + $0x440] sm:$0xf] %v1669
        %1736 = vst [vmem:[#allocation3 + $0x464] sm:$0xf] %v1672
        %v1737 = vld [vmem:[%s784] sm:$0xf]
        %v1738 = vld [vmem:[%s784 + $0x4] sm:$0xf]
        %v1739 = vld [vmem:[%s784 + $0xc] sm:$0xf]
        %v1740 = vld [vmem:[%s784 + $0x10] sm:$0xf]
        %v1741 = vld [vmem:[%s784 + $0x18] sm:$0xf]
        %v1742 = vld [vmem:[%s784 + $0x1c] sm:$0xf]
        %v1743 = vld [vmem:[%s784 + $0x24] sm:$0xf]
        %v1744 = vld [vmem:[%s784 + $0x28] sm:$0xf]
        %v1745 = vld [vmem:[%s784 + $0x30] sm:$0xf]
        %v1746 = vld [vmem:[%s784 + $0x34] sm:$0xf]
        %v1747 = vld [vmem:[%s784 + $0x3c] sm:$0xf]
        %v1748 = vld [vmem:[%s784 + $0x40] sm:$0xf]
        %v1749 = vld [vmem:[%s784 + $0x48] sm:$0xf]
        %v1750 = vld [vmem:[%s784 + $0x4c] sm:$0xf]
        %v1751 = vld [vmem:[%s784 + $0x54] sm:$0xf]
        %v1752 = vld [vmem:[%s784 + $0x58] sm:$0xf]
        %v1753 = vld [vmem:[%s784 + $0x60] sm:$0xf]
        %v1754 = vld [vmem:[%s784 + $0x64] sm:$0xf]
        %v1755 = vld [vmem:[%s784 + $0x6c] sm:$0xf]
        %v1756 = vld [vmem:[%s784 + $0x70] sm:$0xf]
        %v1757 = vld [vmem:[%s784 + $0x78] sm:$0xf]
        %v1758 = vld [vmem:[%s784 + $0x7c] sm:$0xf]
        %v1759 = vld [vmem:[%s784 + $0x84] sm:$0xf]
        %v1760 = vld [vmem:[%s784 + $0x88] sm:$0xf]
        %v1761 = vld [vmem:[%s784 + $0x90] sm:$0xf]
        %v1762 = vld [vmem:[%s784 + $0x94] sm:$0xf]
        %v1763 = vld [vmem:[%s784 + $0x9c] sm:$0xf]
        %v1764 = vld [vmem:[%s784 + $0xa0] sm:$0xf]
        %v1765 = vld [vmem:[%s784 + $0xa8] sm:$0xf]
        %v1766 = vld [vmem:[%s784 + $0xac] sm:$0xf]
        %v1767 = vld [vmem:[%s784 + $0xb4] sm:$0xf]
        %v1768 = vld [vmem:[%s784 + $0xb8] sm:$0xf]
        %1769 = vst [vmem:[#allocation3 + $0xc] sm:$0xf] %v1737
        %1770 = vst [vmem:[#allocation3 + $0x30] sm:$0xf] %v1738
        %1771 = vst [vmem:[#allocation3 + $0x54] sm:$0xf] %v1739
        %1772 = vst [vmem:[#allocation3 + $0x78] sm:$0xf] %v1740
        %1773 = vst [vmem:[#allocation3 + $0x9c] sm:$0xf] %v1741
        %1774 = vst [vmem:[#allocation3 + $0xc0] sm:$0xf] %v1742
        %1775 = vst [vmem:[#allocation3 + $0xe4] sm:$0xf] %v1743
        %1776 = vst [vmem:[#allocation3 + $0x108] sm:$0xf] %v1744
        %1777 = vst [vmem:[#allocation3 + $0x12c] sm:$0xf] %v1745
        %1778 = vst [vmem:[#allocation3 + $0x150] sm:$0xf] %v1746
        %1779 = vst [vmem:[#allocation3 + $0x174] sm:$0xf] %v1747
        %1780 = vst [vmem:[#allocation3 + $0x198] sm:$0xf] %v1748
        %1781 = vst [vmem:[#allocation3 + $0x1bc] sm:$0xf] %v1749
        %1782 = vst [vmem:[#allocation3 + $0x1e0] sm:$0xf] %v1750
        %1783 = vst [vmem:[#allocation3 + $0x204] sm:$0xf] %v1751
        %1784 = vst [vmem:[#allocation3 + $0x228] sm:$0xf] %v1752
        %1785 = vst [vmem:[#allocation3 + $0x24c] sm:$0xf] %v1753
        %1786 = vst [vmem:[#allocation3 + $0x270] sm:$0xf] %v1754
        %1787 = vst [vmem:[#allocation3 + $0x294] sm:$0xf] %v1755
        %1788 = vst [vmem:[#allocation3 + $0x2b8] sm:$0xf] %v1756
        %1789 = vst [vmem:[#allocation3 + $0x2dc] sm:$0xf] %v1757
        %1790 = vst [vmem:[#allocation3 + $0x300] sm:$0xf] %v1758
        %1791 = vst [vmem:[#allocation3 + $0x324] sm:$0xf] %v1759
        %1792 = vst [vmem:[#allocation3 + $0x348] sm:$0xf] %v1760
        %1793 = vst [vmem:[#allocation3 + $0x36c] sm:$0xf] %v1761
        %1794 = vst [vmem:[#allocation3 + $0x390] sm:$0xf] %v1762
        %1795 = vst [vmem:[#allocation3 + $0x3b4] sm:$0xf] %v1763
        %1796 = vst [vmem:[#allocation3 + $0x3d8] sm:$0xf] %v1764
        %1797 = vst [vmem:[#allocation3 + $0x3fc] sm:$0xf] %v1765
        %1798 = vst [vmem:[#allocation3 + $0x420] sm:$0xf] %v1766
        %1799 = vst [vmem:[#allocation3 + $0x444] sm:$0xf] %v1767
        %1800 = vst [vmem:[#allocation3 + $0x468] sm:$0xf] %v1768
        %v1801 = vld [vmem:[%s784] sm:$0xf]
        %v1802 = vld [vmem:[%s784 + $0x4] sm:$0xf]
        %v1803 = vld [vmem:[%s784 + $0x8] sm:$0x1]
        %v1804 = vld [vmem:[%s784 + $0xc] sm:$0xf]
        %v1805 = vld [vmem:[%s784 + $0x10] sm:$0xf]
        %v1806 = vld [vmem:[%s784 + $0x14] sm:$0x1]
        %v1807 = vld [vmem:[%s784 + $0x18] sm:$0xf]
        %v1808 = vld [vmem:[%s784 + $0x1c] sm:$0xf]
        %v1809 = vld [vmem:[%s784 + $0x20] sm:$0x1]
        %v1810 = vld [vmem:[%s784 + $0x24] sm:$0xf]
        %v1811 = vld [vmem:[%s784 + $0x28] sm:$0xf]
        %v1812 = vld [vmem:[%s784 + $0x2c] sm:$0x1]
        %v1813 = vld [vmem:[%s784 + $0x30] sm:$0xf]
        %v1814 = vld [vmem:[%s784 + $0x34] sm:$0xf]
        %v1815 = vld [vmem:[%s784 + $0x38] sm:$0x1]
        %v1816 = vld [vmem:[%s784 + $0x3c] sm:$0xf]
        %v1817 = vld [vmem:[%s784 + $0x40] sm:$0xf]
        %v1818 = vld [vmem:[%s784 + $0x44] sm:$0x1]
        %v1819 = vld [vmem:[%s784 + $0x48] sm:$0xf]
        %v1820 = vld [vmem:[%s784 + $0x4c] sm:$0xf]
        %v1821 = vld [vmem:[%s784 + $0x50] sm:$0x1]
        %v1822 = vld [vmem:[%s784 + $0x54] sm:$0xf]
        %v1823 = vld [vmem:[%s784 + $0x58] sm:$0xf]
        %v1824 = vld [vmem:[%s784 + $0x5c] sm:$0x1]
        %v1825 = vld [vmem:[%s784 + $0x60] sm:$0xf]
        %v1826 = vld [vmem:[%s784 + $0x64] sm:$0xf]
        %v1827 = vld [vmem:[%s784 + $0x68] sm:$0x1]
        %v1828 = vld [vmem:[%s784 + $0x6c] sm:$0xf]
        %v1829 = vld [vmem:[%s784 + $0x70] sm:$0xf]
        %v1830 = vld [vmem:[%s784 + $0x74] sm:$0x1]
        %v1831 = vld [vmem:[%s784 + $0x78] sm:$0xf]
        %v1832 = vld [vmem:[%s784 + $0x7c] sm:$0xf]
        %v1833 = vld [vmem:[%s784 + $0x80] sm:$0x1]
        %v1834 = vld [vmem:[%s784 + $0x84] sm:$0xf]
        %v1835 = vld [vmem:[%s784 + $0x88] sm:$0xf]
        %v1836 = vld [vmem:[%s784 + $0x8c] sm:$0x1]
        %v1837 = vld [vmem:[%s784 + $0x90] sm:$0xf]
        %v1838 = vld [vmem:[%s784 + $0x94] sm:$0xf]
        %v1839 = vld [vmem:[%s784 + $0x98] sm:$0x1]
        %v1840 = vld [vmem:[%s784 + $0x9c] sm:$0xf]
        %v1841 = vld [vmem:[%s784 + $0xa0] sm:$0xf]
        %v1842 = vld [vmem:[%s784 + $0xa4] sm:$0x1]
        %v1843 = vld [vmem:[%s784 + $0xa8] sm:$0xf]
        %v1844 = vld [vmem:[%s784 + $0xac] sm:$0xf]
        %v1845 = vld [vmem:[%s784 + $0xb0] sm:$0x1]
        %v1846 = vld [vmem:[%s784 + $0xb4] sm:$0xf]
        %v1847 = vld [vmem:[%s784 + $0xb8] sm:$0xf]
        %v1848 = vld [vmem:[%s784 + $0xbc] sm:$0x1]
        %v1850 = vshrl.u32 %v1801, 16
        %v1852 = vrot.slane %v1850, 4
        %v1853 = vshll.u32 %v1801, 16
        %v1855 = vrot.slane %v1853, 5
        %v1856 = vor.u32 %v1852, %v1855
        %v1857 = vrot.slane %v1856, 4
        %v1859 = vshll.u32 %v1802, 16
        %v1861 = vrot.slane %v1859, 5
        %v1862 = vsel %vm1013, %v1857, %v1861
        %v1863 = vshrl.u32 %v1802, 16
        %v1865 = vrot.slane %v1863, 4
        %v1866 = vor.u32 %v1865, %v1861
        %v1867 = vrot.slane %v1866, 4
        %v1869 = vshll.u32 %v1803, 16
        %v1871 = vrot.slane %v1869, 5
        %v1872 = vsel %vm1013, %v1867, %v1871
        %v1874 = vshrl.u32 %v1804, 16
        %v1876 = vrot.slane %v1874, 4
        %v1877 = vshll.u32 %v1804, 16
        %v1879 = vrot.slane %v1877, 5
        %v1880 = vor.u32 %v1876, %v1879
        %v1881 = vrot.slane %v1880, 4
        %v1883 = vshll.u32 %v1805, 16
        %v1885 = vrot.slane %v1883, 5
        %v1886 = vsel %vm1013, %v1881, %v1885
        %v1887 = vshrl.u32 %v1805, 16
        %v1889 = vrot.slane %v1887, 4
        %v1890 = vor.u32 %v1889, %v1885
        %v1891 = vrot.slane %v1890, 4
        %v1893 = vshll.u32 %v1806, 16
        %v1895 = vrot.slane %v1893, 5
        %v1896 = vsel %vm1013, %v1891, %v1895
        %v1898 = vshrl.u32 %v1807, 16
        %v1900 = vrot.slane %v1898, 4
        %v1901 = vshll.u32 %v1807, 16
        %v1903 = vrot.slane %v1901, 5
        %v1904 = vor.u32 %v1900, %v1903
        %v1905 = vrot.slane %v1904, 4
        %v1907 = vshll.u32 %v1808, 16
        %v1909 = vrot.slane %v1907, 5
        %v1910 = vsel %vm1013, %v1905, %v1909
        %v1911 = vshrl.u32 %v1808, 16
        %v1913 = vrot.slane %v1911, 4
        %v1914 = vor.u32 %v1913, %v1909
        %v1915 = vrot.slane %v1914, 4
        %v1917 = vshll.u32 %v1809, 16
        %v1919 = vrot.slane %v1917, 5
        %v1920 = vsel %vm1013, %v1915, %v1919
        %v1922 = vshrl.u32 %v1810, 16
        %v1924 = vrot.slane %v1922, 4
        %v1925 = vshll.u32 %v1810, 16
        %v1927 = vrot.slane %v1925, 5
        %v1928 = vor.u32 %v1924, %v1927
        %v1929 = vrot.slane %v1928, 4
        %v1931 = vshll.u32 %v1811, 16
        %v1933 = vrot.slane %v1931, 5
        %v1934 = vsel %vm1013, %v1929, %v1933
        %v1935 = vshrl.u32 %v1811, 16
        %v1937 = vrot.slane %v1935, 4
        %v1938 = vor.u32 %v1937, %v1933
        %v1939 = vrot.slane %v1938, 4
        %v1941 = vshll.u32 %v1812, 16
        %v1943 = vrot.slane %v1941, 5
        %v1944 = vsel %vm1013, %v1939, %v1943
        %v1946 = vshrl.u32 %v1813, 16
        %v1948 = vrot.slane %v1946, 4
        %v1949 = vshll.u32 %v1813, 16
        %v1951 = vrot.slane %v1949, 5
        %v1952 = vor.u32 %v1948, %v1951
        %v1953 = vrot.slane %v1952, 4
        %v1955 = vshll.u32 %v1814, 16
        %v1957 = vrot.slane %v1955, 5
        %v1958 = vsel %vm1013, %v1953, %v1957
        %v1959 = vshrl.u32 %v1814, 16
        %v1961 = vrot.slane %v1959, 4
        %v1962 = vor.u32 %v1961, %v1957
        %v1963 = vrot.slane %v1962, 4
        %v1965 = vshll.u32 %v1815, 16
        %v1967 = vrot.slane %v1965, 5
        %v1968 = vsel %vm1013, %v1963, %v1967
        %v1970 = vshrl.u32 %v1816, 16
        %v1972 = vrot.slane %v1970, 4
        %v1973 = vshll.u32 %v1816, 16
        %v1975 = vrot.slane %v1973, 5
        %v1976 = vor.u32 %v1972, %v1975
        %v1977 = vrot.slane %v1976, 4
        %v1979 = vshll.u32 %v1817, 16
        %v1981 = vrot.slane %v1979, 5
        %v1982 = vsel %vm1013, %v1977, %v1981
        %v1983 = vshrl.u32 %v1817, 16
        %v1985 = vrot.slane %v1983, 4
        %v1986 = vor.u32 %v1985, %v1981
        %v1987 = vrot.slane %v1986, 4
        %v1989 = vshll.u32 %v1818, 16
        %v1991 = vrot.slane %v1989, 5
        %v1992 = vsel %vm1013, %v1987, %v1991
        %v1994 = vshrl.u32 %v1819, 16
        %v1996 = vrot.slane %v1994, 4
        %v1997 = vshll.u32 %v1819, 16
        %v1999 = vrot.slane %v1997, 5
        %v2000 = vor.u32 %v1996, %v1999
        %v2001 = vrot.slane %v2000, 4
        %v2003 = vshll.u32 %v1820, 16
        %v2005 = vrot.slane %v2003, 5
        %v2006 = vsel %vm1013, %v2001, %v2005
        %v2007 = vshrl.u32 %v1820, 16
        %v2009 = vrot.slane %v2007, 4
        %v2010 = vor.u32 %v2009, %v2005
        %v2011 = vrot.slane %v2010, 4
        %v2013 = vshll.u32 %v1821, 16
        %v2015 = vrot.slane %v2013, 5
        %v2016 = vsel %vm1013, %v2011, %v2015
        %v2018 = vshrl.u32 %v1822, 16
        %v2020 = vrot.slane %v2018, 4
        %v2021 = vshll.u32 %v1822, 16
        %v2023 = vrot.slane %v2021, 5
        %v2024 = vor.u32 %v2020, %v2023
        %v2025 = vrot.slane %v2024, 4
        %v2027 = vshll.u32 %v1823, 16
        %v2029 = vrot.slane %v2027, 5
        %v2030 = vsel %vm1013, %v2025, %v2029
        %v2031 = vshrl.u32 %v1823, 16
        %v2033 = vrot.slane %v2031, 4
        %v2034 = vor.u32 %v2033, %v2029
        %v2035 = vrot.slane %v2034, 4
        %v2037 = vshll.u32 %v1824, 16
        %v2039 = vrot.slane %v2037, 5
        %v2040 = vsel %vm1013, %v2035, %v2039
        %v2042 = vshrl.u32 %v1825, 16
        %v2044 = vrot.slane %v2042, 4
        %v2045 = vshll.u32 %v1825, 16
        %v2047 = vrot.slane %v2045, 5
        %v2048 = vor.u32 %v2044, %v2047
        %v2049 = vrot.slane %v2048, 4
        %v2051 = vshll.u32 %v1826, 16
        %v2053 = vrot.slane %v2051, 5
        %v2054 = vsel %vm1013, %v2049, %v2053
        %v2055 = vshrl.u32 %v1826, 16
        %v2057 = vrot.slane %v2055, 4
        %v2058 = vor.u32 %v2057, %v2053
        %v2059 = vrot.slane %v2058, 4
        %v2061 = vshll.u32 %v1827, 16
        %v2063 = vrot.slane %v2061, 5
        %v2064 = vsel %vm1013, %v2059, %v2063
        %v2066 = vshrl.u32 %v1828, 16
        %v2068 = vrot.slane %v2066, 4
        %v2069 = vshll.u32 %v1828, 16
        %v2071 = vrot.slane %v2069, 5
        %v2072 = vor.u32 %v2068, %v2071
        %v2073 = vrot.slane %v2072, 4
        %v2075 = vshll.u32 %v1829, 16
        %v2077 = vrot.slane %v2075, 5
        %v2078 = vsel %vm1013, %v2073, %v2077
        %v2079 = vshrl.u32 %v1829, 16
        %v2081 = vrot.slane %v2079, 4
        %v2082 = vor.u32 %v2081, %v2077
        %v2083 = vrot.slane %v2082, 4
        %v2085 = vshll.u32 %v1830, 16
        %v2087 = vrot.slane %v2085, 5
        %v2088 = vsel %vm1013, %v2083, %v2087
        %v2090 = vshrl.u32 %v1831, 16
        %v2092 = vrot.slane %v2090, 4
        %v2093 = vshll.u32 %v1831, 16
        %v2095 = vrot.slane %v2093, 5
        %v2096 = vor.u32 %v2092, %v2095
        %v2097 = vrot.slane %v2096, 4
        %v2099 = vshll.u32 %v1832, 16
        %v2101 = vrot.slane %v2099, 5
        %v2102 = vsel %vm1013, %v2097, %v2101
        %v2103 = vshrl.u32 %v1832, 16
        %v2105 = vrot.slane %v2103, 4
        %v2106 = vor.u32 %v2105, %v2101
        %v2107 = vrot.slane %v2106, 4
        %v2109 = vshll.u32 %v1833, 16
        %v2111 = vrot.slane %v2109, 5
        %v2112 = vsel %vm1013, %v2107, %v2111
        %v2114 = vshrl.u32 %v1834, 16
        %v2116 = vrot.slane %v2114, 4
        %v2117 = vshll.u32 %v1834, 16
        %v2119 = vrot.slane %v2117, 5
        %v2120 = vor.u32 %v2116, %v2119
        %v2121 = vrot.slane %v2120, 4
        %v2123 = vshll.u32 %v1835, 16
        %v2125 = vrot.slane %v2123, 5
        %v2126 = vsel %vm1013, %v2121, %v2125
        %v2127 = vshrl.u32 %v1835, 16
        %v2129 = vrot.slane %v2127, 4
        %v2130 = vor.u32 %v2129, %v2125
        %v2131 = vrot.slane %v2130, 4
        %v2133 = vshll.u32 %v1836, 16
        %v2135 = vrot.slane %v2133, 5
        %v2136 = vsel %vm1013, %v2131, %v2135
        %v2138 = vshrl.u32 %v1837, 16
        %v2140 = vrot.slane %v2138, 4
        %v2141 = vshll.u32 %v1837, 16
        %v2143 = vrot.slane %v2141, 5
        %v2144 = vor.u32 %v2140, %v2143
        %v2145 = vrot.slane %v2144, 4
        %v2147 = vshll.u32 %v1838, 16
        %v2149 = vrot.slane %v2147, 5
        %v2150 = vsel %vm1013, %v2145, %v2149
        %v2151 = vshrl.u32 %v1838, 16
        %v2153 = vrot.slane %v2151, 4
        %v2154 = vor.u32 %v2153, %v2149
        %v2155 = vrot.slane %v2154, 4
        %v2157 = vshll.u32 %v1839, 16
        %v2159 = vrot.slane %v2157, 5
        %v2160 = vsel %vm1013, %v2155, %v2159
        %v2162 = vshrl.u32 %v1840, 16
        %v2164 = vrot.slane %v2162, 4
        %v2165 = vshll.u32 %v1840, 16
        %v2167 = vrot.slane %v2165, 5
        %v2168 = vor.u32 %v2164, %v2167
        %v2169 = vrot.slane %v2168, 4
        %v2171 = vshll.u32 %v1841, 16
        %v2173 = vrot.slane %v2171, 5
        %v2174 = vsel %vm1013, %v2169, %v2173
        %v2175 = vshrl.u32 %v1841, 16
        %v2177 = vrot.slane %v2175, 4
        %v2178 = vor.u32 %v2177, %v2173
        %v2179 = vrot.slane %v2178, 4
        %v2181 = vshll.u32 %v1842, 16
        %v2183 = vrot.slane %v2181, 5
        %v2184 = vsel %vm1013, %v2179, %v2183
        %v2186 = vshrl.u32 %v1843, 16
        %v2188 = vrot.slane %v2186, 4
        %v2189 = vshll.u32 %v1843, 16
        %v2191 = vrot.slane %v2189, 5
        %v2192 = vor.u32 %v2188, %v2191
        %v2193 = vrot.slane %v2192, 4
        %v2195 = vshll.u32 %v1844, 16
        %v2197 = vrot.slane %v2195, 5
        %v2198 = vsel %vm1013, %v2193, %v2197
        %v2199 = vshrl.u32 %v1844, 16
        %v2201 = vrot.slane %v2199, 4
        %v2202 = vor.u32 %v2201, %v2197
        %v2203 = vrot.slane %v2202, 4
        %v2205 = vshll.u32 %v1845, 16
        %v2207 = vrot.slane %v2205, 5
        %v2208 = vsel %vm1013, %v2203, %v2207
        %v2210 = vshrl.u32 %v1846, 16
        %v2212 = vrot.slane %v2210, 4
        %v2213 = vshll.u32 %v1846, 16
        %v2215 = vrot.slane %v2213, 5
        %v2216 = vor.u32 %v2212, %v2215
        %v2217 = vrot.slane %v2216, 4
        %v2219 = vshll.u32 %v1847, 16
        %v2221 = vrot.slane %v2219, 5
        %v2222 = vsel %vm1013, %v2217, %v2221
        %v2223 = vshrl.u32 %v1847, 16
        %v2225 = vrot.slane %v2223, 4
        %v2226 = vor.u32 %v2225, %v2221
        %v2227 = vrot.slane %v2226, 4
        %v2229 = vshll.u32 %v1848, 16
        %v2231 = vrot.slane %v2229, 5
        %v2232 = vsel %vm1013, %v2227, %v2231
        %2265 = vst [vmem:[#allocation3 + $0x10] sm:$0xf] %v1862
        %2266 = vst [vmem:[#allocation3 + $0x34] sm:$0xf] %v1872
        %2267 = vst [vmem:[#allocation3 + $0x58] sm:$0xf] %v1886
        %2268 = vst [vmem:[#allocation3 + $0x7c] sm:$0xf] %v1896
        %2269 = vst [vmem:[#allocation3 + $0xa0] sm:$0xf] %v1910
        %2270 = vst [vmem:[#allocation3 + $0xc4] sm:$0xf] %v1920
        %2271 = vst [vmem:[#allocation3 + $0xe8] sm:$0xf] %v1934
        %2272 = vst [vmem:[#allocation3 + $0x10c] sm:$0xf] %v1944
        %2273 = vst [vmem:[#allocation3 + $0x130] sm:$0xf] %v1958
        %2274 = vst [vmem:[#allocation3 + $0x154] sm:$0xf] %v1968
        %2275 = vst [vmem:[#allocation3 + $0x178] sm:$0xf] %v1982
        %2276 = vst [vmem:[#allocation3 + $0x19c] sm:$0xf] %v1992
        %2277 = vst [vmem:[#allocation3 + $0x1c0] sm:$0xf] %v2006
        %2278 = vst [vmem:[#allocation3 + $0x1e4] sm:$0xf] %v2016
        %2279 = vst [vmem:[#allocation3 + $0x208] sm:$0xf] %v2030
        %2280 = vst [vmem:[#allocation3 + $0x22c] sm:$0xf] %v2040
        %2281 = vst [vmem:[#allocation3 + $0x250] sm:$0xf] %v2054
        %2282 = vst [vmem:[#allocation3 + $0x274] sm:$0xf] %v2064
        %2283 = vst [vmem:[#allocation3 + $0x298] sm:$0xf] %v2078
        %2284 = vst [vmem:[#allocation3 + $0x2bc] sm:$0xf] %v2088
        %2285 = vst [vmem:[#allocation3 + $0x2e0] sm:$0xf] %v2102
        %2286 = vst [vmem:[#allocation3 + $0x304] sm:$0xf] %v2112
        %2287 = vst [vmem:[#allocation3 + $0x328] sm:$0xf] %v2126
        %2288 = vst [vmem:[#allocation3 + $0x34c] sm:$0xf] %v2136
        %2289 = vst [vmem:[#allocation3 + $0x370] sm:$0xf] %v2150
        %2290 = vst [vmem:[#allocation3 + $0x394] sm:$0xf] %v2160
        %2291 = vst [vmem:[#allocation3 + $0x3b8] sm:$0xf] %v2174
        %2292 = vst [vmem:[#allocation3 + $0x3dc] sm:$0xf] %v2184
        %2293 = vst [vmem:[#allocation3 + $0x400] sm:$0xf] %v2198
        %2294 = vst [vmem:[#allocation3 + $0x424] sm:$0xf] %v2208
        %2295 = vst [vmem:[#allocation3 + $0x448] sm:$0xf] %v2222
        %2296 = vst [vmem:[#allocation3 + $0x46c] sm:$0xf] %v2232
        %v2297 = vld [vmem:[%s784] sm:$0xe]
        %v2298 = vld [vmem:[%s784 + $0x4] sm:$0xf]
        %v2299 = vld [vmem:[%s784 + $0x8] sm:$0x1]
        %v2300 = vld [vmem:[%s784 + $0xc] sm:$0xe]
        %v2301 = vld [vmem:[%s784 + $0x10] sm:$0xf]
        %v2302 = vld [vmem:[%s784 + $0x14] sm:$0x1]
        %v2303 = vld [vmem:[%s784 + $0x18] sm:$0xe]
        %v2304 = vld [vmem:[%s784 + $0x1c] sm:$0xf]
        %v2305 = vld [vmem:[%s784 + $0x20] sm:$0x1]
        %v2306 = vld [vmem:[%s784 + $0x24] sm:$0xe]
        %v2307 = vld [vmem:[%s784 + $0x28] sm:$0xf]
        %v2308 = vld [vmem:[%s784 + $0x2c] sm:$0x1]
        %v2309 = vld [vmem:[%s784 + $0x30] sm:$0xe]
        %v2310 = vld [vmem:[%s784 + $0x34] sm:$0xf]
        %v2311 = vld [vmem:[%s784 + $0x38] sm:$0x1]
        %v2312 = vld [vmem:[%s784 + $0x3c] sm:$0xe]
        %v2313 = vld [vmem:[%s784 + $0x40] sm:$0xf]
        %v2314 = vld [vmem:[%s784 + $0x44] sm:$0x1]
        %v2315 = vld [vmem:[%s784 + $0x48] sm:$0xe]
        %v2316 = vld [vmem:[%s784 + $0x4c] sm:$0xf]
        %v2317 = vld [vmem:[%s784 + $0x50] sm:$0x1]
        %v2318 = vld [vmem:[%s784 + $0x54] sm:$0xe]
        %v2319 = vld [vmem:[%s784 + $0x58] sm:$0xf]
        %v2320 = vld [vmem:[%s784 + $0x5c] sm:$0x1]
        %v2321 = vld [vmem:[%s784 + $0x60] sm:$0xe]
        %v2322 = vld [vmem:[%s784 + $0x64] sm:$0xf]
        %v2323 = vld [vmem:[%s784 + $0x68] sm:$0x1]
        %v2324 = vld [vmem:[%s784 + $0x6c] sm:$0xe]
        %v2325 = vld [vmem:[%s784 + $0x70] sm:$0xf]
        %v2326 = vld [vmem:[%s784 + $0x74] sm:$0x1]
        %v2327 = vld [vmem:[%s784 + $0x78] sm:$0xe]
        %v2328 = vld [vmem:[%s784 + $0x7c] sm:$0xf]
        %v2329 = vld [vmem:[%s784 + $0x80] sm:$0x1]
        %v2330 = vld [vmem:[%s784 + $0x84] sm:$0xe]
        %v2331 = vld [vmem:[%s784 + $0x88] sm:$0xf]
        %v2332 = vld [vmem:[%s784 + $0x8c] sm:$0x1]
        %v2333 = vld [vmem:[%s784 + $0x90] sm:$0xe]
        %v2334 = vld [vmem:[%s784 + $0x94] sm:$0xf]
        %v2335 = vld [vmem:[%s784 + $0x98] sm:$0x1]
        %v2336 = vld [vmem:[%s784 + $0x9c] sm:$0xe]
        %v2337 = vld [vmem:[%s784 + $0xa0] sm:$0xf]
        %v2338 = vld [vmem:[%s784 + $0xa4] sm:$0x1]
        %v2339 = vld [vmem:[%s784 + $0xa8] sm:$0xe]
        %v2340 = vld [vmem:[%s784 + $0xac] sm:$0xf]
        %v2341 = vld [vmem:[%s784 + $0xb0] sm:$0x1]
        %v2342 = vld [vmem:[%s784 + $0xb4] sm:$0xe]
        %v2343 = vld [vmem:[%s784 + $0xb8] sm:$0xf]
        %v2344 = vld [vmem:[%s784 + $0xbc] sm:$0x1]
        %v2393 = vrot.slane %v2297, 5
        %v2394 = vrot.slane %v2393, 4
        %v2395 = vrot.slane %v2298, 5
        %v2396 = vsel %vm1560, %v2394, %v2395
        %v2397 = vrot.slane %v2395, 4
        %v2398 = vrot.slane %v2299, 5
        %v2399 = vsel %vm1560, %v2397, %v2398
        %v2400 = vrot.slane %v2300, 5
        %v2401 = vrot.slane %v2400, 4
        %v2402 = vrot.slane %v2301, 5
        %v2403 = vsel %vm1560, %v2401, %v2402
        %v2404 = vrot.slane %v2402, 4
        %v2405 = vrot.slane %v2302, 5
        %v2406 = vsel %vm1560, %v2404, %v2405
        %v2407 = vrot.slane %v2303, 5
        %v2408 = vrot.slane %v2407, 4
        %v2409 = vrot.slane %v2304, 5
        %v2410 = vsel %vm1560, %v2408, %v2409
        %v2411 = vrot.slane %v2409, 4
        %v2412 = vrot.slane %v2305, 5
        %v2413 = vsel %vm1560, %v2411, %v2412
        %v2414 = vrot.slane %v2306, 5
        %v2415 = vrot.slane %v2414, 4
        %v2416 = vrot.slane %v2307, 5
        %v2417 = vsel %vm1560, %v2415, %v2416
        %v2418 = vrot.slane %v2416, 4
        %v2419 = vrot.slane %v2308, 5
        %v2420 = vsel %vm1560, %v2418, %v2419
        %v2421 = vrot.slane %v2309, 5
        %v2422 = vrot.slane %v2421, 4
        %v2423 = vrot.slane %v2310, 5
        %v2424 = vsel %vm1560, %v2422, %v2423
        %v2425 = vrot.slane %v2423, 4
        %v2426 = vrot.slane %v2311, 5
        %v2427 = vsel %vm1560, %v2425, %v2426
        %v2428 = vrot.slane %v2312, 5
        %v2429 = vrot.slane %v2428, 4
        %v2430 = vrot.slane %v2313, 5
        %v2431 = vsel %vm1560, %v2429, %v2430
        %v2432 = vrot.slane %v2430, 4
        %v2433 = vrot.slane %v2314, 5
        %v2434 = vsel %vm1560, %v2432, %v2433
        %v2435 = vrot.slane %v2315, 5
        %v2436 = vrot.slane %v2435, 4
        %v2437 = vrot.slane %v2316, 5
        %v2438 = vsel %vm1560, %v2436, %v2437
        %v2439 = vrot.slane %v2437, 4
        %v2440 = vrot.slane %v2317, 5
        %v2441 = vsel %vm1560, %v2439, %v2440
        %v2442 = vrot.slane %v2318, 5
        %v2443 = vrot.slane %v2442, 4
        %v2444 = vrot.slane %v2319, 5
        %v2445 = vsel %vm1560, %v2443, %v2444
        %v2446 = vrot.slane %v2444, 4
        %v2447 = vrot.slane %v2320, 5
        %v2448 = vsel %vm1560, %v2446, %v2447
        %v2449 = vrot.slane %v2321, 5
        %v2450 = vrot.slane %v2449, 4
        %v2451 = vrot.slane %v2322, 5
        %v2452 = vsel %vm1560, %v2450, %v2451
        %v2453 = vrot.slane %v2451, 4
        %v2454 = vrot.slane %v2323, 5
        %v2455 = vsel %vm1560, %v2453, %v2454
        %v2456 = vrot.slane %v2324, 5
        %v2457 = vrot.slane %v2456, 4
        %v2458 = vrot.slane %v2325, 5
        %v2459 = vsel %vm1560, %v2457, %v2458
        %v2460 = vrot.slane %v2458, 4
        %v2461 = vrot.slane %v2326, 5
        %v2462 = vsel %vm1560, %v2460, %v2461
        %v2463 = vrot.slane %v2327, 5
        %v2464 = vrot.slane %v2463, 4
        %v2465 = vrot.slane %v2328, 5
        %v2466 = vsel %vm1560, %v2464, %v2465
        %v2467 = vrot.slane %v2465, 4
        %v2468 = vrot.slane %v2329, 5
        %v2469 = vsel %vm1560, %v2467, %v2468
        %v2470 = vrot.slane %v2330, 5
        %v2471 = vrot.slane %v2470, 4
        %v2472 = vrot.slane %v2331, 5
        %v2473 = vsel %vm1560, %v2471, %v2472
        %v2474 = vrot.slane %v2472, 4
        %v2475 = vrot.slane %v2332, 5
        %v2476 = vsel %vm1560, %v2474, %v2475
        %v2477 = vrot.slane %v2333, 5
        %v2478 = vrot.slane %v2477, 4
        %v2479 = vrot.slane %v2334, 5
        %v2480 = vsel %vm1560, %v2478, %v2479
        %v2481 = vrot.slane %v2479, 4
        %v2482 = vrot.slane %v2335, 5
        %v2483 = vsel %vm1560, %v2481, %v2482
        %v2484 = vrot.slane %v2336, 5
        %v2485 = vrot.slane %v2484, 4
        %v2486 = vrot.slane %v2337, 5
        %v2487 = vsel %vm1560, %v2485, %v2486
        %v2488 = vrot.slane %v2486, 4
        %v2489 = vrot.slane %v2338, 5
        %v2490 = vsel %vm1560, %v2488, %v2489
        %v2491 = vrot.slane %v2339, 5
        %v2492 = vrot.slane %v2491, 4
        %v2493 = vrot.slane %v2340, 5
        %v2494 = vsel %vm1560, %v2492, %v2493
        %v2495 = vrot.slane %v2493, 4
        %v2496 = vrot.slane %v2341, 5
        %v2497 = vsel %vm1560, %v2495, %v2496
        %v2498 = vrot.slane %v2342, 5
        %v2499 = vrot.slane %v2498, 4
        %v2500 = vrot.slane %v2343, 5
        %v2501 = vsel %vm1560, %v2499, %v2500
        %v2502 = vrot.slane %v2500, 4
        %v2503 = vrot.slane %v2344, 5
        %v2504 = vsel %vm1560, %v2502, %v2503
        %2537 = vst [vmem:[#allocation3 + $0x14] sm:$0xf] %v2396
        %2538 = vst [vmem:[#allocation3 + $0x38] sm:$0xf] %v2399
        %2539 = vst [vmem:[#allocation3 + $0x5c] sm:$0xf] %v2403
        %2540 = vst [vmem:[#allocation3 + $0x80] sm:$0xf] %v2406
        %2541 = vst [vmem:[#allocation3 + $0xa4] sm:$0xf] %v2410
        %2542 = vst [vmem:[#allocation3 + $0xc8] sm:$0xf] %v2413
        %2543 = vst [vmem:[#allocation3 + $0xec] sm:$0xf] %v2417
        %2544 = vst [vmem:[#allocation3 + $0x110] sm:$0xf] %v2420
        %2545 = vst [vmem:[#allocation3 + $0x134] sm:$0xf] %v2424
        %2546 = vst [vmem:[#allocation3 + $0x158] sm:$0xf] %v2427
        %2547 = vst [vmem:[#allocation3 + $0x17c] sm:$0xf] %v2431
        %2548 = vst [vmem:[#allocation3 + $0x1a0] sm:$0xf] %v2434
        %2549 = vst [vmem:[#allocation3 + $0x1c4] sm:$0xf] %v2438
        %2550 = vst [vmem:[#allocation3 + $0x1e8] sm:$0xf] %v2441
        %2551 = vst [vmem:[#allocation3 + $0x20c] sm:$0xf] %v2445
        %2552 = vst [vmem:[#allocation3 + $0x230] sm:$0xf] %v2448
        %2553 = vst [vmem:[#allocation3 + $0x254] sm:$0xf] %v2452
        %2554 = vst [vmem:[#allocation3 + $0x278] sm:$0xf] %v2455
        %2555 = vst [vmem:[#allocation3 + $0x29c] sm:$0xf] %v2459
        %2556 = vst [vmem:[#allocation3 + $0x2c0] sm:$0xf] %v2462
        %2557 = vst [vmem:[#allocation3 + $0x2e4] sm:$0xf] %v2466
        %2558 = vst [vmem:[#allocation3 + $0x308] sm:$0xf] %v2469
        %2559 = vst [vmem:[#allocation3 + $0x32c] sm:$0xf] %v2473
        %2560 = vst [vmem:[#allocation3 + $0x350] sm:$0xf] %v2476
        %2561 = vst [vmem:[#allocation3 + $0x374] sm:$0xf] %v2480
        %2562 = vst [vmem:[#allocation3 + $0x398] sm:$0xf] %v2483
        %2563 = vst [vmem:[#allocation3 + $0x3bc] sm:$0xf] %v2487
        %2564 = vst [vmem:[#allocation3 + $0x3e0] sm:$0xf] %v2490
        %2565 = vst [vmem:[#allocation3 + $0x404] sm:$0xf] %v2494
        %2566 = vst [vmem:[#allocation3 + $0x428] sm:$0xf] %v2497
        %2567 = vst [vmem:[#allocation3 + $0x44c] sm:$0xf] %v2501
        %2568 = vst [vmem:[#allocation3 + $0x470] sm:$0xf] %v2504
        %s2569 = scalar_lea.vmem [#allocation2], 24
        %v2570 = vld [vmem:[%s2569] sm:$0xf]
        %v2571 = vld [vmem:[%s2569 + $0x4] sm:$0xf]
        %v2572 = vld [vmem:[%s2569 + $0xc] sm:$0xf]
        %v2573 = vld [vmem:[%s2569 + $0x10] sm:$0xf]
        %v2574 = vld [vmem:[%s2569 + $0x18] sm:$0xf]
        %v2575 = vld [vmem:[%s2569 + $0x1c] sm:$0xf]
        %v2576 = vld [vmem:[%s2569 + $0x24] sm:$0xf]
        %v2577 = vld [vmem:[%s2569 + $0x28] sm:$0xf]
        %v2578 = vld [vmem:[%s2569 + $0x30] sm:$0xf]
        %v2579 = vld [vmem:[%s2569 + $0x34] sm:$0xf]
        %v2580 = vld [vmem:[%s2569 + $0x3c] sm:$0xf]
        %v2581 = vld [vmem:[%s2569 + $0x40] sm:$0xf]
        %v2582 = vld [vmem:[%s2569 + $0x48] sm:$0xf]
        %v2583 = vld [vmem:[%s2569 + $0x4c] sm:$0xf]
        %v2584 = vld [vmem:[%s2569 + $0x54] sm:$0xf]
        %v2585 = vld [vmem:[%s2569 + $0x58] sm:$0xf]
        %v2586 = vld [vmem:[%s2569 + $0x60] sm:$0xf]
        %v2587 = vld [vmem:[%s2569 + $0x64] sm:$0xf]
        %v2588 = vld [vmem:[%s2569 + $0x6c] sm:$0xf]
        %v2589 = vld [vmem:[%s2569 + $0x70] sm:$0xf]
        %v2590 = vld [vmem:[%s2569 + $0x78] sm:$0xf]
        %v2591 = vld [vmem:[%s2569 + $0x7c] sm:$0xf]
        %v2592 = vld [vmem:[%s2569 + $0x84] sm:$0xf]
        %v2593 = vld [vmem:[%s2569 + $0x88] sm:$0xf]
        %v2594 = vld [vmem:[%s2569 + $0x90] sm:$0xf]
        %v2595 = vld [vmem:[%s2569 + $0x94] sm:$0xf]
        %v2596 = vld [vmem:[%s2569 + $0x9c] sm:$0xf]
        %v2597 = vld [vmem:[%s2569 + $0xa0] sm:$0xf]
        %v2598 = vld [vmem:[%s2569 + $0xa8] sm:$0xf]
        %v2599 = vld [vmem:[%s2569 + $0xac] sm:$0xf]
        %v2600 = vld [vmem:[%s2569 + $0xb4] sm:$0xf]
        %v2601 = vld [vmem:[%s2569 + $0xb8] sm:$0xf]
        %2602 = vst [vmem:[#allocation3 + $0x18] sm:$0xf] %v2570
        %2603 = vst [vmem:[#allocation3 + $0x3c] sm:$0xf] %v2571
        %2604 = vst [vmem:[#allocation3 + $0x60] sm:$0xf] %v2572
        %2605 = vst [vmem:[#allocation3 + $0x84] sm:$0xf] %v2573
        %2606 = vst [vmem:[#allocation3 + $0xa8] sm:$0xf] %v2574
        %2607 = vst [vmem:[#allocation3 + $0xcc] sm:$0xf] %v2575
        %2608 = vst [vmem:[#allocation3 + $0xf0] sm:$0xf] %v2576
        %2609 = vst [vmem:[#allocation3 + $0x114] sm:$0xf] %v2577
        %2610 = vst [vmem:[#allocation3 + $0x138] sm:$0xf] %v2578
        %2611 = vst [vmem:[#allocation3 + $0x15c] sm:$0xf] %v2579
        %2612 = vst [vmem:[#allocation3 + $0x180] sm:$0xf] %v2580
        %2613 = vst [vmem:[#allocation3 + $0x1a4] sm:$0xf] %v2581
        %2614 = vst [vmem:[#allocation3 + $0x1c8] sm:$0xf] %v2582
        %2615 = vst [vmem:[#allocation3 + $0x1ec] sm:$0xf] %v2583
        %2616 = vst [vmem:[#allocation3 + $0x210] sm:$0xf] %v2584
        %2617 = vst [vmem:[#allocation3 + $0x234] sm:$0xf] %v2585
        %2618 = vst [vmem:[#allocation3 + $0x258] sm:$0xf] %v2586
        %2619 = vst [vmem:[#allocation3 + $0x27c] sm:$0xf] %v2587
        %2620 = vst [vmem:[#allocation3 + $0x2a0] sm:$0xf] %v2588
        %2621 = vst [vmem:[#allocation3 + $0x2c4] sm:$0xf] %v2589
        %2622 = vst [vmem:[#allocation3 + $0x2e8] sm:$0xf] %v2590
        %2623 = vst [vmem:[#allocation3 + $0x30c] sm:$0xf] %v2591
        %2624 = vst [vmem:[#allocation3 + $0x330] sm:$0xf] %v2592
        %2625 = vst [vmem:[#allocation3 + $0x354] sm:$0xf] %v2593
        %2626 = vst [vmem:[#allocation3 + $0x378] sm:$0xf] %v2594
        %2627 = vst [vmem:[#allocation3 + $0x39c] sm:$0xf] %v2595
        %2628 = vst [vmem:[#allocation3 + $0x3c0] sm:$0xf] %v2596
        %2629 = vst [vmem:[#allocation3 + $0x3e4] sm:$0xf] %v2597
        %2630 = vst [vmem:[#allocation3 + $0x408] sm:$0xf] %v2598
        %2631 = vst [vmem:[#allocation3 + $0x42c] sm:$0xf] %v2599
        %2632 = vst [vmem:[#allocation3 + $0x450] sm:$0xf] %v2600
        %2633 = vst [vmem:[#allocation3 + $0x474] sm:$0xf] %v2601
        %v2634 = vld [vmem:[%s2569] sm:$0xf]
        %v2635 = vld [vmem:[%s2569 + $0x4] sm:$0xf]
        %v2636 = vld [vmem:[%s2569 + $0x8] sm:$0x1]
        %v2637 = vld [vmem:[%s2569 + $0xc] sm:$0xf]
        %v2638 = vld [vmem:[%s2569 + $0x10] sm:$0xf]
        %v2639 = vld [vmem:[%s2569 + $0x14] sm:$0x1]
        %v2640 = vld [vmem:[%s2569 + $0x18] sm:$0xf]
        %v2641 = vld [vmem:[%s2569 + $0x1c] sm:$0xf]
        %v2642 = vld [vmem:[%s2569 + $0x20] sm:$0x1]
        %v2643 = vld [vmem:[%s2569 + $0x24] sm:$0xf]
        %v2644 = vld [vmem:[%s2569 + $0x28] sm:$0xf]
        %v2645 = vld [vmem:[%s2569 + $0x2c] sm:$0x1]
        %v2646 = vld [vmem:[%s2569 + $0x30] sm:$0xf]
        %v2647 = vld [vmem:[%s2569 + $0x34] sm:$0xf]
        %v2648 = vld [vmem:[%s2569 + $0x38] sm:$0x1]
        %v2649 = vld [vmem:[%s2569 + $0x3c] sm:$0xf]
        %v2650 = vld [vmem:[%s2569 + $0x40] sm:$0xf]
        %v2651 = vld [vmem:[%s2569 + $0x44] sm:$0x1]
        %v2652 = vld [vmem:[%s2569 + $0x48] sm:$0xf]
        %v2653 = vld [vmem:[%s2569 + $0x4c] sm:$0xf]
        %v2654 = vld [vmem:[%s2569 + $0x50] sm:$0x1]
        %v2655 = vld [vmem:[%s2569 + $0x54] sm:$0xf]
        %v2656 = vld [vmem:[%s2569 + $0x58] sm:$0xf]
        %v2657 = vld [vmem:[%s2569 + $0x5c] sm:$0x1]
        %v2658 = vld [vmem:[%s2569 + $0x60] sm:$0xf]
        %v2659 = vld [vmem:[%s2569 + $0x64] sm:$0xf]
        %v2660 = vld [vmem:[%s2569 + $0x68] sm:$0x1]
        %v2661 = vld [vmem:[%s2569 + $0x6c] sm:$0xf]
        %v2662 = vld [vmem:[%s2569 + $0x70] sm:$0xf]
        %v2663 = vld [vmem:[%s2569 + $0x74] sm:$0x1]
        %v2664 = vld [vmem:[%s2569 + $0x78] sm:$0xf]
        %v2665 = vld [vmem:[%s2569 + $0x7c] sm:$0xf]
        %v2666 = vld [vmem:[%s2569 + $0x80] sm:$0x1]
        %v2667 = vld [vmem:[%s2569 + $0x84] sm:$0xf]
        %v2668 = vld [vmem:[%s2569 + $0x88] sm:$0xf]
        %v2669 = vld [vmem:[%s2569 + $0x8c] sm:$0x1]
        %v2670 = vld [vmem:[%s2569 + $0x90] sm:$0xf]
        %v2671 = vld [vmem:[%s2569 + $0x94] sm:$0xf]
        %v2672 = vld [vmem:[%s2569 + $0x98] sm:$0x1]
        %v2673 = vld [vmem:[%s2569 + $0x9c] sm:$0xf]
        %v2674 = vld [vmem:[%s2569 + $0xa0] sm:$0xf]
        %v2675 = vld [vmem:[%s2569 + $0xa4] sm:$0x1]
        %v2676 = vld [vmem:[%s2569 + $0xa8] sm:$0xf]
        %v2677 = vld [vmem:[%s2569 + $0xac] sm:$0xf]
        %v2678 = vld [vmem:[%s2569 + $0xb0] sm:$0x1]
        %v2679 = vld [vmem:[%s2569 + $0xb4] sm:$0xf]
        %v2680 = vld [vmem:[%s2569 + $0xb8] sm:$0xf]
        %v2681 = vld [vmem:[%s2569 + $0xbc] sm:$0x1]
        %v2683 = vshrl.u32 %v2634, 16
        %v2685 = vrot.slane %v2683, 4
        %v2686 = vshll.u32 %v2634, 16
        %v2688 = vrot.slane %v2686, 5
        %v2689 = vor.u32 %v2685, %v2688
        %v2690 = vrot.slane %v2689, 4
        %v2692 = vshll.u32 %v2635, 16
        %v2694 = vrot.slane %v2692, 5
        %v2695 = vsel %vm1013, %v2690, %v2694
        %v2696 = vshrl.u32 %v2635, 16
        %v2698 = vrot.slane %v2696, 4
        %v2699 = vor.u32 %v2698, %v2694
        %v2700 = vrot.slane %v2699, 4
        %v2702 = vshll.u32 %v2636, 16
        %v2704 = vrot.slane %v2702, 5
        %v2705 = vsel %vm1013, %v2700, %v2704
        %v2707 = vshrl.u32 %v2637, 16
        %v2709 = vrot.slane %v2707, 4
        %v2710 = vshll.u32 %v2637, 16
        %v2712 = vrot.slane %v2710, 5
        %v2713 = vor.u32 %v2709, %v2712
        %v2714 = vrot.slane %v2713, 4
        %v2716 = vshll.u32 %v2638, 16
        %v2718 = vrot.slane %v2716, 5
        %v2719 = vsel %vm1013, %v2714, %v2718
        %v2720 = vshrl.u32 %v2638, 16
        %v2722 = vrot.slane %v2720, 4
        %v2723 = vor.u32 %v2722, %v2718
        %v2724 = vrot.slane %v2723, 4
        %v2726 = vshll.u32 %v2639, 16
        %v2728 = vrot.slane %v2726, 5
        %v2729 = vsel %vm1013, %v2724, %v2728
        %v2731 = vshrl.u32 %v2640, 16
        %v2733 = vrot.slane %v2731, 4
        %v2734 = vshll.u32 %v2640, 16
        %v2736 = vrot.slane %v2734, 5
        %v2737 = vor.u32 %v2733, %v2736
        %v2738 = vrot.slane %v2737, 4
        %v2740 = vshll.u32 %v2641, 16
        %v2742 = vrot.slane %v2740, 5
        %v2743 = vsel %vm1013, %v2738, %v2742
        %v2744 = vshrl.u32 %v2641, 16
        %v2746 = vrot.slane %v2744, 4
        %v2747 = vor.u32 %v2746, %v2742
        %v2748 = vrot.slane %v2747, 4
        %v2750 = vshll.u32 %v2642, 16
        %v2752 = vrot.slane %v2750, 5
        %v2753 = vsel %vm1013, %v2748, %v2752
        %v2755 = vshrl.u32 %v2643, 16
        %v2757 = vrot.slane %v2755, 4
        %v2758 = vshll.u32 %v2643, 16
        %v2760 = vrot.slane %v2758, 5
        %v2761 = vor.u32 %v2757, %v2760
        %v2762 = vrot.slane %v2761, 4
        %v2764 = vshll.u32 %v2644, 16
        %v2766 = vrot.slane %v2764, 5
        %v2767 = vsel %vm1013, %v2762, %v2766
        %v2768 = vshrl.u32 %v2644, 16
        %v2770 = vrot.slane %v2768, 4
        %v2771 = vor.u32 %v2770, %v2766
        %v2772 = vrot.slane %v2771, 4
        %v2774 = vshll.u32 %v2645, 16
        %v2776 = vrot.slane %v2774, 5
        %v2777 = vsel %vm1013, %v2772, %v2776
        %v2779 = vshrl.u32 %v2646, 16
        %v2781 = vrot.slane %v2779, 4
        %v2782 = vshll.u32 %v2646, 16
        %v2784 = vrot.slane %v2782, 5
        %v2785 = vor.u32 %v2781, %v2784
        %v2786 = vrot.slane %v2785, 4
        %v2788 = vshll.u32 %v2647, 16
        %v2790 = vrot.slane %v2788, 5
        %v2791 = vsel %vm1013, %v2786, %v2790
        %v2792 = vshrl.u32 %v2647, 16
        %v2794 = vrot.slane %v2792, 4
        %v2795 = vor.u32 %v2794, %v2790
        %v2796 = vrot.slane %v2795, 4
        %v2798 = vshll.u32 %v2648, 16
        %v2800 = vrot.slane %v2798, 5
        %v2801 = vsel %vm1013, %v2796, %v2800
        %v2803 = vshrl.u32 %v2649, 16
        %v2805 = vrot.slane %v2803, 4
        %v2806 = vshll.u32 %v2649, 16
        %v2808 = vrot.slane %v2806, 5
        %v2809 = vor.u32 %v2805, %v2808
        %v2810 = vrot.slane %v2809, 4
        %v2812 = vshll.u32 %v2650, 16
        %v2814 = vrot.slane %v2812, 5
        %v2815 = vsel %vm1013, %v2810, %v2814
        %v2816 = vshrl.u32 %v2650, 16
        %v2818 = vrot.slane %v2816, 4
        %v2819 = vor.u32 %v2818, %v2814
        %v2820 = vrot.slane %v2819, 4
        %v2822 = vshll.u32 %v2651, 16
        %v2824 = vrot.slane %v2822, 5
        %v2825 = vsel %vm1013, %v2820, %v2824
        %v2827 = vshrl.u32 %v2652, 16
        %v2829 = vrot.slane %v2827, 4
        %v2830 = vshll.u32 %v2652, 16
        %v2832 = vrot.slane %v2830, 5
        %v2833 = vor.u32 %v2829, %v2832
        %v2834 = vrot.slane %v2833, 4
        %v2836 = vshll.u32 %v2653, 16
        %v2838 = vrot.slane %v2836, 5
        %v2839 = vsel %vm1013, %v2834, %v2838
        %v2840 = vshrl.u32 %v2653, 16
        %v2842 = vrot.slane %v2840, 4
        %v2843 = vor.u32 %v2842, %v2838
        %v2844 = vrot.slane %v2843, 4
        %v2846 = vshll.u32 %v2654, 16
        %v2848 = vrot.slane %v2846, 5
        %v2849 = vsel %vm1013, %v2844, %v2848
        %v2851 = vshrl.u32 %v2655, 16
        %v2853 = vrot.slane %v2851, 4
        %v2854 = vshll.u32 %v2655, 16
        %v2856 = vrot.slane %v2854, 5
        %v2857 = vor.u32 %v2853, %v2856
        %v2858 = vrot.slane %v2857, 4
        %v2860 = vshll.u32 %v2656, 16
        %v2862 = vrot.slane %v2860, 5
        %v2863 = vsel %vm1013, %v2858, %v2862
        %v2864 = vshrl.u32 %v2656, 16
        %v2866 = vrot.slane %v2864, 4
        %v2867 = vor.u32 %v2866, %v2862
        %v2868 = vrot.slane %v2867, 4
        %v2870 = vshll.u32 %v2657, 16
        %v2872 = vrot.slane %v2870, 5
        %v2873 = vsel %vm1013, %v2868, %v2872
        %v2875 = vshrl.u32 %v2658, 16
        %v2877 = vrot.slane %v2875, 4
        %v2878 = vshll.u32 %v2658, 16
        %v2880 = vrot.slane %v2878, 5
        %v2881 = vor.u32 %v2877, %v2880
        %v2882 = vrot.slane %v2881, 4
        %v2884 = vshll.u32 %v2659, 16
        %v2886 = vrot.slane %v2884, 5
        %v2887 = vsel %vm1013, %v2882, %v2886
        %v2888 = vshrl.u32 %v2659, 16
        %v2890 = vrot.slane %v2888, 4
        %v2891 = vor.u32 %v2890, %v2886
        %v2892 = vrot.slane %v2891, 4
        %v2894 = vshll.u32 %v2660, 16
        %v2896 = vrot.slane %v2894, 5
        %v2897 = vsel %vm1013, %v2892, %v2896
        %v2899 = vshrl.u32 %v2661, 16
        %v2901 = vrot.slane %v2899, 4
        %v2902 = vshll.u32 %v2661, 16
        %v2904 = vrot.slane %v2902, 5
        %v2905 = vor.u32 %v2901, %v2904
        %v2906 = vrot.slane %v2905, 4
        %v2908 = vshll.u32 %v2662, 16
        %v2910 = vrot.slane %v2908, 5
        %v2911 = vsel %vm1013, %v2906, %v2910
        %v2912 = vshrl.u32 %v2662, 16
        %v2914 = vrot.slane %v2912, 4
        %v2915 = vor.u32 %v2914, %v2910
        %v2916 = vrot.slane %v2915, 4
        %v2918 = vshll.u32 %v2663, 16
        %v2920 = vrot.slane %v2918, 5
        %v2921 = vsel %vm1013, %v2916, %v2920
        %v2923 = vshrl.u32 %v2664, 16
        %v2925 = vrot.slane %v2923, 4
        %v2926 = vshll.u32 %v2664, 16
        %v2928 = vrot.slane %v2926, 5
        %v2929 = vor.u32 %v2925, %v2928
        %v2930 = vrot.slane %v2929, 4
        %v2932 = vshll.u32 %v2665, 16
        %v2934 = vrot.slane %v2932, 5
        %v2935 = vsel %vm1013, %v2930, %v2934
        %v2936 = vshrl.u32 %v2665, 16
        %v2938 = vrot.slane %v2936, 4
        %v2939 = vor.u32 %v2938, %v2934
        %v2940 = vrot.slane %v2939, 4
        %v2942 = vshll.u32 %v2666, 16
        %v2944 = vrot.slane %v2942, 5
        %v2945 = vsel %vm1013, %v2940, %v2944
        %v2947 = vshrl.u32 %v2667, 16
        %v2949 = vrot.slane %v2947, 4
        %v2950 = vshll.u32 %v2667, 16
        %v2952 = vrot.slane %v2950, 5
        %v2953 = vor.u32 %v2949, %v2952
        %v2954 = vrot.slane %v2953, 4
        %v2956 = vshll.u32 %v2668, 16
        %v2958 = vrot.slane %v2956, 5
        %v2959 = vsel %vm1013, %v2954, %v2958
        %v2960 = vshrl.u32 %v2668, 16
        %v2962 = vrot.slane %v2960, 4
        %v2963 = vor.u32 %v2962, %v2958
        %v2964 = vrot.slane %v2963, 4
        %v2966 = vshll.u32 %v2669, 16
        %v2968 = vrot.slane %v2966, 5
        %v2969 = vsel %vm1013, %v2964, %v2968
        %v2971 = vshrl.u32 %v2670, 16
        %v2973 = vrot.slane %v2971, 4
        %v2974 = vshll.u32 %v2670, 16
        %v2976 = vrot.slane %v2974, 5
        %v2977 = vor.u32 %v2973, %v2976
        %v2978 = vrot.slane %v2977, 4
        %v2980 = vshll.u32 %v2671, 16
        %v2982 = vrot.slane %v2980, 5
        %v2983 = vsel %vm1013, %v2978, %v2982
        %v2984 = vshrl.u32 %v2671, 16
        %v2986 = vrot.slane %v2984, 4
        %v2987 = vor.u32 %v2986, %v2982
        %v2988 = vrot.slane %v2987, 4
        %v2990 = vshll.u32 %v2672, 16
        %v2992 = vrot.slane %v2990, 5
        %v2993 = vsel %vm1013, %v2988, %v2992
        %v2995 = vshrl.u32 %v2673, 16
        %v2997 = vrot.slane %v2995, 4
        %v2998 = vshll.u32 %v2673, 16
        %v3000 = vrot.slane %v2998, 5
        %v3001 = vor.u32 %v2997, %v3000
        %v3002 = vrot.slane %v3001, 4
        %v3004 = vshll.u32 %v2674, 16
        %v3006 = vrot.slane %v3004, 5
        %v3007 = vsel %vm1013, %v3002, %v3006
        %v3008 = vshrl.u32 %v2674, 16
        %v3010 = vrot.slane %v3008, 4
        %v3011 = vor.u32 %v3010, %v3006
        %v3012 = vrot.slane %v3011, 4
        %v3014 = vshll.u32 %v2675, 16
        %v3016 = vrot.slane %v3014, 5
        %v3017 = vsel %vm1013, %v3012, %v3016
        %v3019 = vshrl.u32 %v2676, 16
        %v3021 = vrot.slane %v3019, 4
        %v3022 = vshll.u32 %v2676, 16
        %v3024 = vrot.slane %v3022, 5
        %v3025 = vor.u32 %v3021, %v3024
        %v3026 = vrot.slane %v3025, 4
        %v3028 = vshll.u32 %v2677, 16
        %v3030 = vrot.slane %v3028, 5
        %v3031 = vsel %vm1013, %v3026, %v3030
        %v3032 = vshrl.u32 %v2677, 16
        %v3034 = vrot.slane %v3032, 4
        %v3035 = vor.u32 %v3034, %v3030
        %v3036 = vrot.slane %v3035, 4
        %v3038 = vshll.u32 %v2678, 16
        %v3040 = vrot.slane %v3038, 5
        %v3041 = vsel %vm1013, %v3036, %v3040
        %v3043 = vshrl.u32 %v2679, 16
        %v3045 = vrot.slane %v3043, 4
        %v3046 = vshll.u32 %v2679, 16
        %v3048 = vrot.slane %v3046, 5
        %v3049 = vor.u32 %v3045, %v3048
        %v3050 = vrot.slane %v3049, 4
        %v3052 = vshll.u32 %v2680, 16
        %v3054 = vrot.slane %v3052, 5
        %v3055 = vsel %vm1013, %v3050, %v3054
        %v3056 = vshrl.u32 %v2680, 16
        %v3058 = vrot.slane %v3056, 4
        %v3059 = vor.u32 %v3058, %v3054
        %v3060 = vrot.slane %v3059, 4
        %v3062 = vshll.u32 %v2681, 16
        %v3064 = vrot.slane %v3062, 5
        %v3065 = vsel %vm1013, %v3060, %v3064
        %3098 = vst [vmem:[#allocation3 + $0x1c] sm:$0xf] %v2695
        %3099 = vst [vmem:[#allocation3 + $0x40] sm:$0xf] %v2705
        %3100 = vst [vmem:[#allocation3 + $0x64] sm:$0xf] %v2719
        %3101 = vst [vmem:[#allocation3 + $0x88] sm:$0xf] %v2729
        %3102 = vst [vmem:[#allocation3 + $0xac] sm:$0xf] %v2743
        %3103 = vst [vmem:[#allocation3 + $0xd0] sm:$0xf] %v2753
        %3104 = vst [vmem:[#allocation3 + $0xf4] sm:$0xf] %v2767
        %3105 = vst [vmem:[#allocation3 + $0x118] sm:$0xf] %v2777
        %3106 = vst [vmem:[#allocation3 + $0x13c] sm:$0xf] %v2791
        %3107 = vst [vmem:[#allocation3 + $0x160] sm:$0xf] %v2801
        %3108 = vst [vmem:[#allocation3 + $0x184] sm:$0xf] %v2815
        %3109 = vst [vmem:[#allocation3 + $0x1a8] sm:$0xf] %v2825
        %3110 = vst [vmem:[#allocation3 + $0x1cc] sm:$0xf] %v2839
        %3111 = vst [vmem:[#allocation3 + $0x1f0] sm:$0xf] %v2849
        %3112 = vst [vmem:[#allocation3 + $0x214] sm:$0xf] %v2863
        %3113 = vst [vmem:[#allocation3 + $0x238] sm:$0xf] %v2873
        %3114 = vst [vmem:[#allocation3 + $0x25c] sm:$0xf] %v2887
        %3115 = vst [vmem:[#allocation3 + $0x280] sm:$0xf] %v2897
        %3116 = vst [vmem:[#allocation3 + $0x2a4] sm:$0xf] %v2911
        %3117 = vst [vmem:[#allocation3 + $0x2c8] sm:$0xf] %v2921
        %3118 = vst [vmem:[#allocation3 + $0x2ec] sm:$0xf] %v2935
        %3119 = vst [vmem:[#allocation3 + $0x310] sm:$0xf] %v2945
        %3120 = vst [vmem:[#allocation3 + $0x334] sm:$0xf] %v2959
        %3121 = vst [vmem:[#allocation3 + $0x358] sm:$0xf] %v2969
        %3122 = vst [vmem:[#allocation3 + $0x37c] sm:$0xf] %v2983
        %3123 = vst [vmem:[#allocation3 + $0x3a0] sm:$0xf] %v2993
        %3124 = vst [vmem:[#allocation3 + $0x3c4] sm:$0xf] %v3007
        %3125 = vst [vmem:[#allocation3 + $0x3e8] sm:$0xf] %v3017
        %3126 = vst [vmem:[#allocation3 + $0x40c] sm:$0xf] %v3031
        %3127 = vst [vmem:[#allocation3 + $0x430] sm:$0xf] %v3041
        %3128 = vst [vmem:[#allocation3 + $0x454] sm:$0xf] %v3055
        %3129 = vst [vmem:[#allocation3 + $0x478] sm:$0xf] %v3065
        %v3130 = vld [vmem:[%s2569] sm:$0xe]
        %v3131 = vld [vmem:[%s2569 + $0x4] sm:$0xf]
        %v3132 = vld [vmem:[%s2569 + $0x8] sm:$0x1]
        %v3133 = vld [vmem:[%s2569 + $0xc] sm:$0xe]
        %v3134 = vld [vmem:[%s2569 + $0x10] sm:$0xf]
        %v3135 = vld [vmem:[%s2569 + $0x14] sm:$0x1]
        %v3136 = vld [vmem:[%s2569 + $0x18] sm:$0xe]
        %v3137 = vld [vmem:[%s2569 + $0x1c] sm:$0xf]
        %v3138 = vld [vmem:[%s2569 + $0x20] sm:$0x1]
        %v3139 = vld [vmem:[%s2569 + $0x24] sm:$0xe]
        %v3140 = vld [vmem:[%s2569 + $0x28] sm:$0xf]
        %v3141 = vld [vmem:[%s2569 + $0x2c] sm:$0x1]
        %v3142 = vld [vmem:[%s2569 + $0x30] sm:$0xe]
        %v3143 = vld [vmem:[%s2569 + $0x34] sm:$0xf]
        %v3144 = vld [vmem:[%s2569 + $0x38] sm:$0x1]
        %v3145 = vld [vmem:[%s2569 + $0x3c] sm:$0xe]
        %v3146 = vld [vmem:[%s2569 + $0x40] sm:$0xf]
        %v3147 = vld [vmem:[%s2569 + $0x44] sm:$0x1]
        %v3148 = vld [vmem:[%s2569 + $0x48] sm:$0xe]
        %v3149 = vld [vmem:[%s2569 + $0x4c] sm:$0xf]
        %v3150 = vld [vmem:[%s2569 + $0x50] sm:$0x1]
        %v3151 = vld [vmem:[%s2569 + $0x54] sm:$0xe]
        %v3152 = vld [vmem:[%s2569 + $0x58] sm:$0xf]
        %v3153 = vld [vmem:[%s2569 + $0x5c] sm:$0x1]
        %v3154 = vld [vmem:[%s2569 + $0x60] sm:$0xe]
        %v3155 = vld [vmem:[%s2569 + $0x64] sm:$0xf]
        %v3156 = vld [vmem:[%s2569 + $0x68] sm:$0x1]
        %v3157 = vld [vmem:[%s2569 + $0x6c] sm:$0xe]
        %v3158 = vld [vmem:[%s2569 + $0x70] sm:$0xf]
        %v3159 = vld [vmem:[%s2569 + $0x74] sm:$0x1]
        %v3160 = vld [vmem:[%s2569 + $0x78] sm:$0xe]
        %v3161 = vld [vmem:[%s2569 + $0x7c] sm:$0xf]
        %v3162 = vld [vmem:[%s2569 + $0x80] sm:$0x1]
        %v3163 = vld [vmem:[%s2569 + $0x84] sm:$0xe]
        %v3164 = vld [vmem:[%s2569 + $0x88] sm:$0xf]
        %v3165 = vld [vmem:[%s2569 + $0x8c] sm:$0x1]
        %v3166 = vld [vmem:[%s2569 + $0x90] sm:$0xe]
        %v3167 = vld [vmem:[%s2569 + $0x94] sm:$0xf]
        %v3168 = vld [vmem:[%s2569 + $0x98] sm:$0x1]
        %v3169 = vld [vmem:[%s2569 + $0x9c] sm:$0xe]
        %v3170 = vld [vmem:[%s2569 + $0xa0] sm:$0xf]
        %v3171 = vld [vmem:[%s2569 + $0xa4] sm:$0x1]
        %v3172 = vld [vmem:[%s2569 + $0xa8] sm:$0xe]
        %v3173 = vld [vmem:[%s2569 + $0xac] sm:$0xf]
        %v3174 = vld [vmem:[%s2569 + $0xb0] sm:$0x1]
        %v3175 = vld [vmem:[%s2569 + $0xb4] sm:$0xe]
        %v3176 = vld [vmem:[%s2569 + $0xb8] sm:$0xf]
        %v3177 = vld [vmem:[%s2569 + $0xbc] sm:$0x1]
        %v3226 = vrot.slane %v3130, 5
        %v3227 = vrot.slane %v3226, 4
        %v3228 = vrot.slane %v3131, 5
        %v3229 = vsel %vm1560, %v3227, %v3228
        %v3230 = vrot.slane %v3228, 4
        %v3231 = vrot.slane %v3132, 5
        %v3232 = vsel %vm1560, %v3230, %v3231
        %v3233 = vrot.slane %v3133, 5
        %v3234 = vrot.slane %v3233, 4
        %v3235 = vrot.slane %v3134, 5
        %v3236 = vsel %vm1560, %v3234, %v3235
        %v3237 = vrot.slane %v3235, 4
        %v3238 = vrot.slane %v3135, 5
        %v3239 = vsel %vm1560, %v3237, %v3238
        %v3240 = vrot.slane %v3136, 5
        %v3241 = vrot.slane %v3240, 4
        %v3242 = vrot.slane %v3137, 5
        %v3243 = vsel %vm1560, %v3241, %v3242
        %v3244 = vrot.slane %v3242, 4
        %v3245 = vrot.slane %v3138, 5
        %v3246 = vsel %vm1560, %v3244, %v3245
        %v3247 = vrot.slane %v3139, 5
        %v3248 = vrot.slane %v3247, 4
        %v3249 = vrot.slane %v3140, 5
        %v3250 = vsel %vm1560, %v3248, %v3249
        %v3251 = vrot.slane %v3249, 4
        %v3252 = vrot.slane %v3141, 5
        %v3253 = vsel %vm1560, %v3251, %v3252
        %v3254 = vrot.slane %v3142, 5
        %v3255 = vrot.slane %v3254, 4
        %v3256 = vrot.slane %v3143, 5
        %v3257 = vsel %vm1560, %v3255, %v3256
        %v3258 = vrot.slane %v3256, 4
        %v3259 = vrot.slane %v3144, 5
        %v3260 = vsel %vm1560, %v3258, %v3259
        %v3261 = vrot.slane %v3145, 5
        %v3262 = vrot.slane %v3261, 4
        %v3263 = vrot.slane %v3146, 5
        %v3264 = vsel %vm1560, %v3262, %v3263
        %v3265 = vrot.slane %v3263, 4
        %v3266 = vrot.slane %v3147, 5
        %v3267 = vsel %vm1560, %v3265, %v3266
        %v3268 = vrot.slane %v3148, 5
        %v3269 = vrot.slane %v3268, 4
        %v3270 = vrot.slane %v3149, 5
        %v3271 = vsel %vm1560, %v3269, %v3270
        %v3272 = vrot.slane %v3270, 4
        %v3273 = vrot.slane %v3150, 5
        %v3274 = vsel %vm1560, %v3272, %v3273
        %v3275 = vrot.slane %v3151, 5
        %v3276 = vrot.slane %v3275, 4
        %v3277 = vrot.slane %v3152, 5
        %v3278 = vsel %vm1560, %v3276, %v3277
        %v3279 = vrot.slane %v3277, 4
        %v3280 = vrot.slane %v3153, 5
        %v3281 = vsel %vm1560, %v3279, %v3280
        %v3282 = vrot.slane %v3154, 5
        %v3283 = vrot.slane %v3282, 4
        %v3284 = vrot.slane %v3155, 5
        %v3285 = vsel %vm1560, %v3283, %v3284
        %v3286 = vrot.slane %v3284, 4
        %v3287 = vrot.slane %v3156, 5
        %v3288 = vsel %vm1560, %v3286, %v3287
        %v3289 = vrot.slane %v3157, 5
        %v3290 = vrot.slane %v3289, 4
        %v3291 = vrot.slane %v3158, 5
        %v3292 = vsel %vm1560, %v3290, %v3291
        %v3293 = vrot.slane %v3291, 4
        %v3294 = vrot.slane %v3159, 5
        %v3295 = vsel %vm1560, %v3293, %v3294
        %v3296 = vrot.slane %v3160, 5
        %v3297 = vrot.slane %v3296, 4
        %v3298 = vrot.slane %v3161, 5
        %v3299 = vsel %vm1560, %v3297, %v3298
        %v3300 = vrot.slane %v3298, 4
        %v3301 = vrot.slane %v3162, 5
        %v3302 = vsel %vm1560, %v3300, %v3301
        %v3303 = vrot.slane %v3163, 5
        %v3304 = vrot.slane %v3303, 4
        %v3305 = vrot.slane %v3164, 5
        %v3306 = vsel %vm1560, %v3304, %v3305
        %v3307 = vrot.slane %v3305, 4
        %v3308 = vrot.slane %v3165, 5
        %v3309 = vsel %vm1560, %v3307, %v3308
        %v3310 = vrot.slane %v3166, 5
        %v3311 = vrot.slane %v3310, 4
        %v3312 = vrot.slane %v3167, 5
        %v3313 = vsel %vm1560, %v3311, %v3312
        %v3314 = vrot.slane %v3312, 4
        %v3315 = vrot.slane %v3168, 5
        %v3316 = vsel %vm1560, %v3314, %v3315
        %v3317 = vrot.slane %v3169, 5
        %v3318 = vrot.slane %v3317, 4
        %v3319 = vrot.slane %v3170, 5
        %v3320 = vsel %vm1560, %v3318, %v3319
        %v3321 = vrot.slane %v3319, 4
        %v3322 = vrot.slane %v3171, 5
        %v3323 = vsel %vm1560, %v3321, %v3322
        %v3324 = vrot.slane %v3172, 5
        %v3325 = vrot.slane %v3324, 4
        %v3326 = vrot.slane %v3173, 5
        %v3327 = vsel %vm1560, %v3325, %v3326
        %v3328 = vrot.slane %v3326, 4
        %v3329 = vrot.slane %v3174, 5
        %v3330 = vsel %vm1560, %v3328, %v3329
        %v3331 = vrot.slane %v3175, 5
        %v3332 = vrot.slane %v3331, 4
        %v3333 = vrot.slane %v3176, 5
        %v3334 = vsel %vm1560, %v3332, %v3333
        %v3335 = vrot.slane %v3333, 4
        %v3336 = vrot.slane %v3177, 5
        %v3337 = vsel %vm1560, %v3335, %v3336
        %3370 = vst [vmem:[#allocation3 + $0x20] sm:$0xf] %v3229
        %3371 = vst [vmem:[#allocation3 + $0x44] sm:$0xf] %v3232
        %3372 = vst [vmem:[#allocation3 + $0x68] sm:$0xf] %v3236
        %3373 = vst [vmem:[#allocation3 + $0x8c] sm:$0xf] %v3239
        %3374 = vst [vmem:[#allocation3 + $0xb0] sm:$0xf] %v3243
        %3375 = vst [vmem:[#allocation3 + $0xd4] sm:$0xf] %v3246
        %3376 = vst [vmem:[#allocation3 + $0xf8] sm:$0xf] %v3250
        %3377 = vst [vmem:[#allocation3 + $0x11c] sm:$0xf] %v3253
        %3378 = vst [vmem:[#allocation3 + $0x140] sm:$0xf] %v3257
        %3379 = vst [vmem:[#allocation3 + $0x164] sm:$0xf] %v3260
        %3380 = vst [vmem:[#allocation3 + $0x188] sm:$0xf] %v3264
        %3381 = vst [vmem:[#allocation3 + $0x1ac] sm:$0xf] %v3267
        %3382 = vst [vmem:[#allocation3 + $0x1d0] sm:$0xf] %v3271
        %3383 = vst [vmem:[#allocation3 + $0x1f4] sm:$0xf] %v3274
        %3384 = vst [vmem:[#allocation3 + $0x218] sm:$0xf] %v3278
        %3385 = vst [vmem:[#allocation3 + $0x23c] sm:$0xf] %v3281
        %3386 = vst [vmem:[#allocation3 + $0x260] sm:$0xf] %v3285
        %3387 = vst [vmem:[#allocation3 + $0x284] sm:$0xf] %v3288
        %3388 = vst [vmem:[#allocation3 + $0x2a8] sm:$0xf] %v3292
        %3389 = vst [vmem:[#allocation3 + $0x2cc] sm:$0xf] %v3295
        %3390 = vst [vmem:[#allocation3 + $0x2f0] sm:$0xf] %v3299
        %3391 = vst [vmem:[#allocation3 + $0x314] sm:$0xf] %v3302
        %3392 = vst [vmem:[#allocation3 + $0x338] sm:$0xf] %v3306
        %3393 = vst [vmem:[#allocation3 + $0x35c] sm:$0xf] %v3309
        %3394 = vst [vmem:[#allocation3 + $0x380] sm:$0xf] %v3313
        %3395 = vst [vmem:[#allocation3 + $0x3a4] sm:$0xf] %v3316
        %3396 = vst [vmem:[#allocation3 + $0x3c8] sm:$0xf] %v3320
        %3397 = vst [vmem:[#allocation3 + $0x3ec] sm:$0xf] %v3323
        %3398 = vst [vmem:[#allocation3 + $0x410] sm:$0xf] %v3327
        %3399 = vst [vmem:[#allocation3 + $0x434] sm:$0xf] %v3330
        %3400 = vst [vmem:[#allocation3 + $0x458] sm:$0xf] %v3334
        %3401 = vst [vmem:[#allocation3 + $0x47c] sm:$0xf] %v3337
        %v3402 = vld [vmem:[#allocation3] sm:$0xff]
        %v3403 = vld [vmem:[#allocation3 + $0x8] sm:$0xff]
        %v3404 = vld [vmem:[#allocation3 + $0x10] sm:$0xff]
        %v3405 = vld [vmem:[#allocation3 + $0x18] sm:$0xff]
        %v3406 = vld [vmem:[#allocation3 + $0x20] sm:$0xf]
        %v3407 = vld [vmem:[#allocation3 + $0x24] sm:$0xff]
        %v3408 = vld [vmem:[#allocation3 + $0x2c] sm:$0xff]
        %v3409 = vld [vmem:[#allocation3 + $0x34] sm:$0xff]
        %v3410 = vld [vmem:[#allocation3 + $0x3c] sm:$0xff]
        %v3411 = vld [vmem:[#allocation3 + $0x44] sm:$0xf]
        %v3412 = vld [vmem:[#allocation3 + $0x48] sm:$0xff]
        %v3413 = vld [vmem:[#allocation3 + $0x50] sm:$0xff]
        %v3414 = vld [vmem:[#allocation3 + $0x58] sm:$0xff]
        %v3415 = vld [vmem:[#allocation3 + $0x60] sm:$0xff]
        %v3416 = vld [vmem:[#allocation3 + $0x68] sm:$0xf]
        %v3417 = vld [vmem:[#allocation3 + $0x6c] sm:$0xff]
        %v3418 = vld [vmem:[#allocation3 + $0x74] sm:$0xff]
        %v3419 = vld [vmem:[#allocation3 + $0x7c] sm:$0xff]
        %v3420 = vld [vmem:[#allocation3 + $0x84] sm:$0xff]
        %v3421 = vld [vmem:[#allocation3 + $0x8c] sm:$0xf]
        %v3422 = vld [vmem:[#allocation3 + $0x90] sm:$0xff]
        %v3423 = vld [vmem:[#allocation3 + $0x98] sm:$0xff]
        %v3424 = vld [vmem:[#allocation3 + $0xa0] sm:$0xff]
        %v3425 = vld [vmem:[#allocation3 + $0xa8] sm:$0xff]
        %v3426 = vld [vmem:[#allocation3 + $0xb0] sm:$0xf]
        %v3427 = vld [vmem:[#allocation3 + $0xb4] sm:$0xff]
        %v3428 = vld [vmem:[#allocation3 + $0xbc] sm:$0xff]
        %v3429 = vld [vmem:[#allocation3 + $0xc4] sm:$0xff]
        %v3430 = vld [vmem:[#allocation3 + $0xcc] sm:$0xff]
        %v3431 = vld [vmem:[#allocation3 + $0xd4] sm:$0xf]
        %v3432 = vld [vmem:[#allocation3 + $0xd8] sm:$0xff]
        %v3433 = vld [vmem:[#allocation3 + $0xe0] sm:$0xff]
        %v3434 = vld [vmem:[#allocation3 + $0xe8] sm:$0xff]
        %v3435 = vld [vmem:[#allocation3 + $0xf0] sm:$0xff]
        %v3436 = vld [vmem:[#allocation3 + $0xf8] sm:$0xf]
        %v3437 = vld [vmem:[#allocation3 + $0xfc] sm:$0xff]
        %v3438 = vld [vmem:[#allocation3 + $0x104] sm:$0xff]
        %v3439 = vld [vmem:[#allocation3 + $0x10c] sm:$0xff]
        %v3440 = vld [vmem:[#allocation3 + $0x114] sm:$0xff]
        %v3441 = vld [vmem:[#allocation3 + $0x11c] sm:$0xf]
        %v3442 = vld [vmem:[#allocation3 + $0x120] sm:$0xff]
        %v3443 = vld [vmem:[#allocation3 + $0x128] sm:$0xff]
        %v3444 = vld [vmem:[#allocation3 + $0x130] sm:$0xff]
        %v3445 = vld [vmem:[#allocation3 + $0x138] sm:$0xff]
        %v3446 = vld [vmem:[#allocation3 + $0x140] sm:$0xf]
        %v3447 = vld [vmem:[#allocation3 + $0x144] sm:$0xff]
        %v3448 = vld [vmem:[#allocation3 + $0x14c] sm:$0xff]
        %v3449 = vld [vmem:[#allocation3 + $0x154] sm:$0xff]
        %v3450 = vld [vmem:[#allocation3 + $0x15c] sm:$0xff]
        %v3451 = vld [vmem:[#allocation3 + $0x164] sm:$0xf]
        %v3452 = vld [vmem:[#allocation3 + $0x168] sm:$0xff]
        %v3453 = vld [vmem:[#allocation3 + $0x170] sm:$0xff]
        %v3454 = vld [vmem:[#allocation3 + $0x178] sm:$0xff]
        %v3455 = vld [vmem:[#allocation3 + $0x180] sm:$0xff]
        %v3456 = vld [vmem:[#allocation3 + $0x188] sm:$0xf]
        %v3457 = vld [vmem:[#allocation3 + $0x18c] sm:$0xff]
        %v3458 = vld [vmem:[#allocation3 + $0x194] sm:$0xff]
        %v3459 = vld [vmem:[#allocation3 + $0x19c] sm:$0xff]
        %v3460 = vld [vmem:[#allocation3 + $0x1a4] sm:$0xff]
        %v3461 = vld [vmem:[#allocation3 + $0x1ac] sm:$0xf]
        %v3462 = vld [vmem:[#allocation3 + $0x1b0] sm:$0xff]
        %v3463 = vld [vmem:[#allocation3 + $0x1b8] sm:$0xff]
        %v3464 = vld [vmem:[#allocation3 + $0x1c0] sm:$0xff]
        %v3465 = vld [vmem:[#allocation3 + $0x1c8] sm:$0xff]
        %v3466 = vld [vmem:[#allocation3 + $0x1d0] sm:$0xf]
        %v3467 = vld [vmem:[#allocation3 + $0x1d4] sm:$0xff]
        %v3468 = vld [vmem:[#allocation3 + $0x1dc] sm:$0xff]
        %v3469 = vld [vmem:[#allocation3 + $0x1e4] sm:$0xff]
        %v3470 = vld [vmem:[#allocation3 + $0x1ec] sm:$0xff]
        %v3471 = vld [vmem:[#allocation3 + $0x1f4] sm:$0xf]
        %v3472 = vld [vmem:[#allocation3 + $0x1f8] sm:$0xff]
        %v3473 = vld [vmem:[#allocation3 + $0x200] sm:$0xff]
        %v3474 = vld [vmem:[#allocation3 + $0x208] sm:$0xff]
        %v3475 = vld [vmem:[#allocation3 + $0x210] sm:$0xff]
        %v3476 = vld [vmem:[#allocation3 + $0x218] sm:$0xf]
        %v3477 = vld [vmem:[#allocation3 + $0x21c] sm:$0xff]
        %v3478 = vld [vmem:[#allocation3 + $0x224] sm:$0xff]
        %v3479 = vld [vmem:[#allocation3 + $0x22c] sm:$0xff]
        %v3480 = vld [vmem:[#allocation3 + $0x234] sm:$0xff]
        %v3481 = vld [vmem:[#allocation3 + $0x23c] sm:$0xf]
        %v3482 = vld [vmem:[#allocation3 + $0x240] sm:$0xff]
        %v3483 = vld [vmem:[#allocation3 + $0x248] sm:$0xff]
        %v3484 = vld [vmem:[#allocation3 + $0x250] sm:$0xff]
        %v3485 = vld [vmem:[#allocation3 + $0x258] sm:$0xff]
        %v3486 = vld [vmem:[#allocation3 + $0x260] sm:$0xf]
        %v3487 = vld [vmem:[#allocation3 + $0x264] sm:$0xff]
        %v3488 = vld [vmem:[#allocation3 + $0x26c] sm:$0xff]
        %v3489 = vld [vmem:[#allocation3 + $0x274] sm:$0xff]
        %v3490 = vld [vmem:[#allocation3 + $0x27c] sm:$0xff]
        %v3491 = vld [vmem:[#allocation3 + $0x284] sm:$0xf]
        %v3492 = vld [vmem:[#allocation3 + $0x288] sm:$0xff]
        %v3493 = vld [vmem:[#allocation3 + $0x290] sm:$0xff]
        %v3494 = vld [vmem:[#allocation3 + $0x298] sm:$0xff]
        %v3495 = vld [vmem:[#allocation3 + $0x2a0] sm:$0xff]
        %v3496 = vld [vmem:[#allocation3 + $0x2a8] sm:$0xf]
        %v3497 = vld [vmem:[#allocation3 + $0x2ac] sm:$0xff]
        %v3498 = vld [vmem:[#allocation3 + $0x2b4] sm:$0xff]
        %v3499 = vld [vmem:[#allocation3 + $0x2bc] sm:$0xff]
        %v3500 = vld [vmem:[#allocation3 + $0x2c4] sm:$0xff]
        %v3501 = vld [vmem:[#allocation3 + $0x2cc] sm:$0xf]
        %v3502 = vld [vmem:[#allocation3 + $0x2d0] sm:$0xff]
        %v3503 = vld [vmem:[#allocation3 + $0x2d8] sm:$0xff]
        %v3504 = vld [vmem:[#allocation3 + $0x2e0] sm:$0xff]
        %v3505 = vld [vmem:[#allocation3 + $0x2e8] sm:$0xff]
        %v3506 = vld [vmem:[#allocation3 + $0x2f0] sm:$0xf]
        %v3507 = vld [vmem:[#allocation3 + $0x2f4] sm:$0xff]
        %v3508 = vld [vmem:[#allocation3 + $0x2fc] sm:$0xff]
        %v3509 = vld [vmem:[#allocation3 + $0x304] sm:$0xff]
        %v3510 = vld [vmem:[#allocation3 + $0x30c] sm:$0xff]
        %v3511 = vld [vmem:[#allocation3 + $0x314] sm:$0xf]
        %v3512 = vld [vmem:[#allocation3 + $0x318] sm:$0xff]
        %v3513 = vld [vmem:[#allocation3 + $0x320] sm:$0xff]
        %v3514 = vld [vmem:[#allocation3 + $0x328] sm:$0xff]
        %v3515 = vld [vmem:[#allocation3 + $0x330] sm:$0xff]
        %v3516 = vld [vmem:[#allocation3 + $0x338] sm:$0xf]
        %v3517 = vld [vmem:[#allocation3 + $0x33c] sm:$0xff]
        %v3518 = vld [vmem:[#allocation3 + $0x344] sm:$0xff]
        %v3519 = vld [vmem:[#allocation3 + $0x34c] sm:$0xff]
        %v3520 = vld [vmem:[#allocation3 + $0x354] sm:$0xff]
        %v3521 = vld [vmem:[#allocation3 + $0x35c] sm:$0xf]
        %v3522 = vld [vmem:[#allocation3 + $0x360] sm:$0xff]
        %v3523 = vld [vmem:[#allocation3 + $0x368] sm:$0xff]
        %v3524 = vld [vmem:[#allocation3 + $0x370] sm:$0xff]
        %v3525 = vld [vmem:[#allocation3 + $0x378] sm:$0xff]
        %v3526 = vld [vmem:[#allocation3 + $0x380] sm:$0xf]
        %v3527 = vld [vmem:[#allocation3 + $0x384] sm:$0xff]
        %v3528 = vld [vmem:[#allocation3 + $0x38c] sm:$0xff]
        %v3529 = vld [vmem:[#allocation3 + $0x394] sm:$0xff]
        %v3530 = vld [vmem:[#allocation3 + $0x39c] sm:$0xff]
        %v3531 = vld [vmem:[#allocation3 + $0x3a4] sm:$0xf]
        %v3532 = vld [vmem:[#allocation3 + $0x3a8] sm:$0xff]
        %v3533 = vld [vmem:[#allocation3 + $0x3b0] sm:$0xff]
        %v3534 = vld [vmem:[#allocation3 + $0x3b8] sm:$0xff]
        %v3535 = vld [vmem:[#allocation3 + $0x3c0] sm:$0xff]
        %v3536 = vld [vmem:[#allocation3 + $0x3c8] sm:$0xf]
        %v3537 = vld [vmem:[#allocation3 + $0x3cc] sm:$0xff]
        %v3538 = vld [vmem:[#allocation3 + $0x3d4] sm:$0xff]
        %v3539 = vld [vmem:[#allocation3 + $0x3dc] sm:$0xff]
        %v3540 = vld [vmem:[#allocation3 + $0x3e4] sm:$0xff]
        %v3541 = vld [vmem:[#allocation3 + $0x3ec] sm:$0xf]
        %v3542 = vld [vmem:[#allocation3 + $0x3f0] sm:$0xff]
        %v3543 = vld [vmem:[#allocation3 + $0x3f8] sm:$0xff]
        %v3544 = vld [vmem:[#allocation3 + $0x400] sm:$0xff]
        %v3545 = vld [vmem:[#allocation3 + $0x408] sm:$0xff]
        %v3546 = vld [vmem:[#allocation3 + $0x410] sm:$0xf]
        %v3547 = vld [vmem:[#allocation3 + $0x414] sm:$0xff]
        %v3548 = vld [vmem:[#allocation3 + $0x41c] sm:$0xff]
        %v3549 = vld [vmem:[#allocation3 + $0x424] sm:$0xff]
        %v3550 = vld [vmem:[#allocation3 + $0x42c] sm:$0xff]
        %v3551 = vld [vmem:[#allocation3 + $0x434] sm:$0xf]
        %v3552 = vld [vmem:[#allocation3 + $0x438] sm:$0xff]
        %v3553 = vld [vmem:[#allocation3 + $0x440] sm:$0xff]
        %v3554 = vld [vmem:[#allocation3 + $0x448] sm:$0xff]
        %v3555 = vld [vmem:[#allocation3 + $0x450] sm:$0xff]
        %v3556 = vld [vmem:[#allocation3 + $0x458] sm:$0xf]
        %v3557 = vld [vmem:[#allocation3 + $0x45c] sm:$0xff]
        %v3558 = vld [vmem:[#allocation3 + $0x464] sm:$0xff]
        %v3559 = vld [vmem:[#allocation3 + $0x46c] sm:$0xff]
        %v3560 = vld [vmem:[#allocation3 + $0x474] sm:$0xff]
        %v3561 = vld [vmem:[#allocation3 + $0x47c] sm:$0xf]
        %v3562 = vld [vmem:[%s1] sm:$0xf]
        %v3563 = vld [vmem:[%s1 + $0x4] sm:$0xf]
        %v3564 = vld [vmem:[%s1 + $0x8] sm:$0xf]
        %v3565 = vld [vmem:[%s1 + $0xc] sm:$0xf]
        %v3566 = vld [vmem:[%s1 + $0x10] sm:$0xf]
        %v3567 = vld [vmem:[%s1 + $0x14] sm:$0xf]
        %v3568 = vld [vmem:[%s1 + $0x18] sm:$0xf]
        %v3569 = vld [vmem:[%s1 + $0x1c] sm:$0xf]
        %v3570 = vld [vmem:[%s1 + $0x20] sm:$0xf]
        %v3571 = vld [vmem:[%s1 + $0x24] sm:$0xf]
        %v3572 = vld [vmem:[%s1 + $0x28] sm:$0xf]
        %v3573 = vld [vmem:[%s1 + $0x2c] sm:$0xf]
        %v3574 = vld [vmem:[%s1 + $0x30] sm:$0xf]
        %v3575 = vld [vmem:[%s1 + $0x34] sm:$0xf]
        %v3576 = vld [vmem:[%s1 + $0x38] sm:$0xf]
        %v3577 = vld [vmem:[%s1 + $0x3c] sm:$0xf]
        %v3578 = vld [vmem:[%s1 + $0x40] sm:$0xf]
        %v3579 = vld [vmem:[%s1 + $0x44] sm:$0xf]
        %v3580 = vld [vmem:[%s1 + $0x48] sm:$0xf]
        %v3581 = vld [vmem:[%s1 + $0x4c] sm:$0xf]
        %v3582 = vld [vmem:[%s1 + $0x50] sm:$0xf]
        %v3583 = vld [vmem:[%s1 + $0x54] sm:$0xf]
        %v3584 = vld [vmem:[%s1 + $0x58] sm:$0xf]
        %v3585 = vld [vmem:[%s1 + $0x5c] sm:$0xf]
        %v3586 = vld [vmem:[%s1 + $0x60] sm:$0xf]
        %v3587 = vld [vmem:[%s1 + $0x64] sm:$0xf]
        %v3588 = vld [vmem:[%s1 + $0x68] sm:$0xf]
        %v3589 = vld [vmem:[%s1 + $0x6c] sm:$0xf]
        %v3590 = vld [vmem:[%s1 + $0x70] sm:$0xf]
        %v3591 = vld [vmem:[%s1 + $0x74] sm:$0xf]
        %v3592 = vld [vmem:[%s1 + $0x78] sm:$0xf]
        %v3593 = vld [vmem:[%s1 + $0x7c] sm:$0xf]
        %v3594 = vld [vmem:[%s1 + $0x80] sm:$0xf]
        %v3595 = vld [vmem:[%s1 + $0x84] sm:$0xf]
        %v3596 = vld [vmem:[%s1 + $0x88] sm:$0xf]
        %v3597 = vld [vmem:[%s1 + $0x8c] sm:$0xf]
        %v3598 = vld [vmem:[%s1 + $0x90] sm:$0xf]
        %v3599 = vld [vmem:[%s1 + $0x94] sm:$0xf]
        %v3600 = vld [vmem:[%s1 + $0x98] sm:$0xf]
        %v3601 = vld [vmem:[%s1 + $0x9c] sm:$0xf]
        %v3602 = vld [vmem:[%s1 + $0xa0] sm:$0xf]
        %v3603 = vld [vmem:[%s1 + $0xa4] sm:$0xf]
        %v3604 = vld [vmem:[%s1 + $0xa8] sm:$0xf]
        %v3605 = vld [vmem:[%s1 + $0xac] sm:$0xf]
        %v3606 = vld [vmem:[%s1 + $0xb0] sm:$0xf]
        %v3607 = vld [vmem:[%s1 + $0xb4] sm:$0xf]
        %v3608 = vld [vmem:[%s1 + $0xb8] sm:$0xf]
        %v3609 = vld [vmem:[%s1 + $0xbc] sm:$0xf]
        %v3610 = vld [vmem:[%s1 + $0xc0] sm:$0xf]
        %v3611 = vld [vmem:[%s1 + $0xc4] sm:$0xf]
        %v3612 = vld [vmem:[%s1 + $0xc8] sm:$0xf]
        %v3613 = vld [vmem:[%s1 + $0xcc] sm:$0xf]
        %v3614 = vld [vmem:[%s1 + $0xd0] sm:$0xf]
        %v3615 = vld [vmem:[%s1 + $0xd4] sm:$0xf]
        %v3616 = vld [vmem:[%s1 + $0xd8] sm:$0xf]
        %v3617 = vld [vmem:[%s1 + $0xdc] sm:$0xf]
        %v3618 = vld [vmem:[%s1 + $0xe0] sm:$0xf]
        %v3619 = vld [vmem:[%s1 + $0xe4] sm:$0xf]
        %v3620 = vld [vmem:[%s1 + $0xe8] sm:$0xf]
        %v3621 = vld [vmem:[%s1 + $0xec] sm:$0xf]
        %v3622 = vld [vmem:[%s1 + $0xf0] sm:$0xf]
        %v3623 = vld [vmem:[%s1 + $0xf4] sm:$0xf]
        %v3624 = vld [vmem:[%s1 + $0xf8] sm:$0xf]
        %v3625 = vld [vmem:[%s1 + $0xfc] sm:$0xf]
        %v3626 = vld [vmem:[%s1 + $0x100] sm:$0xf]
        %v3627 = vld [vmem:[%s1 + $0x104] sm:$0xf]
        %v3628 = vld [vmem:[%s1 + $0x108] sm:$0xf]
        %v3629 = vld [vmem:[%s1 + $0x10c] sm:$0xf]
        %v3630 = vld [vmem:[%s1 + $0x110] sm:$0xf]
        %v3631 = vld [vmem:[%s1 + $0x114] sm:$0xf]
        %v3632 = vld [vmem:[%s1 + $0x118] sm:$0xf]
        %v3633 = vld [vmem:[%s1 + $0x11c] sm:$0xf]
        %v3634 = vld [vmem:[%s1 + $0x120] sm:$0xf]
        %v3635 = vld [vmem:[%s1 + $0x124] sm:$0xf]
        %v3636 = vld [vmem:[%s1 + $0x128] sm:$0xf]
        %v3637 = vld [vmem:[%s1 + $0x12c] sm:$0xf]
        %v3638 = vld [vmem:[%s1 + $0x130] sm:$0xf]
        %v3639 = vld [vmem:[%s1 + $0x134] sm:$0xf]
        %v3640 = vld [vmem:[%s1 + $0x138] sm:$0xf]
        %v3641 = vld [vmem:[%s1 + $0x13c] sm:$0xf]
        %v3642 = vld [vmem:[%s1 + $0x140] sm:$0xf]
        %v3643 = vld [vmem:[%s1 + $0x144] sm:$0xf]
        %v3644 = vld [vmem:[%s1 + $0x148] sm:$0xf]
        %v3645 = vld [vmem:[%s1 + $0x14c] sm:$0xf]
        %v3646 = vld [vmem:[%s1 + $0x150] sm:$0xf]
        %v3647 = vld [vmem:[%s1 + $0x154] sm:$0xf]
        %v3648 = vld [vmem:[%s1 + $0x158] sm:$0xf]
        %v3649 = vld [vmem:[%s1 + $0x15c] sm:$0xf]
        %v3650 = vld [vmem:[%s1 + $0x160] sm:$0xf]
        %v3651 = vld [vmem:[%s1 + $0x164] sm:$0xf]
        %v3652 = vld [vmem:[%s1 + $0x168] sm:$0xf]
        %v3653 = vld [vmem:[%s1 + $0x16c] sm:$0xf]
        %v3654 = vld [vmem:[%s1 + $0x170] sm:$0xf]
        %v3655 = vld [vmem:[%s1 + $0x174] sm:$0xf]
        %v3656 = vld [vmem:[%s1 + $0x178] sm:$0xf]
        %v3657 = vld [vmem:[%s1 + $0x17c] sm:$0xf]
        %v3658 = vld [vmem:[%s1 + $0x180] sm:$0xf]
        %v3659 = vld [vmem:[%s1 + $0x184] sm:$0xf]
        %v3660 = vld [vmem:[%s1 + $0x188] sm:$0xf]
        %v3661 = vld [vmem:[%s1 + $0x18c] sm:$0xf]
        %v3662 = vld [vmem:[%s1 + $0x190] sm:$0xf]
        %v3663 = vld [vmem:[%s1 + $0x194] sm:$0xf]
        %v3664 = vld [vmem:[%s1 + $0x198] sm:$0xf]
        %v3665 = vld [vmem:[%s1 + $0x19c] sm:$0xf]
        %v3666 = vld [vmem:[%s1 + $0x1a0] sm:$0xf]
        %v3667 = vld [vmem:[%s1 + $0x1a4] sm:$0xf]
        %v3668 = vld [vmem:[%s1 + $0x1a8] sm:$0xf]
        %v3669 = vld [vmem:[%s1 + $0x1ac] sm:$0xf]
        %v3670 = vld [vmem:[%s1 + $0x1b0] sm:$0xf]
        %v3671 = vld [vmem:[%s1 + $0x1b4] sm:$0xf]
        %v3672 = vld [vmem:[%s1 + $0x1b8] sm:$0xf]
        %v3673 = vld [vmem:[%s1 + $0x1bc] sm:$0xf]
        %v3674 = vld [vmem:[%s1 + $0x1c0] sm:$0xf]
        %v3675 = vld [vmem:[%s1 + $0x1c4] sm:$0xf]
        %v3676 = vld [vmem:[%s1 + $0x1c8] sm:$0xf]
        %v3677 = vld [vmem:[%s1 + $0x1cc] sm:$0xf]
        %v3678 = vld [vmem:[%s1 + $0x1d0] sm:$0xf]
        %v3679 = vld [vmem:[%s1 + $0x1d4] sm:$0xf]
        %v3680 = vld [vmem:[%s1 + $0x1d8] sm:$0xf]
        %v3681 = vld [vmem:[%s1 + $0x1dc] sm:$0xf]
        %v3682 = vld [vmem:[%s1 + $0x1e0] sm:$0xf]
        %v3683 = vld [vmem:[%s1 + $0x1e4] sm:$0xf]
        %v3684 = vld [vmem:[%s1 + $0x1e8] sm:$0xf]
        %v3685 = vld [vmem:[%s1 + $0x1ec] sm:$0xf]
        %v3686 = vld [vmem:[%s1 + $0x1f0] sm:$0xf]
        %v3687 = vld [vmem:[%s1 + $0x1f4] sm:$0xf]
        %v3688 = vld [vmem:[%s1 + $0x1f8] sm:$0xf]
        %v3689 = vld [vmem:[%s1 + $0x1fc] sm:$0xf]
        %v3690 = vld [vmem:[%s1 + $0x200] sm:$0xf]
        %v3691 = vld [vmem:[%s1 + $0x204] sm:$0xf]
        %v3692 = vld [vmem:[%s1 + $0x208] sm:$0xf]
        %v3693 = vld [vmem:[%s1 + $0x20c] sm:$0xf]
        %v3694 = vld [vmem:[%s1 + $0x210] sm:$0xf]
        %v3695 = vld [vmem:[%s1 + $0x214] sm:$0xf]
        %v3696 = vld [vmem:[%s1 + $0x218] sm:$0xf]
        %v3697 = vld [vmem:[%s1 + $0x21c] sm:$0xf]
        %v3698 = vld [vmem:[%s1 + $0x220] sm:$0xf]
        %v3699 = vld [vmem:[%s1 + $0x224] sm:$0xf]
        %v3700 = vld [vmem:[%s1 + $0x228] sm:$0xf]
        %v3701 = vld [vmem:[%s1 + $0x22c] sm:$0xf]
        %v3702 = vld [vmem:[%s1 + $0x230] sm:$0xf]
        %v3703 = vld [vmem:[%s1 + $0x234] sm:$0xf]
        %v3704 = vld [vmem:[%s1 + $0x238] sm:$0xf]
        %v3705 = vld [vmem:[%s1 + $0x23c] sm:$0xf]
        %v3866 = vunpack.c.l.b16 %v3402
        %v3867 = vunpack.c.h.b16 %v3402
        %v3868 = vunpack.c.l.b16 %v3403
        %v3869 = vunpack.c.h.b16 %v3403
        %v3870 = vunpack.c.l.b16 %v3404
        %v3871 = vunpack.c.h.b16 %v3404
        %v3872 = vunpack.c.l.b16 %v3405
        %v3873 = vunpack.c.h.b16 %v3405
        %v3874 = vunpack.c.l.b16 %v3406
        %v3875 = vunpack.c.l.b16 %v3407
        %v3876 = vunpack.c.h.b16 %v3407
        %v3877 = vunpack.c.l.b16 %v3408
        %v3878 = vunpack.c.h.b16 %v3408
        %v3879 = vunpack.c.l.b16 %v3409
        %v3880 = vunpack.c.h.b16 %v3409
        %v3881 = vunpack.c.l.b16 %v3410
        %v3882 = vunpack.c.h.b16 %v3410
        %v3883 = vunpack.c.l.b16 %v3411
        %v3884 = vunpack.c.l.b16 %v3412
        %v3885 = vunpack.c.h.b16 %v3412
        %v3886 = vunpack.c.l.b16 %v3413
        %v3887 = vunpack.c.h.b16 %v3413
        %v3888 = vunpack.c.l.b16 %v3414
        %v3889 = vunpack.c.h.b16 %v3414
        %v3890 = vunpack.c.l.b16 %v3415
        %v3891 = vunpack.c.h.b16 %v3415
        %v3892 = vunpack.c.l.b16 %v3416
        %v3893 = vunpack.c.l.b16 %v3417
        %v3894 = vunpack.c.h.b16 %v3417
        %v3895 = vunpack.c.l.b16 %v3418
        %v3896 = vunpack.c.h.b16 %v3418
        %v3897 = vunpack.c.l.b16 %v3419
        %v3898 = vunpack.c.h.b16 %v3419
        %v3899 = vunpack.c.l.b16 %v3420
        %v3900 = vunpack.c.h.b16 %v3420
        %v3901 = vunpack.c.l.b16 %v3421
        %v3902 = vunpack.c.l.b16 %v3422
        %v3903 = vunpack.c.h.b16 %v3422
        %v3904 = vunpack.c.l.b16 %v3423
        %v3905 = vunpack.c.h.b16 %v3423
        %v3906 = vunpack.c.l.b16 %v3424
        %v3907 = vunpack.c.h.b16 %v3424
        %v3908 = vunpack.c.l.b16 %v3425
        %v3909 = vunpack.c.h.b16 %v3425
        %v3910 = vunpack.c.l.b16 %v3426
        %v3911 = vunpack.c.l.b16 %v3427
        %v3912 = vunpack.c.h.b16 %v3427
        %v3913 = vunpack.c.l.b16 %v3428
        %v3914 = vunpack.c.h.b16 %v3428
        %v3915 = vunpack.c.l.b16 %v3429
        %v3916 = vunpack.c.h.b16 %v3429
        %v3917 = vunpack.c.l.b16 %v3430
        %v3918 = vunpack.c.h.b16 %v3430
        %v3919 = vunpack.c.l.b16 %v3431
        %v3920 = vunpack.c.l.b16 %v3432
        %v3921 = vunpack.c.h.b16 %v3432
        %v3922 = vunpack.c.l.b16 %v3433
        %v3923 = vunpack.c.h.b16 %v3433
        %v3924 = vunpack.c.l.b16 %v3434
        %v3925 = vunpack.c.h.b16 %v3434
        %v3926 = vunpack.c.l.b16 %v3435
        %v3927 = vunpack.c.h.b16 %v3435
        %v3928 = vunpack.c.l.b16 %v3436
        %v3929 = vunpack.c.l.b16 %v3437
        %v3930 = vunpack.c.h.b16 %v3437
        %v3931 = vunpack.c.l.b16 %v3438
        %v3932 = vunpack.c.h.b16 %v3438
        %v3933 = vunpack.c.l.b16 %v3439
        %v3934 = vunpack.c.h.b16 %v3439
        %v3935 = vunpack.c.l.b16 %v3440
        %v3936 = vunpack.c.h.b16 %v3440
        %v3937 = vunpack.c.l.b16 %v3441
        %v3938 = vunpack.c.l.b16 %v3442
        %v3939 = vunpack.c.h.b16 %v3442
        %v3940 = vunpack.c.l.b16 %v3443
        %v3941 = vunpack.c.h.b16 %v3443
        %v3942 = vunpack.c.l.b16 %v3444
        %v3943 = vunpack.c.h.b16 %v3444
        %v3944 = vunpack.c.l.b16 %v3445
        %v3945 = vunpack.c.h.b16 %v3445
        %v3946 = vunpack.c.l.b16 %v3446
        %v3947 = vunpack.c.l.b16 %v3447
        %v3948 = vunpack.c.h.b16 %v3447
        %v3949 = vunpack.c.l.b16 %v3448
        %v3950 = vunpack.c.h.b16 %v3448
        %v3951 = vunpack.c.l.b16 %v3449
        %v3952 = vunpack.c.h.b16 %v3449
        %v3953 = vunpack.c.l.b16 %v3450
        %v3954 = vunpack.c.h.b16 %v3450
        %v3955 = vunpack.c.l.b16 %v3451
        %v3956 = vunpack.c.l.b16 %v3452
        %v3957 = vunpack.c.h.b16 %v3452
        %v3958 = vunpack.c.l.b16 %v3453
        %v3959 = vunpack.c.h.b16 %v3453
        %v3960 = vunpack.c.l.b16 %v3454
        %v3961 = vunpack.c.h.b16 %v3454
        %v3962 = vunpack.c.l.b16 %v3455
        %v3963 = vunpack.c.h.b16 %v3455
        %v3964 = vunpack.c.l.b16 %v3456
        %v3965 = vunpack.c.l.b16 %v3457
        %v3966 = vunpack.c.h.b16 %v3457
        %v3967 = vunpack.c.l.b16 %v3458
        %v3968 = vunpack.c.h.b16 %v3458
        %v3969 = vunpack.c.l.b16 %v3459
        %v3970 = vunpack.c.h.b16 %v3459
        %v3971 = vunpack.c.l.b16 %v3460
        %v3972 = vunpack.c.h.b16 %v3460
        %v3973 = vunpack.c.l.b16 %v3461
        %v3974 = vunpack.c.l.b16 %v3462
        %v3975 = vunpack.c.h.b16 %v3462
        %v3976 = vunpack.c.l.b16 %v3463
        %v3977 = vunpack.c.h.b16 %v3463
        %v3978 = vunpack.c.l.b16 %v3464
        %v3979 = vunpack.c.h.b16 %v3464
        %v3980 = vunpack.c.l.b16 %v3465
        %v3981 = vunpack.c.h.b16 %v3465
        %v3982 = vunpack.c.l.b16 %v3466
        %v3983 = vunpack.c.l.b16 %v3467
        %v3984 = vunpack.c.h.b16 %v3467
        %v3985 = vunpack.c.l.b16 %v3468
        %v3986 = vunpack.c.h.b16 %v3468
        %v3987 = vunpack.c.l.b16 %v3469
        %v3988 = vunpack.c.h.b16 %v3469
        %v3989 = vunpack.c.l.b16 %v3470
        %v3990 = vunpack.c.h.b16 %v3470
        %v3991 = vunpack.c.l.b16 %v3471
        %v3992 = vunpack.c.l.b16 %v3472
        %v3993 = vunpack.c.h.b16 %v3472
        %v3994 = vunpack.c.l.b16 %v3473
        %v3995 = vunpack.c.h.b16 %v3473
        %v3996 = vunpack.c.l.b16 %v3474
        %v3997 = vunpack.c.h.b16 %v3474
        %v3998 = vunpack.c.l.b16 %v3475
        %v3999 = vunpack.c.h.b16 %v3475
        %v4000 = vunpack.c.l.b16 %v3476
        %v4001 = vunpack.c.l.b16 %v3477
        %v4002 = vunpack.c.h.b16 %v3477
        %v4003 = vunpack.c.l.b16 %v3478
        %v4004 = vunpack.c.h.b16 %v3478
        %v4005 = vunpack.c.l.b16 %v3479
        %v4006 = vunpack.c.h.b16 %v3479
        %v4007 = vunpack.c.l.b16 %v3480
        %v4008 = vunpack.c.h.b16 %v3480
        %v4009 = vunpack.c.l.b16 %v3481
        %v4010 = vunpack.c.l.b16 %v3482
        %v4011 = vunpack.c.h.b16 %v3482
        %v4012 = vunpack.c.l.b16 %v3483
        %v4013 = vunpack.c.h.b16 %v3483
        %v4014 = vunpack.c.l.b16 %v3484
        %v4015 = vunpack.c.h.b16 %v3484
        %v4016 = vunpack.c.l.b16 %v3485
        %v4017 = vunpack.c.h.b16 %v3485
        %v4018 = vunpack.c.l.b16 %v3486
        %v4019 = vunpack.c.l.b16 %v3487
        %v4020 = vunpack.c.h.b16 %v3487
        %v4021 = vunpack.c.l.b16 %v3488
        %v4022 = vunpack.c.h.b16 %v3488
        %v4023 = vunpack.c.l.b16 %v3489
        %v4024 = vunpack.c.h.b16 %v3489
        %v4025 = vunpack.c.l.b16 %v3490
        %v4026 = vunpack.c.h.b16 %v3490
        %v4027 = vunpack.c.l.b16 %v3491
        %v4028 = vunpack.c.l.b16 %v3492
        %v4029 = vunpack.c.h.b16 %v3492
        %v4030 = vunpack.c.l.b16 %v3493
        %v4031 = vunpack.c.h.b16 %v3493
        %v4032 = vunpack.c.l.b16 %v3494
        %v4033 = vunpack.c.h.b16 %v3494
        %v4034 = vunpack.c.l.b16 %v3495
        %v4035 = vunpack.c.h.b16 %v3495
        %v4036 = vunpack.c.l.b16 %v3496
        %v4037 = vunpack.c.l.b16 %v3497
        %v4038 = vunpack.c.h.b16 %v3497
        %v4039 = vunpack.c.l.b16 %v3498
        %v4040 = vunpack.c.h.b16 %v3498
        %v4041 = vunpack.c.l.b16 %v3499
        %v4042 = vunpack.c.h.b16 %v3499
        %v4043 = vunpack.c.l.b16 %v3500
        %v4044 = vunpack.c.h.b16 %v3500
        %v4045 = vunpack.c.l.b16 %v3501
        %v4046 = vunpack.c.l.b16 %v3502
        %v4047 = vunpack.c.h.b16 %v3502
        %v4048 = vunpack.c.l.b16 %v3503
        %v4049 = vunpack.c.h.b16 %v3503
        %v4050 = vunpack.c.l.b16 %v3504
        %v4051 = vunpack.c.h.b16 %v3504
        %v4052 = vunpack.c.l.b16 %v3505
        %v4053 = vunpack.c.h.b16 %v3505
        %v4054 = vunpack.c.l.b16 %v3506
        %v4055 = vunpack.c.l.b16 %v3507
        %v4056 = vunpack.c.h.b16 %v3507
        %v4057 = vunpack.c.l.b16 %v3508
        %v4058 = vunpack.c.h.b16 %v3508
        %v4059 = vunpack.c.l.b16 %v3509
        %v4060 = vunpack.c.h.b16 %v3509
        %v4061 = vunpack.c.l.b16 %v3510
        %v4062 = vunpack.c.h.b16 %v3510
        %v4063 = vunpack.c.l.b16 %v3511
        %v4064 = vunpack.c.l.b16 %v3512
        %v4065 = vunpack.c.h.b16 %v3512
        %v4066 = vunpack.c.l.b16 %v3513
        %v4067 = vunpack.c.h.b16 %v3513
        %v4068 = vunpack.c.l.b16 %v3514
        %v4069 = vunpack.c.h.b16 %v3514
        %v4070 = vunpack.c.l.b16 %v3515
        %v4071 = vunpack.c.h.b16 %v3515
        %v4072 = vunpack.c.l.b16 %v3516
        %v4073 = vunpack.c.l.b16 %v3517
        %v4074 = vunpack.c.h.b16 %v3517
        %v4075 = vunpack.c.l.b16 %v3518
        %v4076 = vunpack.c.h.b16 %v3518
        %v4077 = vunpack.c.l.b16 %v3519
        %v4078 = vunpack.c.h.b16 %v3519
        %v4079 = vunpack.c.l.b16 %v3520
        %v4080 = vunpack.c.h.b16 %v3520
        %v4081 = vunpack.c.l.b16 %v3521
        %v4082 = vunpack.c.l.b16 %v3522
        %v4083 = vunpack.c.h.b16 %v3522
        %v4084 = vunpack.c.l.b16 %v3523
        %v4085 = vunpack.c.h.b16 %v3523
        %v4086 = vunpack.c.l.b16 %v3524
        %v4087 = vunpack.c.h.b16 %v3524
        %v4088 = vunpack.c.l.b16 %v3525
        %v4089 = vunpack.c.h.b16 %v3525
        %v4090 = vunpack.c.l.b16 %v3526
        %v4091 = vunpack.c.l.b16 %v3527
        %v4092 = vunpack.c.h.b16 %v3527
        %v4093 = vunpack.c.l.b16 %v3528
        %v4094 = vunpack.c.h.b16 %v3528
        %v4095 = vunpack.c.l.b16 %v3529
        %v4096 = vunpack.c.h.b16 %v3529
        %v4097 = vunpack.c.l.b16 %v3530
        %v4098 = vunpack.c.h.b16 %v3530
        %v4099 = vunpack.c.l.b16 %v3531
        %v4100 = vunpack.c.l.b16 %v3532
        %v4101 = vunpack.c.h.b16 %v3532
        %v4102 = vunpack.c.l.b16 %v3533
        %v4103 = vunpack.c.h.b16 %v3533
        %v4104 = vunpack.c.l.b16 %v3534
        %v4105 = vunpack.c.h.b16 %v3534
        %v4106 = vunpack.c.l.b16 %v3535
        %v4107 = vunpack.c.h.b16 %v3535
        %v4108 = vunpack.c.l.b16 %v3536
        %v4109 = vunpack.c.l.b16 %v3537
        %v4110 = vunpack.c.h.b16 %v3537
        %v4111 = vunpack.c.l.b16 %v3538
        %v4112 = vunpack.c.h.b16 %v3538
        %v4113 = vunpack.c.l.b16 %v3539
        %v4114 = vunpack.c.h.b16 %v3539
        %v4115 = vunpack.c.l.b16 %v3540
        %v4116 = vunpack.c.h.b16 %v3540
        %v4117 = vunpack.c.l.b16 %v3541
        %v4118 = vunpack.c.l.b16 %v3542
        %v4119 = vunpack.c.h.b16 %v3542
        %v4120 = vunpack.c.l.b16 %v3543
        %v4121 = vunpack.c.h.b16 %v3543
        %v4122 = vunpack.c.l.b16 %v3544
        %v4123 = vunpack.c.h.b16 %v3544
        %v4124 = vunpack.c.l.b16 %v3545
        %v4125 = vunpack.c.h.b16 %v3545
        %v4126 = vunpack.c.l.b16 %v3546
        %v4127 = vunpack.c.l.b16 %v3547
        %v4128 = vunpack.c.h.b16 %v3547
        %v4129 = vunpack.c.l.b16 %v3548
        %v4130 = vunpack.c.h.b16 %v3548
        %v4131 = vunpack.c.l.b16 %v3549
        %v4132 = vunpack.c.h.b16 %v3549
        %v4133 = vunpack.c.l.b16 %v3550
        %v4134 = vunpack.c.h.b16 %v3550
        %v4135 = vunpack.c.l.b16 %v3551
        %v4136 = vunpack.c.l.b16 %v3552
        %v4137 = vunpack.c.h.b16 %v3552
        %v4138 = vunpack.c.l.b16 %v3553
        %v4139 = vunpack.c.h.b16 %v3553
        %v4140 = vunpack.c.l.b16 %v3554
        %v4141 = vunpack.c.h.b16 %v3554
        %v4142 = vunpack.c.l.b16 %v3555
        %v4143 = vunpack.c.h.b16 %v3555
        %v4144 = vunpack.c.l.b16 %v3556
        %v4145 = vunpack.c.l.b16 %v3557
        %v4146 = vunpack.c.h.b16 %v3557
        %v4147 = vunpack.c.l.b16 %v3558
        %v4148 = vunpack.c.h.b16 %v3558
        %v4149 = vunpack.c.l.b16 %v3559
        %v4150 = vunpack.c.h.b16 %v3559
        %v4151 = vunpack.c.l.b16 %v3560
        %v4152 = vunpack.c.h.b16 %v3560
        %v4153 = vunpack.c.l.b16 %v3561
        %v4154 = vpack.c.b16 %v3875, %v3866
        %v4155 = vpack.c.b16 %v3876, %v3867
        %v4156 = vpack.c.b16 %v3877, %v3868
        %v4157 = vpack.c.b16 %v3878, %v3869
        %v4158 = vpack.c.b16 %v3879, %v3870
        %v4159 = vpack.c.b16 %v3880, %v3871
        %v4160 = vpack.c.b16 %v3881, %v3872
        %v4161 = vpack.c.b16 %v3882, %v3873
        %v4162 = vpack.c.b16 %v3883, %v3874
        %v4163 = vpack.c.b16 %v3893, %v3884
        %v4164 = vpack.c.b16 %v3894, %v3885
        %v4165 = vpack.c.b16 %v3895, %v3886
        %v4166 = vpack.c.b16 %v3896, %v3887
        %v4167 = vpack.c.b16 %v3897, %v3888
        %v4168 = vpack.c.b16 %v3898, %v3889
        %v4169 = vpack.c.b16 %v3899, %v3890
        %v4170 = vpack.c.b16 %v3900, %v3891
        %v4171 = vpack.c.b16 %v3901, %v3892
        %v4172 = vpack.c.b16 %v3911, %v3902
        %v4173 = vpack.c.b16 %v3912, %v3903
        %v4174 = vpack.c.b16 %v3913, %v3904
        %v4175 = vpack.c.b16 %v3914, %v3905
        %v4176 = vpack.c.b16 %v3915, %v3906
        %v4177 = vpack.c.b16 %v3916, %v3907
        %v4178 = vpack.c.b16 %v3917, %v3908
        %v4179 = vpack.c.b16 %v3918, %v3909
        %v4180 = vpack.c.b16 %v3919, %v3910
        %v4181 = vpack.c.b16 %v3929, %v3920
        %v4182 = vpack.c.b16 %v3930, %v3921
        %v4183 = vpack.c.b16 %v3931, %v3922
        %v4184 = vpack.c.b16 %v3932, %v3923
        %v4185 = vpack.c.b16 %v3933, %v3924
        %v4186 = vpack.c.b16 %v3934, %v3925
        %v4187 = vpack.c.b16 %v3935, %v3926
        %v4188 = vpack.c.b16 %v3936, %v3927
        %v4189 = vpack.c.b16 %v3937, %v3928
        %v4190 = vpack.c.b16 %v3947, %v3938
        %v4191 = vpack.c.b16 %v3948, %v3939
        %v4192 = vpack.c.b16 %v3949, %v3940
        %v4193 = vpack.c.b16 %v3950, %v3941
        %v4194 = vpack.c.b16 %v3951, %v3942
        %v4195 = vpack.c.b16 %v3952, %v3943
        %v4196 = vpack.c.b16 %v3953, %v3944
        %v4197 = vpack.c.b16 %v3954, %v3945
        %v4198 = vpack.c.b16 %v3955, %v3946
        %v4199 = vpack.c.b16 %v3965, %v3956
        %v4200 = vpack.c.b16 %v3966, %v3957
        %v4201 = vpack.c.b16 %v3967, %v3958
        %v4202 = vpack.c.b16 %v3968, %v3959
        %v4203 = vpack.c.b16 %v3969, %v3960
        %v4204 = vpack.c.b16 %v3970, %v3961
        %v4205 = vpack.c.b16 %v3971, %v3962
        %v4206 = vpack.c.b16 %v3972, %v3963
        %v4207 = vpack.c.b16 %v3973, %v3964
        %v4208 = vpack.c.b16 %v3983, %v3974
        %v4209 = vpack.c.b16 %v3984, %v3975
        %v4210 = vpack.c.b16 %v3985, %v3976
        %v4211 = vpack.c.b16 %v3986, %v3977
        %v4212 = vpack.c.b16 %v3987, %v3978
        %v4213 = vpack.c.b16 %v3988, %v3979
        %v4214 = vpack.c.b16 %v3989, %v3980
        %v4215 = vpack.c.b16 %v3990, %v3981
        %v4216 = vpack.c.b16 %v3991, %v3982
        %v4217 = vpack.c.b16 %v4001, %v3992
        %v4218 = vpack.c.b16 %v4002, %v3993
        %v4219 = vpack.c.b16 %v4003, %v3994
        %v4220 = vpack.c.b16 %v4004, %v3995
        %v4221 = vpack.c.b16 %v4005, %v3996
        %v4222 = vpack.c.b16 %v4006, %v3997
        %v4223 = vpack.c.b16 %v4007, %v3998
        %v4224 = vpack.c.b16 %v4008, %v3999
        %v4225 = vpack.c.b16 %v4009, %v4000
        %v4226 = vpack.c.b16 %v4019, %v4010
        %v4227 = vpack.c.b16 %v4020, %v4011
        %v4228 = vpack.c.b16 %v4021, %v4012
        %v4229 = vpack.c.b16 %v4022, %v4013
        %v4230 = vpack.c.b16 %v4023, %v4014
        %v4231 = vpack.c.b16 %v4024, %v4015
        %v4232 = vpack.c.b16 %v4025, %v4016
        %v4233 = vpack.c.b16 %v4026, %v4017
        %v4234 = vpack.c.b16 %v4027, %v4018
        %v4235 = vpack.c.b16 %v4037, %v4028
        %v4236 = vpack.c.b16 %v4038, %v4029
        %v4237 = vpack.c.b16 %v4039, %v4030
        %v4238 = vpack.c.b16 %v4040, %v4031
        %v4239 = vpack.c.b16 %v4041, %v4032
        %v4240 = vpack.c.b16 %v4042, %v4033
        %v4241 = vpack.c.b16 %v4043, %v4034
        %v4242 = vpack.c.b16 %v4044, %v4035
        %v4243 = vpack.c.b16 %v4045, %v4036
        %v4244 = vpack.c.b16 %v4055, %v4046
        %v4245 = vpack.c.b16 %v4056, %v4047
        %v4246 = vpack.c.b16 %v4057, %v4048
        %v4247 = vpack.c.b16 %v4058, %v4049
        %v4248 = vpack.c.b16 %v4059, %v4050
        %v4249 = vpack.c.b16 %v4060, %v4051
        %v4250 = vpack.c.b16 %v4061, %v4052
        %v4251 = vpack.c.b16 %v4062, %v4053
        %v4252 = vpack.c.b16 %v4063, %v4054
        %v4253 = vpack.c.b16 %v4073, %v4064
        %v4254 = vpack.c.b16 %v4074, %v4065
        %v4255 = vpack.c.b16 %v4075, %v4066
        %v4256 = vpack.c.b16 %v4076, %v4067
        %v4257 = vpack.c.b16 %v4077, %v4068
        %v4258 = vpack.c.b16 %v4078, %v4069
        %v4259 = vpack.c.b16 %v4079, %v4070
        %v4260 = vpack.c.b16 %v4080, %v4071
        %v4261 = vpack.c.b16 %v4081, %v4072
        %v4262 = vpack.c.b16 %v4091, %v4082
        %v4263 = vpack.c.b16 %v4092, %v4083
        %v4264 = vpack.c.b16 %v4093, %v4084
        %v4265 = vpack.c.b16 %v4094, %v4085
        %v4266 = vpack.c.b16 %v4095, %v4086
        %v4267 = vpack.c.b16 %v4096, %v4087
        %v4268 = vpack.c.b16 %v4097, %v4088
        %v4269 = vpack.c.b16 %v4098, %v4089
        %v4270 = vpack.c.b16 %v4099, %v4090
        %v4271 = vpack.c.b16 %v4109, %v4100
        %v4272 = vpack.c.b16 %v4110, %v4101
        %v4273 = vpack.c.b16 %v4111, %v4102
        %v4274 = vpack.c.b16 %v4112, %v4103
        %v4275 = vpack.c.b16 %v4113, %v4104
        %v4276 = vpack.c.b16 %v4114, %v4105
        %v4277 = vpack.c.b16 %v4115, %v4106
        %v4278 = vpack.c.b16 %v4116, %v4107
        %v4279 = vpack.c.b16 %v4117, %v4108
        %v4280 = vpack.c.b16 %v4127, %v4118
        %v4281 = vpack.c.b16 %v4128, %v4119
        %v4282 = vpack.c.b16 %v4129, %v4120
        %v4283 = vpack.c.b16 %v4130, %v4121
        %v4284 = vpack.c.b16 %v4131, %v4122
        %v4285 = vpack.c.b16 %v4132, %v4123
        %v4286 = vpack.c.b16 %v4133, %v4124
        %v4287 = vpack.c.b16 %v4134, %v4125
        %v4288 = vpack.c.b16 %v4135, %v4126
        %v4289 = vpack.c.b16 %v4145, %v4136
        %v4290 = vpack.c.b16 %v4146, %v4137
        %v4291 = vpack.c.b16 %v4147, %v4138
        %v4292 = vpack.c.b16 %v4148, %v4139
        %v4293 = vpack.c.b16 %v4149, %v4140
        %v4294 = vpack.c.b16 %v4150, %v4141
        %v4295 = vpack.c.b16 %v4151, %v4142
        %v4296 = vpack.c.b16 %v4152, %v4143
        %v4297 = vpack.c.b16 %v4153, %v4144
        %v4586 = vunpack.c.l.b16 %v3562
        %v4587 = vunpack.c.l.b16 %v3563
        %v4588 = vunpack.c.l.b16 %v3564
        %v4589 = vunpack.c.l.b16 %v3565
        %v4590 = vunpack.c.l.b16 %v3566
        %v4591 = vunpack.c.l.b16 %v3567
        %v4592 = vunpack.c.l.b16 %v3568
        %v4593 = vunpack.c.l.b16 %v3569
        %v4594 = vunpack.c.l.b16 %v3570
        %v4595 = vunpack.c.l.b16 %v3571
        %v4596 = vunpack.c.l.b16 %v3572
        %v4597 = vunpack.c.l.b16 %v3573
        %v4598 = vunpack.c.l.b16 %v3574
        %v4599 = vunpack.c.l.b16 %v3575
        %v4600 = vunpack.c.l.b16 %v3576
        %v4601 = vunpack.c.l.b16 %v3577
        %v4602 = vunpack.c.l.b16 %v3578
        %v4603 = vunpack.c.l.b16 %v3579
        %v4604 = vunpack.c.l.b16 %v3580
        %v4605 = vunpack.c.l.b16 %v3581
        %v4606 = vunpack.c.l.b16 %v3582
        %v4607 = vunpack.c.l.b16 %v3583
        %v4608 = vunpack.c.l.b16 %v3584
        %v4609 = vunpack.c.l.b16 %v3585
        %v4610 = vunpack.c.l.b16 %v3586
        %v4611 = vunpack.c.l.b16 %v3587
        %v4612 = vunpack.c.l.b16 %v3588
        %v4613 = vunpack.c.l.b16 %v3589
        %v4614 = vunpack.c.l.b16 %v3590
        %v4615 = vunpack.c.l.b16 %v3591
        %v4616 = vunpack.c.l.b16 %v3592
        %v4617 = vunpack.c.l.b16 %v3593
        %v4618 = vunpack.c.l.b16 %v3594
        %v4619 = vunpack.c.l.b16 %v3595
        %v4620 = vunpack.c.l.b16 %v3596
        %v4621 = vunpack.c.l.b16 %v3597
        %v4622 = vunpack.c.l.b16 %v3598
        %v4623 = vunpack.c.l.b16 %v3599
        %v4624 = vunpack.c.l.b16 %v3600
        %v4625 = vunpack.c.l.b16 %v3601
        %v4626 = vunpack.c.l.b16 %v3602
        %v4627 = vunpack.c.l.b16 %v3603
        %v4628 = vunpack.c.l.b16 %v3604
        %v4629 = vunpack.c.l.b16 %v3605
        %v4630 = vunpack.c.l.b16 %v3606
        %v4631 = vunpack.c.l.b16 %v3607
        %v4632 = vunpack.c.l.b16 %v3608
        %v4633 = vunpack.c.l.b16 %v3609
        %v4634 = vunpack.c.l.b16 %v3610
        %v4635 = vunpack.c.l.b16 %v3611
        %v4636 = vunpack.c.l.b16 %v3612
        %v4637 = vunpack.c.l.b16 %v3613
        %v4638 = vunpack.c.l.b16 %v3614
        %v4639 = vunpack.c.l.b16 %v3615
        %v4640 = vunpack.c.l.b16 %v3616
        %v4641 = vunpack.c.l.b16 %v3617
        %v4642 = vunpack.c.l.b16 %v3618
        %v4643 = vunpack.c.l.b16 %v3619
        %v4644 = vunpack.c.l.b16 %v3620
        %v4645 = vunpack.c.l.b16 %v3621
        %v4646 = vunpack.c.l.b16 %v3622
        %v4647 = vunpack.c.l.b16 %v3623
        %v4648 = vunpack.c.l.b16 %v3624
        %v4649 = vunpack.c.l.b16 %v3625
        %v4650 = vunpack.c.l.b16 %v3626
        %v4651 = vunpack.c.l.b16 %v3627
        %v4652 = vunpack.c.l.b16 %v3628
        %v4653 = vunpack.c.l.b16 %v3629
        %v4654 = vunpack.c.l.b16 %v3630
        %v4655 = vunpack.c.l.b16 %v3631
        %v4656 = vunpack.c.l.b16 %v3632
        %v4657 = vunpack.c.l.b16 %v3633
        %v4658 = vunpack.c.l.b16 %v3634
        %v4659 = vunpack.c.l.b16 %v3635
        %v4660 = vunpack.c.l.b16 %v3636
        %v4661 = vunpack.c.l.b16 %v3637
        %v4662 = vunpack.c.l.b16 %v3638
        %v4663 = vunpack.c.l.b16 %v3639
        %v4664 = vunpack.c.l.b16 %v3640
        %v4665 = vunpack.c.l.b16 %v3641
        %v4666 = vunpack.c.l.b16 %v3642
        %v4667 = vunpack.c.l.b16 %v3643
        %v4668 = vunpack.c.l.b16 %v3644
        %v4669 = vunpack.c.l.b16 %v3645
        %v4670 = vunpack.c.l.b16 %v3646
        %v4671 = vunpack.c.l.b16 %v3647
        %v4672 = vunpack.c.l.b16 %v3648
        %v4673 = vunpack.c.l.b16 %v3649
        %v4674 = vunpack.c.l.b16 %v3650
        %v4675 = vunpack.c.l.b16 %v3651
        %v4676 = vunpack.c.l.b16 %v3652
        %v4677 = vunpack.c.l.b16 %v3653
        %v4678 = vunpack.c.l.b16 %v3654
        %v4679 = vunpack.c.l.b16 %v3655
        %v4680 = vunpack.c.l.b16 %v3656
        %v4681 = vunpack.c.l.b16 %v3657
        %v4682 = vunpack.c.l.b16 %v3658
        %v4683 = vunpack.c.l.b16 %v3659
        %v4684 = vunpack.c.l.b16 %v3660
        %v4685 = vunpack.c.l.b16 %v3661
        %v4686 = vunpack.c.l.b16 %v3662
        %v4687 = vunpack.c.l.b16 %v3663
        %v4688 = vunpack.c.l.b16 %v3664
        %v4689 = vunpack.c.l.b16 %v3665
        %v4690 = vunpack.c.l.b16 %v3666
        %v4691 = vunpack.c.l.b16 %v3667
        %v4692 = vunpack.c.l.b16 %v3668
        %v4693 = vunpack.c.l.b16 %v3669
        %v4694 = vunpack.c.l.b16 %v3670
        %v4695 = vunpack.c.l.b16 %v3671
        %v4696 = vunpack.c.l.b16 %v3672
        %v4697 = vunpack.c.l.b16 %v3673
        %v4698 = vunpack.c.l.b16 %v3674
        %v4699 = vunpack.c.l.b16 %v3675
        %v4700 = vunpack.c.l.b16 %v3676
        %v4701 = vunpack.c.l.b16 %v3677
        %v4702 = vunpack.c.l.b16 %v3678
        %v4703 = vunpack.c.l.b16 %v3679
        %v4704 = vunpack.c.l.b16 %v3680
        %v4705 = vunpack.c.l.b16 %v3681
        %v4706 = vunpack.c.l.b16 %v3682
        %v4707 = vunpack.c.l.b16 %v3683
        %v4708 = vunpack.c.l.b16 %v3684
        %v4709 = vunpack.c.l.b16 %v3685
        %v4710 = vunpack.c.l.b16 %v3686
        %v4711 = vunpack.c.l.b16 %v3687
        %v4712 = vunpack.c.l.b16 %v3688
        %v4713 = vunpack.c.l.b16 %v3689
        %v4714 = vunpack.c.l.b16 %v3690
        %v4715 = vunpack.c.l.b16 %v3691
        %v4716 = vunpack.c.l.b16 %v3692
        %v4717 = vunpack.c.l.b16 %v3693
        %v4718 = vunpack.c.l.b16 %v3694
        %v4719 = vunpack.c.l.b16 %v3695
        %v4720 = vunpack.c.l.b16 %v3696
        %v4721 = vunpack.c.l.b16 %v3697
        %v4722 = vunpack.c.l.b16 %v3698
        %v4723 = vunpack.c.l.b16 %v3699
        %v4724 = vunpack.c.l.b16 %v3700
        %v4725 = vunpack.c.l.b16 %v3701
        %v4726 = vunpack.c.l.b16 %v3702
        %v4727 = vunpack.c.l.b16 %v3703
        %v4728 = vunpack.c.l.b16 %v3704
        %v4729 = vunpack.c.l.b16 %v3705
        %v4730 = vpack.c.b16 %v4587, %v4586
        %v4731 = vpack.c.b16 %v4589, %v4588
        %v4732 = vpack.c.b16 %v4591, %v4590
        %v4733 = vpack.c.b16 %v4593, %v4592
        %v4734 = vpack.c.b16 %v4595, %v4594
        %v4735 = vpack.c.b16 %v4597, %v4596
        %v4736 = vpack.c.b16 %v4599, %v4598
        %v4737 = vpack.c.b16 %v4601, %v4600
        %v4738 = vpack.c.b16 %v4603, %v4602
        %v4739 = vpack.c.b16 %v4605, %v4604
        %v4740 = vpack.c.b16 %v4607, %v4606
        %v4741 = vpack.c.b16 %v4609, %v4608
        %v4742 = vpack.c.b16 %v4611, %v4610
        %v4743 = vpack.c.b16 %v4613, %v4612
        %v4744 = vpack.c.b16 %v4615, %v4614
        %v4745 = vpack.c.b16 %v4617, %v4616
        %v4746 = vpack.c.b16 %v4619, %v4618
        %v4747 = vpack.c.b16 %v4621, %v4620
        %v4748 = vpack.c.b16 %v4623, %v4622
        %v4749 = vpack.c.b16 %v4625, %v4624
        %v4750 = vpack.c.b16 %v4627, %v4626
        %v4751 = vpack.c.b16 %v4629, %v4628
        %v4752 = vpack.c.b16 %v4631, %v4630
        %v4753 = vpack.c.b16 %v4633, %v4632
        %v4754 = vpack.c.b16 %v4635, %v4634
        %v4755 = vpack.c.b16 %v4637, %v4636
        %v4756 = vpack.c.b16 %v4639, %v4638
        %v4757 = vpack.c.b16 %v4641, %v4640
        %v4758 = vpack.c.b16 %v4643, %v4642
        %v4759 = vpack.c.b16 %v4645, %v4644
        %v4760 = vpack.c.b16 %v4647, %v4646
        %v4761 = vpack.c.b16 %v4649, %v4648
        %v4762 = vpack.c.b16 %v4651, %v4650
        %v4763 = vpack.c.b16 %v4653, %v4652
        %v4764 = vpack.c.b16 %v4655, %v4654
        %v4765 = vpack.c.b16 %v4657, %v4656
        %v4766 = vpack.c.b16 %v4659, %v4658
        %v4767 = vpack.c.b16 %v4661, %v4660
        %v4768 = vpack.c.b16 %v4663, %v4662
        %v4769 = vpack.c.b16 %v4665, %v4664
        %v4770 = vpack.c.b16 %v4667, %v4666
        %v4771 = vpack.c.b16 %v4669, %v4668
        %v4772 = vpack.c.b16 %v4671, %v4670
        %v4773 = vpack.c.b16 %v4673, %v4672
        %v4774 = vpack.c.b16 %v4675, %v4674
        %v4775 = vpack.c.b16 %v4677, %v4676
        %v4776 = vpack.c.b16 %v4679, %v4678
        %v4777 = vpack.c.b16 %v4681, %v4680
        %v4778 = vpack.c.b16 %v4683, %v4682
        %v4779 = vpack.c.b16 %v4685, %v4684
        %v4780 = vpack.c.b16 %v4687, %v4686
        %v4781 = vpack.c.b16 %v4689, %v4688
        %v4782 = vpack.c.b16 %v4691, %v4690
        %v4783 = vpack.c.b16 %v4693, %v4692
        %v4784 = vpack.c.b16 %v4695, %v4694
        %v4785 = vpack.c.b16 %v4697, %v4696
        %v4786 = vpack.c.b16 %v4699, %v4698
        %v4787 = vpack.c.b16 %v4701, %v4700
        %v4788 = vpack.c.b16 %v4703, %v4702
        %v4789 = vpack.c.b16 %v4705, %v4704
        %v4790 = vpack.c.b16 %v4707, %v4706
        %v4791 = vpack.c.b16 %v4709, %v4708
        %v4792 = vpack.c.b16 %v4711, %v4710
        %v4793 = vpack.c.b16 %v4713, %v4712
        %v4794 = vpack.c.b16 %v4715, %v4714
        %v4795 = vpack.c.b16 %v4717, %v4716
        %v4796 = vpack.c.b16 %v4719, %v4718
        %v4797 = vpack.c.b16 %v4721, %v4720
        %v4798 = vpack.c.b16 %v4723, %v4722
        %v4799 = vpack.c.b16 %v4725, %v4724
        %v4800 = vpack.c.b16 %v4727, %v4726
        %v4801 = vpack.c.b16 %v4729, %v4728
        %4874 = vmatpush.bf16.msra.mxu0 %v4737
        %4875 = vmatpush.bf16.msra.mxu0 %v4736
        %4876 = vmatpush.bf16.msra.mxu0 %v4735
        %4877 = vmatpush.bf16.msra.mxu0 %v4734
        %4878 = vmatpush.bf16.msra.mxu0 %v4733
        %4879 = vmatpush.bf16.msra.mxu0 %v4732
        %4880 = vmatpush.bf16.msra.mxu0 %v4731
        %4881 = vmatpush.bf16.msra.mxu0 %v4730
        %4882 = vmatmul.bf16.gmra.mxu0 %v4154
        %v4883 = vpop.f32.mrf.mxu0
        %v4884 = vadd.f32 0.0, %v4883
        %v4885 = vpop.f32.mrf.mxu0
        %v4886 = vadd.f32 0.0, %v4885
        %4887 = vmatmul.bf16.gmra.mxu0 %v4163
        %v4888 = vpop.f32.mrf.mxu0
        %v4889 = vadd.f32 0.0, %v4888
        %v4890 = vpop.f32.mrf.mxu0
        %v4891 = vadd.f32 0.0, %v4890
        %4892 = vmatmul.bf16.gmra.mxu0 %v4172
        %v4893 = vpop.f32.mrf.mxu0
        %v4894 = vadd.f32 0.0, %v4893
        %v4895 = vpop.f32.mrf.mxu0
        %v4896 = vadd.f32 0.0, %v4895
        %4897 = vmatmul.bf16.gmra.mxu0 %v4181
        %v4898 = vpop.f32.mrf.mxu0
        %v4899 = vadd.f32 0.0, %v4898
        %v4900 = vpop.f32.mrf.mxu0
        %v4901 = vadd.f32 0.0, %v4900
        %4902 = vmatmul.bf16.gmra.mxu0 %v4190
        %v4903 = vpop.f32.mrf.mxu0
        %v4904 = vadd.f32 0.0, %v4903
        %v4905 = vpop.f32.mrf.mxu0
        %v4906 = vadd.f32 0.0, %v4905
        %4907 = vmatmul.bf16.gmra.mxu0 %v4199
        %v4908 = vpop.f32.mrf.mxu0
        %v4909 = vadd.f32 0.0, %v4908
        %v4910 = vpop.f32.mrf.mxu0
        %v4911 = vadd.f32 0.0, %v4910
        %4912 = vmatmul.bf16.gmra.mxu0 %v4208
        %v4913 = vpop.f32.mrf.mxu0
        %v4914 = vadd.f32 0.0, %v4913
        %v4915 = vpop.f32.mrf.mxu0
        %v4916 = vadd.f32 0.0, %v4915
        %4917 = vmatmul.bf16.gmra.mxu0 %v4217
        %v4918 = vpop.f32.mrf.mxu0
        %v4919 = vadd.f32 0.0, %v4918
        %v4920 = vpop.f32.mrf.mxu0
        %v4921 = vadd.f32 0.0, %v4920
        %4922 = vmatmul.bf16.gmra.mxu0 %v4226
        %v4923 = vpop.f32.mrf.mxu0
        %v4924 = vadd.f32 0.0, %v4923
        %v4925 = vpop.f32.mrf.mxu0
        %v4926 = vadd.f32 0.0, %v4925
        %4927 = vmatmul.bf16.gmra.mxu0 %v4235
        %v4928 = vpop.f32.mrf.mxu0
        %v4929 = vadd.f32 0.0, %v4928
        %v4930 = vpop.f32.mrf.mxu0
        %v4931 = vadd.f32 0.0, %v4930
        %4932 = vmatmul.bf16.gmra.mxu0 %v4244
        %v4933 = vpop.f32.mrf.mxu0
        %v4934 = vadd.f32 0.0, %v4933
        %v4935 = vpop.f32.mrf.mxu0
        %v4936 = vadd.f32 0.0, %v4935
        %4937 = vmatmul.bf16.gmra.mxu0 %v4253
        %v4938 = vpop.f32.mrf.mxu0
        %v4939 = vadd.f32 0.0, %v4938
        %v4940 = vpop.f32.mrf.mxu0
        %v4941 = vadd.f32 0.0, %v4940
        %4942 = vmatmul.bf16.gmra.mxu0 %v4262
        %v4943 = vpop.f32.mrf.mxu0
        %v4944 = vadd.f32 0.0, %v4943
        %v4945 = vpop.f32.mrf.mxu0
        %v4946 = vadd.f32 0.0, %v4945
        %4947 = vmatmul.bf16.gmra.mxu0 %v4271
        %v4948 = vpop.f32.mrf.mxu0
        %v4949 = vadd.f32 0.0, %v4948
        %v4950 = vpop.f32.mrf.mxu0
        %v4951 = vadd.f32 0.0, %v4950
        %4952 = vmatmul.bf16.gmra.mxu0 %v4280
        %v4953 = vpop.f32.mrf.mxu0
        %v4954 = vadd.f32 0.0, %v4953
        %v4955 = vpop.f32.mrf.mxu0
        %v4956 = vadd.f32 0.0, %v4955
        %4957 = vmatmul.bf16.gmra.mxu0 %v4289
        %v4958 = vpop.f32.mrf.mxu0
        %v4959 = vadd.f32 0.0, %v4958
        %v4960 = vpop.f32.mrf.mxu0
        %v4961 = vadd.f32 0.0, %v4960
        %4962 = vdwg.mxu0
        %4963 = vmatpush.bf16.msra.mxu0 %v4745
        %4964 = vmatpush.bf16.msra.mxu0 %v4744
        %4965 = vmatpush.bf16.msra.mxu0 %v4743
        %4966 = vmatpush.bf16.msra.mxu0 %v4742
        %4967 = vmatpush.bf16.msra.mxu0 %v4741
        %4968 = vmatpush.bf16.msra.mxu0 %v4740
        %4969 = vmatpush.bf16.msra.mxu0 %v4739
        %4970 = vmatpush.bf16.msra.mxu0 %v4738
        %4971 = vmatmul.bf16.gmra.mxu0 %v4155
        %v4972 = vpop.f32.mrf.mxu0
        %v4973 = vadd.f32 %v4884, %v4972
        %v4974 = vpop.f32.mrf.mxu0
        %v4975 = vadd.f32 %v4886, %v4974
        %4976 = vmatmul.bf16.gmra.mxu0 %v4164
        %v4977 = vpop.f32.mrf.mxu0
        %v4978 = vadd.f32 %v4889, %v4977
        %v4979 = vpop.f32.mrf.mxu0
        %v4980 = vadd.f32 %v4891, %v4979
        %4981 = vmatmul.bf16.gmra.mxu0 %v4173
        %v4982 = vpop.f32.mrf.mxu0
        %v4983 = vadd.f32 %v4894, %v4982
        %v4984 = vpop.f32.mrf.mxu0
        %v4985 = vadd.f32 %v4896, %v4984
        %4986 = vmatmul.bf16.gmra.mxu0 %v4182
        %v4987 = vpop.f32.mrf.mxu0
        %v4988 = vadd.f32 %v4899, %v4987
        %v4989 = vpop.f32.mrf.mxu0
        %v4990 = vadd.f32 %v4901, %v4989
        %4991 = vmatmul.bf16.gmra.mxu0 %v4191
        %v4992 = vpop.f32.mrf.mxu0
        %v4993 = vadd.f32 %v4904, %v4992
        %v4994 = vpop.f32.mrf.mxu0
        %v4995 = vadd.f32 %v4906, %v4994
        %4996 = vmatmul.bf16.gmra.mxu0 %v4200
        %v4997 = vpop.f32.mrf.mxu0
        %v4998 = vadd.f32 %v4909, %v4997
        %v4999 = vpop.f32.mrf.mxu0
        %v5000 = vadd.f32 %v4911, %v4999
        %5001 = vmatmul.bf16.gmra.mxu0 %v4209
        %v5002 = vpop.f32.mrf.mxu0
        %v5003 = vadd.f32 %v4914, %v5002
        %v5004 = vpop.f32.mrf.mxu0
        %v5005 = vadd.f32 %v4916, %v5004
        %5006 = vmatmul.bf16.gmra.mxu0 %v4218
        %v5007 = vpop.f32.mrf.mxu0
        %v5008 = vadd.f32 %v4919, %v5007
        %v5009 = vpop.f32.mrf.mxu0
        %v5010 = vadd.f32 %v4921, %v5009
        %5011 = vmatmul.bf16.gmra.mxu0 %v4227
        %v5012 = vpop.f32.mrf.mxu0
        %v5013 = vadd.f32 %v4924, %v5012
        %v5014 = vpop.f32.mrf.mxu0
        %v5015 = vadd.f32 %v4926, %v5014
        %5016 = vmatmul.bf16.gmra.mxu0 %v4236
        %v5017 = vpop.f32.mrf.mxu0
        %v5018 = vadd.f32 %v4929, %v5017
        %v5019 = vpop.f32.mrf.mxu0
        %v5020 = vadd.f32 %v4931, %v5019
        %5021 = vmatmul.bf16.gmra.mxu0 %v4245
        %v5022 = vpop.f32.mrf.mxu0
        %v5023 = vadd.f32 %v4934, %v5022
        %v5024 = vpop.f32.mrf.mxu0
        %v5025 = vadd.f32 %v4936, %v5024
        %5026 = vmatmul.bf16.gmra.mxu0 %v4254
        %v5027 = vpop.f32.mrf.mxu0
        %v5028 = vadd.f32 %v4939, %v5027
        %v5029 = vpop.f32.mrf.mxu0
        %v5030 = vadd.f32 %v4941, %v5029
        %5031 = vmatmul.bf16.gmra.mxu0 %v4263
        %v5032 = vpop.f32.mrf.mxu0
        %v5033 = vadd.f32 %v4944, %v5032
        %v5034 = vpop.f32.mrf.mxu0
        %v5035 = vadd.f32 %v4946, %v5034
        %5036 = vmatmul.bf16.gmra.mxu0 %v4272
        %v5037 = vpop.f32.mrf.mxu0
        %v5038 = vadd.f32 %v4949, %v5037
        %v5039 = vpop.f32.mrf.mxu0
        %v5040 = vadd.f32 %v4951, %v5039
        %5041 = vmatmul.bf16.gmra.mxu0 %v4281
        %v5042 = vpop.f32.mrf.mxu0
        %v5043 = vadd.f32 %v4954, %v5042
        %v5044 = vpop.f32.mrf.mxu0
        %v5045 = vadd.f32 %v4956, %v5044
        %5046 = vmatmul.bf16.gmra.mxu0 %v4290
        %v5047 = vpop.f32.mrf.mxu0
        %v5048 = vadd.f32 %v4959, %v5047
        %v5049 = vpop.f32.mrf.mxu0
        %v5050 = vadd.f32 %v4961, %v5049
        %5051 = vdwg.mxu0
        %5052 = vmatpush.bf16.msra.mxu0 %v4753
        %5053 = vmatpush.bf16.msra.mxu0 %v4752
        %5054 = vmatpush.bf16.msra.mxu0 %v4751
        %5055 = vmatpush.bf16.msra.mxu0 %v4750
        %5056 = vmatpush.bf16.msra.mxu0 %v4749
        %5057 = vmatpush.bf16.msra.mxu0 %v4748
        %5058 = vmatpush.bf16.msra.mxu0 %v4747
        %5059 = vmatpush.bf16.msra.mxu0 %v4746
        %5060 = vmatmul.bf16.gmra.mxu0 %v4156
        %v5061 = vpop.f32.mrf.mxu0
        %v5062 = vadd.f32 %v4973, %v5061
        %v5063 = vpop.f32.mrf.mxu0
        %v5064 = vadd.f32 %v4975, %v5063
        %5065 = vmatmul.bf16.gmra.mxu0 %v4165
        %v5066 = vpop.f32.mrf.mxu0
        %v5067 = vadd.f32 %v4978, %v5066
        %v5068 = vpop.f32.mrf.mxu0
        %v5069 = vadd.f32 %v4980, %v5068
        %5070 = vmatmul.bf16.gmra.mxu0 %v4174
        %v5071 = vpop.f32.mrf.mxu0
        %v5072 = vadd.f32 %v4983, %v5071
        %v5073 = vpop.f32.mrf.mxu0
        %v5074 = vadd.f32 %v4985, %v5073
        %5075 = vmatmul.bf16.gmra.mxu0 %v4183
        %v5076 = vpop.f32.mrf.mxu0
        %v5077 = vadd.f32 %v4988, %v5076
        %v5078 = vpop.f32.mrf.mxu0
        %v5079 = vadd.f32 %v4990, %v5078
        %5080 = vmatmul.bf16.gmra.mxu0 %v4192
        %v5081 = vpop.f32.mrf.mxu0
        %v5082 = vadd.f32 %v4993, %v5081
        %v5083 = vpop.f32.mrf.mxu0
        %v5084 = vadd.f32 %v4995, %v5083
        %5085 = vmatmul.bf16.gmra.mxu0 %v4201
        %v5086 = vpop.f32.mrf.mxu0
        %v5087 = vadd.f32 %v4998, %v5086
        %v5088 = vpop.f32.mrf.mxu0
        %v5089 = vadd.f32 %v5000, %v5088
        %5090 = vmatmul.bf16.gmra.mxu0 %v4210
        %v5091 = vpop.f32.mrf.mxu0
        %v5092 = vadd.f32 %v5003, %v5091
        %v5093 = vpop.f32.mrf.mxu0
        %v5094 = vadd.f32 %v5005, %v5093
        %5095 = vmatmul.bf16.gmra.mxu0 %v4219
        %v5096 = vpop.f32.mrf.mxu0
        %v5097 = vadd.f32 %v5008, %v5096
        %v5098 = vpop.f32.mrf.mxu0
        %v5099 = vadd.f32 %v5010, %v5098
        %5100 = vmatmul.bf16.gmra.mxu0 %v4228
        %v5101 = vpop.f32.mrf.mxu0
        %v5102 = vadd.f32 %v5013, %v5101
        %v5103 = vpop.f32.mrf.mxu0
        %v5104 = vadd.f32 %v5015, %v5103
        %5105 = vmatmul.bf16.gmra.mxu0 %v4237
        %v5106 = vpop.f32.mrf.mxu0
        %v5107 = vadd.f32 %v5018, %v5106
        %v5108 = vpop.f32.mrf.mxu0
        %v5109 = vadd.f32 %v5020, %v5108
        %5110 = vmatmul.bf16.gmra.mxu0 %v4246
        %v5111 = vpop.f32.mrf.mxu0
        %v5112 = vadd.f32 %v5023, %v5111
        %v5113 = vpop.f32.mrf.mxu0
        %v5114 = vadd.f32 %v5025, %v5113
        %5115 = vmatmul.bf16.gmra.mxu0 %v4255
        %v5116 = vpop.f32.mrf.mxu0
        %v5117 = vadd.f32 %v5028, %v5116
        %v5118 = vpop.f32.mrf.mxu0
        %v5119 = vadd.f32 %v5030, %v5118
        %5120 = vmatmul.bf16.gmra.mxu0 %v4264
        %v5121 = vpop.f32.mrf.mxu0
        %v5122 = vadd.f32 %v5033, %v5121
        %v5123 = vpop.f32.mrf.mxu0
        %v5124 = vadd.f32 %v5035, %v5123
        %5125 = vmatmul.bf16.gmra.mxu0 %v4273
        %v5126 = vpop.f32.mrf.mxu0
        %v5127 = vadd.f32 %v5038, %v5126
        %v5128 = vpop.f32.mrf.mxu0
        %v5129 = vadd.f32 %v5040, %v5128
        %5130 = vmatmul.bf16.gmra.mxu0 %v4282
        %v5131 = vpop.f32.mrf.mxu0
        %v5132 = vadd.f32 %v5043, %v5131
        %v5133 = vpop.f32.mrf.mxu0
        %v5134 = vadd.f32 %v5045, %v5133
        %5135 = vmatmul.bf16.gmra.mxu0 %v4291
        %v5136 = vpop.f32.mrf.mxu0
        %v5137 = vadd.f32 %v5048, %v5136
        %v5138 = vpop.f32.mrf.mxu0
        %v5139 = vadd.f32 %v5050, %v5138
        %5140 = vdwg.mxu0
        %5141 = vmatpush.bf16.msra.mxu0 %v4761
        %5142 = vmatpush.bf16.msra.mxu0 %v4760
        %5143 = vmatpush.bf16.msra.mxu0 %v4759
        %5144 = vmatpush.bf16.msra.mxu0 %v4758
        %5145 = vmatpush.bf16.msra.mxu0 %v4757
        %5146 = vmatpush.bf16.msra.mxu0 %v4756
        %5147 = vmatpush.bf16.msra.mxu0 %v4755
        %5148 = vmatpush.bf16.msra.mxu0 %v4754
        %5149 = vmatmul.bf16.gmra.mxu0 %v4157
        %v5150 = vpop.f32.mrf.mxu0
        %v5151 = vadd.f32 %v5062, %v5150
        %v5152 = vpop.f32.mrf.mxu0
        %v5153 = vadd.f32 %v5064, %v5152
        %5154 = vmatmul.bf16.gmra.mxu0 %v4166
        %v5155 = vpop.f32.mrf.mxu0
        %v5156 = vadd.f32 %v5067, %v5155
        %v5157 = vpop.f32.mrf.mxu0
        %v5158 = vadd.f32 %v5069, %v5157
        %5159 = vmatmul.bf16.gmra.mxu0 %v4175
        %v5160 = vpop.f32.mrf.mxu0
        %v5161 = vadd.f32 %v5072, %v5160
        %v5162 = vpop.f32.mrf.mxu0
        %v5163 = vadd.f32 %v5074, %v5162
        %5164 = vmatmul.bf16.gmra.mxu0 %v4184
        %v5165 = vpop.f32.mrf.mxu0
        %v5166 = vadd.f32 %v5077, %v5165
        %v5167 = vpop.f32.mrf.mxu0
        %v5168 = vadd.f32 %v5079, %v5167
        %5169 = vmatmul.bf16.gmra.mxu0 %v4193
        %v5170 = vpop.f32.mrf.mxu0
        %v5171 = vadd.f32 %v5082, %v5170
        %v5172 = vpop.f32.mrf.mxu0
        %v5173 = vadd.f32 %v5084, %v5172
        %5174 = vmatmul.bf16.gmra.mxu0 %v4202
        %v5175 = vpop.f32.mrf.mxu0
        %v5176 = vadd.f32 %v5087, %v5175
        %v5177 = vpop.f32.mrf.mxu0
        %v5178 = vadd.f32 %v5089, %v5177
        %5179 = vmatmul.bf16.gmra.mxu0 %v4211
        %v5180 = vpop.f32.mrf.mxu0
        %v5181 = vadd.f32 %v5092, %v5180
        %v5182 = vpop.f32.mrf.mxu0
        %v5183 = vadd.f32 %v5094, %v5182
        %5184 = vmatmul.bf16.gmra.mxu0 %v4220
        %v5185 = vpop.f32.mrf.mxu0
        %v5186 = vadd.f32 %v5097, %v5185
        %v5187 = vpop.f32.mrf.mxu0
        %v5188 = vadd.f32 %v5099, %v5187
        %5189 = vmatmul.bf16.gmra.mxu0 %v4229
        %v5190 = vpop.f32.mrf.mxu0
        %v5191 = vadd.f32 %v5102, %v5190
        %v5192 = vpop.f32.mrf.mxu0
        %v5193 = vadd.f32 %v5104, %v5192
        %5194 = vmatmul.bf16.gmra.mxu0 %v4238
        %v5195 = vpop.f32.mrf.mxu0
        %v5196 = vadd.f32 %v5107, %v5195
        %v5197 = vpop.f32.mrf.mxu0
        %v5198 = vadd.f32 %v5109, %v5197
        %5199 = vmatmul.bf16.gmra.mxu0 %v4247
        %v5200 = vpop.f32.mrf.mxu0
        %v5201 = vadd.f32 %v5112, %v5200
        %v5202 = vpop.f32.mrf.mxu0
        %v5203 = vadd.f32 %v5114, %v5202
        %5204 = vmatmul.bf16.gmra.mxu0 %v4256
        %v5205 = vpop.f32.mrf.mxu0
        %v5206 = vadd.f32 %v5117, %v5205
        %v5207 = vpop.f32.mrf.mxu0
        %v5208 = vadd.f32 %v5119, %v5207
        %5209 = vmatmul.bf16.gmra.mxu0 %v4265
        %v5210 = vpop.f32.mrf.mxu0
        %v5211 = vadd.f32 %v5122, %v5210
        %v5212 = vpop.f32.mrf.mxu0
        %v5213 = vadd.f32 %v5124, %v5212
        %5214 = vmatmul.bf16.gmra.mxu0 %v4274
        %v5215 = vpop.f32.mrf.mxu0
        %v5216 = vadd.f32 %v5127, %v5215
        %v5217 = vpop.f32.mrf.mxu0
        %v5218 = vadd.f32 %v5129, %v5217
        %5219 = vmatmul.bf16.gmra.mxu0 %v4283
        %v5220 = vpop.f32.mrf.mxu0
        %v5221 = vadd.f32 %v5132, %v5220
        %v5222 = vpop.f32.mrf.mxu0
        %v5223 = vadd.f32 %v5134, %v5222
        %5224 = vmatmul.bf16.gmra.mxu0 %v4292
        %v5225 = vpop.f32.mrf.mxu0
        %v5226 = vadd.f32 %v5137, %v5225
        %v5227 = vpop.f32.mrf.mxu0
        %v5228 = vadd.f32 %v5139, %v5227
        %5229 = vdwg.mxu0
        %5230 = vmatpush.bf16.msra.mxu0 %v4769
        %5231 = vmatpush.bf16.msra.mxu0 %v4768
        %5232 = vmatpush.bf16.msra.mxu0 %v4767
        %5233 = vmatpush.bf16.msra.mxu0 %v4766
        %5234 = vmatpush.bf16.msra.mxu0 %v4765
        %5235 = vmatpush.bf16.msra.mxu0 %v4764
        %5236 = vmatpush.bf16.msra.mxu0 %v4763
        %5237 = vmatpush.bf16.msra.mxu0 %v4762
        %5238 = vmatmul.bf16.gmra.mxu0 %v4158
        %v5239 = vpop.f32.mrf.mxu0
        %v5240 = vadd.f32 %v5151, %v5239
        %v5241 = vpop.f32.mrf.mxu0
        %v5242 = vadd.f32 %v5153, %v5241
        %5243 = vmatmul.bf16.gmra.mxu0 %v4167
        %v5244 = vpop.f32.mrf.mxu0
        %v5245 = vadd.f32 %v5156, %v5244
        %v5246 = vpop.f32.mrf.mxu0
        %v5247 = vadd.f32 %v5158, %v5246
        %5248 = vmatmul.bf16.gmra.mxu0 %v4176
        %v5249 = vpop.f32.mrf.mxu0
        %v5250 = vadd.f32 %v5161, %v5249
        %v5251 = vpop.f32.mrf.mxu0
        %v5252 = vadd.f32 %v5163, %v5251
        %5253 = vmatmul.bf16.gmra.mxu0 %v4185
        %v5254 = vpop.f32.mrf.mxu0
        %v5255 = vadd.f32 %v5166, %v5254
        %v5256 = vpop.f32.mrf.mxu0
        %v5257 = vadd.f32 %v5168, %v5256
        %5258 = vmatmul.bf16.gmra.mxu0 %v4194
        %v5259 = vpop.f32.mrf.mxu0
        %v5260 = vadd.f32 %v5171, %v5259
        %v5261 = vpop.f32.mrf.mxu0
        %v5262 = vadd.f32 %v5173, %v5261
        %5263 = vmatmul.bf16.gmra.mxu0 %v4203
        %v5264 = vpop.f32.mrf.mxu0
        %v5265 = vadd.f32 %v5176, %v5264
        %v5266 = vpop.f32.mrf.mxu0
        %v5267 = vadd.f32 %v5178, %v5266
        %5268 = vmatmul.bf16.gmra.mxu0 %v4212
        %v5269 = vpop.f32.mrf.mxu0
        %v5270 = vadd.f32 %v5181, %v5269
        %v5271 = vpop.f32.mrf.mxu0
        %v5272 = vadd.f32 %v5183, %v5271
        %5273 = vmatmul.bf16.gmra.mxu0 %v4221
        %v5274 = vpop.f32.mrf.mxu0
        %v5275 = vadd.f32 %v5186, %v5274
        %v5276 = vpop.f32.mrf.mxu0
        %v5277 = vadd.f32 %v5188, %v5276
        %5278 = vmatmul.bf16.gmra.mxu0 %v4230
        %v5279 = vpop.f32.mrf.mxu0
        %v5280 = vadd.f32 %v5191, %v5279
        %v5281 = vpop.f32.mrf.mxu0
        %v5282 = vadd.f32 %v5193, %v5281
        %5283 = vmatmul.bf16.gmra.mxu0 %v4239
        %v5284 = vpop.f32.mrf.mxu0
        %v5285 = vadd.f32 %v5196, %v5284
        %v5286 = vpop.f32.mrf.mxu0
        %v5287 = vadd.f32 %v5198, %v5286
        %5288 = vmatmul.bf16.gmra.mxu0 %v4248
        %v5289 = vpop.f32.mrf.mxu0
        %v5290 = vadd.f32 %v5201, %v5289
        %v5291 = vpop.f32.mrf.mxu0
        %v5292 = vadd.f32 %v5203, %v5291
        %5293 = vmatmul.bf16.gmra.mxu0 %v4257
        %v5294 = vpop.f32.mrf.mxu0
        %v5295 = vadd.f32 %v5206, %v5294
        %v5296 = vpop.f32.mrf.mxu0
        %v5297 = vadd.f32 %v5208, %v5296
        %5298 = vmatmul.bf16.gmra.mxu0 %v4266
        %v5299 = vpop.f32.mrf.mxu0
        %v5300 = vadd.f32 %v5211, %v5299
        %v5301 = vpop.f32.mrf.mxu0
        %v5302 = vadd.f32 %v5213, %v5301
        %5303 = vmatmul.bf16.gmra.mxu0 %v4275
        %v5304 = vpop.f32.mrf.mxu0
        %v5305 = vadd.f32 %v5216, %v5304
        %v5306 = vpop.f32.mrf.mxu0
        %v5307 = vadd.f32 %v5218, %v5306
        %5308 = vmatmul.bf16.gmra.mxu0 %v4284
        %v5309 = vpop.f32.mrf.mxu0
        %v5310 = vadd.f32 %v5221, %v5309
        %v5311 = vpop.f32.mrf.mxu0
        %v5312 = vadd.f32 %v5223, %v5311
        %5313 = vmatmul.bf16.gmra.mxu0 %v4293
        %v5314 = vpop.f32.mrf.mxu0
        %v5315 = vadd.f32 %v5226, %v5314
        %v5316 = vpop.f32.mrf.mxu0
        %v5317 = vadd.f32 %v5228, %v5316
        %5318 = vdwg.mxu0
        %5319 = vmatpush.bf16.msra.mxu0 %v4777
        %5320 = vmatpush.bf16.msra.mxu0 %v4776
        %5321 = vmatpush.bf16.msra.mxu0 %v4775
        %5322 = vmatpush.bf16.msra.mxu0 %v4774
        %5323 = vmatpush.bf16.msra.mxu0 %v4773
        %5324 = vmatpush.bf16.msra.mxu0 %v4772
        %5325 = vmatpush.bf16.msra.mxu0 %v4771
        %5326 = vmatpush.bf16.msra.mxu0 %v4770
        %5327 = vmatmul.bf16.gmra.mxu0 %v4159
        %v5328 = vpop.f32.mrf.mxu0
        %v5329 = vadd.f32 %v5240, %v5328
        %v5330 = vpop.f32.mrf.mxu0
        %v5331 = vadd.f32 %v5242, %v5330
        %5332 = vmatmul.bf16.gmra.mxu0 %v4168
        %v5333 = vpop.f32.mrf.mxu0
        %v5334 = vadd.f32 %v5245, %v5333
        %v5335 = vpop.f32.mrf.mxu0
        %v5336 = vadd.f32 %v5247, %v5335
        %5337 = vmatmul.bf16.gmra.mxu0 %v4177
        %v5338 = vpop.f32.mrf.mxu0
        %v5339 = vadd.f32 %v5250, %v5338
        %v5340 = vpop.f32.mrf.mxu0
        %v5341 = vadd.f32 %v5252, %v5340
        %5342 = vmatmul.bf16.gmra.mxu0 %v4186
        %v5343 = vpop.f32.mrf.mxu0
        %v5344 = vadd.f32 %v5255, %v5343
        %v5345 = vpop.f32.mrf.mxu0
        %v5346 = vadd.f32 %v5257, %v5345
        %5347 = vmatmul.bf16.gmra.mxu0 %v4195
        %v5348 = vpop.f32.mrf.mxu0
        %v5349 = vadd.f32 %v5260, %v5348
        %v5350 = vpop.f32.mrf.mxu0
        %v5351 = vadd.f32 %v5262, %v5350
        %5352 = vmatmul.bf16.gmra.mxu0 %v4204
        %v5353 = vpop.f32.mrf.mxu0
        %v5354 = vadd.f32 %v5265, %v5353
        %v5355 = vpop.f32.mrf.mxu0
        %v5356 = vadd.f32 %v5267, %v5355
        %5357 = vmatmul.bf16.gmra.mxu0 %v4213
        %v5358 = vpop.f32.mrf.mxu0
        %v5359 = vadd.f32 %v5270, %v5358
        %v5360 = vpop.f32.mrf.mxu0
        %v5361 = vadd.f32 %v5272, %v5360
        %5362 = vmatmul.bf16.gmra.mxu0 %v4222
        %v5363 = vpop.f32.mrf.mxu0
        %v5364 = vadd.f32 %v5275, %v5363
        %v5365 = vpop.f32.mrf.mxu0
        %v5366 = vadd.f32 %v5277, %v5365
        %5367 = vmatmul.bf16.gmra.mxu0 %v4231
        %v5368 = vpop.f32.mrf.mxu0
        %v5369 = vadd.f32 %v5280, %v5368
        %v5370 = vpop.f32.mrf.mxu0
        %v5371 = vadd.f32 %v5282, %v5370
        %5372 = vmatmul.bf16.gmra.mxu0 %v4240
        %v5373 = vpop.f32.mrf.mxu0
        %v5374 = vadd.f32 %v5285, %v5373
        %v5375 = vpop.f32.mrf.mxu0
        %v5376 = vadd.f32 %v5287, %v5375
        %5377 = vmatmul.bf16.gmra.mxu0 %v4249
        %v5378 = vpop.f32.mrf.mxu0
        %v5379 = vadd.f32 %v5290, %v5378
        %v5380 = vpop.f32.mrf.mxu0
        %v5381 = vadd.f32 %v5292, %v5380
        %5382 = vmatmul.bf16.gmra.mxu0 %v4258
        %v5383 = vpop.f32.mrf.mxu0
        %v5384 = vadd.f32 %v5295, %v5383
        %v5385 = vpop.f32.mrf.mxu0
        %v5386 = vadd.f32 %v5297, %v5385
        %5387 = vmatmul.bf16.gmra.mxu0 %v4267
        %v5388 = vpop.f32.mrf.mxu0
        %v5389 = vadd.f32 %v5300, %v5388
        %v5390 = vpop.f32.mrf.mxu0
        %v5391 = vadd.f32 %v5302, %v5390
        %5392 = vmatmul.bf16.gmra.mxu0 %v4276
        %v5393 = vpop.f32.mrf.mxu0
        %v5394 = vadd.f32 %v5305, %v5393
        %v5395 = vpop.f32.mrf.mxu0
        %v5396 = vadd.f32 %v5307, %v5395
        %5397 = vmatmul.bf16.gmra.mxu0 %v4285
        %v5398 = vpop.f32.mrf.mxu0
        %v5399 = vadd.f32 %v5310, %v5398
        %v5400 = vpop.f32.mrf.mxu0
        %v5401 = vadd.f32 %v5312, %v5400
        %5402 = vmatmul.bf16.gmra.mxu0 %v4294
        %v5403 = vpop.f32.mrf.mxu0
        %v5404 = vadd.f32 %v5315, %v5403
        %v5405 = vpop.f32.mrf.mxu0
        %v5406 = vadd.f32 %v5317, %v5405
        %5407 = vdwg.mxu0
        %5408 = vmatpush.bf16.msra.mxu0 %v4785
        %5409 = vmatpush.bf16.msra.mxu0 %v4784
        %5410 = vmatpush.bf16.msra.mxu0 %v4783
        %5411 = vmatpush.bf16.msra.mxu0 %v4782
        %5412 = vmatpush.bf16.msra.mxu0 %v4781
        %5413 = vmatpush.bf16.msra.mxu0 %v4780
        %5414 = vmatpush.bf16.msra.mxu0 %v4779
        %5415 = vmatpush.bf16.msra.mxu0 %v4778
        %5416 = vmatmul.bf16.gmra.mxu0 %v4160
        %v5417 = vpop.f32.mrf.mxu0
        %v5418 = vadd.f32 %v5329, %v5417
        %v5419 = vpop.f32.mrf.mxu0
        %v5420 = vadd.f32 %v5331, %v5419
        %5421 = vmatmul.bf16.gmra.mxu0 %v4169
        %v5422 = vpop.f32.mrf.mxu0
        %v5423 = vadd.f32 %v5334, %v5422
        %v5424 = vpop.f32.mrf.mxu0
        %v5425 = vadd.f32 %v5336, %v5424
        %5426 = vmatmul.bf16.gmra.mxu0 %v4178
        %v5427 = vpop.f32.mrf.mxu0
        %v5428 = vadd.f32 %v5339, %v5427
        %v5429 = vpop.f32.mrf.mxu0
        %v5430 = vadd.f32 %v5341, %v5429
        %5431 = vmatmul.bf16.gmra.mxu0 %v4187
        %v5432 = vpop.f32.mrf.mxu0
        %v5433 = vadd.f32 %v5344, %v5432
        %v5434 = vpop.f32.mrf.mxu0
        %v5435 = vadd.f32 %v5346, %v5434
        %5436 = vmatmul.bf16.gmra.mxu0 %v4196
        %v5437 = vpop.f32.mrf.mxu0
        %v5438 = vadd.f32 %v5349, %v5437
        %v5439 = vpop.f32.mrf.mxu0
        %v5440 = vadd.f32 %v5351, %v5439
        %5441 = vmatmul.bf16.gmra.mxu0 %v4205
        %v5442 = vpop.f32.mrf.mxu0
        %v5443 = vadd.f32 %v5354, %v5442
        %v5444 = vpop.f32.mrf.mxu0
        %v5445 = vadd.f32 %v5356, %v5444
        %5446 = vmatmul.bf16.gmra.mxu0 %v4214
        %v5447 = vpop.f32.mrf.mxu0
        %v5448 = vadd.f32 %v5359, %v5447
        %v5449 = vpop.f32.mrf.mxu0
        %v5450 = vadd.f32 %v5361, %v5449
        %5451 = vmatmul.bf16.gmra.mxu0 %v4223
        %v5452 = vpop.f32.mrf.mxu0
        %v5453 = vadd.f32 %v5364, %v5452
        %v5454 = vpop.f32.mrf.mxu0
        %v5455 = vadd.f32 %v5366, %v5454
        %5456 = vmatmul.bf16.gmra.mxu0 %v4232
        %v5457 = vpop.f32.mrf.mxu0
        %v5458 = vadd.f32 %v5369, %v5457
        %v5459 = vpop.f32.mrf.mxu0
        %v5460 = vadd.f32 %v5371, %v5459
        %5461 = vmatmul.bf16.gmra.mxu0 %v4241
        %v5462 = vpop.f32.mrf.mxu0
        %v5463 = vadd.f32 %v5374, %v5462
        %v5464 = vpop.f32.mrf.mxu0
        %v5465 = vadd.f32 %v5376, %v5464
        %5466 = vmatmul.bf16.gmra.mxu0 %v4250
        %v5467 = vpop.f32.mrf.mxu0
        %v5468 = vadd.f32 %v5379, %v5467
        %v5469 = vpop.f32.mrf.mxu0
        %v5470 = vadd.f32 %v5381, %v5469
        %5471 = vmatmul.bf16.gmra.mxu0 %v4259
        %v5472 = vpop.f32.mrf.mxu0
        %v5473 = vadd.f32 %v5384, %v5472
        %v5474 = vpop.f32.mrf.mxu0
        %v5475 = vadd.f32 %v5386, %v5474
        %5476 = vmatmul.bf16.gmra.mxu0 %v4268
        %v5477 = vpop.f32.mrf.mxu0
        %v5478 = vadd.f32 %v5389, %v5477
        %v5479 = vpop.f32.mrf.mxu0
        %v5480 = vadd.f32 %v5391, %v5479
        %5481 = vmatmul.bf16.gmra.mxu0 %v4277
        %v5482 = vpop.f32.mrf.mxu0
        %v5483 = vadd.f32 %v5394, %v5482
        %v5484 = vpop.f32.mrf.mxu0
        %v5485 = vadd.f32 %v5396, %v5484
        %5486 = vmatmul.bf16.gmra.mxu0 %v4286
        %v5487 = vpop.f32.mrf.mxu0
        %v5488 = vadd.f32 %v5399, %v5487
        %v5489 = vpop.f32.mrf.mxu0
        %v5490 = vadd.f32 %v5401, %v5489
        %5491 = vmatmul.bf16.gmra.mxu0 %v4295
        %v5492 = vpop.f32.mrf.mxu0
        %v5493 = vadd.f32 %v5404, %v5492
        %v5494 = vpop.f32.mrf.mxu0
        %v5495 = vadd.f32 %v5406, %v5494
        %5496 = vdwg.mxu0
        %5497 = vmatpush.bf16.msra.mxu0 %v4793
        %5498 = vmatpush.bf16.msra.mxu0 %v4792
        %5499 = vmatpush.bf16.msra.mxu0 %v4791
        %5500 = vmatpush.bf16.msra.mxu0 %v4790
        %5501 = vmatpush.bf16.msra.mxu0 %v4789
        %5502 = vmatpush.bf16.msra.mxu0 %v4788
        %5503 = vmatpush.bf16.msra.mxu0 %v4787
        %5504 = vmatpush.bf16.msra.mxu0 %v4786
        %5505 = vmatmul.bf16.gmra.mxu0 %v4161
        %v5506 = vpop.f32.mrf.mxu0
        %v5507 = vadd.f32 %v5418, %v5506
        %v5508 = vpop.f32.mrf.mxu0
        %v5509 = vadd.f32 %v5420, %v5508
        %5510 = vmatmul.bf16.gmra.mxu0 %v4170
        %v5511 = vpop.f32.mrf.mxu0
        %v5512 = vadd.f32 %v5423, %v5511
        %v5513 = vpop.f32.mrf.mxu0
        %v5514 = vadd.f32 %v5425, %v5513
        %5515 = vmatmul.bf16.gmra.mxu0 %v4179
        %v5516 = vpop.f32.mrf.mxu0
        %v5517 = vadd.f32 %v5428, %v5516
        %v5518 = vpop.f32.mrf.mxu0
        %v5519 = vadd.f32 %v5430, %v5518
        %5520 = vmatmul.bf16.gmra.mxu0 %v4188
        %v5521 = vpop.f32.mrf.mxu0
        %v5522 = vadd.f32 %v5433, %v5521
        %v5523 = vpop.f32.mrf.mxu0
        %v5524 = vadd.f32 %v5435, %v5523
        %5525 = vmatmul.bf16.gmra.mxu0 %v4197
        %v5526 = vpop.f32.mrf.mxu0
        %v5527 = vadd.f32 %v5438, %v5526
        %v5528 = vpop.f32.mrf.mxu0
        %v5529 = vadd.f32 %v5440, %v5528
        %5530 = vmatmul.bf16.gmra.mxu0 %v4206
        %v5531 = vpop.f32.mrf.mxu0
        %v5532 = vadd.f32 %v5443, %v5531
        %v5533 = vpop.f32.mrf.mxu0
        %v5534 = vadd.f32 %v5445, %v5533
        %5535 = vmatmul.bf16.gmra.mxu0 %v4215
        %v5536 = vpop.f32.mrf.mxu0
        %v5537 = vadd.f32 %v5448, %v5536
        %v5538 = vpop.f32.mrf.mxu0
        %v5539 = vadd.f32 %v5450, %v5538
        %5540 = vmatmul.bf16.gmra.mxu0 %v4224
        %v5541 = vpop.f32.mrf.mxu0
        %v5542 = vadd.f32 %v5453, %v5541
        %v5543 = vpop.f32.mrf.mxu0
        %v5544 = vadd.f32 %v5455, %v5543
        %5545 = vmatmul.bf16.gmra.mxu0 %v4233
        %v5546 = vpop.f32.mrf.mxu0
        %v5547 = vadd.f32 %v5458, %v5546
        %v5548 = vpop.f32.mrf.mxu0
        %v5549 = vadd.f32 %v5460, %v5548
        %5550 = vmatmul.bf16.gmra.mxu0 %v4242
        %v5551 = vpop.f32.mrf.mxu0
        %v5552 = vadd.f32 %v5463, %v5551
        %v5553 = vpop.f32.mrf.mxu0
        %v5554 = vadd.f32 %v5465, %v5553
        %5555 = vmatmul.bf16.gmra.mxu0 %v4251
        %v5556 = vpop.f32.mrf.mxu0
        %v5557 = vadd.f32 %v5468, %v5556
        %v5558 = vpop.f32.mrf.mxu0
        %v5559 = vadd.f32 %v5470, %v5558
        %5560 = vmatmul.bf16.gmra.mxu0 %v4260
        %v5561 = vpop.f32.mrf.mxu0
        %v5562 = vadd.f32 %v5473, %v5561
        %v5563 = vpop.f32.mrf.mxu0
        %v5564 = vadd.f32 %v5475, %v5563
        %5565 = vmatmul.bf16.gmra.mxu0 %v4269
        %v5566 = vpop.f32.mrf.mxu0
        %v5567 = vadd.f32 %v5478, %v5566
        %v5568 = vpop.f32.mrf.mxu0
        %v5569 = vadd.f32 %v5480, %v5568
        %5570 = vmatmul.bf16.gmra.mxu0 %v4278
        %v5571 = vpop.f32.mrf.mxu0
        %v5572 = vadd.f32 %v5483, %v5571
        %v5573 = vpop.f32.mrf.mxu0
        %v5574 = vadd.f32 %v5485, %v5573
        %5575 = vmatmul.bf16.gmra.mxu0 %v4287
        %v5576 = vpop.f32.mrf.mxu0
        %v5577 = vadd.f32 %v5488, %v5576
        %v5578 = vpop.f32.mrf.mxu0
        %v5579 = vadd.f32 %v5490, %v5578
        %5580 = vmatmul.bf16.gmra.mxu0 %v4296
        %v5581 = vpop.f32.mrf.mxu0
        %v5582 = vadd.f32 %v5493, %v5581
        %v5583 = vpop.f32.mrf.mxu0
        %v5584 = vadd.f32 %v5495, %v5583
        %5585 = vdwg.mxu0
        %5586 = vmatpush.bf16.msra.mxu0 %v4801
        %5587 = vmatpush.bf16.msra.mxu0 %v4800
        %5588 = vmatpush.bf16.msra.mxu0 %v4799
        %5589 = vmatpush.bf16.msra.mxu0 %v4798
        %5590 = vmatpush.bf16.msra.mxu0 %v4797
        %5591 = vmatpush.bf16.msra.mxu0 %v4796
        %5592 = vmatpush.bf16.msra.mxu0 %v4795
        %5593 = vmatpush.bf16.msra.mxu0 %v4794
        %5594 = vmatmul.bf16.gmra.mxu0 %v4162
        %v5595 = vpop.f32.mrf.mxu0
        %v5596 = vadd.f32 %v5507, %v5595
        %v5597 = vpop.f32.mrf.mxu0
        %v5598 = vadd.f32 %v5509, %v5597
        %5599 = vmatmul.bf16.gmra.mxu0 %v4171
        %v5600 = vpop.f32.mrf.mxu0
        %v5601 = vadd.f32 %v5512, %v5600
        %v5602 = vpop.f32.mrf.mxu0
        %v5603 = vadd.f32 %v5514, %v5602
        %5604 = vmatmul.bf16.gmra.mxu0 %v4180
        %v5605 = vpop.f32.mrf.mxu0
        %v5606 = vadd.f32 %v5517, %v5605
        %v5607 = vpop.f32.mrf.mxu0
        %v5608 = vadd.f32 %v5519, %v5607
        %5609 = vmatmul.bf16.gmra.mxu0 %v4189
        %v5610 = vpop.f32.mrf.mxu0
        %v5611 = vadd.f32 %v5522, %v5610
        %v5612 = vpop.f32.mrf.mxu0
        %v5613 = vadd.f32 %v5524, %v5612
        %5614 = vmatmul.bf16.gmra.mxu0 %v4198
        %v5615 = vpop.f32.mrf.mxu0
        %v5616 = vadd.f32 %v5527, %v5615
        %v5617 = vpop.f32.mrf.mxu0
        %v5618 = vadd.f32 %v5529, %v5617
        %5619 = vmatmul.bf16.gmra.mxu0 %v4207
        %v5620 = vpop.f32.mrf.mxu0
        %v5621 = vadd.f32 %v5532, %v5620
        %v5622 = vpop.f32.mrf.mxu0
        %v5623 = vadd.f32 %v5534, %v5622
        %5624 = vmatmul.bf16.gmra.mxu0 %v4216
        %v5625 = vpop.f32.mrf.mxu0
        %v5626 = vadd.f32 %v5537, %v5625
        %v5627 = vpop.f32.mrf.mxu0
        %v5628 = vadd.f32 %v5539, %v5627
        %5629 = vmatmul.bf16.gmra.mxu0 %v4225
        %v5630 = vpop.f32.mrf.mxu0
        %v5631 = vadd.f32 %v5542, %v5630
        %v5632 = vpop.f32.mrf.mxu0
        %v5633 = vadd.f32 %v5544, %v5632
        %5634 = vmatmul.bf16.gmra.mxu0 %v4234
        %v5635 = vpop.f32.mrf.mxu0
        %v5636 = vadd.f32 %v5547, %v5635
        %v5637 = vpop.f32.mrf.mxu0
        %v5638 = vadd.f32 %v5549, %v5637
        %5639 = vmatmul.bf16.gmra.mxu0 %v4243
        %v5640 = vpop.f32.mrf.mxu0
        %v5641 = vadd.f32 %v5552, %v5640
        %v5642 = vpop.f32.mrf.mxu0
        %v5643 = vadd.f32 %v5554, %v5642
        %5644 = vmatmul.bf16.gmra.mxu0 %v4252
        %v5645 = vpop.f32.mrf.mxu0
        %v5646 = vadd.f32 %v5557, %v5645
        %v5647 = vpop.f32.mrf.mxu0
        %v5648 = vadd.f32 %v5559, %v5647
        %5649 = vmatmul.bf16.gmra.mxu0 %v4261
        %v5650 = vpop.f32.mrf.mxu0
        %v5651 = vadd.f32 %v5562, %v5650
        %v5652 = vpop.f32.mrf.mxu0
        %v5653 = vadd.f32 %v5564, %v5652
        %5654 = vmatmul.bf16.gmra.mxu0 %v4270
        %v5655 = vpop.f32.mrf.mxu0
        %v5656 = vadd.f32 %v5567, %v5655
        %v5657 = vpop.f32.mrf.mxu0
        %v5658 = vadd.f32 %v5569, %v5657
        %5659 = vmatmul.bf16.gmra.mxu0 %v4279
        %v5660 = vpop.f32.mrf.mxu0
        %v5661 = vadd.f32 %v5572, %v5660
        %v5662 = vpop.f32.mrf.mxu0
        %v5663 = vadd.f32 %v5574, %v5662
        %5664 = vmatmul.bf16.gmra.mxu0 %v4288
        %v5665 = vpop.f32.mrf.mxu0
        %v5666 = vadd.f32 %v5577, %v5665
        %v5667 = vpop.f32.mrf.mxu0
        %v5668 = vadd.f32 %v5579, %v5667
        %5669 = vmatmul.bf16.gmra.mxu0 %v4297
        %v5670 = vpop.f32.mrf.mxu0
        %v5671 = vadd.f32 %v5582, %v5670
        %v5672 = vpop.f32.mrf.mxu0
        %v5673 = vadd.f32 %v5584, %v5672
        %5674 = vdwg.mxu0
        %v5675 = vld [vmem:[%s2] sm:$0x1]
        %v5677 = vperm.slane %v5675, 0
        %v5679 = vmul.f32 %v5596, %v5677
        %v5680 = vmul.f32 %v5598, %v5677
        %v5681 = vmul.f32 %v5601, %v5677
        %v5682 = vmul.f32 %v5603, %v5677
        %v5683 = vmul.f32 %v5606, %v5677
        %v5684 = vmul.f32 %v5608, %v5677
        %v5685 = vmul.f32 %v5611, %v5677
        %v5686 = vmul.f32 %v5613, %v5677
        %v5687 = vmul.f32 %v5616, %v5677
        %v5688 = vmul.f32 %v5618, %v5677
        %v5689 = vmul.f32 %v5621, %v5677
        %v5690 = vmul.f32 %v5623, %v5677
        %v5691 = vmul.f32 %v5626, %v5677
        %v5692 = vmul.f32 %v5628, %v5677
        %v5693 = vmul.f32 %v5631, %v5677
        %v5694 = vmul.f32 %v5633, %v5677
        %v5695 = vmul.f32 %v5636, %v5677
        %v5696 = vmul.f32 %v5638, %v5677
        %v5697 = vmul.f32 %v5641, %v5677
        %v5698 = vmul.f32 %v5643, %v5677
        %v5699 = vmul.f32 %v5646, %v5677
        %v5700 = vmul.f32 %v5648, %v5677
        %v5701 = vmul.f32 %v5651, %v5677
        %v5702 = vmul.f32 %v5653, %v5677
        %v5703 = vmul.f32 %v5656, %v5677
        %v5704 = vmul.f32 %v5658, %v5677
        %v5705 = vmul.f32 %v5661, %v5677
        %v5706 = vmul.f32 %v5663, %v5677
        %v5707 = vmul.f32 %v5666, %v5677
        %v5708 = vmul.f32 %v5668, %v5677
        %v5709 = vmul.f32 %v5671, %v5677
        %v5710 = vmul.f32 %v5673, %v5677
        %v5711 = vld [vmem:[%s3] sm:$0x1]
        %v5713 = vperm.slane %v5711, 0
        %v5715 = vadd.f32 %v5679, %v5713
        %v5716 = vadd.f32 %v5680, %v5713
        %v5717 = vadd.f32 %v5681, %v5713
        %v5718 = vadd.f32 %v5682, %v5713
        %v5719 = vadd.f32 %v5683, %v5713
        %v5720 = vadd.f32 %v5684, %v5713
        %v5721 = vadd.f32 %v5685, %v5713
        %v5722 = vadd.f32 %v5686, %v5713
        %v5723 = vadd.f32 %v5687, %v5713
        %v5724 = vadd.f32 %v5688, %v5713
        %v5725 = vadd.f32 %v5689, %v5713
        %v5726 = vadd.f32 %v5690, %v5713
        %v5727 = vadd.f32 %v5691, %v5713
        %v5728 = vadd.f32 %v5692, %v5713
        %v5729 = vadd.f32 %v5693, %v5713
        %v5730 = vadd.f32 %v5694, %v5713
        %v5731 = vadd.f32 %v5695, %v5713
        %v5732 = vadd.f32 %v5696, %v5713
        %v5733 = vadd.f32 %v5697, %v5713
        %v5734 = vadd.f32 %v5698, %v5713
        %v5735 = vadd.f32 %v5699, %v5713
        %v5736 = vadd.f32 %v5700, %v5713
        %v5737 = vadd.f32 %v5701, %v5713
        %v5738 = vadd.f32 %v5702, %v5713
        %v5739 = vadd.f32 %v5703, %v5713
        %v5740 = vadd.f32 %v5704, %v5713
        %v5741 = vadd.f32 %v5705, %v5713
        %v5742 = vadd.f32 %v5706, %v5713
        %v5743 = vadd.f32 %v5707, %v5713
        %v5744 = vadd.f32 %v5708, %v5713
        %v5745 = vadd.f32 %v5709, %v5713
        %v5746 = vadd.f32 %v5710, %v5713
        %v5747 = vmax.f32 %v5715, 0.0
        %v5748 = vmax.f32 %v5716, 0.0
        %v5749 = vmax.f32 %v5717, 0.0
        %v5750 = vmax.f32 %v5718, 0.0
        %v5751 = vmax.f32 %v5719, 0.0
        %v5752 = vmax.f32 %v5720, 0.0
        %v5753 = vmax.f32 %v5721, 0.0
        %v5754 = vmax.f32 %v5722, 0.0
        %v5755 = vmax.f32 %v5723, 0.0
        %v5756 = vmax.f32 %v5724, 0.0
        %v5757 = vmax.f32 %v5725, 0.0
        %v5758 = vmax.f32 %v5726, 0.0
        %v5759 = vmax.f32 %v5727, 0.0
        %v5760 = vmax.f32 %v5728, 0.0
        %v5761 = vmax.f32 %v5729, 0.0
        %v5762 = vmax.f32 %v5730, 0.0
        %v5763 = vmax.f32 %v5731, 0.0
        %v5764 = vmax.f32 %v5732, 0.0
        %v5765 = vmax.f32 %v5733, 0.0
        %v5766 = vmax.f32 %v5734, 0.0
        %v5767 = vmax.f32 %v5735, 0.0
        %v5768 = vmax.f32 %v5736, 0.0
        %v5769 = vmax.f32 %v5737, 0.0
        %v5770 = vmax.f32 %v5738, 0.0
        %v5771 = vmax.f32 %v5739, 0.0
        %v5772 = vmax.f32 %v5740, 0.0
        %v5773 = vmax.f32 %v5741, 0.0
        %v5774 = vmax.f32 %v5742, 0.0
        %v5775 = vmax.f32 %v5743, 0.0
        %v5776 = vmax.f32 %v5744, 0.0
        %v5777 = vmax.f32 %v5745, 0.0
        %v5778 = vmax.f32 %v5746, 0.0
        %v5779 = vpack.c.bf16 %v5747, %v5747
        %v5780 = vpack.c.bf16 %v5748, %v5748
        %v5781 = vpack.c.bf16 %v5749, %v5749
        %v5782 = vpack.c.bf16 %v5750, %v5750
        %v5783 = vpack.c.bf16 %v5751, %v5751
        %v5784 = vpack.c.bf16 %v5752, %v5752
        %v5785 = vpack.c.bf16 %v5753, %v5753
        %v5786 = vpack.c.bf16 %v5754, %v5754
        %v5787 = vpack.c.bf16 %v5755, %v5755
        %v5788 = vpack.c.bf16 %v5756, %v5756
        %v5789 = vpack.c.bf16 %v5757, %v5757
        %v5790 = vpack.c.bf16 %v5758, %v5758
        %v5791 = vpack.c.bf16 %v5759, %v5759
        %v5792 = vpack.c.bf16 %v5760, %v5760
        %v5793 = vpack.c.bf16 %v5761, %v5761
        %v5794 = vpack.c.bf16 %v5762, %v5762
        %v5795 = vpack.c.bf16 %v5763, %v5763
        %v5796 = vpack.c.bf16 %v5764, %v5764
        %v5797 = vpack.c.bf16 %v5765, %v5765
        %v5798 = vpack.c.bf16 %v5766, %v5766
        %v5799 = vpack.c.bf16 %v5767, %v5767
        %v5800 = vpack.c.bf16 %v5768, %v5768
        %v5801 = vpack.c.bf16 %v5769, %v5769
        %v5802 = vpack.c.bf16 %v5770, %v5770
        %v5803 = vpack.c.bf16 %v5771, %v5771
        %v5804 = vpack.c.bf16 %v5772, %v5772
        %v5805 = vpack.c.bf16 %v5773, %v5773
        %v5806 = vpack.c.bf16 %v5774, %v5774
        %v5807 = vpack.c.bf16 %v5775, %v5775
        %v5808 = vpack.c.bf16 %v5776, %v5776
        %v5809 = vpack.c.bf16 %v5777, %v5777
        %v5810 = vpack.c.bf16 %v5778, %v5778
        %v5812 = vshrl.u32 %v5779, 16
        %v5814 = vrot.slane %v5812, 7
        %v5815 = vshll.u32 %v5779, 16
        %v5817 = vor.u32 %v5814, %v5815
        %v5818 = vrot.slane %v5814, 4
        %v5820 = vshrl.u32 %v5780, 16
        %v5822 = vrot.slane %v5820, 7
        %v5823 = vshll.u32 %v5780, 16
        %v5825 = vor.u32 %v5822, %v5823
        %v5826 = vsel %vm463, %v5818, %v5825
        %v5827 = vrot.slane %v5822, 4
        %v5829 = vshrl.u32 %v5781, 16
        %v5831 = vrot.slane %v5829, 7
        %v5832 = vshll.u32 %v5781, 16
        %v5834 = vor.u32 %v5831, %v5832
        %v5835 = vrot.slane %v5831, 4
        %v5837 = vshrl.u32 %v5782, 16
        %v5839 = vrot.slane %v5837, 7
        %v5840 = vshll.u32 %v5782, 16
        %v5842 = vor.u32 %v5839, %v5840
        %v5843 = vsel %vm463, %v5835, %v5842
        %v5844 = vrot.slane %v5839, 4
        %v5846 = vshrl.u32 %v5783, 16
        %v5848 = vrot.slane %v5846, 7
        %v5849 = vshll.u32 %v5783, 16
        %v5851 = vor.u32 %v5848, %v5849
        %v5852 = vrot.slane %v5848, 4
        %v5854 = vshrl.u32 %v5784, 16
        %v5856 = vrot.slane %v5854, 7
        %v5857 = vshll.u32 %v5784, 16
        %v5859 = vor.u32 %v5856, %v5857
        %v5860 = vsel %vm463, %v5852, %v5859
        %v5861 = vrot.slane %v5856, 4
        %v5863 = vshrl.u32 %v5785, 16
        %v5865 = vrot.slane %v5863, 7
        %v5866 = vshll.u32 %v5785, 16
        %v5868 = vor.u32 %v5865, %v5866
        %v5869 = vrot.slane %v5865, 4
        %v5871 = vshrl.u32 %v5786, 16
        %v5873 = vrot.slane %v5871, 7
        %v5874 = vshll.u32 %v5786, 16
        %v5876 = vor.u32 %v5873, %v5874
        %v5877 = vsel %vm463, %v5869, %v5876
        %v5878 = vrot.slane %v5873, 4
        %v5880 = vshrl.u32 %v5787, 16
        %v5882 = vrot.slane %v5880, 7
        %v5883 = vshll.u32 %v5787, 16
        %v5885 = vor.u32 %v5882, %v5883
        %v5886 = vrot.slane %v5882, 4
        %v5888 = vshrl.u32 %v5788, 16
        %v5890 = vrot.slane %v5888, 7
        %v5891 = vshll.u32 %v5788, 16
        %v5893 = vor.u32 %v5890, %v5891
        %v5894 = vsel %vm463, %v5886, %v5893
        %v5895 = vrot.slane %v5890, 4
        %v5897 = vshrl.u32 %v5789, 16
        %v5899 = vrot.slane %v5897, 7
        %v5900 = vshll.u32 %v5789, 16
        %v5902 = vor.u32 %v5899, %v5900
        %v5903 = vrot.slane %v5899, 4
        %v5905 = vshrl.u32 %v5790, 16
        %v5907 = vrot.slane %v5905, 7
        %v5908 = vshll.u32 %v5790, 16
        %v5910 = vor.u32 %v5907, %v5908
        %v5911 = vsel %vm463, %v5903, %v5910
        %v5912 = vrot.slane %v5907, 4
        %v5914 = vshrl.u32 %v5791, 16
        %v5916 = vrot.slane %v5914, 7
        %v5917 = vshll.u32 %v5791, 16
        %v5919 = vor.u32 %v5916, %v5917
        %v5920 = vrot.slane %v5916, 4
        %v5922 = vshrl.u32 %v5792, 16
        %v5924 = vrot.slane %v5922, 7
        %v5925 = vshll.u32 %v5792, 16
        %v5927 = vor.u32 %v5924, %v5925
        %v5928 = vsel %vm463, %v5920, %v5927
        %v5929 = vrot.slane %v5924, 4
        %v5931 = vshrl.u32 %v5793, 16
        %v5933 = vrot.slane %v5931, 7
        %v5934 = vshll.u32 %v5793, 16
        %v5936 = vor.u32 %v5933, %v5934
        %v5937 = vrot.slane %v5933, 4
        %v5939 = vshrl.u32 %v5794, 16
        %v5941 = vrot.slane %v5939, 7
        %v5942 = vshll.u32 %v5794, 16
        %v5944 = vor.u32 %v5941, %v5942
        %v5945 = vsel %vm463, %v5937, %v5944
        %v5946 = vrot.slane %v5941, 4
        %v5948 = vshrl.u32 %v5795, 16
        %v5950 = vrot.slane %v5948, 7
        %v5951 = vshll.u32 %v5795, 16
        %v5953 = vor.u32 %v5950, %v5951
        %v5954 = vrot.slane %v5950, 4
        %v5956 = vshrl.u32 %v5796, 16
        %v5958 = vrot.slane %v5956, 7
        %v5959 = vshll.u32 %v5796, 16
        %v5961 = vor.u32 %v5958, %v5959
        %v5962 = vsel %vm463, %v5954, %v5961
        %v5963 = vrot.slane %v5958, 4
        %v5965 = vshrl.u32 %v5797, 16
        %v5967 = vrot.slane %v5965, 7
        %v5968 = vshll.u32 %v5797, 16
        %v5970 = vor.u32 %v5967, %v5968
        %v5971 = vrot.slane %v5967, 4
        %v5973 = vshrl.u32 %v5798, 16
        %v5975 = vrot.slane %v5973, 7
        %v5976 = vshll.u32 %v5798, 16
        %v5978 = vor.u32 %v5975, %v5976
        %v5979 = vsel %vm463, %v5971, %v5978
        %v5980 = vrot.slane %v5975, 4
        %v5982 = vshrl.u32 %v5799, 16
        %v5984 = vrot.slane %v5982, 7
        %v5985 = vshll.u32 %v5799, 16
        %v5987 = vor.u32 %v5984, %v5985
        %v5988 = vrot.slane %v5984, 4
        %v5990 = vshrl.u32 %v5800, 16
        %v5992 = vrot.slane %v5990, 7
        %v5993 = vshll.u32 %v5800, 16
        %v5995 = vor.u32 %v5992, %v5993
        %v5996 = vsel %vm463, %v5988, %v5995
        %v5997 = vrot.slane %v5992, 4
        %v5999 = vshrl.u32 %v5801, 16
        %v6001 = vrot.slane %v5999, 7
        %v6002 = vshll.u32 %v5801, 16
        %v6004 = vor.u32 %v6001, %v6002
        %v6005 = vrot.slane %v6001, 4
        %v6007 = vshrl.u32 %v5802, 16
        %v6009 = vrot.slane %v6007, 7
        %v6010 = vshll.u32 %v5802, 16
        %v6012 = vor.u32 %v6009, %v6010
        %v6013 = vsel %vm463, %v6005, %v6012
        %v6014 = vrot.slane %v6009, 4
        %v6016 = vshrl.u32 %v5803, 16
        %v6018 = vrot.slane %v6016, 7
        %v6019 = vshll.u32 %v5803, 16
        %v6021 = vor.u32 %v6018, %v6019
        %v6022 = vrot.slane %v6018, 4
        %v6024 = vshrl.u32 %v5804, 16
        %v6026 = vrot.slane %v6024, 7
        %v6027 = vshll.u32 %v5804, 16
        %v6029 = vor.u32 %v6026, %v6027
        %v6030 = vsel %vm463, %v6022, %v6029
        %v6031 = vrot.slane %v6026, 4
        %v6033 = vshrl.u32 %v5805, 16
        %v6035 = vrot.slane %v6033, 7
        %v6036 = vshll.u32 %v5805, 16
        %v6038 = vor.u32 %v6035, %v6036
        %v6039 = vrot.slane %v6035, 4
        %v6041 = vshrl.u32 %v5806, 16
        %v6043 = vrot.slane %v6041, 7
        %v6044 = vshll.u32 %v5806, 16
        %v6046 = vor.u32 %v6043, %v6044
        %v6047 = vsel %vm463, %v6039, %v6046
        %v6048 = vrot.slane %v6043, 4
        %v6050 = vshrl.u32 %v5807, 16
        %v6052 = vrot.slane %v6050, 7
        %v6053 = vshll.u32 %v5807, 16
        %v6055 = vor.u32 %v6052, %v6053
        %v6056 = vrot.slane %v6052, 4
        %v6058 = vshrl.u32 %v5808, 16
        %v6060 = vrot.slane %v6058, 7
        %v6061 = vshll.u32 %v5808, 16
        %v6063 = vor.u32 %v6060, %v6061
        %v6064 = vsel %vm463, %v6056, %v6063
        %v6065 = vrot.slane %v6060, 4
        %v6067 = vshrl.u32 %v5809, 16
        %v6069 = vrot.slane %v6067, 7
        %v6070 = vshll.u32 %v5809, 16
        %v6072 = vor.u32 %v6069, %v6070
        %v6073 = vrot.slane %v6069, 4
        %v6075 = vshrl.u32 %v5810, 16
        %v6077 = vrot.slane %v6075, 7
        %v6078 = vshll.u32 %v5810, 16
        %v6080 = vor.u32 %v6077, %v6078
        %v6081 = vsel %vm463, %v6073, %v6080
        %v6082 = vrot.slane %v6077, 4
        %v6131 = vld [vmem:[%s784] sm:$0xf]
        %v6132 = vsel %vm786, %v5817, %v6131
        %6133 = vst [vmem:[%s784] sm:$0xf] %v6132
        %6134 = vst [vmem:[%s784 + $0x4] sm:$0xf] %v5826
        %v6135 = vld [vmem:[%s784 + $0x8] sm:$0x1]
        %v6136 = vsel %vm287, %v5827, %v6135
        %6137 = vst [vmem:[%s784 + $0x8] sm:$0x1] %v6136
        %v6138 = vld [vmem:[%s784 + $0xc] sm:$0xf]
        %v6139 = vsel %vm786, %v5834, %v6138
        %6140 = vst [vmem:[%s784 + $0xc] sm:$0xf] %v6139
        %6141 = vst [vmem:[%s784 + $0x10] sm:$0xf] %v5843
        %v6142 = vld [vmem:[%s784 + $0x14] sm:$0x1]
        %v6143 = vsel %vm287, %v5844, %v6142
        %6144 = vst [vmem:[%s784 + $0x14] sm:$0x1] %v6143
        %v6145 = vld [vmem:[%s784 + $0x18] sm:$0xf]
        %v6146 = vsel %vm786, %v5851, %v6145
        %6147 = vst [vmem:[%s784 + $0x18] sm:$0xf] %v6146
        %6148 = vst [vmem:[%s784 + $0x1c] sm:$0xf] %v5860
        %v6149 = vld [vmem:[%s784 + $0x20] sm:$0x1]
        %v6150 = vsel %vm287, %v5861, %v6149
        %6151 = vst [vmem:[%s784 + $0x20] sm:$0x1] %v6150
        %v6152 = vld [vmem:[%s784 + $0x24] sm:$0xf]
        %v6153 = vsel %vm786, %v5868, %v6152
        %6154 = vst [vmem:[%s784 + $0x24] sm:$0xf] %v6153
        %6155 = vst [vmem:[%s784 + $0x28] sm:$0xf] %v5877
        %v6156 = vld [vmem:[%s784 + $0x2c] sm:$0x1]
        %v6157 = vsel %vm287, %v5878, %v6156
        %6158 = vst [vmem:[%s784 + $0x2c] sm:$0x1] %v6157
        %v6159 = vld [vmem:[%s784 + $0x30] sm:$0xf]
        %v6160 = vsel %vm786, %v5885, %v6159
        %6161 = vst [vmem:[%s784 + $0x30] sm:$0xf] %v6160
        %6162 = vst [vmem:[%s784 + $0x34] sm:$0xf] %v5894
        %v6163 = vld [vmem:[%s784 + $0x38] sm:$0x1]
        %v6164 = vsel %vm287, %v5895, %v6163
        %6165 = vst [vmem:[%s784 + $0x38] sm:$0x1] %v6164
        %v6166 = vld [vmem:[%s784 + $0x3c] sm:$0xf]
        %v6167 = vsel %vm786, %v5902, %v6166
        %6168 = vst [vmem:[%s784 + $0x3c] sm:$0xf] %v6167
        %6169 = vst [vmem:[%s784 + $0x40] sm:$0xf] %v5911
        %v6170 = vld [vmem:[%s784 + $0x44] sm:$0x1]
        %v6171 = vsel %vm287, %v5912, %v6170
        %6172 = vst [vmem:[%s784 + $0x44] sm:$0x1] %v6171
        %v6173 = vld [vmem:[%s784 + $0x48] sm:$0xf]
        %v6174 = vsel %vm786, %v5919, %v6173
        %6175 = vst [vmem:[%s784 + $0x48] sm:$0xf] %v6174
        %6176 = vst [vmem:[%s784 + $0x4c] sm:$0xf] %v5928
        %v6177 = vld [vmem:[%s784 + $0x50] sm:$0x1]
        %v6178 = vsel %vm287, %v5929, %v6177
        %6179 = vst [vmem:[%s784 + $0x50] sm:$0x1] %v6178
        %v6180 = vld [vmem:[%s784 + $0x54] sm:$0xf]
        %v6181 = vsel %vm786, %v5936, %v6180
        %6182 = vst [vmem:[%s784 + $0x54] sm:$0xf] %v6181
        %6183 = vst [vmem:[%s784 + $0x58] sm:$0xf] %v5945
        %v6184 = vld [vmem:[%s784 + $0x5c] sm:$0x1]
        %v6185 = vsel %vm287, %v5946, %v6184
        %6186 = vst [vmem:[%s784 + $0x5c] sm:$0x1] %v6185
        %v6187 = vld [vmem:[%s784 + $0x60] sm:$0xf]
        %v6188 = vsel %vm786, %v5953, %v6187
        %6189 = vst [vmem:[%s784 + $0x60] sm:$0xf] %v6188
        %6190 = vst [vmem:[%s784 + $0x64] sm:$0xf] %v5962
        %v6191 = vld [vmem:[%s784 + $0x68] sm:$0x1]
        %v6192 = vsel %vm287, %v5963, %v6191
        %6193 = vst [vmem:[%s784 + $0x68] sm:$0x1] %v6192
        %v6194 = vld [vmem:[%s784 + $0x6c] sm:$0xf]
        %v6195 = vsel %vm786, %v5970, %v6194
        %6196 = vst [vmem:[%s784 + $0x6c] sm:$0xf] %v6195
        %6197 = vst [vmem:[%s784 + $0x70] sm:$0xf] %v5979
        %v6198 = vld [vmem:[%s784 + $0x74] sm:$0x1]
        %v6199 = vsel %vm287, %v5980, %v6198
        %6200 = vst [vmem:[%s784 + $0x74] sm:$0x1] %v6199
        %v6201 = vld [vmem:[%s784 + $0x78] sm:$0xf]
        %v6202 = vsel %vm786, %v5987, %v6201
        %6203 = vst [vmem:[%s784 + $0x78] sm:$0xf] %v6202
        %6204 = vst [vmem:[%s784 + $0x7c] sm:$0xf] %v5996
        %v6205 = vld [vmem:[%s784 + $0x80] sm:$0x1]
        %v6206 = vsel %vm287, %v5997, %v6205
        %6207 = vst [vmem:[%s784 + $0x80] sm:$0x1] %v6206
        %v6208 = vld [vmem:[%s784 + $0x84] sm:$0xf]
        %v6209 = vsel %vm786, %v6004, %v6208
        %6210 = vst [vmem:[%s784 + $0x84] sm:$0xf] %v6209
        %6211 = vst [vmem:[%s784 + $0x88] sm:$0xf] %v6013
        %v6212 = vld [vmem:[%s784 + $0x8c] sm:$0x1]
        %v6213 = vsel %vm287, %v6014, %v6212
        %6214 = vst [vmem:[%s784 + $0x8c] sm:$0x1] %v6213
        %v6215 = vld [vmem:[%s784 + $0x90] sm:$0xf]
        %v6216 = vsel %vm786, %v6021, %v6215
        %6217 = vst [vmem:[%s784 + $0x90] sm:$0xf] %v6216
        %6218 = vst [vmem:[%s784 + $0x94] sm:$0xf] %v6030
        %v6219 = vld [vmem:[%s784 + $0x98] sm:$0x1]
        %v6220 = vsel %vm287, %v6031, %v6219
        %6221 = vst [vmem:[%s784 + $0x98] sm:$0x1] %v6220
        %v6222 = vld [vmem:[%s784 + $0x9c] sm:$0xf]
        %v6223 = vsel %vm786, %v6038, %v6222
        %6224 = vst [vmem:[%s784 + $0x9c] sm:$0xf] %v6223
        %6225 = vst [vmem:[%s784 + $0xa0] sm:$0xf] %v6047
        %v6226 = vld [vmem:[%s784 + $0xa4] sm:$0x1]
        %v6227 = vsel %vm287, %v6048, %v6226
        %6228 = vst [vmem:[%s784 + $0xa4] sm:$0x1] %v6227
        %v6229 = vld [vmem:[%s784 + $0xa8] sm:$0xf]
        %v6230 = vsel %vm786, %v6055, %v6229
        %6231 = vst [vmem:[%s784 + $0xa8] sm:$0xf] %v6230
        %6232 = vst [vmem:[%s784 + $0xac] sm:$0xf] %v6064
        %v6233 = vld [vmem:[%s784 + $0xb0] sm:$0x1]
        %v6234 = vsel %vm287, %v6065, %v6233
        %6235 = vst [vmem:[%s784 + $0xb0] sm:$0x1] %v6234
        %v6236 = vld [vmem:[%s784 + $0xb4] sm:$0xf]
        %v6237 = vsel %vm786, %v6072, %v6236
        %6238 = vst [vmem:[%s784 + $0xb4] sm:$0xf] %v6237
        %6239 = vst [vmem:[%s784 + $0xb8] sm:$0xf] %v6081
        %v6240 = vld [vmem:[%s784 + $0xbc] sm:$0x1]
        %v6241 = vsel %vm287, %v6082, %v6240
        %6242 = vst [vmem:[%s784 + $0xbc] sm:$0x1] %v6241
        %v6243 = vld [vmem:[#allocation2] sm:$0xf]
        %v6244 = vld [vmem:[#allocation2 + $0x4] sm:$0xf]
        %v6245 = vld [vmem:[#allocation2 + $0xc] sm:$0xf]
        %v6246 = vld [vmem:[#allocation2 + $0x10] sm:$0xf]
        %v6247 = vld [vmem:[#allocation2 + $0x18] sm:$0xf]
        %v6248 = vld [vmem:[#allocation2 + $0x1c] sm:$0xf]
        %v6249 = vld [vmem:[#allocation2 + $0x24] sm:$0xf]
        %v6250 = vld [vmem:[#allocation2 + $0x28] sm:$0xf]
        %v6251 = vld [vmem:[#allocation2 + $0x30] sm:$0xf]
        %v6252 = vld [vmem:[#allocation2 + $0x34] sm:$0xf]
        %v6253 = vld [vmem:[#allocation2 + $0x3c] sm:$0xf]
        %v6254 = vld [vmem:[#allocation2 + $0x40] sm:$0xf]
        %v6255 = vld [vmem:[#allocation2 + $0x48] sm:$0xf]
        %v6256 = vld [vmem:[#allocation2 + $0x4c] sm:$0xf]
        %v6257 = vld [vmem:[#allocation2 + $0x54] sm:$0xf]
        %v6258 = vld [vmem:[#allocation2 + $0x58] sm:$0xf]
        %v6259 = vld [vmem:[#allocation2 + $0x60] sm:$0xf]
        %v6260 = vld [vmem:[#allocation2 + $0x64] sm:$0xf]
        %v6261 = vld [vmem:[#allocation2 + $0x6c] sm:$0xf]
        %v6262 = vld [vmem:[#allocation2 + $0x70] sm:$0xf]
        %v6263 = vld [vmem:[#allocation2 + $0x78] sm:$0xf]
        %v6264 = vld [vmem:[#allocation2 + $0x7c] sm:$0xf]
        %v6265 = vld [vmem:[#allocation2 + $0x84] sm:$0xf]
        %v6266 = vld [vmem:[#allocation2 + $0x88] sm:$0xf]
        %v6267 = vld [vmem:[#allocation2 + $0x90] sm:$0xf]
        %v6268 = vld [vmem:[#allocation2 + $0x94] sm:$0xf]
        %v6269 = vld [vmem:[#allocation2 + $0x9c] sm:$0xf]
        %v6270 = vld [vmem:[#allocation2 + $0xa0] sm:$0xf]
        %v6271 = vld [vmem:[#allocation2 + $0xa8] sm:$0xf]
        %v6272 = vld [vmem:[#allocation2 + $0xac] sm:$0xf]
        %v6273 = vld [vmem:[#allocation2 + $0xb4] sm:$0xf]
        %v6274 = vld [vmem:[#allocation2 + $0xb8] sm:$0xf]
        %6275 = vst [vmem:[#allocation3] sm:$0xf] %v6243
        %6276 = vst [vmem:[#allocation3 + $0x24] sm:$0xf] %v6244
        %6277 = vst [vmem:[#allocation3 + $0x48] sm:$0xf] %v6245
        %6278 = vst [vmem:[#allocation3 + $0x6c] sm:$0xf] %v6246
        %6279 = vst [vmem:[#allocation3 + $0x90] sm:$0xf] %v6247
        %6280 = vst [vmem:[#allocation3 + $0xb4] sm:$0xf] %v6248
        %6281 = vst [vmem:[#allocation3 + $0xd8] sm:$0xf] %v6249
        %6282 = vst [vmem:[#allocation3 + $0xfc] sm:$0xf] %v6250
        %6283 = vst [vmem:[#allocation3 + $0x120] sm:$0xf] %v6251
        %6284 = vst [vmem:[#allocation3 + $0x144] sm:$0xf] %v6252
        %6285 = vst [vmem:[#allocation3 + $0x168] sm:$0xf] %v6253
        %6286 = vst [vmem:[#allocation3 + $0x18c] sm:$0xf] %v6254
        %6287 = vst [vmem:[#allocation3 + $0x1b0] sm:$0xf] %v6255
        %6288 = vst [vmem:[#allocation3 + $0x1d4] sm:$0xf] %v6256
        %6289 = vst [vmem:[#allocation3 + $0x1f8] sm:$0xf] %v6257
        %6290 = vst [vmem:[#allocation3 + $0x21c] sm:$0xf] %v6258
        %6291 = vst [vmem:[#allocation3 + $0x240] sm:$0xf] %v6259
        %6292 = vst [vmem:[#allocation3 + $0x264] sm:$0xf] %v6260
        %6293 = vst [vmem:[#allocation3 + $0x288] sm:$0xf] %v6261
        %6294 = vst [vmem:[#allocation3 + $0x2ac] sm:$0xf] %v6262
        %6295 = vst [vmem:[#allocation3 + $0x2d0] sm:$0xf] %v6263
        %6296 = vst [vmem:[#allocation3 + $0x2f4] sm:$0xf] %v6264
        %6297 = vst [vmem:[#allocation3 + $0x318] sm:$0xf] %v6265
        %6298 = vst [vmem:[#allocation3 + $0x33c] sm:$0xf] %v6266
        %6299 = vst [vmem:[#allocation3 + $0x360] sm:$0xf] %v6267
        %6300 = vst [vmem:[#allocation3 + $0x384] sm:$0xf] %v6268
        %6301 = vst [vmem:[#allocation3 + $0x3a8] sm:$0xf] %v6269
        %6302 = vst [vmem:[#allocation3 + $0x3cc] sm:$0xf] %v6270
        %6303 = vst [vmem:[#allocation3 + $0x3f0] sm:$0xf] %v6271
        %6304 = vst [vmem:[#allocation3 + $0x414] sm:$0xf] %v6272
        %6305 = vst [vmem:[#allocation3 + $0x438] sm:$0xf] %v6273
        %6306 = vst [vmem:[#allocation3 + $0x45c] sm:$0xf] %v6274
        %v6307 = vld [vmem:[#allocation2] sm:$0xf]
        %v6308 = vld [vmem:[#allocation2 + $0x4] sm:$0xf]
        %v6309 = vld [vmem:[#allocation2 + $0x8] sm:$0x1]
        %v6310 = vld [vmem:[#allocation2 + $0xc] sm:$0xf]
        %v6311 = vld [vmem:[#allocation2 + $0x10] sm:$0xf]
        %v6312 = vld [vmem:[#allocation2 + $0x14] sm:$0x1]
        %v6313 = vld [vmem:[#allocation2 + $0x18] sm:$0xf]
        %v6314 = vld [vmem:[#allocation2 + $0x1c] sm:$0xf]
        %v6315 = vld [vmem:[#allocation2 + $0x20] sm:$0x1]
        %v6316 = vld [vmem:[#allocation2 + $0x24] sm:$0xf]
        %v6317 = vld [vmem:[#allocation2 + $0x28] sm:$0xf]
        %v6318 = vld [vmem:[#allocation2 + $0x2c] sm:$0x1]
        %v6319 = vld [vmem:[#allocation2 + $0x30] sm:$0xf]
        %v6320 = vld [vmem:[#allocation2 + $0x34] sm:$0xf]
        %v6321 = vld [vmem:[#allocation2 + $0x38] sm:$0x1]
        %v6322 = vld [vmem:[#allocation2 + $0x3c] sm:$0xf]
        %v6323 = vld [vmem:[#allocation2 + $0x40] sm:$0xf]
        %v6324 = vld [vmem:[#allocation2 + $0x44] sm:$0x1]
        %v6325 = vld [vmem:[#allocation2 + $0x48] sm:$0xf]
        %v6326 = vld [vmem:[#allocation2 + $0x4c] sm:$0xf]
        %v6327 = vld [vmem:[#allocation2 + $0x50] sm:$0x1]
        %v6328 = vld [vmem:[#allocation2 + $0x54] sm:$0xf]
        %v6329 = vld [vmem:[#allocation2 + $0x58] sm:$0xf]
        %v6330 = vld [vmem:[#allocation2 + $0x5c] sm:$0x1]
        %v6331 = vld [vmem:[#allocation2 + $0x60] sm:$0xf]
        %v6332 = vld [vmem:[#allocation2 + $0x64] sm:$0xf]
        %v6333 = vld [vmem:[#allocation2 + $0x68] sm:$0x1]
        %v6334 = vld [vmem:[#allocation2 + $0x6c] sm:$0xf]
        %v6335 = vld [vmem:[#allocation2 + $0x70] sm:$0xf]
        %v6336 = vld [vmem:[#allocation2 + $0x74] sm:$0x1]
        %v6337 = vld [vmem:[#allocation2 + $0x78] sm:$0xf]
        %v6338 = vld [vmem:[#allocation2 + $0x7c] sm:$0xf]
        %v6339 = vld [vmem:[#allocation2 + $0x80] sm:$0x1]
        %v6340 = vld [vmem:[#allocation2 + $0x84] sm:$0xf]
        %v6341 = vld [vmem:[#allocation2 + $0x88] sm:$0xf]
        %v6342 = vld [vmem:[#allocation2 + $0x8c] sm:$0x1]
        %v6343 = vld [vmem:[#allocation2 + $0x90] sm:$0xf]
        %v6344 = vld [vmem:[#allocation2 + $0x94] sm:$0xf]
        %v6345 = vld [vmem:[#allocation2 + $0x98] sm:$0x1]
        %v6346 = vld [vmem:[#allocation2 + $0x9c] sm:$0xf]
        %v6347 = vld [vmem:[#allocation2 + $0xa0] sm:$0xf]
        %v6348 = vld [vmem:[#allocation2 + $0xa4] sm:$0x1]
        %v6349 = vld [vmem:[#allocation2 + $0xa8] sm:$0xf]
        %v6350 = vld [vmem:[#allocation2 + $0xac] sm:$0xf]
        %v6351 = vld [vmem:[#allocation2 + $0xb0] sm:$0x1]
        %v6352 = vld [vmem:[#allocation2 + $0xb4] sm:$0xf]
        %v6353 = vld [vmem:[#allocation2 + $0xb8] sm:$0xf]
        %v6354 = vld [vmem:[#allocation2 + $0xbc] sm:$0x1]
        %v6356 = vshrl.u32 %v6307, 16
        %v6358 = vrot.slane %v6356, 4
        %v6359 = vshll.u32 %v6307, 16
        %v6361 = vrot.slane %v6359, 5
        %v6362 = vor.u32 %v6358, %v6361
        %v6363 = vrot.slane %v6362, 4
        %v6365 = vshll.u32 %v6308, 16
        %v6367 = vrot.slane %v6365, 5
        %v6368 = vsel %vm1013, %v6363, %v6367
        %v6369 = vshrl.u32 %v6308, 16
        %v6371 = vrot.slane %v6369, 4
        %v6372 = vor.u32 %v6371, %v6367
        %v6373 = vrot.slane %v6372, 4
        %v6375 = vshll.u32 %v6309, 16
        %v6377 = vrot.slane %v6375, 5
        %v6378 = vsel %vm1013, %v6373, %v6377
        %v6380 = vshrl.u32 %v6310, 16
        %v6382 = vrot.slane %v6380, 4
        %v6383 = vshll.u32 %v6310, 16
        %v6385 = vrot.slane %v6383, 5
        %v6386 = vor.u32 %v6382, %v6385
        %v6387 = vrot.slane %v6386, 4
        %v6389 = vshll.u32 %v6311, 16
        %v6391 = vrot.slane %v6389, 5
        %v6392 = vsel %vm1013, %v6387, %v6391
        %v6393 = vshrl.u32 %v6311, 16
        %v6395 = vrot.slane %v6393, 4
        %v6396 = vor.u32 %v6395, %v6391
        %v6397 = vrot.slane %v6396, 4
        %v6399 = vshll.u32 %v6312, 16
        %v6401 = vrot.slane %v6399, 5
        %v6402 = vsel %vm1013, %v6397, %v6401
        %v6404 = vshrl.u32 %v6313, 16
        %v6406 = vrot.slane %v6404, 4
        %v6407 = vshll.u32 %v6313, 16
        %v6409 = vrot.slane %v6407, 5
        %v6410 = vor.u32 %v6406, %v6409
        %v6411 = vrot.slane %v6410, 4
        %v6413 = vshll.u32 %v6314, 16
        %v6415 = vrot.slane %v6413, 5
        %v6416 = vsel %vm1013, %v6411, %v6415
        %v6417 = vshrl.u32 %v6314, 16
        %v6419 = vrot.slane %v6417, 4
        %v6420 = vor.u32 %v6419, %v6415
        %v6421 = vrot.slane %v6420, 4
        %v6423 = vshll.u32 %v6315, 16
        %v6425 = vrot.slane %v6423, 5
        %v6426 = vsel %vm1013, %v6421, %v6425
        %v6428 = vshrl.u32 %v6316, 16
        %v6430 = vrot.slane %v6428, 4
        %v6431 = vshll.u32 %v6316, 16
        %v6433 = vrot.slane %v6431, 5
        %v6434 = vor.u32 %v6430, %v6433
        %v6435 = vrot.slane %v6434, 4
        %v6437 = vshll.u32 %v6317, 16
        %v6439 = vrot.slane %v6437, 5
        %v6440 = vsel %vm1013, %v6435, %v6439
        %v6441 = vshrl.u32 %v6317, 16
        %v6443 = vrot.slane %v6441, 4
        %v6444 = vor.u32 %v6443, %v6439
        %v6445 = vrot.slane %v6444, 4
        %v6447 = vshll.u32 %v6318, 16
        %v6449 = vrot.slane %v6447, 5
        %v6450 = vsel %vm1013, %v6445, %v6449
        %v6452 = vshrl.u32 %v6319, 16
        %v6454 = vrot.slane %v6452, 4
        %v6455 = vshll.u32 %v6319, 16
        %v6457 = vrot.slane %v6455, 5
        %v6458 = vor.u32 %v6454, %v6457
        %v6459 = vrot.slane %v6458, 4
        %v6461 = vshll.u32 %v6320, 16
        %v6463 = vrot.slane %v6461, 5
        %v6464 = vsel %vm1013, %v6459, %v6463
        %v6465 = vshrl.u32 %v6320, 16
        %v6467 = vrot.slane %v6465, 4
        %v6468 = vor.u32 %v6467, %v6463
        %v6469 = vrot.slane %v6468, 4
        %v6471 = vshll.u32 %v6321, 16
        %v6473 = vrot.slane %v6471, 5
        %v6474 = vsel %vm1013, %v6469, %v6473
        %v6476 = vshrl.u32 %v6322, 16
        %v6478 = vrot.slane %v6476, 4
        %v6479 = vshll.u32 %v6322, 16
        %v6481 = vrot.slane %v6479, 5
        %v6482 = vor.u32 %v6478, %v6481
        %v6483 = vrot.slane %v6482, 4
        %v6485 = vshll.u32 %v6323, 16
        %v6487 = vrot.slane %v6485, 5
        %v6488 = vsel %vm1013, %v6483, %v6487
        %v6489 = vshrl.u32 %v6323, 16
        %v6491 = vrot.slane %v6489, 4
        %v6492 = vor.u32 %v6491, %v6487
        %v6493 = vrot.slane %v6492, 4
        %v6495 = vshll.u32 %v6324, 16
        %v6497 = vrot.slane %v6495, 5
        %v6498 = vsel %vm1013, %v6493, %v6497
        %v6500 = vshrl.u32 %v6325, 16
        %v6502 = vrot.slane %v6500, 4
        %v6503 = vshll.u32 %v6325, 16
        %v6505 = vrot.slane %v6503, 5
        %v6506 = vor.u32 %v6502, %v6505
        %v6507 = vrot.slane %v6506, 4
        %v6509 = vshll.u32 %v6326, 16
        %v6511 = vrot.slane %v6509, 5
        %v6512 = vsel %vm1013, %v6507, %v6511
        %v6513 = vshrl.u32 %v6326, 16
        %v6515 = vrot.slane %v6513, 4
        %v6516 = vor.u32 %v6515, %v6511
        %v6517 = vrot.slane %v6516, 4
        %v6519 = vshll.u32 %v6327, 16
        %v6521 = vrot.slane %v6519, 5
        %v6522 = vsel %vm1013, %v6517, %v6521
        %v6524 = vshrl.u32 %v6328, 16
        %v6526 = vrot.slane %v6524, 4
        %v6527 = vshll.u32 %v6328, 16
        %v6529 = vrot.slane %v6527, 5
        %v6530 = vor.u32 %v6526, %v6529
        %v6531 = vrot.slane %v6530, 4
        %v6533 = vshll.u32 %v6329, 16
        %v6535 = vrot.slane %v6533, 5
        %v6536 = vsel %vm1013, %v6531, %v6535
        %v6537 = vshrl.u32 %v6329, 16
        %v6539 = vrot.slane %v6537, 4
        %v6540 = vor.u32 %v6539, %v6535
        %v6541 = vrot.slane %v6540, 4
        %v6543 = vshll.u32 %v6330, 16
        %v6545 = vrot.slane %v6543, 5
        %v6546 = vsel %vm1013, %v6541, %v6545
        %v6548 = vshrl.u32 %v6331, 16
        %v6550 = vrot.slane %v6548, 4
        %v6551 = vshll.u32 %v6331, 16
        %v6553 = vrot.slane %v6551, 5
        %v6554 = vor.u32 %v6550, %v6553
        %v6555 = vrot.slane %v6554, 4
        %v6557 = vshll.u32 %v6332, 16
        %v6559 = vrot.slane %v6557, 5
        %v6560 = vsel %vm1013, %v6555, %v6559
        %v6561 = vshrl.u32 %v6332, 16
        %v6563 = vrot.slane %v6561, 4
        %v6564 = vor.u32 %v6563, %v6559
        %v6565 = vrot.slane %v6564, 4
        %v6567 = vshll.u32 %v6333, 16
        %v6569 = vrot.slane %v6567, 5
        %v6570 = vsel %vm1013, %v6565, %v6569
        %v6572 = vshrl.u32 %v6334, 16
        %v6574 = vrot.slane %v6572, 4
        %v6575 = vshll.u32 %v6334, 16
        %v6577 = vrot.slane %v6575, 5
        %v6578 = vor.u32 %v6574, %v6577
        %v6579 = vrot.slane %v6578, 4
        %v6581 = vshll.u32 %v6335, 16
        %v6583 = vrot.slane %v6581, 5
        %v6584 = vsel %vm1013, %v6579, %v6583
        %v6585 = vshrl.u32 %v6335, 16
        %v6587 = vrot.slane %v6585, 4
        %v6588 = vor.u32 %v6587, %v6583
        %v6589 = vrot.slane %v6588, 4
        %v6591 = vshll.u32 %v6336, 16
        %v6593 = vrot.slane %v6591, 5
        %v6594 = vsel %vm1013, %v6589, %v6593
        %v6596 = vshrl.u32 %v6337, 16
        %v6598 = vrot.slane %v6596, 4
        %v6599 = vshll.u32 %v6337, 16
        %v6601 = vrot.slane %v6599, 5
        %v6602 = vor.u32 %v6598, %v6601
        %v6603 = vrot.slane %v6602, 4
        %v6605 = vshll.u32 %v6338, 16
        %v6607 = vrot.slane %v6605, 5
        %v6608 = vsel %vm1013, %v6603, %v6607
        %v6609 = vshrl.u32 %v6338, 16
        %v6611 = vrot.slane %v6609, 4
        %v6612 = vor.u32 %v6611, %v6607
        %v6613 = vrot.slane %v6612, 4
        %v6615 = vshll.u32 %v6339, 16
        %v6617 = vrot.slane %v6615, 5
        %v6618 = vsel %vm1013, %v6613, %v6617
        %v6620 = vshrl.u32 %v6340, 16
        %v6622 = vrot.slane %v6620, 4
        %v6623 = vshll.u32 %v6340, 16
        %v6625 = vrot.slane %v6623, 5
        %v6626 = vor.u32 %v6622, %v6625
        %v6627 = vrot.slane %v6626, 4
        %v6629 = vshll.u32 %v6341, 16
        %v6631 = vrot.slane %v6629, 5
        %v6632 = vsel %vm1013, %v6627, %v6631
        %v6633 = vshrl.u32 %v6341, 16
        %v6635 = vrot.slane %v6633, 4
        %v6636 = vor.u32 %v6635, %v6631
        %v6637 = vrot.slane %v6636, 4
        %v6639 = vshll.u32 %v6342, 16
        %v6641 = vrot.slane %v6639, 5
        %v6642 = vsel %vm1013, %v6637, %v6641
        %v6644 = vshrl.u32 %v6343, 16
        %v6646 = vrot.slane %v6644, 4
        %v6647 = vshll.u32 %v6343, 16
        %v6649 = vrot.slane %v6647, 5
        %v6650 = vor.u32 %v6646, %v6649
        %v6651 = vrot.slane %v6650, 4
        %v6653 = vshll.u32 %v6344, 16
        %v6655 = vrot.slane %v6653, 5
        %v6656 = vsel %vm1013, %v6651, %v6655
        %v6657 = vshrl.u32 %v6344, 16
        %v6659 = vrot.slane %v6657, 4
        %v6660 = vor.u32 %v6659, %v6655
        %v6661 = vrot.slane %v6660, 4
        %v6663 = vshll.u32 %v6345, 16
        %v6665 = vrot.slane %v6663, 5
        %v6666 = vsel %vm1013, %v6661, %v6665
        %v6668 = vshrl.u32 %v6346, 16
        %v6670 = vrot.slane %v6668, 4
        %v6671 = vshll.u32 %v6346, 16
        %v6673 = vrot.slane %v6671, 5
        %v6674 = vor.u32 %v6670, %v6673
        %v6675 = vrot.slane %v6674, 4
        %v6677 = vshll.u32 %v6347, 16
        %v6679 = vrot.slane %v6677, 5
        %v6680 = vsel %vm1013, %v6675, %v6679
        %v6681 = vshrl.u32 %v6347, 16
        %v6683 = vrot.slane %v6681, 4
        %v6684 = vor.u32 %v6683, %v6679
        %v6685 = vrot.slane %v6684, 4
        %v6687 = vshll.u32 %v6348, 16
        %v6689 = vrot.slane %v6687, 5
        %v6690 = vsel %vm1013, %v6685, %v6689
        %v6692 = vshrl.u32 %v6349, 16
        %v6694 = vrot.slane %v6692, 4
        %v6695 = vshll.u32 %v6349, 16
        %v6697 = vrot.slane %v6695, 5
        %v6698 = vor.u32 %v6694, %v6697
        %v6699 = vrot.slane %v6698, 4
        %v6701 = vshll.u32 %v6350, 16
        %v6703 = vrot.slane %v6701, 5
        %v6704 = vsel %vm1013, %v6699, %v6703
        %v6705 = vshrl.u32 %v6350, 16
        %v6707 = vrot.slane %v6705, 4
        %v6708 = vor.u32 %v6707, %v6703
        %v6709 = vrot.slane %v6708, 4
        %v6711 = vshll.u32 %v6351, 16
        %v6713 = vrot.slane %v6711, 5
        %v6714 = vsel %vm1013, %v6709, %v6713
        %v6716 = vshrl.u32 %v6352, 16
        %v6718 = vrot.slane %v6716, 4
        %v6719 = vshll.u32 %v6352, 16
        %v6721 = vrot.slane %v6719, 5
        %v6722 = vor.u32 %v6718, %v6721
        %v6723 = vrot.slane %v6722, 4
        %v6725 = vshll.u32 %v6353, 16
        %v6727 = vrot.slane %v6725, 5
        %v6728 = vsel %vm1013, %v6723, %v6727
        %v6729 = vshrl.u32 %v6353, 16
        %v6731 = vrot.slane %v6729, 4
        %v6732 = vor.u32 %v6731, %v6727
        %v6733 = vrot.slane %v6732, 4
        %v6735 = vshll.u32 %v6354, 16
        %v6737 = vrot.slane %v6735, 5
        %v6738 = vsel %vm1013, %v6733, %v6737
        %6771 = vst [vmem:[#allocation3 + $0x4] sm:$0xf] %v6368
        %6772 = vst [vmem:[#allocation3 + $0x28] sm:$0xf] %v6378
        %6773 = vst [vmem:[#allocation3 + $0x4c] sm:$0xf] %v6392
        %6774 = vst [vmem:[#allocation3 + $0x70] sm:$0xf] %v6402
        %6775 = vst [vmem:[#allocation3 + $0x94] sm:$0xf] %v6416
        %6776 = vst [vmem:[#allocation3 + $0xb8] sm:$0xf] %v6426
        %6777 = vst [vmem:[#allocation3 + $0xdc] sm:$0xf] %v6440
        %6778 = vst [vmem:[#allocation3 + $0x100] sm:$0xf] %v6450
        %6779 = vst [vmem:[#allocation3 + $0x124] sm:$0xf] %v6464
        %6780 = vst [vmem:[#allocation3 + $0x148] sm:$0xf] %v6474
        %6781 = vst [vmem:[#allocation3 + $0x16c] sm:$0xf] %v6488
        %6782 = vst [vmem:[#allocation3 + $0x190] sm:$0xf] %v6498
        %6783 = vst [vmem:[#allocation3 + $0x1b4] sm:$0xf] %v6512
        %6784 = vst [vmem:[#allocation3 + $0x1d8] sm:$0xf] %v6522
        %6785 = vst [vmem:[#allocation3 + $0x1fc] sm:$0xf] %v6536
        %6786 = vst [vmem:[#allocation3 + $0x220] sm:$0xf] %v6546
        %6787 = vst [vmem:[#allocation3 + $0x244] sm:$0xf] %v6560
        %6788 = vst [vmem:[#allocation3 + $0x268] sm:$0xf] %v6570
        %6789 = vst [vmem:[#allocation3 + $0x28c] sm:$0xf] %v6584
        %6790 = vst [vmem:[#allocation3 + $0x2b0] sm:$0xf] %v6594
        %6791 = vst [vmem:[#allocation3 + $0x2d4] sm:$0xf] %v6608
        %6792 = vst [vmem:[#allocation3 + $0x2f8] sm:$0xf] %v6618
        %6793 = vst [vmem:[#allocation3 + $0x31c] sm:$0xf] %v6632
        %6794 = vst [vmem:[#allocation3 + $0x340] sm:$0xf] %v6642
        %6795 = vst [vmem:[#allocation3 + $0x364] sm:$0xf] %v6656
        %6796 = vst [vmem:[#allocation3 + $0x388] sm:$0xf] %v6666
        %6797 = vst [vmem:[#allocation3 + $0x3ac] sm:$0xf] %v6680
        %6798 = vst [vmem:[#allocation3 + $0x3d0] sm:$0xf] %v6690
        %6799 = vst [vmem:[#allocation3 + $0x3f4] sm:$0xf] %v6704
        %6800 = vst [vmem:[#allocation3 + $0x418] sm:$0xf] %v6714
        %6801 = vst [vmem:[#allocation3 + $0x43c] sm:$0xf] %v6728
        %6802 = vst [vmem:[#allocation3 + $0x460] sm:$0xf] %v6738
        %v6803 = vld [vmem:[#allocation2] sm:$0xe]
        %v6804 = vld [vmem:[#allocation2 + $0x4] sm:$0xf]
        %v6805 = vld [vmem:[#allocation2 + $0x8] sm:$0x1]
        %v6806 = vld [vmem:[#allocation2 + $0xc] sm:$0xe]
        %v6807 = vld [vmem:[#allocation2 + $0x10] sm:$0xf]
        %v6808 = vld [vmem:[#allocation2 + $0x14] sm:$0x1]
        %v6809 = vld [vmem:[#allocation2 + $0x18] sm:$0xe]
        %v6810 = vld [vmem:[#allocation2 + $0x1c] sm:$0xf]
        %v6811 = vld [vmem:[#allocation2 + $0x20] sm:$0x1]
        %v6812 = vld [vmem:[#allocation2 + $0x24] sm:$0xe]
        %v6813 = vld [vmem:[#allocation2 + $0x28] sm:$0xf]
        %v6814 = vld [vmem:[#allocation2 + $0x2c] sm:$0x1]
        %v6815 = vld [vmem:[#allocation2 + $0x30] sm:$0xe]
        %v6816 = vld [vmem:[#allocation2 + $0x34] sm:$0xf]
        %v6817 = vld [vmem:[#allocation2 + $0x38] sm:$0x1]
        %v6818 = vld [vmem:[#allocation2 + $0x3c] sm:$0xe]
        %v6819 = vld [vmem:[#allocation2 + $0x40] sm:$0xf]
        %v6820 = vld [vmem:[#allocation2 + $0x44] sm:$0x1]
        %v6821 = vld [vmem:[#allocation2 + $0x48] sm:$0xe]
        %v6822 = vld [vmem:[#allocation2 + $0x4c] sm:$0xf]
        %v6823 = vld [vmem:[#allocation2 + $0x50] sm:$0x1]
        %v6824 = vld [vmem:[#allocation2 + $0x54] sm:$0xe]
        %v6825 = vld [vmem:[#allocation2 + $0x58] sm:$0xf]
        %v6826 = vld [vmem:[#allocation2 + $0x5c] sm:$0x1]
        %v6827 = vld [vmem:[#allocation2 + $0x60] sm:$0xe]
        %v6828 = vld [vmem:[#allocation2 + $0x64] sm:$0xf]
        %v6829 = vld [vmem:[#allocation2 + $0x68] sm:$0x1]
        %v6830 = vld [vmem:[#allocation2 + $0x6c] sm:$0xe]
        %v6831 = vld [vmem:[#allocation2 + $0x70] sm:$0xf]
        %v6832 = vld [vmem:[#allocation2 + $0x74] sm:$0x1]
        %v6833 = vld [vmem:[#allocation2 + $0x78] sm:$0xe]
        %v6834 = vld [vmem:[#allocation2 + $0x7c] sm:$0xf]
        %v6835 = vld [vmem:[#allocation2 + $0x80] sm:$0x1]
        %v6836 = vld [vmem:[#allocation2 + $0x84] sm:$0xe]
        %v6837 = vld [vmem:[#allocation2 + $0x88] sm:$0xf]
        %v6838 = vld [vmem:[#allocation2 + $0x8c] sm:$0x1]
        %v6839 = vld [vmem:[#allocation2 + $0x90] sm:$0xe]
        %v6840 = vld [vmem:[#allocation2 + $0x94] sm:$0xf]
        %v6841 = vld [vmem:[#allocation2 + $0x98] sm:$0x1]
        %v6842 = vld [vmem:[#allocation2 + $0x9c] sm:$0xe]
        %v6843 = vld [vmem:[#allocation2 + $0xa0] sm:$0xf]
        %v6844 = vld [vmem:[#allocation2 + $0xa4] sm:$0x1]
        %v6845 = vld [vmem:[#allocation2 + $0xa8] sm:$0xe]
        %v6846 = vld [vmem:[#allocation2 + $0xac] sm:$0xf]
        %v6847 = vld [vmem:[#allocation2 + $0xb0] sm:$0x1]
        %v6848 = vld [vmem:[#allocation2 + $0xb4] sm:$0xe]
        %v6849 = vld [vmem:[#allocation2 + $0xb8] sm:$0xf]
        %v6850 = vld [vmem:[#allocation2 + $0xbc] sm:$0x1]
        %v6899 = vrot.slane %v6803, 5
        %v6900 = vrot.slane %v6899, 4
        %v6901 = vrot.slane %v6804, 5
        %v6902 = vsel %vm1560, %v6900, %v6901
        %v6903 = vrot.slane %v6901, 4
        %v6904 = vrot.slane %v6805, 5
        %v6905 = vsel %vm1560, %v6903, %v6904
        %v6906 = vrot.slane %v6806, 5
        %v6907 = vrot.slane %v6906, 4
        %v6908 = vrot.slane %v6807, 5
        %v6909 = vsel %vm1560, %v6907, %v6908
        %v6910 = vrot.slane %v6908, 4
        %v6911 = vrot.slane %v6808, 5
        %v6912 = vsel %vm1560, %v6910, %v6911
        %v6913 = vrot.slane %v6809, 5
        %v6914 = vrot.slane %v6913, 4
        %v6915 = vrot.slane %v6810, 5
        %v6916 = vsel %vm1560, %v6914, %v6915
        %v6917 = vrot.slane %v6915, 4
        %v6918 = vrot.slane %v6811, 5
        %v6919 = vsel %vm1560, %v6917, %v6918
        %v6920 = vrot.slane %v6812, 5
        %v6921 = vrot.slane %v6920, 4
        %v6922 = vrot.slane %v6813, 5
        %v6923 = vsel %vm1560, %v6921, %v6922
        %v6924 = vrot.slane %v6922, 4
        %v6925 = vrot.slane %v6814, 5
        %v6926 = vsel %vm1560, %v6924, %v6925
        %v6927 = vrot.slane %v6815, 5
        %v6928 = vrot.slane %v6927, 4
        %v6929 = vrot.slane %v6816, 5
        %v6930 = vsel %vm1560, %v6928, %v6929
        %v6931 = vrot.slane %v6929, 4
        %v6932 = vrot.slane %v6817, 5
        %v6933 = vsel %vm1560, %v6931, %v6932
        %v6934 = vrot.slane %v6818, 5
        %v6935 = vrot.slane %v6934, 4
        %v6936 = vrot.slane %v6819, 5
        %v6937 = vsel %vm1560, %v6935, %v6936
        %v6938 = vrot.slane %v6936, 4
        %v6939 = vrot.slane %v6820, 5
        %v6940 = vsel %vm1560, %v6938, %v6939
        %v6941 = vrot.slane %v6821, 5
        %v6942 = vrot.slane %v6941, 4
        %v6943 = vrot.slane %v6822, 5
        %v6944 = vsel %vm1560, %v6942, %v6943
        %v6945 = vrot.slane %v6943, 4
        %v6946 = vrot.slane %v6823, 5
        %v6947 = vsel %vm1560, %v6945, %v6946
        %v6948 = vrot.slane %v6824, 5
        %v6949 = vrot.slane %v6948, 4
        %v6950 = vrot.slane %v6825, 5
        %v6951 = vsel %vm1560, %v6949, %v6950
        %v6952 = vrot.slane %v6950, 4
        %v6953 = vrot.slane %v6826, 5
        %v6954 = vsel %vm1560, %v6952, %v6953
        %v6955 = vrot.slane %v6827, 5
        %v6956 = vrot.slane %v6955, 4
        %v6957 = vrot.slane %v6828, 5
        %v6958 = vsel %vm1560, %v6956, %v6957
        %v6959 = vrot.slane %v6957, 4
        %v6960 = vrot.slane %v6829, 5
        %v6961 = vsel %vm1560, %v6959, %v6960
        %v6962 = vrot.slane %v6830, 5
        %v6963 = vrot.slane %v6962, 4
        %v6964 = vrot.slane %v6831, 5
        %v6965 = vsel %vm1560, %v6963, %v6964
        %v6966 = vrot.slane %v6964, 4
        %v6967 = vrot.slane %v6832, 5
        %v6968 = vsel %vm1560, %v6966, %v6967
        %v6969 = vrot.slane %v6833, 5
        %v6970 = vrot.slane %v6969, 4
        %v6971 = vrot.slane %v6834, 5
        %v6972 = vsel %vm1560, %v6970, %v6971
        %v6973 = vrot.slane %v6971, 4
        %v6974 = vrot.slane %v6835, 5
        %v6975 = vsel %vm1560, %v6973, %v6974
        %v6976 = vrot.slane %v6836, 5
        %v6977 = vrot.slane %v6976, 4
        %v6978 = vrot.slane %v6837, 5
        %v6979 = vsel %vm1560, %v6977, %v6978
        %v6980 = vrot.slane %v6978, 4
        %v6981 = vrot.slane %v6838, 5
        %v6982 = vsel %vm1560, %v6980, %v6981
        %v6983 = vrot.slane %v6839, 5
        %v6984 = vrot.slane %v6983, 4
        %v6985 = vrot.slane %v6840, 5
        %v6986 = vsel %vm1560, %v6984, %v6985
        %v6987 = vrot.slane %v6985, 4
        %v6988 = vrot.slane %v6841, 5
        %v6989 = vsel %vm1560, %v6987, %v6988
        %v6990 = vrot.slane %v6842, 5
        %v6991 = vrot.slane %v6990, 4
        %v6992 = vrot.slane %v6843, 5
        %v6993 = vsel %vm1560, %v6991, %v6992
        %v6994 = vrot.slane %v6992, 4
        %v6995 = vrot.slane %v6844, 5
        %v6996 = vsel %vm1560, %v6994, %v6995
        %v6997 = vrot.slane %v6845, 5
        %v6998 = vrot.slane %v6997, 4
        %v6999 = vrot.slane %v6846, 5
        %v7000 = vsel %vm1560, %v6998, %v6999
        %v7001 = vrot.slane %v6999, 4
        %v7002 = vrot.slane %v6847, 5
        %v7003 = vsel %vm1560, %v7001, %v7002
        %v7004 = vrot.slane %v6848, 5
        %v7005 = vrot.slane %v7004, 4
        %v7006 = vrot.slane %v6849, 5
        %v7007 = vsel %vm1560, %v7005, %v7006
        %v7008 = vrot.slane %v7006, 4
        %v7009 = vrot.slane %v6850, 5
        %v7010 = vsel %vm1560, %v7008, %v7009
        %7043 = vst [vmem:[#allocation3 + $0x8] sm:$0xf] %v6902
        %7044 = vst [vmem:[#allocation3 + $0x2c] sm:$0xf] %v6905
        %7045 = vst [vmem:[#allocation3 + $0x50] sm:$0xf] %v6909
        %7046 = vst [vmem:[#allocation3 + $0x74] sm:$0xf] %v6912
        %7047 = vst [vmem:[#allocation3 + $0x98] sm:$0xf] %v6916
        %7048 = vst [vmem:[#allocation3 + $0xbc] sm:$0xf] %v6919
        %7049 = vst [vmem:[#allocation3 + $0xe0] sm:$0xf] %v6923
        %7050 = vst [vmem:[#allocation3 + $0x104] sm:$0xf] %v6926
        %7051 = vst [vmem:[#allocation3 + $0x128] sm:$0xf] %v6930
        %7052 = vst [vmem:[#allocation3 + $0x14c] sm:$0xf] %v6933
        %7053 = vst [vmem:[#allocation3 + $0x170] sm:$0xf] %v6937
        %7054 = vst [vmem:[#allocation3 + $0x194] sm:$0xf] %v6940
        %7055 = vst [vmem:[#allocation3 + $0x1b8] sm:$0xf] %v6944
        %7056 = vst [vmem:[#allocation3 + $0x1dc] sm:$0xf] %v6947
        %7057 = vst [vmem:[#allocation3 + $0x200] sm:$0xf] %v6951
        %7058 = vst [vmem:[#allocation3 + $0x224] sm:$0xf] %v6954
        %7059 = vst [vmem:[#allocation3 + $0x248] sm:$0xf] %v6958
        %7060 = vst [vmem:[#allocation3 + $0x26c] sm:$0xf] %v6961
        %7061 = vst [vmem:[#allocation3 + $0x290] sm:$0xf] %v6965
        %7062 = vst [vmem:[#allocation3 + $0x2b4] sm:$0xf] %v6968
        %7063 = vst [vmem:[#allocation3 + $0x2d8] sm:$0xf] %v6972
        %7064 = vst [vmem:[#allocation3 + $0x2fc] sm:$0xf] %v6975
        %7065 = vst [vmem:[#allocation3 + $0x320] sm:$0xf] %v6979
        %7066 = vst [vmem:[#allocation3 + $0x344] sm:$0xf] %v6982
        %7067 = vst [vmem:[#allocation3 + $0x368] sm:$0xf] %v6986
        %7068 = vst [vmem:[#allocation3 + $0x38c] sm:$0xf] %v6989
        %7069 = vst [vmem:[#allocation3 + $0x3b0] sm:$0xf] %v6993
        %7070 = vst [vmem:[#allocation3 + $0x3d4] sm:$0xf] %v6996
        %7071 = vst [vmem:[#allocation3 + $0x3f8] sm:$0xf] %v7000
        %7072 = vst [vmem:[#allocation3 + $0x41c] sm:$0xf] %v7003
        %7073 = vst [vmem:[#allocation3 + $0x440] sm:$0xf] %v7007
        %7074 = vst [vmem:[#allocation3 + $0x464] sm:$0xf] %v7010
        %v7075 = vld [vmem:[%s784] sm:$0xf]
        %v7076 = vld [vmem:[%s784 + $0x4] sm:$0xf]
        %v7077 = vld [vmem:[%s784 + $0xc] sm:$0xf]
        %v7078 = vld [vmem:[%s784 + $0x10] sm:$0xf]
        %v7079 = vld [vmem:[%s784 + $0x18] sm:$0xf]
        %v7080 = vld [vmem:[%s784 + $0x1c] sm:$0xf]
        %v7081 = vld [vmem:[%s784 + $0x24] sm:$0xf]
        %v7082 = vld [vmem:[%s784 + $0x28] sm:$0xf]
        %v7083 = vld [vmem:[%s784 + $0x30] sm:$0xf]
        %v7084 = vld [vmem:[%s784 + $0x34] sm:$0xf]
        %v7085 = vld [vmem:[%s784 + $0x3c] sm:$0xf]
        %v7086 = vld [vmem:[%s784 + $0x40] sm:$0xf]
        %v7087 = vld [vmem:[%s784 + $0x48] sm:$0xf]
        %v7088 = vld [vmem:[%s784 + $0x4c] sm:$0xf]
        %v7089 = vld [vmem:[%s784 + $0x54] sm:$0xf]
        %v7090 = vld [vmem:[%s784 + $0x58] sm:$0xf]
        %v7091 = vld [vmem:[%s784 + $0x60] sm:$0xf]
        %v7092 = vld [vmem:[%s784 + $0x64] sm:$0xf]
        %v7093 = vld [vmem:[%s784 + $0x6c] sm:$0xf]
        %v7094 = vld [vmem:[%s784 + $0x70] sm:$0xf]
        %v7095 = vld [vmem:[%s784 + $0x78] sm:$0xf]
        %v7096 = vld [vmem:[%s784 + $0x7c] sm:$0xf]
        %v7097 = vld [vmem:[%s784 + $0x84] sm:$0xf]
        %v7098 = vld [vmem:[%s784 + $0x88] sm:$0xf]
        %v7099 = vld [vmem:[%s784 + $0x90] sm:$0xf]
        %v7100 = vld [vmem:[%s784 + $0x94] sm:$0xf]
        %v7101 = vld [vmem:[%s784 + $0x9c] sm:$0xf]
        %v7102 = vld [vmem:[%s784 + $0xa0] sm:$0xf]
        %v7103 = vld [vmem:[%s784 + $0xa8] sm:$0xf]
        %v7104 = vld [vmem:[%s784 + $0xac] sm:$0xf]
        %v7105 = vld [vmem:[%s784 + $0xb4] sm:$0xf]
        %v7106 = vld [vmem:[%s784 + $0xb8] sm:$0xf]
        %7107 = vst [vmem:[#allocation3 + $0xc] sm:$0xf] %v7075
        %7108 = vst [vmem:[#allocation3 + $0x30] sm:$0xf] %v7076
        %7109 = vst [vmem:[#allocation3 + $0x54] sm:$0xf] %v7077
        %7110 = vst [vmem:[#allocation3 + $0x78] sm:$0xf] %v7078
        %7111 = vst [vmem:[#allocation3 + $0x9c] sm:$0xf] %v7079
        %7112 = vst [vmem:[#allocation3 + $0xc0] sm:$0xf] %v7080
        %7113 = vst [vmem:[#allocation3 + $0xe4] sm:$0xf] %v7081
        %7114 = vst [vmem:[#allocation3 + $0x108] sm:$0xf] %v7082
        %7115 = vst [vmem:[#allocation3 + $0x12c] sm:$0xf] %v7083
        %7116 = vst [vmem:[#allocation3 + $0x150] sm:$0xf] %v7084
        %7117 = vst [vmem:[#allocation3 + $0x174] sm:$0xf] %v7085
        %7118 = vst [vmem:[#allocation3 + $0x198] sm:$0xf] %v7086
        %7119 = vst [vmem:[#allocation3 + $0x1bc] sm:$0xf] %v7087
        %7120 = vst [vmem:[#allocation3 + $0x1e0] sm:$0xf] %v7088
        %7121 = vst [vmem:[#allocation3 + $0x204] sm:$0xf] %v7089
        %7122 = vst [vmem:[#allocation3 + $0x228] sm:$0xf] %v7090
        %7123 = vst [vmem:[#allocation3 + $0x24c] sm:$0xf] %v7091
        %7124 = vst [vmem:[#allocation3 + $0x270] sm:$0xf] %v7092
        %7125 = vst [vmem:[#allocation3 + $0x294] sm:$0xf] %v7093
        %7126 = vst [vmem:[#allocation3 + $0x2b8] sm:$0xf] %v7094
        %7127 = vst [vmem:[#allocation3 + $0x2dc] sm:$0xf] %v7095
        %7128 = vst [vmem:[#allocation3 + $0x300] sm:$0xf] %v7096
        %7129 = vst [vmem:[#allocation3 + $0x324] sm:$0xf] %v7097
        %7130 = vst [vmem:[#allocation3 + $0x348] sm:$0xf] %v7098
        %7131 = vst [vmem:[#allocation3 + $0x36c] sm:$0xf] %v7099
        %7132 = vst [vmem:[#allocation3 + $0x390] sm:$0xf] %v7100
        %7133 = vst [vmem:[#allocation3 + $0x3b4] sm:$0xf] %v7101
        %7134 = vst [vmem:[#allocation3 + $0x3d8] sm:$0xf] %v7102
        %7135 = vst [vmem:[#allocation3 + $0x3fc] sm:$0xf] %v7103
        %7136 = vst [vmem:[#allocation3 + $0x420] sm:$0xf] %v7104
        %7137 = vst [vmem:[#allocation3 + $0x444] sm:$0xf] %v7105
        %7138 = vst [vmem:[#allocation3 + $0x468] sm:$0xf] %v7106
        %v7139 = vld [vmem:[%s784] sm:$0xf]
        %v7140 = vld [vmem:[%s784 + $0x4] sm:$0xf]
        %v7141 = vld [vmem:[%s784 + $0x8] sm:$0x1]
        %v7142 = vld [vmem:[%s784 + $0xc] sm:$0xf]
        %v7143 = vld [vmem:[%s784 + $0x10] sm:$0xf]
        %v7144 = vld [vmem:[%s784 + $0x14] sm:$0x1]
        %v7145 = vld [vmem:[%s784 + $0x18] sm:$0xf]
        %v7146 = vld [vmem:[%s784 + $0x1c] sm:$0xf]
        %v7147 = vld [vmem:[%s784 + $0x20] sm:$0x1]
        %v7148 = vld [vmem:[%s784 + $0x24] sm:$0xf]
        %v7149 = vld [vmem:[%s784 + $0x28] sm:$0xf]
        %v7150 = vld [vmem:[%s784 + $0x2c] sm:$0x1]
        %v7151 = vld [vmem:[%s784 + $0x30] sm:$0xf]
        %v7152 = vld [vmem:[%s784 + $0x34] sm:$0xf]
        %v7153 = vld [vmem:[%s784 + $0x38] sm:$0x1]
        %v7154 = vld [vmem:[%s784 + $0x3c] sm:$0xf]
        %v7155 = vld [vmem:[%s784 + $0x40] sm:$0xf]
        %v7156 = vld [vmem:[%s784 + $0x44] sm:$0x1]
        %v7157 = vld [vmem:[%s784 + $0x48] sm:$0xf]
        %v7158 = vld [vmem:[%s784 + $0x4c] sm:$0xf]
        %v7159 = vld [vmem:[%s784 + $0x50] sm:$0x1]
        %v7160 = vld [vmem:[%s784 + $0x54] sm:$0xf]
        %v7161 = vld [vmem:[%s784 + $0x58] sm:$0xf]
        %v7162 = vld [vmem:[%s784 + $0x5c] sm:$0x1]
        %v7163 = vld [vmem:[%s784 + $0x60] sm:$0xf]
        %v7164 = vld [vmem:[%s784 + $0x64] sm:$0xf]
        %v7165 = vld [vmem:[%s784 + $0x68] sm:$0x1]
        %v7166 = vld [vmem:[%s784 + $0x6c] sm:$0xf]
        %v7167 = vld [vmem:[%s784 + $0x70] sm:$0xf]
        %v7168 = vld [vmem:[%s784 + $0x74] sm:$0x1]
        %v7169 = vld [vmem:[%s784 + $0x78] sm:$0xf]
        %v7170 = vld [vmem:[%s784 + $0x7c] sm:$0xf]
        %v7171 = vld [vmem:[%s784 + $0x80] sm:$0x1]
        %v7172 = vld [vmem:[%s784 + $0x84] sm:$0xf]
        %v7173 = vld [vmem:[%s784 + $0x88] sm:$0xf]
        %v7174 = vld [vmem:[%s784 + $0x8c] sm:$0x1]
        %v7175 = vld [vmem:[%s784 + $0x90] sm:$0xf]
        %v7176 = vld [vmem:[%s784 + $0x94] sm:$0xf]
        %v7177 = vld [vmem:[%s784 + $0x98] sm:$0x1]
        %v7178 = vld [vmem:[%s784 + $0x9c] sm:$0xf]
        %v7179 = vld [vmem:[%s784 + $0xa0] sm:$0xf]
        %v7180 = vld [vmem:[%s784 + $0xa4] sm:$0x1]
        %v7181 = vld [vmem:[%s784 + $0xa8] sm:$0xf]
        %v7182 = vld [vmem:[%s784 + $0xac] sm:$0xf]
        %v7183 = vld [vmem:[%s784 + $0xb0] sm:$0x1]
        %v7184 = vld [vmem:[%s784 + $0xb4] sm:$0xf]
        %v7185 = vld [vmem:[%s784 + $0xb8] sm:$0xf]
        %v7186 = vld [vmem:[%s784 + $0xbc] sm:$0x1]
        %v7188 = vshrl.u32 %v7139, 16
        %v7190 = vrot.slane %v7188, 4
        %v7191 = vshll.u32 %v7139, 16
        %v7193 = vrot.slane %v7191, 5
        %v7194 = vor.u32 %v7190, %v7193
        %v7195 = vrot.slane %v7194, 4
        %v7197 = vshll.u32 %v7140, 16
        %v7199 = vrot.slane %v7197, 5
        %v7200 = vsel %vm1013, %v7195, %v7199
        %v7201 = vshrl.u32 %v7140, 16
        %v7203 = vrot.slane %v7201, 4
        %v7204 = vor.u32 %v7203, %v7199
        %v7205 = vrot.slane %v7204, 4
        %v7207 = vshll.u32 %v7141, 16
        %v7209 = vrot.slane %v7207, 5
        %v7210 = vsel %vm1013, %v7205, %v7209
        %v7212 = vshrl.u32 %v7142, 16
        %v7214 = vrot.slane %v7212, 4
        %v7215 = vshll.u32 %v7142, 16
        %v7217 = vrot.slane %v7215, 5
        %v7218 = vor.u32 %v7214, %v7217
        %v7219 = vrot.slane %v7218, 4
        %v7221 = vshll.u32 %v7143, 16
        %v7223 = vrot.slane %v7221, 5
        %v7224 = vsel %vm1013, %v7219, %v7223
        %v7225 = vshrl.u32 %v7143, 16
        %v7227 = vrot.slane %v7225, 4
        %v7228 = vor.u32 %v7227, %v7223
        %v7229 = vrot.slane %v7228, 4
        %v7231 = vshll.u32 %v7144, 16
        %v7233 = vrot.slane %v7231, 5
        %v7234 = vsel %vm1013, %v7229, %v7233
        %v7236 = vshrl.u32 %v7145, 16
        %v7238 = vrot.slane %v7236, 4
        %v7239 = vshll.u32 %v7145, 16
        %v7241 = vrot.slane %v7239, 5
        %v7242 = vor.u32 %v7238, %v7241
        %v7243 = vrot.slane %v7242, 4
        %v7245 = vshll.u32 %v7146, 16
        %v7247 = vrot.slane %v7245, 5
        %v7248 = vsel %vm1013, %v7243, %v7247
        %v7249 = vshrl.u32 %v7146, 16
        %v7251 = vrot.slane %v7249, 4
        %v7252 = vor.u32 %v7251, %v7247
        %v7253 = vrot.slane %v7252, 4
        %v7255 = vshll.u32 %v7147, 16
        %v7257 = vrot.slane %v7255, 5
        %v7258 = vsel %vm1013, %v7253, %v7257
        %v7260 = vshrl.u32 %v7148, 16
        %v7262 = vrot.slane %v7260, 4
        %v7263 = vshll.u32 %v7148, 16
        %v7265 = vrot.slane %v7263, 5
        %v7266 = vor.u32 %v7262, %v7265
        %v7267 = vrot.slane %v7266, 4
        %v7269 = vshll.u32 %v7149, 16
        %v7271 = vrot.slane %v7269, 5
        %v7272 = vsel %vm1013, %v7267, %v7271
        %v7273 = vshrl.u32 %v7149, 16
        %v7275 = vrot.slane %v7273, 4
        %v7276 = vor.u32 %v7275, %v7271
        %v7277 = vrot.slane %v7276, 4
        %v7279 = vshll.u32 %v7150, 16
        %v7281 = vrot.slane %v7279, 5
        %v7282 = vsel %vm1013, %v7277, %v7281
        %v7284 = vshrl.u32 %v7151, 16
        %v7286 = vrot.slane %v7284, 4
        %v7287 = vshll.u32 %v7151, 16
        %v7289 = vrot.slane %v7287, 5
        %v7290 = vor.u32 %v7286, %v7289
        %v7291 = vrot.slane %v7290, 4
        %v7293 = vshll.u32 %v7152, 16
        %v7295 = vrot.slane %v7293, 5
        %v7296 = vsel %vm1013, %v7291, %v7295
        %v7297 = vshrl.u32 %v7152, 16
        %v7299 = vrot.slane %v7297, 4
        %v7300 = vor.u32 %v7299, %v7295
        %v7301 = vrot.slane %v7300, 4
        %v7303 = vshll.u32 %v7153, 16
        %v7305 = vrot.slane %v7303, 5
        %v7306 = vsel %vm1013, %v7301, %v7305
        %v7308 = vshrl.u32 %v7154, 16
        %v7310 = vrot.slane %v7308, 4
        %v7311 = vshll.u32 %v7154, 16
        %v7313 = vrot.slane %v7311, 5
        %v7314 = vor.u32 %v7310, %v7313
        %v7315 = vrot.slane %v7314, 4
        %v7317 = vshll.u32 %v7155, 16
        %v7319 = vrot.slane %v7317, 5
        %v7320 = vsel %vm1013, %v7315, %v7319
        %v7321 = vshrl.u32 %v7155, 16
        %v7323 = vrot.slane %v7321, 4
        %v7324 = vor.u32 %v7323, %v7319
        %v7325 = vrot.slane %v7324, 4
        %v7327 = vshll.u32 %v7156, 16
        %v7329 = vrot.slane %v7327, 5
        %v7330 = vsel %vm1013, %v7325, %v7329
        %v7332 = vshrl.u32 %v7157, 16
        %v7334 = vrot.slane %v7332, 4
        %v7335 = vshll.u32 %v7157, 16
        %v7337 = vrot.slane %v7335, 5
        %v7338 = vor.u32 %v7334, %v7337
        %v7339 = vrot.slane %v7338, 4
        %v7341 = vshll.u32 %v7158, 16
        %v7343 = vrot.slane %v7341, 5
        %v7344 = vsel %vm1013, %v7339, %v7343
        %v7345 = vshrl.u32 %v7158, 16
        %v7347 = vrot.slane %v7345, 4
        %v7348 = vor.u32 %v7347, %v7343
        %v7349 = vrot.slane %v7348, 4
        %v7351 = vshll.u32 %v7159, 16
        %v7353 = vrot.slane %v7351, 5
        %v7354 = vsel %vm1013, %v7349, %v7353
        %v7356 = vshrl.u32 %v7160, 16
        %v7358 = vrot.slane %v7356, 4
        %v7359 = vshll.u32 %v7160, 16
        %v7361 = vrot.slane %v7359, 5
        %v7362 = vor.u32 %v7358, %v7361
        %v7363 = vrot.slane %v7362, 4
        %v7365 = vshll.u32 %v7161, 16
        %v7367 = vrot.slane %v7365, 5
        %v7368 = vsel %vm1013, %v7363, %v7367
        %v7369 = vshrl.u32 %v7161, 16
        %v7371 = vrot.slane %v7369, 4
        %v7372 = vor.u32 %v7371, %v7367
        %v7373 = vrot.slane %v7372, 4
        %v7375 = vshll.u32 %v7162, 16
        %v7377 = vrot.slane %v7375, 5
        %v7378 = vsel %vm1013, %v7373, %v7377
        %v7380 = vshrl.u32 %v7163, 16
        %v7382 = vrot.slane %v7380, 4
        %v7383 = vshll.u32 %v7163, 16
        %v7385 = vrot.slane %v7383, 5
        %v7386 = vor.u32 %v7382, %v7385
        %v7387 = vrot.slane %v7386, 4
        %v7389 = vshll.u32 %v7164, 16
        %v7391 = vrot.slane %v7389, 5
        %v7392 = vsel %vm1013, %v7387, %v7391
        %v7393 = vshrl.u32 %v7164, 16
        %v7395 = vrot.slane %v7393, 4
        %v7396 = vor.u32 %v7395, %v7391
        %v7397 = vrot.slane %v7396, 4
        %v7399 = vshll.u32 %v7165, 16
        %v7401 = vrot.slane %v7399, 5
        %v7402 = vsel %vm1013, %v7397, %v7401
        %v7404 = vshrl.u32 %v7166, 16
        %v7406 = vrot.slane %v7404, 4
        %v7407 = vshll.u32 %v7166, 16
        %v7409 = vrot.slane %v7407, 5
        %v7410 = vor.u32 %v7406, %v7409
        %v7411 = vrot.slane %v7410, 4
        %v7413 = vshll.u32 %v7167, 16
        %v7415 = vrot.slane %v7413, 5
        %v7416 = vsel %vm1013, %v7411, %v7415
        %v7417 = vshrl.u32 %v7167, 16
        %v7419 = vrot.slane %v7417, 4
        %v7420 = vor.u32 %v7419, %v7415
        %v7421 = vrot.slane %v7420, 4
        %v7423 = vshll.u32 %v7168, 16
        %v7425 = vrot.slane %v7423, 5
        %v7426 = vsel %vm1013, %v7421, %v7425
        %v7428 = vshrl.u32 %v7169, 16
        %v7430 = vrot.slane %v7428, 4
        %v7431 = vshll.u32 %v7169, 16
        %v7433 = vrot.slane %v7431, 5
        %v7434 = vor.u32 %v7430, %v7433
        %v7435 = vrot.slane %v7434, 4
        %v7437 = vshll.u32 %v7170, 16
        %v7439 = vrot.slane %v7437, 5
        %v7440 = vsel %vm1013, %v7435, %v7439
        %v7441 = vshrl.u32 %v7170, 16
        %v7443 = vrot.slane %v7441, 4
        %v7444 = vor.u32 %v7443, %v7439
        %v7445 = vrot.slane %v7444, 4
        %v7447 = vshll.u32 %v7171, 16
        %v7449 = vrot.slane %v7447, 5
        %v7450 = vsel %vm1013, %v7445, %v7449
        %v7452 = vshrl.u32 %v7172, 16
        %v7454 = vrot.slane %v7452, 4
        %v7455 = vshll.u32 %v7172, 16
        %v7457 = vrot.slane %v7455, 5
        %v7458 = vor.u32 %v7454, %v7457
        %v7459 = vrot.slane %v7458, 4
        %v7461 = vshll.u32 %v7173, 16
        %v7463 = vrot.slane %v7461, 5
        %v7464 = vsel %vm1013, %v7459, %v7463
        %v7465 = vshrl.u32 %v7173, 16
        %v7467 = vrot.slane %v7465, 4
        %v7468 = vor.u32 %v7467, %v7463
        %v7469 = vrot.slane %v7468, 4
        %v7471 = vshll.u32 %v7174, 16
        %v7473 = vrot.slane %v7471, 5
        %v7474 = vsel %vm1013, %v7469, %v7473
        %v7476 = vshrl.u32 %v7175, 16
        %v7478 = vrot.slane %v7476, 4
        %v7479 = vshll.u32 %v7175, 16
        %v7481 = vrot.slane %v7479, 5
        %v7482 = vor.u32 %v7478, %v7481
        %v7483 = vrot.slane %v7482, 4
        %v7485 = vshll.u32 %v7176, 16
        %v7487 = vrot.slane %v7485, 5
        %v7488 = vsel %vm1013, %v7483, %v7487
        %v7489 = vshrl.u32 %v7176, 16
        %v7491 = vrot.slane %v7489, 4
        %v7492 = vor.u32 %v7491, %v7487
        %v7493 = vrot.slane %v7492, 4
        %v7495 = vshll.u32 %v7177, 16
        %v7497 = vrot.slane %v7495, 5
        %v7498 = vsel %vm1013, %v7493, %v7497
        %v7500 = vshrl.u32 %v7178, 16
        %v7502 = vrot.slane %v7500, 4
        %v7503 = vshll.u32 %v7178, 16
        %v7505 = vrot.slane %v7503, 5
        %v7506 = vor.u32 %v7502, %v7505
        %v7507 = vrot.slane %v7506, 4
        %v7509 = vshll.u32 %v7179, 16
        %v7511 = vrot.slane %v7509, 5
        %v7512 = vsel %vm1013, %v7507, %v7511
        %v7513 = vshrl.u32 %v7179, 16
        %v7515 = vrot.slane %v7513, 4
        %v7516 = vor.u32 %v7515, %v7511
        %v7517 = vrot.slane %v7516, 4
        %v7519 = vshll.u32 %v7180, 16
        %v7521 = vrot.slane %v7519, 5
        %v7522 = vsel %vm1013, %v7517, %v7521
        %v7524 = vshrl.u32 %v7181, 16
        %v7526 = vrot.slane %v7524, 4
        %v7527 = vshll.u32 %v7181, 16
        %v7529 = vrot.slane %v7527, 5
        %v7530 = vor.u32 %v7526, %v7529
        %v7531 = vrot.slane %v7530, 4
        %v7533 = vshll.u32 %v7182, 16
        %v7535 = vrot.slane %v7533, 5
        %v7536 = vsel %vm1013, %v7531, %v7535
        %v7537 = vshrl.u32 %v7182, 16
        %v7539 = vrot.slane %v7537, 4
        %v7540 = vor.u32 %v7539, %v7535
        %v7541 = vrot.slane %v7540, 4
        %v7543 = vshll.u32 %v7183, 16
        %v7545 = vrot.slane %v7543, 5
        %v7546 = vsel %vm1013, %v7541, %v7545
        %v7548 = vshrl.u32 %v7184, 16
        %v7550 = vrot.slane %v7548, 4
        %v7551 = vshll.u32 %v7184, 16
        %v7553 = vrot.slane %v7551, 5
        %v7554 = vor.u32 %v7550, %v7553
        %v7555 = vrot.slane %v7554, 4
        %v7557 = vshll.u32 %v7185, 16
        %v7559 = vrot.slane %v7557, 5
        %v7560 = vsel %vm1013, %v7555, %v7559
        %v7561 = vshrl.u32 %v7185, 16
        %v7563 = vrot.slane %v7561, 4
        %v7564 = vor.u32 %v7563, %v7559
        %v7565 = vrot.slane %v7564, 4
        %v7567 = vshll.u32 %v7186, 16
        %v7569 = vrot.slane %v7567, 5
        %v7570 = vsel %vm1013, %v7565, %v7569
        %7603 = vst [vmem:[#allocation3 + $0x10] sm:$0xf] %v7200
        %7604 = vst [vmem:[#allocation3 + $0x34] sm:$0xf] %v7210
        %7605 = vst [vmem:[#allocation3 + $0x58] sm:$0xf] %v7224
        %7606 = vst [vmem:[#allocation3 + $0x7c] sm:$0xf] %v7234
        %7607 = vst [vmem:[#allocation3 + $0xa0] sm:$0xf] %v7248
        %7608 = vst [vmem:[#allocation3 + $0xc4] sm:$0xf] %v7258
        %7609 = vst [vmem:[#allocation3 + $0xe8] sm:$0xf] %v7272
        %7610 = vst [vmem:[#allocation3 + $0x10c] sm:$0xf] %v7282
        %7611 = vst [vmem:[#allocation3 + $0x130] sm:$0xf] %v7296
        %7612 = vst [vmem:[#allocation3 + $0x154] sm:$0xf] %v7306
        %7613 = vst [vmem:[#allocation3 + $0x178] sm:$0xf] %v7320
        %7614 = vst [vmem:[#allocation3 + $0x19c] sm:$0xf] %v7330
        %7615 = vst [vmem:[#allocation3 + $0x1c0] sm:$0xf] %v7344
        %7616 = vst [vmem:[#allocation3 + $0x1e4] sm:$0xf] %v7354
        %7617 = vst [vmem:[#allocation3 + $0x208] sm:$0xf] %v7368
        %7618 = vst [vmem:[#allocation3 + $0x22c] sm:$0xf] %v7378
        %7619 = vst [vmem:[#allocation3 + $0x250] sm:$0xf] %v7392
        %7620 = vst [vmem:[#allocation3 + $0x274] sm:$0xf] %v7402
        %7621 = vst [vmem:[#allocation3 + $0x298] sm:$0xf] %v7416
        %7622 = vst [vmem:[#allocation3 + $0x2bc] sm:$0xf] %v7426
        %7623 = vst [vmem:[#allocation3 + $0x2e0] sm:$0xf] %v7440
        %7624 = vst [vmem:[#allocation3 + $0x304] sm:$0xf] %v7450
        %7625 = vst [vmem:[#allocation3 + $0x328] sm:$0xf] %v7464
        %7626 = vst [vmem:[#allocation3 + $0x34c] sm:$0xf] %v7474
        %7627 = vst [vmem:[#allocation3 + $0x370] sm:$0xf] %v7488
        %7628 = vst [vmem:[#allocation3 + $0x394] sm:$0xf] %v7498
        %7629 = vst [vmem:[#allocation3 + $0x3b8] sm:$0xf] %v7512
        %7630 = vst [vmem:[#allocation3 + $0x3dc] sm:$0xf] %v7522
        %7631 = vst [vmem:[#allocation3 + $0x400] sm:$0xf] %v7536
        %7632 = vst [vmem:[#allocation3 + $0x424] sm:$0xf] %v7546
        %7633 = vst [vmem:[#allocation3 + $0x448] sm:$0xf] %v7560
        %7634 = vst [vmem:[#allocation3 + $0x46c] sm:$0xf] %v7570
        %v7635 = vld [vmem:[%s784] sm:$0xe]
        %v7636 = vld [vmem:[%s784 + $0x4] sm:$0xf]
        %v7637 = vld [vmem:[%s784 + $0x8] sm:$0x1]
        %v7638 = vld [vmem:[%s784 + $0xc] sm:$0xe]
        %v7639 = vld [vmem:[%s784 + $0x10] sm:$0xf]
        %v7640 = vld [vmem:[%s784 + $0x14] sm:$0x1]
        %v7641 = vld [vmem:[%s784 + $0x18] sm:$0xe]
        %v7642 = vld [vmem:[%s784 + $0x1c] sm:$0xf]
        %v7643 = vld [vmem:[%s784 + $0x20] sm:$0x1]
        %v7644 = vld [vmem:[%s784 + $0x24] sm:$0xe]
        %v7645 = vld [vmem:[%s784 + $0x28] sm:$0xf]
        %v7646 = vld [vmem:[%s784 + $0x2c] sm:$0x1]
        %v7647 = vld [vmem:[%s784 + $0x30] sm:$0xe]
        %v7648 = vld [vmem:[%s784 + $0x34] sm:$0xf]
        %v7649 = vld [vmem:[%s784 + $0x38] sm:$0x1]
        %v7650 = vld [vmem:[%s784 + $0x3c] sm:$0xe]
        %v7651 = vld [vmem:[%s784 + $0x40] sm:$0xf]
        %v7652 = vld [vmem:[%s784 + $0x44] sm:$0x1]
        %v7653 = vld [vmem:[%s784 + $0x48] sm:$0xe]
        %v7654 = vld [vmem:[%s784 + $0x4c] sm:$0xf]
        %v7655 = vld [vmem:[%s784 + $0x50] sm:$0x1]
        %v7656 = vld [vmem:[%s784 + $0x54] sm:$0xe]
        %v7657 = vld [vmem:[%s784 + $0x58] sm:$0xf]
        %v7658 = vld [vmem:[%s784 + $0x5c] sm:$0x1]
        %v7659 = vld [vmem:[%s784 + $0x60] sm:$0xe]
        %v7660 = vld [vmem:[%s784 + $0x64] sm:$0xf]
        %v7661 = vld [vmem:[%s784 + $0x68] sm:$0x1]
        %v7662 = vld [vmem:[%s784 + $0x6c] sm:$0xe]
        %v7663 = vld [vmem:[%s784 + $0x70] sm:$0xf]
        %v7664 = vld [vmem:[%s784 + $0x74] sm:$0x1]
        %v7665 = vld [vmem:[%s784 + $0x78] sm:$0xe]
        %v7666 = vld [vmem:[%s784 + $0x7c] sm:$0xf]
        %v7667 = vld [vmem:[%s784 + $0x80] sm:$0x1]
        %v7668 = vld [vmem:[%s784 + $0x84] sm:$0xe]
        %v7669 = vld [vmem:[%s784 + $0x88] sm:$0xf]
        %v7670 = vld [vmem:[%s784 + $0x8c] sm:$0x1]
        %v7671 = vld [vmem:[%s784 + $0x90] sm:$0xe]
        %v7672 = vld [vmem:[%s784 + $0x94] sm:$0xf]
        %v7673 = vld [vmem:[%s784 + $0x98] sm:$0x1]
        %v7674 = vld [vmem:[%s784 + $0x9c] sm:$0xe]
        %v7675 = vld [vmem:[%s784 + $0xa0] sm:$0xf]
        %v7676 = vld [vmem:[%s784 + $0xa4] sm:$0x1]
        %v7677 = vld [vmem:[%s784 + $0xa8] sm:$0xe]
        %v7678 = vld [vmem:[%s784 + $0xac] sm:$0xf]
        %v7679 = vld [vmem:[%s784 + $0xb0] sm:$0x1]
        %v7680 = vld [vmem:[%s784 + $0xb4] sm:$0xe]
        %v7681 = vld [vmem:[%s784 + $0xb8] sm:$0xf]
        %v7682 = vld [vmem:[%s784 + $0xbc] sm:$0x1]
        %v7731 = vrot.slane %v7635, 5
        %v7732 = vrot.slane %v7731, 4
        %v7733 = vrot.slane %v7636, 5
        %v7734 = vsel %vm1560, %v7732, %v7733
        %v7735 = vrot.slane %v7733, 4
        %v7736 = vrot.slane %v7637, 5
        %v7737 = vsel %vm1560, %v7735, %v7736
        %v7738 = vrot.slane %v7638, 5
        %v7739 = vrot.slane %v7738, 4
        %v7740 = vrot.slane %v7639, 5
        %v7741 = vsel %vm1560, %v7739, %v7740
        %v7742 = vrot.slane %v7740, 4
        %v7743 = vrot.slane %v7640, 5
        %v7744 = vsel %vm1560, %v7742, %v7743
        %v7745 = vrot.slane %v7641, 5
        %v7746 = vrot.slane %v7745, 4
        %v7747 = vrot.slane %v7642, 5
        %v7748 = vsel %vm1560, %v7746, %v7747
        %v7749 = vrot.slane %v7747, 4
        %v7750 = vrot.slane %v7643, 5
        %v7751 = vsel %vm1560, %v7749, %v7750
        %v7752 = vrot.slane %v7644, 5
        %v7753 = vrot.slane %v7752, 4
        %v7754 = vrot.slane %v7645, 5
        %v7755 = vsel %vm1560, %v7753, %v7754
        %v7756 = vrot.slane %v7754, 4
        %v7757 = vrot.slane %v7646, 5
        %v7758 = vsel %vm1560, %v7756, %v7757
        %v7759 = vrot.slane %v7647, 5
        %v7760 = vrot.slane %v7759, 4
        %v7761 = vrot.slane %v7648, 5
        %v7762 = vsel %vm1560, %v7760, %v7761
        %v7763 = vrot.slane %v7761, 4
        %v7764 = vrot.slane %v7649, 5
        %v7765 = vsel %vm1560, %v7763, %v7764
        %v7766 = vrot.slane %v7650, 5
        %v7767 = vrot.slane %v7766, 4
        %v7768 = vrot.slane %v7651, 5
        %v7769 = vsel %vm1560, %v7767, %v7768
        %v7770 = vrot.slane %v7768, 4
        %v7771 = vrot.slane %v7652, 5
        %v7772 = vsel %vm1560, %v7770, %v7771
        %v7773 = vrot.slane %v7653, 5
        %v7774 = vrot.slane %v7773, 4
        %v7775 = vrot.slane %v7654, 5
        %v7776 = vsel %vm1560, %v7774, %v7775
        %v7777 = vrot.slane %v7775, 4
        %v7778 = vrot.slane %v7655, 5
        %v7779 = vsel %vm1560, %v7777, %v7778
        %v7780 = vrot.slane %v7656, 5
        %v7781 = vrot.slane %v7780, 4
        %v7782 = vrot.slane %v7657, 5
        %v7783 = vsel %vm1560, %v7781, %v7782
        %v7784 = vrot.slane %v7782, 4
        %v7785 = vrot.slane %v7658, 5
        %v7786 = vsel %vm1560, %v7784, %v7785
        %v7787 = vrot.slane %v7659, 5
        %v7788 = vrot.slane %v7787, 4
        %v7789 = vrot.slane %v7660, 5
        %v7790 = vsel %vm1560, %v7788, %v7789
        %v7791 = vrot.slane %v7789, 4
        %v7792 = vrot.slane %v7661, 5
        %v7793 = vsel %vm1560, %v7791, %v7792
        %v7794 = vrot.slane %v7662, 5
        %v7795 = vrot.slane %v7794, 4
        %v7796 = vrot.slane %v7663, 5
        %v7797 = vsel %vm1560, %v7795, %v7796
        %v7798 = vrot.slane %v7796, 4
        %v7799 = vrot.slane %v7664, 5
        %v7800 = vsel %vm1560, %v7798, %v7799
        %v7801 = vrot.slane %v7665, 5
        %v7802 = vrot.slane %v7801, 4
        %v7803 = vrot.slane %v7666, 5
        %v7804 = vsel %vm1560, %v7802, %v7803
        %v7805 = vrot.slane %v7803, 4
        %v7806 = vrot.slane %v7667, 5
        %v7807 = vsel %vm1560, %v7805, %v7806
        %v7808 = vrot.slane %v7668, 5
        %v7809 = vrot.slane %v7808, 4
        %v7810 = vrot.slane %v7669, 5
        %v7811 = vsel %vm1560, %v7809, %v7810
        %v7812 = vrot.slane %v7810, 4
        %v7813 = vrot.slane %v7670, 5
        %v7814 = vsel %vm1560, %v7812, %v7813
        %v7815 = vrot.slane %v7671, 5
        %v7816 = vrot.slane %v7815, 4
        %v7817 = vrot.slane %v7672, 5
        %v7818 = vsel %vm1560, %v7816, %v7817
        %v7819 = vrot.slane %v7817, 4
        %v7820 = vrot.slane %v7673, 5
        %v7821 = vsel %vm1560, %v7819, %v7820
        %v7822 = vrot.slane %v7674, 5
        %v7823 = vrot.slane %v7822, 4
        %v7824 = vrot.slane %v7675, 5
        %v7825 = vsel %vm1560, %v7823, %v7824
        %v7826 = vrot.slane %v7824, 4
        %v7827 = vrot.slane %v7676, 5
        %v7828 = vsel %vm1560, %v7826, %v7827
        %v7829 = vrot.slane %v7677, 5
        %v7830 = vrot.slane %v7829, 4
        %v7831 = vrot.slane %v7678, 5
        %v7832 = vsel %vm1560, %v7830, %v7831
        %v7833 = vrot.slane %v7831, 4
        %v7834 = vrot.slane %v7679, 5
        %v7835 = vsel %vm1560, %v7833, %v7834
        %v7836 = vrot.slane %v7680, 5
        %v7837 = vrot.slane %v7836, 4
        %v7838 = vrot.slane %v7681, 5
        %v7839 = vsel %vm1560, %v7837, %v7838
        %v7840 = vrot.slane %v7838, 4
        %v7841 = vrot.slane %v7682, 5
        %v7842 = vsel %vm1560, %v7840, %v7841
        %7875 = vst [vmem:[#allocation3 + $0x14] sm:$0xf] %v7734
        %7876 = vst [vmem:[#allocation3 + $0x38] sm:$0xf] %v7737
        %7877 = vst [vmem:[#allocation3 + $0x5c] sm:$0xf] %v7741
        %7878 = vst [vmem:[#allocation3 + $0x80] sm:$0xf] %v7744
        %7879 = vst [vmem:[#allocation3 + $0xa4] sm:$0xf] %v7748
        %7880 = vst [vmem:[#allocation3 + $0xc8] sm:$0xf] %v7751
        %7881 = vst [vmem:[#allocation3 + $0xec] sm:$0xf] %v7755
        %7882 = vst [vmem:[#allocation3 + $0x110] sm:$0xf] %v7758
        %7883 = vst [vmem:[#allocation3 + $0x134] sm:$0xf] %v7762
        %7884 = vst [vmem:[#allocation3 + $0x158] sm:$0xf] %v7765
        %7885 = vst [vmem:[#allocation3 + $0x17c] sm:$0xf] %v7769
        %7886 = vst [vmem:[#allocation3 + $0x1a0] sm:$0xf] %v7772
        %7887 = vst [vmem:[#allocation3 + $0x1c4] sm:$0xf] %v7776
        %7888 = vst [vmem:[#allocation3 + $0x1e8] sm:$0xf] %v7779
        %7889 = vst [vmem:[#allocation3 + $0x20c] sm:$0xf] %v7783
        %7890 = vst [vmem:[#allocation3 + $0x230] sm:$0xf] %v7786
        %7891 = vst [vmem:[#allocation3 + $0x254] sm:$0xf] %v7790
        %7892 = vst [vmem:[#allocation3 + $0x278] sm:$0xf] %v7793
        %7893 = vst [vmem:[#allocation3 + $0x29c] sm:$0xf] %v7797
        %7894 = vst [vmem:[#allocation3 + $0x2c0] sm:$0xf] %v7800
        %7895 = vst [vmem:[#allocation3 + $0x2e4] sm:$0xf] %v7804
        %7896 = vst [vmem:[#allocation3 + $0x308] sm:$0xf] %v7807
        %7897 = vst [vmem:[#allocation3 + $0x32c] sm:$0xf] %v7811
        %7898 = vst [vmem:[#allocation3 + $0x350] sm:$0xf] %v7814
        %7899 = vst [vmem:[#allocation3 + $0x374] sm:$0xf] %v7818
        %7900 = vst [vmem:[#allocation3 + $0x398] sm:$0xf] %v7821
        %7901 = vst [vmem:[#allocation3 + $0x3bc] sm:$0xf] %v7825
        %7902 = vst [vmem:[#allocation3 + $0x3e0] sm:$0xf] %v7828
        %7903 = vst [vmem:[#allocation3 + $0x404] sm:$0xf] %v7832
        %7904 = vst [vmem:[#allocation3 + $0x428] sm:$0xf] %v7835
        %7905 = vst [vmem:[#allocation3 + $0x44c] sm:$0xf] %v7839
        %7906 = vst [vmem:[#allocation3 + $0x470] sm:$0xf] %v7842
        %v7907 = vld [vmem:[%s2569] sm:$0xf]
        %v7908 = vld [vmem:[%s2569 + $0x4] sm:$0xf]
        %v7909 = vld [vmem:[%s2569 + $0xc] sm:$0xf]
        %v7910 = vld [vmem:[%s2569 + $0x10] sm:$0xf]
        %v7911 = vld [vmem:[%s2569 + $0x18] sm:$0xf]
        %v7912 = vld [vmem:[%s2569 + $0x1c] sm:$0xf]
        %v7913 = vld [vmem:[%s2569 + $0x24] sm:$0xf]
        %v7914 = vld [vmem:[%s2569 + $0x28] sm:$0xf]
        %v7915 = vld [vmem:[%s2569 + $0x30] sm:$0xf]
        %v7916 = vld [vmem:[%s2569 + $0x34] sm:$0xf]
        %v7917 = vld [vmem:[%s2569 + $0x3c] sm:$0xf]
        %v7918 = vld [vmem:[%s2569 + $0x40] sm:$0xf]
        %v7919 = vld [vmem:[%s2569 + $0x48] sm:$0xf]
        %v7920 = vld [vmem:[%s2569 + $0x4c] sm:$0xf]
        %v7921 = vld [vmem:[%s2569 + $0x54] sm:$0xf]
        %v7922 = vld [vmem:[%s2569 + $0x58] sm:$0xf]
        %v7923 = vld [vmem:[%s2569 + $0x60] sm:$0xf]
        %v7924 = vld [vmem:[%s2569 + $0x64] sm:$0xf]
        %v7925 = vld [vmem:[%s2569 + $0x6c] sm:$0xf]
        %v7926 = vld [vmem:[%s2569 + $0x70] sm:$0xf]
        %v7927 = vld [vmem:[%s2569 + $0x78] sm:$0xf]
        %v7928 = vld [vmem:[%s2569 + $0x7c] sm:$0xf]
        %v7929 = vld [vmem:[%s2569 + $0x84] sm:$0xf]
        %v7930 = vld [vmem:[%s2569 + $0x88] sm:$0xf]
        %v7931 = vld [vmem:[%s2569 + $0x90] sm:$0xf]
        %v7932 = vld [vmem:[%s2569 + $0x94] sm:$0xf]
        %v7933 = vld [vmem:[%s2569 + $0x9c] sm:$0xf]
        %v7934 = vld [vmem:[%s2569 + $0xa0] sm:$0xf]
        %v7935 = vld [vmem:[%s2569 + $0xa8] sm:$0xf]
        %v7936 = vld [vmem:[%s2569 + $0xac] sm:$0xf]
        %v7937 = vld [vmem:[%s2569 + $0xb4] sm:$0xf]
        %v7938 = vld [vmem:[%s2569 + $0xb8] sm:$0xf]
        %7939 = vst [vmem:[#allocation3 + $0x18] sm:$0xf] %v7907
        %7940 = vst [vmem:[#allocation3 + $0x3c] sm:$0xf] %v7908
        %7941 = vst [vmem:[#allocation3 + $0x60] sm:$0xf] %v7909
        %7942 = vst [vmem:[#allocation3 + $0x84] sm:$0xf] %v7910
        %7943 = vst [vmem:[#allocation3 + $0xa8] sm:$0xf] %v7911
        %7944 = vst [vmem:[#allocation3 + $0xcc] sm:$0xf] %v7912
        %7945 = vst [vmem:[#allocation3 + $0xf0] sm:$0xf] %v7913
        %7946 = vst [vmem:[#allocation3 + $0x114] sm:$0xf] %v7914
        %7947 = vst [vmem:[#allocation3 + $0x138] sm:$0xf] %v7915
        %7948 = vst [vmem:[#allocation3 + $0x15c] sm:$0xf] %v7916
        %7949 = vst [vmem:[#allocation3 + $0x180] sm:$0xf] %v7917
        %7950 = vst [vmem:[#allocation3 + $0x1a4] sm:$0xf] %v7918
        %7951 = vst [vmem:[#allocation3 + $0x1c8] sm:$0xf] %v7919
        %7952 = vst [vmem:[#allocation3 + $0x1ec] sm:$0xf] %v7920
        %7953 = vst [vmem:[#allocation3 + $0x210] sm:$0xf] %v7921
        %7954 = vst [vmem:[#allocation3 + $0x234] sm:$0xf] %v7922
        %7955 = vst [vmem:[#allocation3 + $0x258] sm:$0xf] %v7923
        %7956 = vst [vmem:[#allocation3 + $0x27c] sm:$0xf] %v7924
        %7957 = vst [vmem:[#allocation3 + $0x2a0] sm:$0xf] %v7925
        %7958 = vst [vmem:[#allocation3 + $0x2c4] sm:$0xf] %v7926
        %7959 = vst [vmem:[#allocation3 + $0x2e8] sm:$0xf] %v7927
        %7960 = vst [vmem:[#allocation3 + $0x30c] sm:$0xf] %v7928
        %7961 = vst [vmem:[#allocation3 + $0x330] sm:$0xf] %v7929
        %7962 = vst [vmem:[#allocation3 + $0x354] sm:$0xf] %v7930
        %7963 = vst [vmem:[#allocation3 + $0x378] sm:$0xf] %v7931
        %7964 = vst [vmem:[#allocation3 + $0x39c] sm:$0xf] %v7932
        %7965 = vst [vmem:[#allocation3 + $0x3c0] sm:$0xf] %v7933
        %7966 = vst [vmem:[#allocation3 + $0x3e4] sm:$0xf] %v7934
        %7967 = vst [vmem:[#allocation3 + $0x408] sm:$0xf] %v7935
        %7968 = vst [vmem:[#allocation3 + $0x42c] sm:$0xf] %v7936
        %7969 = vst [vmem:[#allocation3 + $0x450] sm:$0xf] %v7937
        %7970 = vst [vmem:[#allocation3 + $0x474] sm:$0xf] %v7938
        %v7971 = vld [vmem:[%s2569] sm:$0xf]
        %v7972 = vld [vmem:[%s2569 + $0x4] sm:$0xf]
        %v7973 = vld [vmem:[%s2569 + $0x8] sm:$0x1]
        %v7974 = vld [vmem:[%s2569 + $0xc] sm:$0xf]
        %v7975 = vld [vmem:[%s2569 + $0x10] sm:$0xf]
        %v7976 = vld [vmem:[%s2569 + $0x14] sm:$0x1]
        %v7977 = vld [vmem:[%s2569 + $0x18] sm:$0xf]
        %v7978 = vld [vmem:[%s2569 + $0x1c] sm:$0xf]
        %v7979 = vld [vmem:[%s2569 + $0x20] sm:$0x1]
        %v7980 = vld [vmem:[%s2569 + $0x24] sm:$0xf]
        %v7981 = vld [vmem:[%s2569 + $0x28] sm:$0xf]
        %v7982 = vld [vmem:[%s2569 + $0x2c] sm:$0x1]
        %v7983 = vld [vmem:[%s2569 + $0x30] sm:$0xf]
        %v7984 = vld [vmem:[%s2569 + $0x34] sm:$0xf]
        %v7985 = vld [vmem:[%s2569 + $0x38] sm:$0x1]
        %v7986 = vld [vmem:[%s2569 + $0x3c] sm:$0xf]
        %v7987 = vld [vmem:[%s2569 + $0x40] sm:$0xf]
        %v7988 = vld [vmem:[%s2569 + $0x44] sm:$0x1]
        %v7989 = vld [vmem:[%s2569 + $0x48] sm:$0xf]
        %v7990 = vld [vmem:[%s2569 + $0x4c] sm:$0xf]
        %v7991 = vld [vmem:[%s2569 + $0x50] sm:$0x1]
        %v7992 = vld [vmem:[%s2569 + $0x54] sm:$0xf]
        %v7993 = vld [vmem:[%s2569 + $0x58] sm:$0xf]
        %v7994 = vld [vmem:[%s2569 + $0x5c] sm:$0x1]
        %v7995 = vld [vmem:[%s2569 + $0x60] sm:$0xf]
        %v7996 = vld [vmem:[%s2569 + $0x64] sm:$0xf]
        %v7997 = vld [vmem:[%s2569 + $0x68] sm:$0x1]
        %v7998 = vld [vmem:[%s2569 + $0x6c] sm:$0xf]
        %v7999 = vld [vmem:[%s2569 + $0x70] sm:$0xf]
        %v8000 = vld [vmem:[%s2569 + $0x74] sm:$0x1]
        %v8001 = vld [vmem:[%s2569 + $0x78] sm:$0xf]
        %v8002 = vld [vmem:[%s2569 + $0x7c] sm:$0xf]
        %v8003 = vld [vmem:[%s2569 + $0x80] sm:$0x1]
        %v8004 = vld [vmem:[%s2569 + $0x84] sm:$0xf]
        %v8005 = vld [vmem:[%s2569 + $0x88] sm:$0xf]
        %v8006 = vld [vmem:[%s2569 + $0x8c] sm:$0x1]
        %v8007 = vld [vmem:[%s2569 + $0x90] sm:$0xf]
        %v8008 = vld [vmem:[%s2569 + $0x94] sm:$0xf]
        %v8009 = vld [vmem:[%s2569 + $0x98] sm:$0x1]
        %v8010 = vld [vmem:[%s2569 + $0x9c] sm:$0xf]
        %v8011 = vld [vmem:[%s2569 + $0xa0] sm:$0xf]
        %v8012 = vld [vmem:[%s2569 + $0xa4] sm:$0x1]
        %v8013 = vld [vmem:[%s2569 + $0xa8] sm:$0xf]
        %v8014 = vld [vmem:[%s2569 + $0xac] sm:$0xf]
        %v8015 = vld [vmem:[%s2569 + $0xb0] sm:$0x1]
        %v8016 = vld [vmem:[%s2569 + $0xb4] sm:$0xf]
        %v8017 = vld [vmem:[%s2569 + $0xb8] sm:$0xf]
        %v8018 = vld [vmem:[%s2569 + $0xbc] sm:$0x1]
        %v8020 = vshrl.u32 %v7971, 16
        %v8022 = vrot.slane %v8020, 4
        %v8023 = vshll.u32 %v7971, 16
        %v8025 = vrot.slane %v8023, 5
        %v8026 = vor.u32 %v8022, %v8025
        %v8027 = vrot.slane %v8026, 4
        %v8029 = vshll.u32 %v7972, 16
        %v8031 = vrot.slane %v8029, 5
        %v8032 = vsel %vm1013, %v8027, %v8031
        %v8033 = vshrl.u32 %v7972, 16
        %v8035 = vrot.slane %v8033, 4
        %v8036 = vor.u32 %v8035, %v8031
        %v8037 = vrot.slane %v8036, 4
        %v8039 = vshll.u32 %v7973, 16
        %v8041 = vrot.slane %v8039, 5
        %v8042 = vsel %vm1013, %v8037, %v8041
        %v8044 = vshrl.u32 %v7974, 16
        %v8046 = vrot.slane %v8044, 4
        %v8047 = vshll.u32 %v7974, 16
        %v8049 = vrot.slane %v8047, 5
        %v8050 = vor.u32 %v8046, %v8049
        %v8051 = vrot.slane %v8050, 4
        %v8053 = vshll.u32 %v7975, 16
        %v8055 = vrot.slane %v8053, 5
        %v8056 = vsel %vm1013, %v8051, %v8055
        %v8057 = vshrl.u32 %v7975, 16
        %v8059 = vrot.slane %v8057, 4
        %v8060 = vor.u32 %v8059, %v8055
        %v8061 = vrot.slane %v8060, 4
        %v8063 = vshll.u32 %v7976, 16
        %v8065 = vrot.slane %v8063, 5
        %v8066 = vsel %vm1013, %v8061, %v8065
        %v8068 = vshrl.u32 %v7977, 16
        %v8070 = vrot.slane %v8068, 4
        %v8071 = vshll.u32 %v7977, 16
        %v8073 = vrot.slane %v8071, 5
        %v8074 = vor.u32 %v8070, %v8073
        %v8075 = vrot.slane %v8074, 4
        %v8077 = vshll.u32 %v7978, 16
        %v8079 = vrot.slane %v8077, 5
        %v8080 = vsel %vm1013, %v8075, %v8079
        %v8081 = vshrl.u32 %v7978, 16
        %v8083 = vrot.slane %v8081, 4
        %v8084 = vor.u32 %v8083, %v8079
        %v8085 = vrot.slane %v8084, 4
        %v8087 = vshll.u32 %v7979, 16
        %v8089 = vrot.slane %v8087, 5
        %v8090 = vsel %vm1013, %v8085, %v8089
        %v8092 = vshrl.u32 %v7980, 16
        %v8094 = vrot.slane %v8092, 4
        %v8095 = vshll.u32 %v7980, 16
        %v8097 = vrot.slane %v8095, 5
        %v8098 = vor.u32 %v8094, %v8097
        %v8099 = vrot.slane %v8098, 4
        %v8101 = vshll.u32 %v7981, 16
        %v8103 = vrot.slane %v8101, 5
        %v8104 = vsel %vm1013, %v8099, %v8103
        %v8105 = vshrl.u32 %v7981, 16
        %v8107 = vrot.slane %v8105, 4
        %v8108 = vor.u32 %v8107, %v8103
        %v8109 = vrot.slane %v8108, 4
        %v8111 = vshll.u32 %v7982, 16
        %v8113 = vrot.slane %v8111, 5
        %v8114 = vsel %vm1013, %v8109, %v8113
        %v8116 = vshrl.u32 %v7983, 16
        %v8118 = vrot.slane %v8116, 4
        %v8119 = vshll.u32 %v7983, 16
        %v8121 = vrot.slane %v8119, 5
        %v8122 = vor.u32 %v8118, %v8121
        %v8123 = vrot.slane %v8122, 4
        %v8125 = vshll.u32 %v7984, 16
        %v8127 = vrot.slane %v8125, 5
        %v8128 = vsel %vm1013, %v8123, %v8127
        %v8129 = vshrl.u32 %v7984, 16
        %v8131 = vrot.slane %v8129, 4
        %v8132 = vor.u32 %v8131, %v8127
        %v8133 = vrot.slane %v8132, 4
        %v8135 = vshll.u32 %v7985, 16
        %v8137 = vrot.slane %v8135, 5
        %v8138 = vsel %vm1013, %v8133, %v8137
        %v8140 = vshrl.u32 %v7986, 16
        %v8142 = vrot.slane %v8140, 4
        %v8143 = vshll.u32 %v7986, 16
        %v8145 = vrot.slane %v8143, 5
        %v8146 = vor.u32 %v8142, %v8145
        %v8147 = vrot.slane %v8146, 4
        %v8149 = vshll.u32 %v7987, 16
        %v8151 = vrot.slane %v8149, 5
        %v8152 = vsel %vm1013, %v8147, %v8151
        %v8153 = vshrl.u32 %v7987, 16
        %v8155 = vrot.slane %v8153, 4
        %v8156 = vor.u32 %v8155, %v8151
        %v8157 = vrot.slane %v8156, 4
        %v8159 = vshll.u32 %v7988, 16
        %v8161 = vrot.slane %v8159, 5
        %v8162 = vsel %vm1013, %v8157, %v8161
        %v8164 = vshrl.u32 %v7989, 16
        %v8166 = vrot.slane %v8164, 4
        %v8167 = vshll.u32 %v7989, 16
        %v8169 = vrot.slane %v8167, 5
        %v8170 = vor.u32 %v8166, %v8169
        %v8171 = vrot.slane %v8170, 4
        %v8173 = vshll.u32 %v7990, 16
        %v8175 = vrot.slane %v8173, 5
        %v8176 = vsel %vm1013, %v8171, %v8175
        %v8177 = vshrl.u32 %v7990, 16
        %v8179 = vrot.slane %v8177, 4
        %v8180 = vor.u32 %v8179, %v8175
        %v8181 = vrot.slane %v8180, 4
        %v8183 = vshll.u32 %v7991, 16
        %v8185 = vrot.slane %v8183, 5
        %v8186 = vsel %vm1013, %v8181, %v8185
        %v8188 = vshrl.u32 %v7992, 16
        %v8190 = vrot.slane %v8188, 4
        %v8191 = vshll.u32 %v7992, 16
        %v8193 = vrot.slane %v8191, 5
        %v8194 = vor.u32 %v8190, %v8193
        %v8195 = vrot.slane %v8194, 4
        %v8197 = vshll.u32 %v7993, 16
        %v8199 = vrot.slane %v8197, 5
        %v8200 = vsel %vm1013, %v8195, %v8199
        %v8201 = vshrl.u32 %v7993, 16
        %v8203 = vrot.slane %v8201, 4
        %v8204 = vor.u32 %v8203, %v8199
        %v8205 = vrot.slane %v8204, 4
        %v8207 = vshll.u32 %v7994, 16
        %v8209 = vrot.slane %v8207, 5
        %v8210 = vsel %vm1013, %v8205, %v8209
        %v8212 = vshrl.u32 %v7995, 16
        %v8214 = vrot.slane %v8212, 4
        %v8215 = vshll.u32 %v7995, 16
        %v8217 = vrot.slane %v8215, 5
        %v8218 = vor.u32 %v8214, %v8217
        %v8219 = vrot.slane %v8218, 4
        %v8221 = vshll.u32 %v7996, 16
        %v8223 = vrot.slane %v8221, 5
        %v8224 = vsel %vm1013, %v8219, %v8223
        %v8225 = vshrl.u32 %v7996, 16
        %v8227 = vrot.slane %v8225, 4
        %v8228 = vor.u32 %v8227, %v8223
        %v8229 = vrot.slane %v8228, 4
        %v8231 = vshll.u32 %v7997, 16
        %v8233 = vrot.slane %v8231, 5
        %v8234 = vsel %vm1013, %v8229, %v8233
        %v8236 = vshrl.u32 %v7998, 16
        %v8238 = vrot.slane %v8236, 4
        %v8239 = vshll.u32 %v7998, 16
        %v8241 = vrot.slane %v8239, 5
        %v8242 = vor.u32 %v8238, %v8241
        %v8243 = vrot.slane %v8242, 4
        %v8245 = vshll.u32 %v7999, 16
        %v8247 = vrot.slane %v8245, 5
        %v8248 = vsel %vm1013, %v8243, %v8247
        %v8249 = vshrl.u32 %v7999, 16
        %v8251 = vrot.slane %v8249, 4
        %v8252 = vor.u32 %v8251, %v8247
        %v8253 = vrot.slane %v8252, 4
        %v8255 = vshll.u32 %v8000, 16
        %v8257 = vrot.slane %v8255, 5
        %v8258 = vsel %vm1013, %v8253, %v8257
        %v8260 = vshrl.u32 %v8001, 16
        %v8262 = vrot.slane %v8260, 4
        %v8263 = vshll.u32 %v8001, 16
        %v8265 = vrot.slane %v8263, 5
        %v8266 = vor.u32 %v8262, %v8265
        %v8267 = vrot.slane %v8266, 4
        %v8269 = vshll.u32 %v8002, 16
        %v8271 = vrot.slane %v8269, 5
        %v8272 = vsel %vm1013, %v8267, %v8271
        %v8273 = vshrl.u32 %v8002, 16
        %v8275 = vrot.slane %v8273, 4
        %v8276 = vor.u32 %v8275, %v8271
        %v8277 = vrot.slane %v8276, 4
        %v8279 = vshll.u32 %v8003, 16
        %v8281 = vrot.slane %v8279, 5
        %v8282 = vsel %vm1013, %v8277, %v8281
        %v8284 = vshrl.u32 %v8004, 16
        %v8286 = vrot.slane %v8284, 4
        %v8287 = vshll.u32 %v8004, 16
        %v8289 = vrot.slane %v8287, 5
        %v8290 = vor.u32 %v8286, %v8289
        %v8291 = vrot.slane %v8290, 4
        %v8293 = vshll.u32 %v8005, 16
        %v8295 = vrot.slane %v8293, 5
        %v8296 = vsel %vm1013, %v8291, %v8295
        %v8297 = vshrl.u32 %v8005, 16
        %v8299 = vrot.slane %v8297, 4
        %v8300 = vor.u32 %v8299, %v8295
        %v8301 = vrot.slane %v8300, 4
        %v8303 = vshll.u32 %v8006, 16
        %v8305 = vrot.slane %v8303, 5
        %v8306 = vsel %vm1013, %v8301, %v8305
        %v8308 = vshrl.u32 %v8007, 16
        %v8310 = vrot.slane %v8308, 4
        %v8311 = vshll.u32 %v8007, 16
        %v8313 = vrot.slane %v8311, 5
        %v8314 = vor.u32 %v8310, %v8313
        %v8315 = vrot.slane %v8314, 4
        %v8317 = vshll.u32 %v8008, 16
        %v8319 = vrot.slane %v8317, 5
        %v8320 = vsel %vm1013, %v8315, %v8319
        %v8321 = vshrl.u32 %v8008, 16
        %v8323 = vrot.slane %v8321, 4
        %v8324 = vor.u32 %v8323, %v8319
        %v8325 = vrot.slane %v8324, 4
        %v8327 = vshll.u32 %v8009, 16
        %v8329 = vrot.slane %v8327, 5
        %v8330 = vsel %vm1013, %v8325, %v8329
        %v8332 = vshrl.u32 %v8010, 16
        %v8334 = vrot.slane %v8332, 4
        %v8335 = vshll.u32 %v8010, 16
        %v8337 = vrot.slane %v8335, 5
        %v8338 = vor.u32 %v8334, %v8337
        %v8339 = vrot.slane %v8338, 4
        %v8341 = vshll.u32 %v8011, 16
        %v8343 = vrot.slane %v8341, 5
        %v8344 = vsel %vm1013, %v8339, %v8343
        %v8345 = vshrl.u32 %v8011, 16
        %v8347 = vrot.slane %v8345, 4
        %v8348 = vor.u32 %v8347, %v8343
        %v8349 = vrot.slane %v8348, 4
        %v8351 = vshll.u32 %v8012, 16
        %v8353 = vrot.slane %v8351, 5
        %v8354 = vsel %vm1013, %v8349, %v8353
        %v8356 = vshrl.u32 %v8013, 16
        %v8358 = vrot.slane %v8356, 4
        %v8359 = vshll.u32 %v8013, 16
        %v8361 = vrot.slane %v8359, 5
        %v8362 = vor.u32 %v8358, %v8361
        %v8363 = vrot.slane %v8362, 4
        %v8365 = vshll.u32 %v8014, 16
        %v8367 = vrot.slane %v8365, 5
        %v8368 = vsel %vm1013, %v8363, %v8367
        %v8369 = vshrl.u32 %v8014, 16
        %v8371 = vrot.slane %v8369, 4
        %v8372 = vor.u32 %v8371, %v8367
        %v8373 = vrot.slane %v8372, 4
        %v8375 = vshll.u32 %v8015, 16
        %v8377 = vrot.slane %v8375, 5
        %v8378 = vsel %vm1013, %v8373, %v8377
        %v8380 = vshrl.u32 %v8016, 16
        %v8382 = vrot.slane %v8380, 4
        %v8383 = vshll.u32 %v8016, 16
        %v8385 = vrot.slane %v8383, 5
        %v8386 = vor.u32 %v8382, %v8385
        %v8387 = vrot.slane %v8386, 4
        %v8389 = vshll.u32 %v8017, 16
        %v8391 = vrot.slane %v8389, 5
        %v8392 = vsel %vm1013, %v8387, %v8391
        %v8393 = vshrl.u32 %v8017, 16
        %v8395 = vrot.slane %v8393, 4
        %v8396 = vor.u32 %v8395, %v8391
        %v8397 = vrot.slane %v8396, 4
        %v8399 = vshll.u32 %v8018, 16
        %v8401 = vrot.slane %v8399, 5
        %v8402 = vsel %vm1013, %v8397, %v8401
        %8435 = vst [vmem:[#allocation3 + $0x1c] sm:$0xf] %v8032
        %8436 = vst [vmem:[#allocation3 + $0x40] sm:$0xf] %v8042
        %8437 = vst [vmem:[#allocation3 + $0x64] sm:$0xf] %v8056
        %8438 = vst [vmem:[#allocation3 + $0x88] sm:$0xf] %v8066
        %8439 = vst [vmem:[#allocation3 + $0xac] sm:$0xf] %v8080
        %8440 = vst [vmem:[#allocation3 + $0xd0] sm:$0xf] %v8090
        %8441 = vst [vmem:[#allocation3 + $0xf4] sm:$0xf] %v8104
        %8442 = vst [vmem:[#allocation3 + $0x118] sm:$0xf] %v8114
        %8443 = vst [vmem:[#allocation3 + $0x13c] sm:$0xf] %v8128
        %8444 = vst [vmem:[#allocation3 + $0x160] sm:$0xf] %v8138
        %8445 = vst [vmem:[#allocation3 + $0x184] sm:$0xf] %v8152
        %8446 = vst [vmem:[#allocation3 + $0x1a8] sm:$0xf] %v8162
        %8447 = vst [vmem:[#allocation3 + $0x1cc] sm:$0xf] %v8176
        %8448 = vst [vmem:[#allocation3 + $0x1f0] sm:$0xf] %v8186
        %8449 = vst [vmem:[#allocation3 + $0x214] sm:$0xf] %v8200
        %8450 = vst [vmem:[#allocation3 + $0x238] sm:$0xf] %v8210
        %8451 = vst [vmem:[#allocation3 + $0x25c] sm:$0xf] %v8224
        %8452 = vst [vmem:[#allocation3 + $0x280] sm:$0xf] %v8234
        %8453 = vst [vmem:[#allocation3 + $0x2a4] sm:$0xf] %v8248
        %8454 = vst [vmem:[#allocation3 + $0x2c8] sm:$0xf] %v8258
        %8455 = vst [vmem:[#allocation3 + $0x2ec] sm:$0xf] %v8272
        %8456 = vst [vmem:[#allocation3 + $0x310] sm:$0xf] %v8282
        %8457 = vst [vmem:[#allocation3 + $0x334] sm:$0xf] %v8296
        %8458 = vst [vmem:[#allocation3 + $0x358] sm:$0xf] %v8306
        %8459 = vst [vmem:[#allocation3 + $0x37c] sm:$0xf] %v8320
        %8460 = vst [vmem:[#allocation3 + $0x3a0] sm:$0xf] %v8330
        %8461 = vst [vmem:[#allocation3 + $0x3c4] sm:$0xf] %v8344
        %8462 = vst [vmem:[#allocation3 + $0x3e8] sm:$0xf] %v8354
        %8463 = vst [vmem:[#allocation3 + $0x40c] sm:$0xf] %v8368
        %8464 = vst [vmem:[#allocation3 + $0x430] sm:$0xf] %v8378
        %8465 = vst [vmem:[#allocation3 + $0x454] sm:$0xf] %v8392
        %8466 = vst [vmem:[#allocation3 + $0x478] sm:$0xf] %v8402
        %v8467 = vld [vmem:[%s2569] sm:$0xe]
        %v8468 = vld [vmem:[%s2569 + $0x4] sm:$0xf]
        %v8469 = vld [vmem:[%s2569 + $0x8] sm:$0x1]
        %v8470 = vld [vmem:[%s2569 + $0xc] sm:$0xe]
        %v8471 = vld [vmem:[%s2569 + $0x10] sm:$0xf]
        %v8472 = vld [vmem:[%s2569 + $0x14] sm:$0x1]
        %v8473 = vld [vmem:[%s2569 + $0x18] sm:$0xe]
        %v8474 = vld [vmem:[%s2569 + $0x1c] sm:$0xf]
        %v8475 = vld [vmem:[%s2569 + $0x20] sm:$0x1]
        %v8476 = vld [vmem:[%s2569 + $0x24] sm:$0xe]
        %v8477 = vld [vmem:[%s2569 + $0x28] sm:$0xf]
        %v8478 = vld [vmem:[%s2569 + $0x2c] sm:$0x1]
        %v8479 = vld [vmem:[%s2569 + $0x30] sm:$0xe]
        %v8480 = vld [vmem:[%s2569 + $0x34] sm:$0xf]
        %v8481 = vld [vmem:[%s2569 + $0x38] sm:$0x1]
        %v8482 = vld [vmem:[%s2569 + $0x3c] sm:$0xe]
        %v8483 = vld [vmem:[%s2569 + $0x40] sm:$0xf]
        %v8484 = vld [vmem:[%s2569 + $0x44] sm:$0x1]
        %v8485 = vld [vmem:[%s2569 + $0x48] sm:$0xe]
        %v8486 = vld [vmem:[%s2569 + $0x4c] sm:$0xf]
        %v8487 = vld [vmem:[%s2569 + $0x50] sm:$0x1]
        %v8488 = vld [vmem:[%s2569 + $0x54] sm:$0xe]
        %v8489 = vld [vmem:[%s2569 + $0x58] sm:$0xf]
        %v8490 = vld [vmem:[%s2569 + $0x5c] sm:$0x1]
        %v8491 = vld [vmem:[%s2569 + $0x60] sm:$0xe]
        %v8492 = vld [vmem:[%s2569 + $0x64] sm:$0xf]
        %v8493 = vld [vmem:[%s2569 + $0x68] sm:$0x1]
        %v8494 = vld [vmem:[%s2569 + $0x6c] sm:$0xe]
        %v8495 = vld [vmem:[%s2569 + $0x70] sm:$0xf]
        %v8496 = vld [vmem:[%s2569 + $0x74] sm:$0x1]
        %v8497 = vld [vmem:[%s2569 + $0x78] sm:$0xe]
        %v8498 = vld [vmem:[%s2569 + $0x7c] sm:$0xf]
        %v8499 = vld [vmem:[%s2569 + $0x80] sm:$0x1]
        %v8500 = vld [vmem:[%s2569 + $0x84] sm:$0xe]
        %v8501 = vld [vmem:[%s2569 + $0x88] sm:$0xf]
        %v8502 = vld [vmem:[%s2569 + $0x8c] sm:$0x1]
        %v8503 = vld [vmem:[%s2569 + $0x90] sm:$0xe]
        %v8504 = vld [vmem:[%s2569 + $0x94] sm:$0xf]
        %v8505 = vld [vmem:[%s2569 + $0x98] sm:$0x1]
        %v8506 = vld [vmem:[%s2569 + $0x9c] sm:$0xe]
        %v8507 = vld [vmem:[%s2569 + $0xa0] sm:$0xf]
        %v8508 = vld [vmem:[%s2569 + $0xa4] sm:$0x1]
        %v8509 = vld [vmem:[%s2569 + $0xa8] sm:$0xe]
        %v8510 = vld [vmem:[%s2569 + $0xac] sm:$0xf]
        %v8511 = vld [vmem:[%s2569 + $0xb0] sm:$0x1]
        %v8512 = vld [vmem:[%s2569 + $0xb4] sm:$0xe]
        %v8513 = vld [vmem:[%s2569 + $0xb8] sm:$0xf]
        %v8514 = vld [vmem:[%s2569 + $0xbc] sm:$0x1]
        %v8563 = vrot.slane %v8467, 5
        %v8564 = vrot.slane %v8563, 4
        %v8565 = vrot.slane %v8468, 5
        %v8566 = vsel %vm1560, %v8564, %v8565
        %v8567 = vrot.slane %v8565, 4
        %v8568 = vrot.slane %v8469, 5
        %v8569 = vsel %vm1560, %v8567, %v8568
        %v8570 = vrot.slane %v8470, 5
        %v8571 = vrot.slane %v8570, 4
        %v8572 = vrot.slane %v8471, 5
        %v8573 = vsel %vm1560, %v8571, %v8572
        %v8574 = vrot.slane %v8572, 4
        %v8575 = vrot.slane %v8472, 5
        %v8576 = vsel %vm1560, %v8574, %v8575
        %v8577 = vrot.slane %v8473, 5
        %v8578 = vrot.slane %v8577, 4
        %v8579 = vrot.slane %v8474, 5
        %v8580 = vsel %vm1560, %v8578, %v8579
        %v8581 = vrot.slane %v8579, 4
        %v8582 = vrot.slane %v8475, 5
        %v8583 = vsel %vm1560, %v8581, %v8582
        %v8584 = vrot.slane %v8476, 5
        %v8585 = vrot.slane %v8584, 4
        %v8586 = vrot.slane %v8477, 5
        %v8587 = vsel %vm1560, %v8585, %v8586
        %v8588 = vrot.slane %v8586, 4
        %v8589 = vrot.slane %v8478, 5
        %v8590 = vsel %vm1560, %v8588, %v8589
        %v8591 = vrot.slane %v8479, 5
        %v8592 = vrot.slane %v8591, 4
        %v8593 = vrot.slane %v8480, 5
        %v8594 = vsel %vm1560, %v8592, %v8593
        %v8595 = vrot.slane %v8593, 4
        %v8596 = vrot.slane %v8481, 5
        %v8597 = vsel %vm1560, %v8595, %v8596
        %v8598 = vrot.slane %v8482, 5
        %v8599 = vrot.slane %v8598, 4
        %v8600 = vrot.slane %v8483, 5
        %v8601 = vsel %vm1560, %v8599, %v8600
        %v8602 = vrot.slane %v8600, 4
        %v8603 = vrot.slane %v8484, 5
        %v8604 = vsel %vm1560, %v8602, %v8603
        %v8605 = vrot.slane %v8485, 5
        %v8606 = vrot.slane %v8605, 4
        %v8607 = vrot.slane %v8486, 5
        %v8608 = vsel %vm1560, %v8606, %v8607
        %v8609 = vrot.slane %v8607, 4
        %v8610 = vrot.slane %v8487, 5
        %v8611 = vsel %vm1560, %v8609, %v8610
        %v8612 = vrot.slane %v8488, 5
        %v8613 = vrot.slane %v8612, 4
        %v8614 = vrot.slane %v8489, 5
        %v8615 = vsel %vm1560, %v8613, %v8614
        %v8616 = vrot.slane %v8614, 4
        %v8617 = vrot.slane %v8490, 5
        %v8618 = vsel %vm1560, %v8616, %v8617
        %v8619 = vrot.slane %v8491, 5
        %v8620 = vrot.slane %v8619, 4
        %v8621 = vrot.slane %v8492, 5
        %v8622 = vsel %vm1560, %v8620, %v8621
        %v8623 = vrot.slane %v8621, 4
        %v8624 = vrot.slane %v8493, 5
        %v8625 = vsel %vm1560, %v8623, %v8624
        %v8626 = vrot.slane %v8494, 5
        %v8627 = vrot.slane %v8626, 4
        %v8628 = vrot.slane %v8495, 5
        %v8629 = vsel %vm1560, %v8627, %v8628
        %v8630 = vrot.slane %v8628, 4
        %v8631 = vrot.slane %v8496, 5
        %v8632 = vsel %vm1560, %v8630, %v8631
        %v8633 = vrot.slane %v8497, 5
        %v8634 = vrot.slane %v8633, 4
        %v8635 = vrot.slane %v8498, 5
        %v8636 = vsel %vm1560, %v8634, %v8635
        %v8637 = vrot.slane %v8635, 4
        %v8638 = vrot.slane %v8499, 5
        %v8639 = vsel %vm1560, %v8637, %v8638
        %v8640 = vrot.slane %v8500, 5
        %v8641 = vrot.slane %v8640, 4
        %v8642 = vrot.slane %v8501, 5
        %v8643 = vsel %vm1560, %v8641, %v8642
        %v8644 = vrot.slane %v8642, 4
        %v8645 = vrot.slane %v8502, 5
        %v8646 = vsel %vm1560, %v8644, %v8645
        %v8647 = vrot.slane %v8503, 5
        %v8648 = vrot.slane %v8647, 4
        %v8649 = vrot.slane %v8504, 5
        %v8650 = vsel %vm1560, %v8648, %v8649
        %v8651 = vrot.slane %v8649, 4
        %v8652 = vrot.slane %v8505, 5
        %v8653 = vsel %vm1560, %v8651, %v8652
        %v8654 = vrot.slane %v8506, 5
        %v8655 = vrot.slane %v8654, 4
        %v8656 = vrot.slane %v8507, 5
        %v8657 = vsel %vm1560, %v8655, %v8656
        %v8658 = vrot.slane %v8656, 4
        %v8659 = vrot.slane %v8508, 5
        %v8660 = vsel %vm1560, %v8658, %v8659
        %v8661 = vrot.slane %v8509, 5
        %v8662 = vrot.slane %v8661, 4
        %v8663 = vrot.slane %v8510, 5
        %v8664 = vsel %vm1560, %v8662, %v8663
        %v8665 = vrot.slane %v8663, 4
        %v8666 = vrot.slane %v8511, 5
        %v8667 = vsel %vm1560, %v8665, %v8666
        %v8668 = vrot.slane %v8512, 5
        %v8669 = vrot.slane %v8668, 4
        %v8670 = vrot.slane %v8513, 5
        %v8671 = vsel %vm1560, %v8669, %v8670
        %v8672 = vrot.slane %v8670, 4
        %v8673 = vrot.slane %v8514, 5
        %v8674 = vsel %vm1560, %v8672, %v8673
        %8707 = vst [vmem:[#allocation3 + $0x20] sm:$0xf] %v8566
        %8708 = vst [vmem:[#allocation3 + $0x44] sm:$0xf] %v8569
        %8709 = vst [vmem:[#allocation3 + $0x68] sm:$0xf] %v8573
        %8710 = vst [vmem:[#allocation3 + $0x8c] sm:$0xf] %v8576
        %8711 = vst [vmem:[#allocation3 + $0xb0] sm:$0xf] %v8580
        %8712 = vst [vmem:[#allocation3 + $0xd4] sm:$0xf] %v8583
        %8713 = vst [vmem:[#allocation3 + $0xf8] sm:$0xf] %v8587
        %8714 = vst [vmem:[#allocation3 + $0x11c] sm:$0xf] %v8590
        %8715 = vst [vmem:[#allocation3 + $0x140] sm:$0xf] %v8594
        %8716 = vst [vmem:[#allocation3 + $0x164] sm:$0xf] %v8597
        %8717 = vst [vmem:[#allocation3 + $0x188] sm:$0xf] %v8601
        %8718 = vst [vmem:[#allocation3 + $0x1ac] sm:$0xf] %v8604
        %8719 = vst [vmem:[#allocation3 + $0x1d0] sm:$0xf] %v8608
        %8720 = vst [vmem:[#allocation3 + $0x1f4] sm:$0xf] %v8611
        %8721 = vst [vmem:[#allocation3 + $0x218] sm:$0xf] %v8615
        %8722 = vst [vmem:[#allocation3 + $0x23c] sm:$0xf] %v8618
        %8723 = vst [vmem:[#allocation3 + $0x260] sm:$0xf] %v8622
        %8724 = vst [vmem:[#allocation3 + $0x284] sm:$0xf] %v8625
        %8725 = vst [vmem:[#allocation3 + $0x2a8] sm:$0xf] %v8629
        %8726 = vst [vmem:[#allocation3 + $0x2cc] sm:$0xf] %v8632
        %8727 = vst [vmem:[#allocation3 + $0x2f0] sm:$0xf] %v8636
        %8728 = vst [vmem:[#allocation3 + $0x314] sm:$0xf] %v8639
        %8729 = vst [vmem:[#allocation3 + $0x338] sm:$0xf] %v8643
        %8730 = vst [vmem:[#allocation3 + $0x35c] sm:$0xf] %v8646
        %8731 = vst [vmem:[#allocation3 + $0x380] sm:$0xf] %v8650
        %8732 = vst [vmem:[#allocation3 + $0x3a4] sm:$0xf] %v8653
        %8733 = vst [vmem:[#allocation3 + $0x3c8] sm:$0xf] %v8657
        %8734 = vst [vmem:[#allocation3 + $0x3ec] sm:$0xf] %v8660
        %8735 = vst [vmem:[#allocation3 + $0x410] sm:$0xf] %v8664
        %8736 = vst [vmem:[#allocation3 + $0x434] sm:$0xf] %v8667
        %8737 = vst [vmem:[#allocation3 + $0x458] sm:$0xf] %v8671
        %8738 = vst [vmem:[#allocation3 + $0x47c] sm:$0xf] %v8674
        %v8739 = vld [vmem:[#allocation3] sm:$0xff]
        %v8740 = vld [vmem:[#allocation3 + $0x8] sm:$0xff]
        %v8741 = vld [vmem:[#allocation3 + $0x10] sm:$0xff]
        %v8742 = vld [vmem:[#allocation3 + $0x18] sm:$0xff]
        %v8743 = vld [vmem:[#allocation3 + $0x20] sm:$0xf]
        %v8744 = vld [vmem:[#allocation3 + $0x24] sm:$0xff]
        %v8745 = vld [vmem:[#allocation3 + $0x2c] sm:$0xff]
        %v8746 = vld [vmem:[#allocation3 + $0x34] sm:$0xff]
        %v8747 = vld [vmem:[#allocation3 + $0x3c] sm:$0xff]
        %v8748 = vld [vmem:[#allocation3 + $0x44] sm:$0xf]
        %v8749 = vld [vmem:[#allocation3 + $0x48] sm:$0xff]
        %v8750 = vld [vmem:[#allocation3 + $0x50] sm:$0xff]
        %v8751 = vld [vmem:[#allocation3 + $0x58] sm:$0xff]
        %v8752 = vld [vmem:[#allocation3 + $0x60] sm:$0xff]
        %v8753 = vld [vmem:[#allocation3 + $0x68] sm:$0xf]
        %v8754 = vld [vmem:[#allocation3 + $0x6c] sm:$0xff]
        %v8755 = vld [vmem:[#allocation3 + $0x74] sm:$0xff]
        %v8756 = vld [vmem:[#allocation3 + $0x7c] sm:$0xff]
        %v8757 = vld [vmem:[#allocation3 + $0x84] sm:$0xff]
        %v8758 = vld [vmem:[#allocation3 + $0x8c] sm:$0xf]
        %v8759 = vld [vmem:[#allocation3 + $0x90] sm:$0xff]
        %v8760 = vld [vmem:[#allocation3 + $0x98] sm:$0xff]
        %v8761 = vld [vmem:[#allocation3 + $0xa0] sm:$0xff]
        %v8762 = vld [vmem:[#allocation3 + $0xa8] sm:$0xff]
        %v8763 = vld [vmem:[#allocation3 + $0xb0] sm:$0xf]
        %v8764 = vld [vmem:[#allocation3 + $0xb4] sm:$0xff]
        %v8765 = vld [vmem:[#allocation3 + $0xbc] sm:$0xff]
        %v8766 = vld [vmem:[#allocation3 + $0xc4] sm:$0xff]
        %v8767 = vld [vmem:[#allocation3 + $0xcc] sm:$0xff]
        %v8768 = vld [vmem:[#allocation3 + $0xd4] sm:$0xf]
        %v8769 = vld [vmem:[#allocation3 + $0xd8] sm:$0xff]
        %v8770 = vld [vmem:[#allocation3 + $0xe0] sm:$0xff]
        %v8771 = vld [vmem:[#allocation3 + $0xe8] sm:$0xff]
        %v8772 = vld [vmem:[#allocation3 + $0xf0] sm:$0xff]
        %v8773 = vld [vmem:[#allocation3 + $0xf8] sm:$0xf]
        %v8774 = vld [vmem:[#allocation3 + $0xfc] sm:$0xff]
        %v8775 = vld [vmem:[#allocation3 + $0x104] sm:$0xff]
        %v8776 = vld [vmem:[#allocation3 + $0x10c] sm:$0xff]
        %v8777 = vld [vmem:[#allocation3 + $0x114] sm:$0xff]
        %v8778 = vld [vmem:[#allocation3 + $0x11c] sm:$0xf]
        %v8779 = vld [vmem:[#allocation3 + $0x120] sm:$0xff]
        %v8780 = vld [vmem:[#allocation3 + $0x128] sm:$0xff]
        %v8781 = vld [vmem:[#allocation3 + $0x130] sm:$0xff]
        %v8782 = vld [vmem:[#allocation3 + $0x138] sm:$0xff]
        %v8783 = vld [vmem:[#allocation3 + $0x140] sm:$0xf]
        %v8784 = vld [vmem:[#allocation3 + $0x144] sm:$0xff]
        %v8785 = vld [vmem:[#allocation3 + $0x14c] sm:$0xff]
        %v8786 = vld [vmem:[#allocation3 + $0x154] sm:$0xff]
        %v8787 = vld [vmem:[#allocation3 + $0x15c] sm:$0xff]
        %v8788 = vld [vmem:[#allocation3 + $0x164] sm:$0xf]
        %v8789 = vld [vmem:[#allocation3 + $0x168] sm:$0xff]
        %v8790 = vld [vmem:[#allocation3 + $0x170] sm:$0xff]
        %v8791 = vld [vmem:[#allocation3 + $0x178] sm:$0xff]
        %v8792 = vld [vmem:[#allocation3 + $0x180] sm:$0xff]
        %v8793 = vld [vmem:[#allocation3 + $0x188] sm:$0xf]
        %v8794 = vld [vmem:[#allocation3 + $0x18c] sm:$0xff]
        %v8795 = vld [vmem:[#allocation3 + $0x194] sm:$0xff]
        %v8796 = vld [vmem:[#allocation3 + $0x19c] sm:$0xff]
        %v8797 = vld [vmem:[#allocation3 + $0x1a4] sm:$0xff]
        %v8798 = vld [vmem:[#allocation3 + $0x1ac] sm:$0xf]
        %v8799 = vld [vmem:[#allocation3 + $0x1b0] sm:$0xff]
        %v8800 = vld [vmem:[#allocation3 + $0x1b8] sm:$0xff]
        %v8801 = vld [vmem:[#allocation3 + $0x1c0] sm:$0xff]
        %v8802 = vld [vmem:[#allocation3 + $0x1c8] sm:$0xff]
        %v8803 = vld [vmem:[#allocation3 + $0x1d0] sm:$0xf]
        %v8804 = vld [vmem:[#allocation3 + $0x1d4] sm:$0xff]
        %v8805 = vld [vmem:[#allocation3 + $0x1dc] sm:$0xff]
        %v8806 = vld [vmem:[#allocation3 + $0x1e4] sm:$0xff]
        %v8807 = vld [vmem:[#allocation3 + $0x1ec] sm:$0xff]
        %v8808 = vld [vmem:[#allocation3 + $0x1f4] sm:$0xf]
        %v8809 = vld [vmem:[#allocation3 + $0x1f8] sm:$0xff]
        %v8810 = vld [vmem:[#allocation3 + $0x200] sm:$0xff]
        %v8811 = vld [vmem:[#allocation3 + $0x208] sm:$0xff]
        %v8812 = vld [vmem:[#allocation3 + $0x210] sm:$0xff]
        %v8813 = vld [vmem:[#allocation3 + $0x218] sm:$0xf]
        %v8814 = vld [vmem:[#allocation3 + $0x21c] sm:$0xff]
        %v8815 = vld [vmem:[#allocation3 + $0x224] sm:$0xff]
        %v8816 = vld [vmem:[#allocation3 + $0x22c] sm:$0xff]
        %v8817 = vld [vmem:[#allocation3 + $0x234] sm:$0xff]
        %v8818 = vld [vmem:[#allocation3 + $0x23c] sm:$0xf]
        %v8819 = vld [vmem:[#allocation3 + $0x240] sm:$0xff]
        %v8820 = vld [vmem:[#allocation3 + $0x248] sm:$0xff]
        %v8821 = vld [vmem:[#allocation3 + $0x250] sm:$0xff]
        %v8822 = vld [vmem:[#allocation3 + $0x258] sm:$0xff]
        %v8823 = vld [vmem:[#allocation3 + $0x260] sm:$0xf]
        %v8824 = vld [vmem:[#allocation3 + $0x264] sm:$0xff]
        %v8825 = vld [vmem:[#allocation3 + $0x26c] sm:$0xff]
        %v8826 = vld [vmem:[#allocation3 + $0x274] sm:$0xff]
        %v8827 = vld [vmem:[#allocation3 + $0x27c] sm:$0xff]
        %v8828 = vld [vmem:[#allocation3 + $0x284] sm:$0xf]
        %v8829 = vld [vmem:[#allocation3 + $0x288] sm:$0xff]
        %v8830 = vld [vmem:[#allocation3 + $0x290] sm:$0xff]
        %v8831 = vld [vmem:[#allocation3 + $0x298] sm:$0xff]
        %v8832 = vld [vmem:[#allocation3 + $0x2a0] sm:$0xff]
        %v8833 = vld [vmem:[#allocation3 + $0x2a8] sm:$0xf]
        %v8834 = vld [vmem:[#allocation3 + $0x2ac] sm:$0xff]
        %v8835 = vld [vmem:[#allocation3 + $0x2b4] sm:$0xff]
        %v8836 = vld [vmem:[#allocation3 + $0x2bc] sm:$0xff]
        %v8837 = vld [vmem:[#allocation3 + $0x2c4] sm:$0xff]
        %v8838 = vld [vmem:[#allocation3 + $0x2cc] sm:$0xf]
        %v8839 = vld [vmem:[#allocation3 + $0x2d0] sm:$0xff]
        %v8840 = vld [vmem:[#allocation3 + $0x2d8] sm:$0xff]
        %v8841 = vld [vmem:[#allocation3 + $0x2e0] sm:$0xff]
        %v8842 = vld [vmem:[#allocation3 + $0x2e8] sm:$0xff]
        %v8843 = vld [vmem:[#allocation3 + $0x2f0] sm:$0xf]
        %v8844 = vld [vmem:[#allocation3 + $0x2f4] sm:$0xff]
        %v8845 = vld [vmem:[#allocation3 + $0x2fc] sm:$0xff]
        %v8846 = vld [vmem:[#allocation3 + $0x304] sm:$0xff]
        %v8847 = vld [vmem:[#allocation3 + $0x30c] sm:$0xff]
        %v8848 = vld [vmem:[#allocation3 + $0x314] sm:$0xf]
        %v8849 = vld [vmem:[#allocation3 + $0x318] sm:$0xff]
        %v8850 = vld [vmem:[#allocation3 + $0x320] sm:$0xff]
        %v8851 = vld [vmem:[#allocation3 + $0x328] sm:$0xff]
        %v8852 = vld [vmem:[#allocation3 + $0x330] sm:$0xff]
        %v8853 = vld [vmem:[#allocation3 + $0x338] sm:$0xf]
        %v8854 = vld [vmem:[#allocation3 + $0x33c] sm:$0xff]
        %v8855 = vld [vmem:[#allocation3 + $0x344] sm:$0xff]
        %v8856 = vld [vmem:[#allocation3 + $0x34c] sm:$0xff]
        %v8857 = vld [vmem:[#allocation3 + $0x354] sm:$0xff]
        %v8858 = vld [vmem:[#allocation3 + $0x35c] sm:$0xf]
        %v8859 = vld [vmem:[#allocation3 + $0x360] sm:$0xff]
        %v8860 = vld [vmem:[#allocation3 + $0x368] sm:$0xff]
        %v8861 = vld [vmem:[#allocation3 + $0x370] sm:$0xff]
        %v8862 = vld [vmem:[#allocation3 + $0x378] sm:$0xff]
        %v8863 = vld [vmem:[#allocation3 + $0x380] sm:$0xf]
        %v8864 = vld [vmem:[#allocation3 + $0x384] sm:$0xff]
        %v8865 = vld [vmem:[#allocation3 + $0x38c] sm:$0xff]
        %v8866 = vld [vmem:[#allocation3 + $0x394] sm:$0xff]
        %v8867 = vld [vmem:[#allocation3 + $0x39c] sm:$0xff]
        %v8868 = vld [vmem:[#allocation3 + $0x3a4] sm:$0xf]
        %v8869 = vld [vmem:[#allocation3 + $0x3a8] sm:$0xff]
        %v8870 = vld [vmem:[#allocation3 + $0x3b0] sm:$0xff]
        %v8871 = vld [vmem:[#allocation3 + $0x3b8] sm:$0xff]
        %v8872 = vld [vmem:[#allocation3 + $0x3c0] sm:$0xff]
        %v8873 = vld [vmem:[#allocation3 + $0x3c8] sm:$0xf]
        %v8874 = vld [vmem:[#allocation3 + $0x3cc] sm:$0xff]
        %v8875 = vld [vmem:[#allocation3 + $0x3d4] sm:$0xff]
        %v8876 = vld [vmem:[#allocation3 + $0x3dc] sm:$0xff]
        %v8877 = vld [vmem:[#allocation3 + $0x3e4] sm:$0xff]
        %v8878 = vld [vmem:[#allocation3 + $0x3ec] sm:$0xf]
        %v8879 = vld [vmem:[#allocation3 + $0x3f0] sm:$0xff]
        %v8880 = vld [vmem:[#allocation3 + $0x3f8] sm:$0xff]
        %v8881 = vld [vmem:[#allocation3 + $0x400] sm:$0xff]
        %v8882 = vld [vmem:[#allocation3 + $0x408] sm:$0xff]
        %v8883 = vld [vmem:[#allocation3 + $0x410] sm:$0xf]
        %v8884 = vld [vmem:[#allocation3 + $0x414] sm:$0xff]
        %v8885 = vld [vmem:[#allocation3 + $0x41c] sm:$0xff]
        %v8886 = vld [vmem:[#allocation3 + $0x424] sm:$0xff]
        %v8887 = vld [vmem:[#allocation3 + $0x42c] sm:$0xff]
        %v8888 = vld [vmem:[#allocation3 + $0x434] sm:$0xf]
        %v8889 = vld [vmem:[#allocation3 + $0x438] sm:$0xff]
        %v8890 = vld [vmem:[#allocation3 + $0x440] sm:$0xff]
        %v8891 = vld [vmem:[#allocation3 + $0x448] sm:$0xff]
        %v8892 = vld [vmem:[#allocation3 + $0x450] sm:$0xff]
        %v8893 = vld [vmem:[#allocation3 + $0x458] sm:$0xf]
        %v8894 = vld [vmem:[#allocation3 + $0x45c] sm:$0xff]
        %v8895 = vld [vmem:[#allocation3 + $0x464] sm:$0xff]
        %v8896 = vld [vmem:[#allocation3 + $0x46c] sm:$0xff]
        %v8897 = vld [vmem:[#allocation3 + $0x474] sm:$0xff]
        %v8898 = vld [vmem:[#allocation3 + $0x47c] sm:$0xf]
        %v8899 = vld [vmem:[%s4] sm:$0xf]
        %v8900 = vld [vmem:[%s4 + $0x4] sm:$0xf]
        %v8901 = vld [vmem:[%s4 + $0x8] sm:$0xf]
        %v8902 = vld [vmem:[%s4 + $0xc] sm:$0xf]
        %v8903 = vld [vmem:[%s4 + $0x10] sm:$0xf]
        %v8904 = vld [vmem:[%s4 + $0x14] sm:$0xf]
        %v8905 = vld [vmem:[%s4 + $0x18] sm:$0xf]
        %v8906 = vld [vmem:[%s4 + $0x1c] sm:$0xf]
        %v8907 = vld [vmem:[%s4 + $0x20] sm:$0xf]
        %v8908 = vld [vmem:[%s4 + $0x24] sm:$0xf]
        %v8909 = vld [vmem:[%s4 + $0x28] sm:$0xf]
        %v8910 = vld [vmem:[%s4 + $0x2c] sm:$0xf]
        %v8911 = vld [vmem:[%s4 + $0x30] sm:$0xf]
        %v8912 = vld [vmem:[%s4 + $0x34] sm:$0xf]
        %v8913 = vld [vmem:[%s4 + $0x38] sm:$0xf]
        %v8914 = vld [vmem:[%s4 + $0x3c] sm:$0xf]
        %v8915 = vld [vmem:[%s4 + $0x40] sm:$0xf]
        %v8916 = vld [vmem:[%s4 + $0x44] sm:$0xf]
        %v8917 = vld [vmem:[%s4 + $0x48] sm:$0xf]
        %v8918 = vld [vmem:[%s4 + $0x4c] sm:$0xf]
        %v8919 = vld [vmem:[%s4 + $0x50] sm:$0xf]
        %v8920 = vld [vmem:[%s4 + $0x54] sm:$0xf]
        %v8921 = vld [vmem:[%s4 + $0x58] sm:$0xf]
        %v8922 = vld [vmem:[%s4 + $0x5c] sm:$0xf]
        %v8923 = vld [vmem:[%s4 + $0x60] sm:$0xf]
        %v8924 = vld [vmem:[%s4 + $0x64] sm:$0xf]
        %v8925 = vld [vmem:[%s4 + $0x68] sm:$0xf]
        %v8926 = vld [vmem:[%s4 + $0x6c] sm:$0xf]
        %v8927 = vld [vmem:[%s4 + $0x70] sm:$0xf]
        %v8928 = vld [vmem:[%s4 + $0x74] sm:$0xf]
        %v8929 = vld [vmem:[%s4 + $0x78] sm:$0xf]
        %v8930 = vld [vmem:[%s4 + $0x7c] sm:$0xf]
        %v8931 = vld [vmem:[%s4 + $0x80] sm:$0xf]
        %v8932 = vld [vmem:[%s4 + $0x84] sm:$0xf]
        %v8933 = vld [vmem:[%s4 + $0x88] sm:$0xf]
        %v8934 = vld [vmem:[%s4 + $0x8c] sm:$0xf]
        %v8935 = vld [vmem:[%s4 + $0x90] sm:$0xf]
        %v8936 = vld [vmem:[%s4 + $0x94] sm:$0xf]
        %v8937 = vld [vmem:[%s4 + $0x98] sm:$0xf]
        %v8938 = vld [vmem:[%s4 + $0x9c] sm:$0xf]
        %v8939 = vld [vmem:[%s4 + $0xa0] sm:$0xf]
        %v8940 = vld [vmem:[%s4 + $0xa4] sm:$0xf]
        %v8941 = vld [vmem:[%s4 + $0xa8] sm:$0xf]
        %v8942 = vld [vmem:[%s4 + $0xac] sm:$0xf]
        %v8943 = vld [vmem:[%s4 + $0xb0] sm:$0xf]
        %v8944 = vld [vmem:[%s4 + $0xb4] sm:$0xf]
        %v8945 = vld [vmem:[%s4 + $0xb8] sm:$0xf]
        %v8946 = vld [vmem:[%s4 + $0xbc] sm:$0xf]
        %v8947 = vld [vmem:[%s4 + $0xc0] sm:$0xf]
        %v8948 = vld [vmem:[%s4 + $0xc4] sm:$0xf]
        %v8949 = vld [vmem:[%s4 + $0xc8] sm:$0xf]
        %v8950 = vld [vmem:[%s4 + $0xcc] sm:$0xf]
        %v8951 = vld [vmem:[%s4 + $0xd0] sm:$0xf]
        %v8952 = vld [vmem:[%s4 + $0xd4] sm:$0xf]
        %v8953 = vld [vmem:[%s4 + $0xd8] sm:$0xf]
        %v8954 = vld [vmem:[%s4 + $0xdc] sm:$0xf]
        %v8955 = vld [vmem:[%s4 + $0xe0] sm:$0xf]
        %v8956 = vld [vmem:[%s4 + $0xe4] sm:$0xf]
        %v8957 = vld [vmem:[%s4 + $0xe8] sm:$0xf]
        %v8958 = vld [vmem:[%s4 + $0xec] sm:$0xf]
        %v8959 = vld [vmem:[%s4 + $0xf0] sm:$0xf]
        %v8960 = vld [vmem:[%s4 + $0xf4] sm:$0xf]
        %v8961 = vld [vmem:[%s4 + $0xf8] sm:$0xf]
        %v8962 = vld [vmem:[%s4 + $0xfc] sm:$0xf]
        %v8963 = vld [vmem:[%s4 + $0x100] sm:$0xf]
        %v8964 = vld [vmem:[%s4 + $0x104] sm:$0xf]
        %v8965 = vld [vmem:[%s4 + $0x108] sm:$0xf]
        %v8966 = vld [vmem:[%s4 + $0x10c] sm:$0xf]
        %v8967 = vld [vmem:[%s4 + $0x110] sm:$0xf]
        %v8968 = vld [vmem:[%s4 + $0x114] sm:$0xf]
        %v8969 = vld [vmem:[%s4 + $0x118] sm:$0xf]
        %v8970 = vld [vmem:[%s4 + $0x11c] sm:$0xf]
        %v8971 = vld [vmem:[%s4 + $0x120] sm:$0xf]
        %v8972 = vld [vmem:[%s4 + $0x124] sm:$0xf]
        %v8973 = vld [vmem:[%s4 + $0x128] sm:$0xf]
        %v8974 = vld [vmem:[%s4 + $0x12c] sm:$0xf]
        %v8975 = vld [vmem:[%s4 + $0x130] sm:$0xf]
        %v8976 = vld [vmem:[%s4 + $0x134] sm:$0xf]
        %v8977 = vld [vmem:[%s4 + $0x138] sm:$0xf]
        %v8978 = vld [vmem:[%s4 + $0x13c] sm:$0xf]
        %v8979 = vld [vmem:[%s4 + $0x140] sm:$0xf]
        %v8980 = vld [vmem:[%s4 + $0x144] sm:$0xf]
        %v8981 = vld [vmem:[%s4 + $0x148] sm:$0xf]
        %v8982 = vld [vmem:[%s4 + $0x14c] sm:$0xf]
        %v8983 = vld [vmem:[%s4 + $0x150] sm:$0xf]
        %v8984 = vld [vmem:[%s4 + $0x154] sm:$0xf]
        %v8985 = vld [vmem:[%s4 + $0x158] sm:$0xf]
        %v8986 = vld [vmem:[%s4 + $0x15c] sm:$0xf]
        %v8987 = vld [vmem:[%s4 + $0x160] sm:$0xf]
        %v8988 = vld [vmem:[%s4 + $0x164] sm:$0xf]
        %v8989 = vld [vmem:[%s4 + $0x168] sm:$0xf]
        %v8990 = vld [vmem:[%s4 + $0x16c] sm:$0xf]
        %v8991 = vld [vmem:[%s4 + $0x170] sm:$0xf]
        %v8992 = vld [vmem:[%s4 + $0x174] sm:$0xf]
        %v8993 = vld [vmem:[%s4 + $0x178] sm:$0xf]
        %v8994 = vld [vmem:[%s4 + $0x17c] sm:$0xf]
        %v8995 = vld [vmem:[%s4 + $0x180] sm:$0xf]
        %v8996 = vld [vmem:[%s4 + $0x184] sm:$0xf]
        %v8997 = vld [vmem:[%s4 + $0x188] sm:$0xf]
        %v8998 = vld [vmem:[%s4 + $0x18c] sm:$0xf]
        %v8999 = vld [vmem:[%s4 + $0x190] sm:$0xf]
        %v9000 = vld [vmem:[%s4 + $0x194] sm:$0xf]
        %v9001 = vld [vmem:[%s4 + $0x198] sm:$0xf]
        %v9002 = vld [vmem:[%s4 + $0x19c] sm:$0xf]
        %v9003 = vld [vmem:[%s4 + $0x1a0] sm:$0xf]
        %v9004 = vld [vmem:[%s4 + $0x1a4] sm:$0xf]
        %v9005 = vld [vmem:[%s4 + $0x1a8] sm:$0xf]
        %v9006 = vld [vmem:[%s4 + $0x1ac] sm:$0xf]
        %v9007 = vld [vmem:[%s4 + $0x1b0] sm:$0xf]
        %v9008 = vld [vmem:[%s4 + $0x1b4] sm:$0xf]
        %v9009 = vld [vmem:[%s4 + $0x1b8] sm:$0xf]
        %v9010 = vld [vmem:[%s4 + $0x1bc] sm:$0xf]
        %v9011 = vld [vmem:[%s4 + $0x1c0] sm:$0xf]
        %v9012 = vld [vmem:[%s4 + $0x1c4] sm:$0xf]
        %v9013 = vld [vmem:[%s4 + $0x1c8] sm:$0xf]
        %v9014 = vld [vmem:[%s4 + $0x1cc] sm:$0xf]
        %v9015 = vld [vmem:[%s4 + $0x1d0] sm:$0xf]
        %v9016 = vld [vmem:[%s4 + $0x1d4] sm:$0xf]
        %v9017 = vld [vmem:[%s4 + $0x1d8] sm:$0xf]
        %v9018 = vld [vmem:[%s4 + $0x1dc] sm:$0xf]
        %v9019 = vld [vmem:[%s4 + $0x1e0] sm:$0xf]
        %v9020 = vld [vmem:[%s4 + $0x1e4] sm:$0xf]
        %v9021 = vld [vmem:[%s4 + $0x1e8] sm:$0xf]
        %v9022 = vld [vmem:[%s4 + $0x1ec] sm:$0xf]
        %v9023 = vld [vmem:[%s4 + $0x1f0] sm:$0xf]
        %v9024 = vld [vmem:[%s4 + $0x1f4] sm:$0xf]
        %v9025 = vld [vmem:[%s4 + $0x1f8] sm:$0xf]
        %v9026 = vld [vmem:[%s4 + $0x1fc] sm:$0xf]
        %v9027 = vld [vmem:[%s4 + $0x200] sm:$0xf]
        %v9028 = vld [vmem:[%s4 + $0x204] sm:$0xf]
        %v9029 = vld [vmem:[%s4 + $0x208] sm:$0xf]
        %v9030 = vld [vmem:[%s4 + $0x20c] sm:$0xf]
        %v9031 = vld [vmem:[%s4 + $0x210] sm:$0xf]
        %v9032 = vld [vmem:[%s4 + $0x214] sm:$0xf]
        %v9033 = vld [vmem:[%s4 + $0x218] sm:$0xf]
        %v9034 = vld [vmem:[%s4 + $0x21c] sm:$0xf]
        %v9035 = vld [vmem:[%s4 + $0x220] sm:$0xf]
        %v9036 = vld [vmem:[%s4 + $0x224] sm:$0xf]
        %v9037 = vld [vmem:[%s4 + $0x228] sm:$0xf]
        %v9038 = vld [vmem:[%s4 + $0x22c] sm:$0xf]
        %v9039 = vld [vmem:[%s4 + $0x230] sm:$0xf]
        %v9040 = vld [vmem:[%s4 + $0x234] sm:$0xf]
        %v9041 = vld [vmem:[%s4 + $0x238] sm:$0xf]
        %v9042 = vld [vmem:[%s4 + $0x23c] sm:$0xf]
        %v9203 = vunpack.c.l.b16 %v8739
        %v9204 = vunpack.c.h.b16 %v8739
        %v9205 = vunpack.c.l.b16 %v8740
        %v9206 = vunpack.c.h.b16 %v8740
        %v9207 = vunpack.c.l.b16 %v8741
        %v9208 = vunpack.c.h.b16 %v8741
        %v9209 = vunpack.c.l.b16 %v8742
        %v9210 = vunpack.c.h.b16 %v8742
        %v9211 = vunpack.c.l.b16 %v8743
        %v9212 = vunpack.c.l.b16 %v8744
        %v9213 = vunpack.c.h.b16 %v8744
        %v9214 = vunpack.c.l.b16 %v8745
        %v9215 = vunpack.c.h.b16 %v8745
        %v9216 = vunpack.c.l.b16 %v8746
        %v9217 = vunpack.c.h.b16 %v8746
        %v9218 = vunpack.c.l.b16 %v8747
        %v9219 = vunpack.c.h.b16 %v8747
        %v9220 = vunpack.c.l.b16 %v8748
        %v9221 = vunpack.c.l.b16 %v8749
        %v9222 = vunpack.c.h.b16 %v8749
        %v9223 = vunpack.c.l.b16 %v8750
        %v9224 = vunpack.c.h.b16 %v8750
        %v9225 = vunpack.c.l.b16 %v8751
        %v9226 = vunpack.c.h.b16 %v8751
        %v9227 = vunpack.c.l.b16 %v8752
        %v9228 = vunpack.c.h.b16 %v8752
        %v9229 = vunpack.c.l.b16 %v8753
        %v9230 = vunpack.c.l.b16 %v8754
        %v9231 = vunpack.c.h.b16 %v8754
        %v9232 = vunpack.c.l.b16 %v8755
        %v9233 = vunpack.c.h.b16 %v8755
        %v9234 = vunpack.c.l.b16 %v8756
        %v9235 = vunpack.c.h.b16 %v8756
        %v9236 = vunpack.c.l.b16 %v8757
        %v9237 = vunpack.c.h.b16 %v8757
        %v9238 = vunpack.c.l.b16 %v8758
        %v9239 = vunpack.c.l.b16 %v8759
        %v9240 = vunpack.c.h.b16 %v8759
        %v9241 = vunpack.c.l.b16 %v8760
        %v9242 = vunpack.c.h.b16 %v8760
        %v9243 = vunpack.c.l.b16 %v8761
        %v9244 = vunpack.c.h.b16 %v8761
        %v9245 = vunpack.c.l.b16 %v8762
        %v9246 = vunpack.c.h.b16 %v8762
        %v9247 = vunpack.c.l.b16 %v8763
        %v9248 = vunpack.c.l.b16 %v8764
        %v9249 = vunpack.c.h.b16 %v8764
        %v9250 = vunpack.c.l.b16 %v8765
        %v9251 = vunpack.c.h.b16 %v8765
        %v9252 = vunpack.c.l.b16 %v8766
        %v9253 = vunpack.c.h.b16 %v8766
        %v9254 = vunpack.c.l.b16 %v8767
        %v9255 = vunpack.c.h.b16 %v8767
        %v9256 = vunpack.c.l.b16 %v8768
        %v9257 = vunpack.c.l.b16 %v8769
        %v9258 = vunpack.c.h.b16 %v8769
        %v9259 = vunpack.c.l.b16 %v8770
        %v9260 = vunpack.c.h.b16 %v8770
        %v9261 = vunpack.c.l.b16 %v8771
        %v9262 = vunpack.c.h.b16 %v8771
        %v9263 = vunpack.c.l.b16 %v8772
        %v9264 = vunpack.c.h.b16 %v8772
        %v9265 = vunpack.c.l.b16 %v8773
        %v9266 = vunpack.c.l.b16 %v8774
        %v9267 = vunpack.c.h.b16 %v8774
        %v9268 = vunpack.c.l.b16 %v8775
        %v9269 = vunpack.c.h.b16 %v8775
        %v9270 = vunpack.c.l.b16 %v8776
        %v9271 = vunpack.c.h.b16 %v8776
        %v9272 = vunpack.c.l.b16 %v8777
        %v9273 = vunpack.c.h.b16 %v8777
        %v9274 = vunpack.c.l.b16 %v8778
        %v9275 = vunpack.c.l.b16 %v8779
        %v9276 = vunpack.c.h.b16 %v8779
        %v9277 = vunpack.c.l.b16 %v8780
        %v9278 = vunpack.c.h.b16 %v8780
        %v9279 = vunpack.c.l.b16 %v8781
        %v9280 = vunpack.c.h.b16 %v8781
        %v9281 = vunpack.c.l.b16 %v8782
        %v9282 = vunpack.c.h.b16 %v8782
        %v9283 = vunpack.c.l.b16 %v8783
        %v9284 = vunpack.c.l.b16 %v8784
        %v9285 = vunpack.c.h.b16 %v8784
        %v9286 = vunpack.c.l.b16 %v8785
        %v9287 = vunpack.c.h.b16 %v8785
        %v9288 = vunpack.c.l.b16 %v8786
        %v9289 = vunpack.c.h.b16 %v8786
        %v9290 = vunpack.c.l.b16 %v8787
        %v9291 = vunpack.c.h.b16 %v8787
        %v9292 = vunpack.c.l.b16 %v8788
        %v9293 = vunpack.c.l.b16 %v8789
        %v9294 = vunpack.c.h.b16 %v8789
        %v9295 = vunpack.c.l.b16 %v8790
        %v9296 = vunpack.c.h.b16 %v8790
        %v9297 = vunpack.c.l.b16 %v8791
        %v9298 = vunpack.c.h.b16 %v8791
        %v9299 = vunpack.c.l.b16 %v8792
        %v9300 = vunpack.c.h.b16 %v8792
        %v9301 = vunpack.c.l.b16 %v8793
        %v9302 = vunpack.c.l.b16 %v8794
        %v9303 = vunpack.c.h.b16 %v8794
        %v9304 = vunpack.c.l.b16 %v8795
        %v9305 = vunpack.c.h.b16 %v8795
        %v9306 = vunpack.c.l.b16 %v8796
        %v9307 = vunpack.c.h.b16 %v8796
        %v9308 = vunpack.c.l.b16 %v8797
        %v9309 = vunpack.c.h.b16 %v8797
        %v9310 = vunpack.c.l.b16 %v8798
        %v9311 = vunpack.c.l.b16 %v8799
        %v9312 = vunpack.c.h.b16 %v8799
        %v9313 = vunpack.c.l.b16 %v8800
        %v9314 = vunpack.c.h.b16 %v8800
        %v9315 = vunpack.c.l.b16 %v8801
        %v9316 = vunpack.c.h.b16 %v8801
        %v9317 = vunpack.c.l.b16 %v8802
        %v9318 = vunpack.c.h.b16 %v8802
        %v9319 = vunpack.c.l.b16 %v8803
        %v9320 = vunpack.c.l.b16 %v8804
        %v9321 = vunpack.c.h.b16 %v8804
        %v9322 = vunpack.c.l.b16 %v8805
        %v9323 = vunpack.c.h.b16 %v8805
        %v9324 = vunpack.c.l.b16 %v8806
        %v9325 = vunpack.c.h.b16 %v8806
        %v9326 = vunpack.c.l.b16 %v8807
        %v9327 = vunpack.c.h.b16 %v8807
        %v9328 = vunpack.c.l.b16 %v8808
        %v9329 = vunpack.c.l.b16 %v8809
        %v9330 = vunpack.c.h.b16 %v8809
        %v9331 = vunpack.c.l.b16 %v8810
        %v9332 = vunpack.c.h.b16 %v8810
        %v9333 = vunpack.c.l.b16 %v8811
        %v9334 = vunpack.c.h.b16 %v8811
        %v9335 = vunpack.c.l.b16 %v8812
        %v9336 = vunpack.c.h.b16 %v8812
        %v9337 = vunpack.c.l.b16 %v8813
        %v9338 = vunpack.c.l.b16 %v8814
        %v9339 = vunpack.c.h.b16 %v8814
        %v9340 = vunpack.c.l.b16 %v8815
        %v9341 = vunpack.c.h.b16 %v8815
        %v9342 = vunpack.c.l.b16 %v8816
        %v9343 = vunpack.c.h.b16 %v8816
        %v9344 = vunpack.c.l.b16 %v8817
        %v9345 = vunpack.c.h.b16 %v8817
        %v9346 = vunpack.c.l.b16 %v8818
        %v9347 = vunpack.c.l.b16 %v8819
        %v9348 = vunpack.c.h.b16 %v8819
        %v9349 = vunpack.c.l.b16 %v8820
        %v9350 = vunpack.c.h.b16 %v8820
        %v9351 = vunpack.c.l.b16 %v8821
        %v9352 = vunpack.c.h.b16 %v8821
        %v9353 = vunpack.c.l.b16 %v8822
        %v9354 = vunpack.c.h.b16 %v8822
        %v9355 = vunpack.c.l.b16 %v8823
        %v9356 = vunpack.c.l.b16 %v8824
        %v9357 = vunpack.c.h.b16 %v8824
        %v9358 = vunpack.c.l.b16 %v8825
        %v9359 = vunpack.c.h.b16 %v8825
        %v9360 = vunpack.c.l.b16 %v8826
        %v9361 = vunpack.c.h.b16 %v8826
        %v9362 = vunpack.c.l.b16 %v8827
        %v9363 = vunpack.c.h.b16 %v8827
        %v9364 = vunpack.c.l.b16 %v8828
        %v9365 = vunpack.c.l.b16 %v8829
        %v9366 = vunpack.c.h.b16 %v8829
        %v9367 = vunpack.c.l.b16 %v8830
        %v9368 = vunpack.c.h.b16 %v8830
        %v9369 = vunpack.c.l.b16 %v8831
        %v9370 = vunpack.c.h.b16 %v8831
        %v9371 = vunpack.c.l.b16 %v8832
        %v9372 = vunpack.c.h.b16 %v8832
        %v9373 = vunpack.c.l.b16 %v8833
        %v9374 = vunpack.c.l.b16 %v8834
        %v9375 = vunpack.c.h.b16 %v8834
        %v9376 = vunpack.c.l.b16 %v8835
        %v9377 = vunpack.c.h.b16 %v8835
        %v9378 = vunpack.c.l.b16 %v8836
        %v9379 = vunpack.c.h.b16 %v8836
        %v9380 = vunpack.c.l.b16 %v8837
        %v9381 = vunpack.c.h.b16 %v8837
        %v9382 = vunpack.c.l.b16 %v8838
        %v9383 = vunpack.c.l.b16 %v8839
        %v9384 = vunpack.c.h.b16 %v8839
        %v9385 = vunpack.c.l.b16 %v8840
        %v9386 = vunpack.c.h.b16 %v8840
        %v9387 = vunpack.c.l.b16 %v8841
        %v9388 = vunpack.c.h.b16 %v8841
        %v9389 = vunpack.c.l.b16 %v8842
        %v9390 = vunpack.c.h.b16 %v8842
        %v9391 = vunpack.c.l.b16 %v8843
        %v9392 = vunpack.c.l.b16 %v8844
        %v9393 = vunpack.c.h.b16 %v8844
        %v9394 = vunpack.c.l.b16 %v8845
        %v9395 = vunpack.c.h.b16 %v8845
        %v9396 = vunpack.c.l.b16 %v8846
        %v9397 = vunpack.c.h.b16 %v8846
        %v9398 = vunpack.c.l.b16 %v8847
        %v9399 = vunpack.c.h.b16 %v8847
        %v9400 = vunpack.c.l.b16 %v8848
        %v9401 = vunpack.c.l.b16 %v8849
        %v9402 = vunpack.c.h.b16 %v8849
        %v9403 = vunpack.c.l.b16 %v8850
        %v9404 = vunpack.c.h.b16 %v8850
        %v9405 = vunpack.c.l.b16 %v8851
        %v9406 = vunpack.c.h.b16 %v8851
        %v9407 = vunpack.c.l.b16 %v8852
        %v9408 = vunpack.c.h.b16 %v8852
        %v9409 = vunpack.c.l.b16 %v8853
        %v9410 = vunpack.c.l.b16 %v8854
        %v9411 = vunpack.c.h.b16 %v8854
        %v9412 = vunpack.c.l.b16 %v8855
        %v9413 = vunpack.c.h.b16 %v8855
        %v9414 = vunpack.c.l.b16 %v8856
        %v9415 = vunpack.c.h.b16 %v8856
        %v9416 = vunpack.c.l.b16 %v8857
        %v9417 = vunpack.c.h.b16 %v8857
        %v9418 = vunpack.c.l.b16 %v8858
        %v9419 = vunpack.c.l.b16 %v8859
        %v9420 = vunpack.c.h.b16 %v8859
        %v9421 = vunpack.c.l.b16 %v8860
        %v9422 = vunpack.c.h.b16 %v8860
        %v9423 = vunpack.c.l.b16 %v8861
        %v9424 = vunpack.c.h.b16 %v8861
        %v9425 = vunpack.c.l.b16 %v8862
        %v9426 = vunpack.c.h.b16 %v8862
        %v9427 = vunpack.c.l.b16 %v8863
        %v9428 = vunpack.c.l.b16 %v8864
        %v9429 = vunpack.c.h.b16 %v8864
        %v9430 = vunpack.c.l.b16 %v8865
        %v9431 = vunpack.c.h.b16 %v8865
        %v9432 = vunpack.c.l.b16 %v8866
        %v9433 = vunpack.c.h.b16 %v8866
        %v9434 = vunpack.c.l.b16 %v8867
        %v9435 = vunpack.c.h.b16 %v8867
        %v9436 = vunpack.c.l.b16 %v8868
        %v9437 = vunpack.c.l.b16 %v8869
        %v9438 = vunpack.c.h.b16 %v8869
        %v9439 = vunpack.c.l.b16 %v8870
        %v9440 = vunpack.c.h.b16 %v8870
        %v9441 = vunpack.c.l.b16 %v8871
        %v9442 = vunpack.c.h.b16 %v8871
        %v9443 = vunpack.c.l.b16 %v8872
        %v9444 = vunpack.c.h.b16 %v8872
        %v9445 = vunpack.c.l.b16 %v8873
        %v9446 = vunpack.c.l.b16 %v8874
        %v9447 = vunpack.c.h.b16 %v8874
        %v9448 = vunpack.c.l.b16 %v8875
        %v9449 = vunpack.c.h.b16 %v8875
        %v9450 = vunpack.c.l.b16 %v8876
        %v9451 = vunpack.c.h.b16 %v8876
        %v9452 = vunpack.c.l.b16 %v8877
        %v9453 = vunpack.c.h.b16 %v8877
        %v9454 = vunpack.c.l.b16 %v8878
        %v9455 = vunpack.c.l.b16 %v8879
        %v9456 = vunpack.c.h.b16 %v8879
        %v9457 = vunpack.c.l.b16 %v8880
        %v9458 = vunpack.c.h.b16 %v8880
        %v9459 = vunpack.c.l.b16 %v8881
        %v9460 = vunpack.c.h.b16 %v8881
        %v9461 = vunpack.c.l.b16 %v8882
        %v9462 = vunpack.c.h.b16 %v8882
        %v9463 = vunpack.c.l.b16 %v8883
        %v9464 = vunpack.c.l.b16 %v8884
        %v9465 = vunpack.c.h.b16 %v8884
        %v9466 = vunpack.c.l.b16 %v8885
        %v9467 = vunpack.c.h.b16 %v8885
        %v9468 = vunpack.c.l.b16 %v8886
        %v9469 = vunpack.c.h.b16 %v8886
        %v9470 = vunpack.c.l.b16 %v8887
        %v9471 = vunpack.c.h.b16 %v8887
        %v9472 = vunpack.c.l.b16 %v8888
        %v9473 = vunpack.c.l.b16 %v8889
        %v9474 = vunpack.c.h.b16 %v8889
        %v9475 = vunpack.c.l.b16 %v8890
        %v9476 = vunpack.c.h.b16 %v8890
        %v9477 = vunpack.c.l.b16 %v8891
        %v9478 = vunpack.c.h.b16 %v8891
        %v9479 = vunpack.c.l.b16 %v8892
        %v9480 = vunpack.c.h.b16 %v8892
        %v9481 = vunpack.c.l.b16 %v8893
        %v9482 = vunpack.c.l.b16 %v8894
        %v9483 = vunpack.c.h.b16 %v8894
        %v9484 = vunpack.c.l.b16 %v8895
        %v9485 = vunpack.c.h.b16 %v8895
        %v9486 = vunpack.c.l.b16 %v8896
        %v9487 = vunpack.c.h.b16 %v8896
        %v9488 = vunpack.c.l.b16 %v8897
        %v9489 = vunpack.c.h.b16 %v8897
        %v9490 = vunpack.c.l.b16 %v8898
        %v9491 = vpack.c.b16 %v9212, %v9203
        %v9492 = vpack.c.b16 %v9213, %v9204
        %v9493 = vpack.c.b16 %v9214, %v9205
        %v9494 = vpack.c.b16 %v9215, %v9206
        %v9495 = vpack.c.b16 %v9216, %v9207
        %v9496 = vpack.c.b16 %v9217, %v9208
        %v9497 = vpack.c.b16 %v9218, %v9209
        %v9498 = vpack.c.b16 %v9219, %v9210
        %v9499 = vpack.c.b16 %v9220, %v9211
        %v9500 = vpack.c.b16 %v9230, %v9221
        %v9501 = vpack.c.b16 %v9231, %v9222
        %v9502 = vpack.c.b16 %v9232, %v9223
        %v9503 = vpack.c.b16 %v9233, %v9224
        %v9504 = vpack.c.b16 %v9234, %v9225
        %v9505 = vpack.c.b16 %v9235, %v9226
        %v9506 = vpack.c.b16 %v9236, %v9227
        %v9507 = vpack.c.b16 %v9237, %v9228
        %v9508 = vpack.c.b16 %v9238, %v9229
        %v9509 = vpack.c.b16 %v9248, %v9239
        %v9510 = vpack.c.b16 %v9249, %v9240
        %v9511 = vpack.c.b16 %v9250, %v9241
        %v9512 = vpack.c.b16 %v9251, %v9242
        %v9513 = vpack.c.b16 %v9252, %v9243
        %v9514 = vpack.c.b16 %v9253, %v9244
        %v9515 = vpack.c.b16 %v9254, %v9245
        %v9516 = vpack.c.b16 %v9255, %v9246
        %v9517 = vpack.c.b16 %v9256, %v9247
        %v9518 = vpack.c.b16 %v9266, %v9257
        %v9519 = vpack.c.b16 %v9267, %v9258
        %v9520 = vpack.c.b16 %v9268, %v9259
        %v9521 = vpack.c.b16 %v9269, %v9260
        %v9522 = vpack.c.b16 %v9270, %v9261
        %v9523 = vpack.c.b16 %v9271, %v9262
        %v9524 = vpack.c.b16 %v9272, %v9263
        %v9525 = vpack.c.b16 %v9273, %v9264
        %v9526 = vpack.c.b16 %v9274, %v9265
        %v9527 = vpack.c.b16 %v9284, %v9275
        %v9528 = vpack.c.b16 %v9285, %v9276
        %v9529 = vpack.c.b16 %v9286, %v9277
        %v9530 = vpack.c.b16 %v9287, %v9278
        %v9531 = vpack.c.b16 %v9288, %v9279
        %v9532 = vpack.c.b16 %v9289, %v9280
        %v9533 = vpack.c.b16 %v9290, %v9281
        %v9534 = vpack.c.b16 %v9291, %v9282
        %v9535 = vpack.c.b16 %v9292, %v9283
        %v9536 = vpack.c.b16 %v9302, %v9293
        %v9537 = vpack.c.b16 %v9303, %v9294
        %v9538 = vpack.c.b16 %v9304, %v9295
        %v9539 = vpack.c.b16 %v9305, %v9296
        %v9540 = vpack.c.b16 %v9306, %v9297
        %v9541 = vpack.c.b16 %v9307, %v9298
        %v9542 = vpack.c.b16 %v9308, %v9299
        %v9543 = vpack.c.b16 %v9309, %v9300
        %v9544 = vpack.c.b16 %v9310, %v9301
        %v9545 = vpack.c.b16 %v9320, %v9311
        %v9546 = vpack.c.b16 %v9321, %v9312
        %v9547 = vpack.c.b16 %v9322, %v9313
        %v9548 = vpack.c.b16 %v9323, %v9314
        %v9549 = vpack.c.b16 %v9324, %v9315
        %v9550 = vpack.c.b16 %v9325, %v9316
        %v9551 = vpack.c.b16 %v9326, %v9317
        %v9552 = vpack.c.b16 %v9327, %v9318
        %v9553 = vpack.c.b16 %v9328, %v9319
        %v9554 = vpack.c.b16 %v9338, %v9329
        %v9555 = vpack.c.b16 %v9339, %v9330
        %v9556 = vpack.c.b16 %v9340, %v9331
        %v9557 = vpack.c.b16 %v9341, %v9332
        %v9558 = vpack.c.b16 %v9342, %v9333
        %v9559 = vpack.c.b16 %v9343, %v9334
        %v9560 = vpack.c.b16 %v9344, %v9335
        %v9561 = vpack.c.b16 %v9345, %v9336
        %v9562 = vpack.c.b16 %v9346, %v9337
        %v9563 = vpack.c.b16 %v9356, %v9347
        %v9564 = vpack.c.b16 %v9357, %v9348
        %v9565 = vpack.c.b16 %v9358, %v9349
        %v9566 = vpack.c.b16 %v9359, %v9350
        %v9567 = vpack.c.b16 %v9360, %v9351
        %v9568 = vpack.c.b16 %v9361, %v9352
        %v9569 = vpack.c.b16 %v9362, %v9353
        %v9570 = vpack.c.b16 %v9363, %v9354
        %v9571 = vpack.c.b16 %v9364, %v9355
        %v9572 = vpack.c.b16 %v9374, %v9365
        %v9573 = vpack.c.b16 %v9375, %v9366
        %v9574 = vpack.c.b16 %v9376, %v9367
        %v9575 = vpack.c.b16 %v9377, %v9368
        %v9576 = vpack.c.b16 %v9378, %v9369
        %v9577 = vpack.c.b16 %v9379, %v9370
        %v9578 = vpack.c.b16 %v9380, %v9371
        %v9579 = vpack.c.b16 %v9381, %v9372
        %v9580 = vpack.c.b16 %v9382, %v9373
        %v9581 = vpack.c.b16 %v9392, %v9383
        %v9582 = vpack.c.b16 %v9393, %v9384
        %v9583 = vpack.c.b16 %v9394, %v9385
        %v9584 = vpack.c.b16 %v9395, %v9386
        %v9585 = vpack.c.b16 %v9396, %v9387
        %v9586 = vpack.c.b16 %v9397, %v9388
        %v9587 = vpack.c.b16 %v9398, %v9389
        %v9588 = vpack.c.b16 %v9399, %v9390
        %v9589 = vpack.c.b16 %v9400, %v9391
        %v9590 = vpack.c.b16 %v9410, %v9401
        %v9591 = vpack.c.b16 %v9411, %v9402
        %v9592 = vpack.c.b16 %v9412, %v9403
        %v9593 = vpack.c.b16 %v9413, %v9404
        %v9594 = vpack.c.b16 %v9414, %v9405
        %v9595 = vpack.c.b16 %v9415, %v9406
        %v9596 = vpack.c.b16 %v9416, %v9407
        %v9597 = vpack.c.b16 %v9417, %v9408
        %v9598 = vpack.c.b16 %v9418, %v9409
        %v9599 = vpack.c.b16 %v9428, %v9419
        %v9600 = vpack.c.b16 %v9429, %v9420
        %v9601 = vpack.c.b16 %v9430, %v9421
        %v9602 = vpack.c.b16 %v9431, %v9422
        %v9603 = vpack.c.b16 %v9432, %v9423
        %v9604 = vpack.c.b16 %v9433, %v9424
        %v9605 = vpack.c.b16 %v9434, %v9425
        %v9606 = vpack.c.b16 %v9435, %v9426
        %v9607 = vpack.c.b16 %v9436, %v9427
        %v9608 = vpack.c.b16 %v9446, %v9437
        %v9609 = vpack.c.b16 %v9447, %v9438
        %v9610 = vpack.c.b16 %v9448, %v9439
        %v9611 = vpack.c.b16 %v9449, %v9440
        %v9612 = vpack.c.b16 %v9450, %v9441
        %v9613 = vpack.c.b16 %v9451, %v9442
        %v9614 = vpack.c.b16 %v9452, %v9443
        %v9615 = vpack.c.b16 %v9453, %v9444
        %v9616 = vpack.c.b16 %v9454, %v9445
        %v9617 = vpack.c.b16 %v9464, %v9455
        %v9618 = vpack.c.b16 %v9465, %v9456
        %v9619 = vpack.c.b16 %v9466, %v9457
        %v9620 = vpack.c.b16 %v9467, %v9458
        %v9621 = vpack.c.b16 %v9468, %v9459
        %v9622 = vpack.c.b16 %v9469, %v9460
        %v9623 = vpack.c.b16 %v9470, %v9461
        %v9624 = vpack.c.b16 %v9471, %v9462
        %v9625 = vpack.c.b16 %v9472, %v9463
        %v9626 = vpack.c.b16 %v9482, %v9473
        %v9627 = vpack.c.b16 %v9483, %v9474
        %v9628 = vpack.c.b16 %v9484, %v9475
        %v9629 = vpack.c.b16 %v9485, %v9476
        %v9630 = vpack.c.b16 %v9486, %v9477
        %v9631 = vpack.c.b16 %v9487, %v9478
        %v9632 = vpack.c.b16 %v9488, %v9479
        %v9633 = vpack.c.b16 %v9489, %v9480
        %v9634 = vpack.c.b16 %v9490, %v9481
        %v9923 = vunpack.c.l.b16 %v8899
        %v9924 = vunpack.c.l.b16 %v8900
        %v9925 = vunpack.c.l.b16 %v8901
        %v9926 = vunpack.c.l.b16 %v8902
        %v9927 = vunpack.c.l.b16 %v8903
        %v9928 = vunpack.c.l.b16 %v8904
        %v9929 = vunpack.c.l.b16 %v8905
        %v9930 = vunpack.c.l.b16 %v8906
        %v9931 = vunpack.c.l.b16 %v8907
        %v9932 = vunpack.c.l.b16 %v8908
        %v9933 = vunpack.c.l.b16 %v8909
        %v9934 = vunpack.c.l.b16 %v8910
        %v9935 = vunpack.c.l.b16 %v8911
        %v9936 = vunpack.c.l.b16 %v8912
        %v9937 = vunpack.c.l.b16 %v8913
        %v9938 = vunpack.c.l.b16 %v8914
        %v9939 = vunpack.c.l.b16 %v8915
        %v9940 = vunpack.c.l.b16 %v8916
        %v9941 = vunpack.c.l.b16 %v8917
        %v9942 = vunpack.c.l.b16 %v8918
        %v9943 = vunpack.c.l.b16 %v8919
        %v9944 = vunpack.c.l.b16 %v8920
        %v9945 = vunpack.c.l.b16 %v8921
        %v9946 = vunpack.c.l.b16 %v8922
        %v9947 = vunpack.c.l.b16 %v8923
        %v9948 = vunpack.c.l.b16 %v8924
        %v9949 = vunpack.c.l.b16 %v8925
        %v9950 = vunpack.c.l.b16 %v8926
        %v9951 = vunpack.c.l.b16 %v8927
        %v9952 = vunpack.c.l.b16 %v8928
        %v9953 = vunpack.c.l.b16 %v8929
        %v9954 = vunpack.c.l.b16 %v8930
        %v9955 = vunpack.c.l.b16 %v8931
        %v9956 = vunpack.c.l.b16 %v8932
        %v9957 = vunpack.c.l.b16 %v8933
        %v9958 = vunpack.c.l.b16 %v8934
        %v9959 = vunpack.c.l.b16 %v8935
        %v9960 = vunpack.c.l.b16 %v8936
        %v9961 = vunpack.c.l.b16 %v8937
        %v9962 = vunpack.c.l.b16 %v8938
        %v9963 = vunpack.c.l.b16 %v8939
        %v9964 = vunpack.c.l.b16 %v8940
        %v9965 = vunpack.c.l.b16 %v8941
        %v9966 = vunpack.c.l.b16 %v8942
        %v9967 = vunpack.c.l.b16 %v8943
        %v9968 = vunpack.c.l.b16 %v8944
        %v9969 = vunpack.c.l.b16 %v8945
        %v9970 = vunpack.c.l.b16 %v8946
        %v9971 = vunpack.c.l.b16 %v8947
        %v9972 = vunpack.c.l.b16 %v8948
        %v9973 = vunpack.c.l.b16 %v8949
        %v9974 = vunpack.c.l.b16 %v8950
        %v9975 = vunpack.c.l.b16 %v8951
        %v9976 = vunpack.c.l.b16 %v8952
        %v9977 = vunpack.c.l.b16 %v8953
        %v9978 = vunpack.c.l.b16 %v8954
        %v9979 = vunpack.c.l.b16 %v8955
        %v9980 = vunpack.c.l.b16 %v8956
        %v9981 = vunpack.c.l.b16 %v8957
        %v9982 = vunpack.c.l.b16 %v8958
        %v9983 = vunpack.c.l.b16 %v8959
        %v9984 = vunpack.c.l.b16 %v8960
        %v9985 = vunpack.c.l.b16 %v8961
        %v9986 = vunpack.c.l.b16 %v8962
        %v9987 = vunpack.c.l.b16 %v8963
        %v9988 = vunpack.c.l.b16 %v8964
        %v9989 = vunpack.c.l.b16 %v8965
        %v9990 = vunpack.c.l.b16 %v8966
        %v9991 = vunpack.c.l.b16 %v8967
        %v9992 = vunpack.c.l.b16 %v8968
        %v9993 = vunpack.c.l.b16 %v8969
        %v9994 = vunpack.c.l.b16 %v8970
        %v9995 = vunpack.c.l.b16 %v8971
        %v9996 = vunpack.c.l.b16 %v8972
        %v9997 = vunpack.c.l.b16 %v8973
        %v9998 = vunpack.c.l.b16 %v8974
        %v9999 = vunpack.c.l.b16 %v8975
        %v10000 = vunpack.c.l.b16 %v8976
        %v10001 = vunpack.c.l.b16 %v8977
        %v10002 = vunpack.c.l.b16 %v8978
        %v10003 = vunpack.c.l.b16 %v8979
        %v10004 = vunpack.c.l.b16 %v8980
        %v10005 = vunpack.c.l.b16 %v8981
        %v10006 = vunpack.c.l.b16 %v8982
        %v10007 = vunpack.c.l.b16 %v8983
        %v10008 = vunpack.c.l.b16 %v8984
        %v10009 = vunpack.c.l.b16 %v8985
        %v10010 = vunpack.c.l.b16 %v8986
        %v10011 = vunpack.c.l.b16 %v8987
        %v10012 = vunpack.c.l.b16 %v8988
        %v10013 = vunpack.c.l.b16 %v8989
        %v10014 = vunpack.c.l.b16 %v8990
        %v10015 = vunpack.c.l.b16 %v8991
        %v10016 = vunpack.c.l.b16 %v8992
        %v10017 = vunpack.c.l.b16 %v8993
        %v10018 = vunpack.c.l.b16 %v8994
        %v10019 = vunpack.c.l.b16 %v8995
        %v10020 = vunpack.c.l.b16 %v8996
        %v10021 = vunpack.c.l.b16 %v8997
        %v10022 = vunpack.c.l.b16 %v8998
        %v10023 = vunpack.c.l.b16 %v8999
        %v10024 = vunpack.c.l.b16 %v9000
        %v10025 = vunpack.c.l.b16 %v9001
        %v10026 = vunpack.c.l.b16 %v9002
        %v10027 = vunpack.c.l.b16 %v9003
        %v10028 = vunpack.c.l.b16 %v9004
        %v10029 = vunpack.c.l.b16 %v9005
        %v10030 = vunpack.c.l.b16 %v9006
        %v10031 = vunpack.c.l.b16 %v9007
        %v10032 = vunpack.c.l.b16 %v9008
        %v10033 = vunpack.c.l.b16 %v9009
        %v10034 = vunpack.c.l.b16 %v9010
        %v10035 = vunpack.c.l.b16 %v9011
        %v10036 = vunpack.c.l.b16 %v9012
        %v10037 = vunpack.c.l.b16 %v9013
        %v10038 = vunpack.c.l.b16 %v9014
        %v10039 = vunpack.c.l.b16 %v9015
        %v10040 = vunpack.c.l.b16 %v9016
        %v10041 = vunpack.c.l.b16 %v9017
        %v10042 = vunpack.c.l.b16 %v9018
        %v10043 = vunpack.c.l.b16 %v9019
        %v10044 = vunpack.c.l.b16 %v9020
        %v10045 = vunpack.c.l.b16 %v9021
        %v10046 = vunpack.c.l.b16 %v9022
        %v10047 = vunpack.c.l.b16 %v9023
        %v10048 = vunpack.c.l.b16 %v9024
        %v10049 = vunpack.c.l.b16 %v9025
        %v10050 = vunpack.c.l.b16 %v9026
        %v10051 = vunpack.c.l.b16 %v9027
        %v10052 = vunpack.c.l.b16 %v9028
        %v10053 = vunpack.c.l.b16 %v9029
        %v10054 = vunpack.c.l.b16 %v9030
        %v10055 = vunpack.c.l.b16 %v9031
        %v10056 = vunpack.c.l.b16 %v9032
        %v10057 = vunpack.c.l.b16 %v9033
        %v10058 = vunpack.c.l.b16 %v9034
        %v10059 = vunpack.c.l.b16 %v9035
        %v10060 = vunpack.c.l.b16 %v9036
        %v10061 = vunpack.c.l.b16 %v9037
        %v10062 = vunpack.c.l.b16 %v9038
        %v10063 = vunpack.c.l.b16 %v9039
        %v10064 = vunpack.c.l.b16 %v9040
        %v10065 = vunpack.c.l.b16 %v9041
        %v10066 = vunpack.c.l.b16 %v9042
        %v10067 = vpack.c.b16 %v9924, %v9923
        %v10068 = vpack.c.b16 %v9926, %v9925
        %v10069 = vpack.c.b16 %v9928, %v9927
        %v10070 = vpack.c.b16 %v9930, %v9929
        %v10071 = vpack.c.b16 %v9932, %v9931
        %v10072 = vpack.c.b16 %v9934, %v9933
        %v10073 = vpack.c.b16 %v9936, %v9935
        %v10074 = vpack.c.b16 %v9938, %v9937
        %v10075 = vpack.c.b16 %v9940, %v9939
        %v10076 = vpack.c.b16 %v9942, %v9941
        %v10077 = vpack.c.b16 %v9944, %v9943
        %v10078 = vpack.c.b16 %v9946, %v9945
        %v10079 = vpack.c.b16 %v9948, %v9947
        %v10080 = vpack.c.b16 %v9950, %v9949
        %v10081 = vpack.c.b16 %v9952, %v9951
        %v10082 = vpack.c.b16 %v9954, %v9953
        %v10083 = vpack.c.b16 %v9956, %v9955
        %v10084 = vpack.c.b16 %v9958, %v9957
        %v10085 = vpack.c.b16 %v9960, %v9959
        %v10086 = vpack.c.b16 %v9962, %v9961
        %v10087 = vpack.c.b16 %v9964, %v9963
        %v10088 = vpack.c.b16 %v9966, %v9965
        %v10089 = vpack.c.b16 %v9968, %v9967
        %v10090 = vpack.c.b16 %v9970, %v9969
        %v10091 = vpack.c.b16 %v9972, %v9971
        %v10092 = vpack.c.b16 %v9974, %v9973
        %v10093 = vpack.c.b16 %v9976, %v9975
        %v10094 = vpack.c.b16 %v9978, %v9977
        %v10095 = vpack.c.b16 %v9980, %v9979
        %v10096 = vpack.c.b16 %v9982, %v9981
        %v10097 = vpack.c.b16 %v9984, %v9983
        %v10098 = vpack.c.b16 %v9986, %v9985
        %v10099 = vpack.c.b16 %v9988, %v9987
        %v10100 = vpack.c.b16 %v9990, %v9989
        %v10101 = vpack.c.b16 %v9992, %v9991
        %v10102 = vpack.c.b16 %v9994, %v9993
        %v10103 = vpack.c.b16 %v9996, %v9995
        %v10104 = vpack.c.b16 %v9998, %v9997
        %v10105 = vpack.c.b16 %v10000, %v9999
        %v10106 = vpack.c.b16 %v10002, %v10001
        %v10107 = vpack.c.b16 %v10004, %v10003
        %v10108 = vpack.c.b16 %v10006, %v10005
        %v10109 = vpack.c.b16 %v10008, %v10007
        %v10110 = vpack.c.b16 %v10010, %v10009
        %v10111 = vpack.c.b16 %v10012, %v10011
        %v10112 = vpack.c.b16 %v10014, %v10013
        %v10113 = vpack.c.b16 %v10016, %v10015
        %v10114 = vpack.c.b16 %v10018, %v10017
        %v10115 = vpack.c.b16 %v10020, %v10019
        %v10116 = vpack.c.b16 %v10022, %v10021
        %v10117 = vpack.c.b16 %v10024, %v10023
        %v10118 = vpack.c.b16 %v10026, %v10025
        %v10119 = vpack.c.b16 %v10028, %v10027
        %v10120 = vpack.c.b16 %v10030, %v10029
        %v10121 = vpack.c.b16 %v10032, %v10031
        %v10122 = vpack.c.b16 %v10034, %v10033
        %v10123 = vpack.c.b16 %v10036, %v10035
        %v10124 = vpack.c.b16 %v10038, %v10037
        %v10125 = vpack.c.b16 %v10040, %v10039
        %v10126 = vpack.c.b16 %v10042, %v10041
        %v10127 = vpack.c.b16 %v10044, %v10043
        %v10128 = vpack.c.b16 %v10046, %v10045
        %v10129 = vpack.c.b16 %v10048, %v10047
        %v10130 = vpack.c.b16 %v10050, %v10049
        %v10131 = vpack.c.b16 %v10052, %v10051
        %v10132 = vpack.c.b16 %v10054, %v10053
        %v10133 = vpack.c.b16 %v10056, %v10055
        %v10134 = vpack.c.b16 %v10058, %v10057
        %v10135 = vpack.c.b16 %v10060, %v10059
        %v10136 = vpack.c.b16 %v10062, %v10061
        %v10137 = vpack.c.b16 %v10064, %v10063
        %v10138 = vpack.c.b16 %v10066, %v10065
        %10211 = vmatpush.bf16.msra.mxu0 %v10074
        %10212 = vmatpush.bf16.msra.mxu0 %v10073
        %10213 = vmatpush.bf16.msra.mxu0 %v10072
        %10214 = vmatpush.bf16.msra.mxu0 %v10071
        %10215 = vmatpush.bf16.msra.mxu0 %v10070
        %10216 = vmatpush.bf16.msra.mxu0 %v10069
        %10217 = vmatpush.bf16.msra.mxu0 %v10068
        %10218 = vmatpush.bf16.msra.mxu0 %v10067
        %10219 = vmatmul.bf16.gmra.mxu0 %v9491
        %v10220 = vpop.f32.mrf.mxu0
        %v10221 = vadd.f32 0.0, %v10220
        %v10222 = vpop.f32.mrf.mxu0
        %v10223 = vadd.f32 0.0, %v10222
        %10224 = vmatmul.bf16.gmra.mxu0 %v9500
        %v10225 = vpop.f32.mrf.mxu0
        %v10226 = vadd.f32 0.0, %v10225
        %v10227 = vpop.f32.mrf.mxu0
        %v10228 = vadd.f32 0.0, %v10227
        %10229 = vmatmul.bf16.gmra.mxu0 %v9509
        %v10230 = vpop.f32.mrf.mxu0
        %v10231 = vadd.f32 0.0, %v10230
        %v10232 = vpop.f32.mrf.mxu0
        %v10233 = vadd.f32 0.0, %v10232
        %10234 = vmatmul.bf16.gmra.mxu0 %v9518
        %v10235 = vpop.f32.mrf.mxu0
        %v10236 = vadd.f32 0.0, %v10235
        %v10237 = vpop.f32.mrf.mxu0
        %v10238 = vadd.f32 0.0, %v10237
        %10239 = vmatmul.bf16.gmra.mxu0 %v9527
        %v10240 = vpop.f32.mrf.mxu0
        %v10241 = vadd.f32 0.0, %v10240
        %v10242 = vpop.f32.mrf.mxu0
        %v10243 = vadd.f32 0.0, %v10242
        %10244 = vmatmul.bf16.gmra.mxu0 %v9536
        %v10245 = vpop.f32.mrf.mxu0
        %v10246 = vadd.f32 0.0, %v10245
        %v10247 = vpop.f32.mrf.mxu0
        %v10248 = vadd.f32 0.0, %v10247
        %10249 = vmatmul.bf16.gmra.mxu0 %v9545
        %v10250 = vpop.f32.mrf.mxu0
        %v10251 = vadd.f32 0.0, %v10250
        %v10252 = vpop.f32.mrf.mxu0
        %v10253 = vadd.f32 0.0, %v10252
        %10254 = vmatmul.bf16.gmra.mxu0 %v9554
        %v10255 = vpop.f32.mrf.mxu0
        %v10256 = vadd.f32 0.0, %v10255
        %v10257 = vpop.f32.mrf.mxu0
        %v10258 = vadd.f32 0.0, %v10257
        %10259 = vmatmul.bf16.gmra.mxu0 %v9563
        %v10260 = vpop.f32.mrf.mxu0
        %v10261 = vadd.f32 0.0, %v10260
        %v10262 = vpop.f32.mrf.mxu0
        %v10263 = vadd.f32 0.0, %v10262
        %10264 = vmatmul.bf16.gmra.mxu0 %v9572
        %v10265 = vpop.f32.mrf.mxu0
        %v10266 = vadd.f32 0.0, %v10265
        %v10267 = vpop.f32.mrf.mxu0
        %v10268 = vadd.f32 0.0, %v10267
        %10269 = vmatmul.bf16.gmra.mxu0 %v9581
        %v10270 = vpop.f32.mrf.mxu0
        %v10271 = vadd.f32 0.0, %v10270
        %v10272 = vpop.f32.mrf.mxu0
        %v10273 = vadd.f32 0.0, %v10272
        %10274 = vmatmul.bf16.gmra.mxu0 %v9590
        %v10275 = vpop.f32.mrf.mxu0
        %v10276 = vadd.f32 0.0, %v10275
        %v10277 = vpop.f32.mrf.mxu0
        %v10278 = vadd.f32 0.0, %v10277
        %10279 = vmatmul.bf16.gmra.mxu0 %v9599
        %v10280 = vpop.f32.mrf.mxu0
        %v10281 = vadd.f32 0.0, %v10280
        %v10282 = vpop.f32.mrf.mxu0
        %v10283 = vadd.f32 0.0, %v10282
        %10284 = vmatmul.bf16.gmra.mxu0 %v9608
        %v10285 = vpop.f32.mrf.mxu0
        %v10286 = vadd.f32 0.0, %v10285
        %v10287 = vpop.f32.mrf.mxu0
        %v10288 = vadd.f32 0.0, %v10287
        %10289 = vmatmul.bf16.gmra.mxu0 %v9617
        %v10290 = vpop.f32.mrf.mxu0
        %v10291 = vadd.f32 0.0, %v10290
        %v10292 = vpop.f32.mrf.mxu0
        %v10293 = vadd.f32 0.0, %v10292
        %10294 = vmatmul.bf16.gmra.mxu0 %v9626
        %v10295 = vpop.f32.mrf.mxu0
        %v10296 = vadd.f32 0.0, %v10295
        %v10297 = vpop.f32.mrf.mxu0
        %v10298 = vadd.f32 0.0, %v10297
        %10299 = vdwg.mxu0
        %10300 = vmatpush.bf16.msra.mxu0 %v10082
        %10301 = vmatpush.bf16.msra.mxu0 %v10081
        %10302 = vmatpush.bf16.msra.mxu0 %v10080
        %10303 = vmatpush.bf16.msra.mxu0 %v10079
        %10304 = vmatpush.bf16.msra.mxu0 %v10078
        %10305 = vmatpush.bf16.msra.mxu0 %v10077
        %10306 = vmatpush.bf16.msra.mxu0 %v10076
        %10307 = vmatpush.bf16.msra.mxu0 %v10075
        %10308 = vmatmul.bf16.gmra.mxu0 %v9492
        %v10309 = vpop.f32.mrf.mxu0
        %v10310 = vadd.f32 %v10221, %v10309
        %v10311 = vpop.f32.mrf.mxu0
        %v10312 = vadd.f32 %v10223, %v10311
        %10313 = vmatmul.bf16.gmra.mxu0 %v9501
        %v10314 = vpop.f32.mrf.mxu0
        %v10315 = vadd.f32 %v10226, %v10314
        %v10316 = vpop.f32.mrf.mxu0
        %v10317 = vadd.f32 %v10228, %v10316
        %10318 = vmatmul.bf16.gmra.mxu0 %v9510
        %v10319 = vpop.f32.mrf.mxu0
        %v10320 = vadd.f32 %v10231, %v10319
        %v10321 = vpop.f32.mrf.mxu0
        %v10322 = vadd.f32 %v10233, %v10321
        %10323 = vmatmul.bf16.gmra.mxu0 %v9519
        %v10324 = vpop.f32.mrf.mxu0
        %v10325 = vadd.f32 %v10236, %v10324
        %v10326 = vpop.f32.mrf.mxu0
        %v10327 = vadd.f32 %v10238, %v10326
        %10328 = vmatmul.bf16.gmra.mxu0 %v9528
        %v10329 = vpop.f32.mrf.mxu0
        %v10330 = vadd.f32 %v10241, %v10329
        %v10331 = vpop.f32.mrf.mxu0
        %v10332 = vadd.f32 %v10243, %v10331
        %10333 = vmatmul.bf16.gmra.mxu0 %v9537
        %v10334 = vpop.f32.mrf.mxu0
        %v10335 = vadd.f32 %v10246, %v10334
        %v10336 = vpop.f32.mrf.mxu0
        %v10337 = vadd.f32 %v10248, %v10336
        %10338 = vmatmul.bf16.gmra.mxu0 %v9546
        %v10339 = vpop.f32.mrf.mxu0
        %v10340 = vadd.f32 %v10251, %v10339
        %v10341 = vpop.f32.mrf.mxu0
        %v10342 = vadd.f32 %v10253, %v10341
        %10343 = vmatmul.bf16.gmra.mxu0 %v9555
        %v10344 = vpop.f32.mrf.mxu0
        %v10345 = vadd.f32 %v10256, %v10344
        %v10346 = vpop.f32.mrf.mxu0
        %v10347 = vadd.f32 %v10258, %v10346
        %10348 = vmatmul.bf16.gmra.mxu0 %v9564
        %v10349 = vpop.f32.mrf.mxu0
        %v10350 = vadd.f32 %v10261, %v10349
        %v10351 = vpop.f32.mrf.mxu0
        %v10352 = vadd.f32 %v10263, %v10351
        %10353 = vmatmul.bf16.gmra.mxu0 %v9573
        %v10354 = vpop.f32.mrf.mxu0
        %v10355 = vadd.f32 %v10266, %v10354
        %v10356 = vpop.f32.mrf.mxu0
        %v10357 = vadd.f32 %v10268, %v10356
        %10358 = vmatmul.bf16.gmra.mxu0 %v9582
        %v10359 = vpop.f32.mrf.mxu0
        %v10360 = vadd.f32 %v10271, %v10359
        %v10361 = vpop.f32.mrf.mxu0
        %v10362 = vadd.f32 %v10273, %v10361
        %10363 = vmatmul.bf16.gmra.mxu0 %v9591
        %v10364 = vpop.f32.mrf.mxu0
        %v10365 = vadd.f32 %v10276, %v10364
        %v10366 = vpop.f32.mrf.mxu0
        %v10367 = vadd.f32 %v10278, %v10366
        %10368 = vmatmul.bf16.gmra.mxu0 %v9600
        %v10369 = vpop.f32.mrf.mxu0
        %v10370 = vadd.f32 %v10281, %v10369
        %v10371 = vpop.f32.mrf.mxu0
        %v10372 = vadd.f32 %v10283, %v10371
        %10373 = vmatmul.bf16.gmra.mxu0 %v9609
        %v10374 = vpop.f32.mrf.mxu0
        %v10375 = vadd.f32 %v10286, %v10374
        %v10376 = vpop.f32.mrf.mxu0
        %v10377 = vadd.f32 %v10288, %v10376
        %10378 = vmatmul.bf16.gmra.mxu0 %v9618
        %v10379 = vpop.f32.mrf.mxu0
        %v10380 = vadd.f32 %v10291, %v10379
        %v10381 = vpop.f32.mrf.mxu0
        %v10382 = vadd.f32 %v10293, %v10381
        %10383 = vmatmul.bf16.gmra.mxu0 %v9627
        %v10384 = vpop.f32.mrf.mxu0
        %v10385 = vadd.f32 %v10296, %v10384
        %v10386 = vpop.f32.mrf.mxu0
        %v10387 = vadd.f32 %v10298, %v10386
        %10388 = vdwg.mxu0
        %10389 = vmatpush.bf16.msra.mxu0 %v10090
        %10390 = vmatpush.bf16.msra.mxu0 %v10089
        %10391 = vmatpush.bf16.msra.mxu0 %v10088
        %10392 = vmatpush.bf16.msra.mxu0 %v10087
        %10393 = vmatpush.bf16.msra.mxu0 %v10086
        %10394 = vmatpush.bf16.msra.mxu0 %v10085
        %10395 = vmatpush.bf16.msra.mxu0 %v10084
        %10396 = vmatpush.bf16.msra.mxu0 %v10083
        %10397 = vmatmul.bf16.gmra.mxu0 %v9493
        %v10398 = vpop.f32.mrf.mxu0
        %v10399 = vadd.f32 %v10310, %v10398
        %v10400 = vpop.f32.mrf.mxu0
        %v10401 = vadd.f32 %v10312, %v10400
        %10402 = vmatmul.bf16.gmra.mxu0 %v9502
        %v10403 = vpop.f32.mrf.mxu0
        %v10404 = vadd.f32 %v10315, %v10403
        %v10405 = vpop.f32.mrf.mxu0
        %v10406 = vadd.f32 %v10317, %v10405
        %10407 = vmatmul.bf16.gmra.mxu0 %v9511
        %v10408 = vpop.f32.mrf.mxu0
        %v10409 = vadd.f32 %v10320, %v10408
        %v10410 = vpop.f32.mrf.mxu0
        %v10411 = vadd.f32 %v10322, %v10410
        %10412 = vmatmul.bf16.gmra.mxu0 %v9520
        %v10413 = vpop.f32.mrf.mxu0
        %v10414 = vadd.f32 %v10325, %v10413
        %v10415 = vpop.f32.mrf.mxu0
        %v10416 = vadd.f32 %v10327, %v10415
        %10417 = vmatmul.bf16.gmra.mxu0 %v9529
        %v10418 = vpop.f32.mrf.mxu0
        %v10419 = vadd.f32 %v10330, %v10418
        %v10420 = vpop.f32.mrf.mxu0
        %v10421 = vadd.f32 %v10332, %v10420
        %10422 = vmatmul.bf16.gmra.mxu0 %v9538
        %v10423 = vpop.f32.mrf.mxu0
        %v10424 = vadd.f32 %v10335, %v10423
        %v10425 = vpop.f32.mrf.mxu0
        %v10426 = vadd.f32 %v10337, %v10425
        %10427 = vmatmul.bf16.gmra.mxu0 %v9547
        %v10428 = vpop.f32.mrf.mxu0
        %v10429 = vadd.f32 %v10340, %v10428
        %v10430 = vpop.f32.mrf.mxu0
        %v10431 = vadd.f32 %v10342, %v10430
        %10432 = vmatmul.bf16.gmra.mxu0 %v9556
        %v10433 = vpop.f32.mrf.mxu0
        %v10434 = vadd.f32 %v10345, %v10433
        %v10435 = vpop.f32.mrf.mxu0
        %v10436 = vadd.f32 %v10347, %v10435
        %10437 = vmatmul.bf16.gmra.mxu0 %v9565
        %v10438 = vpop.f32.mrf.mxu0
        %v10439 = vadd.f32 %v10350, %v10438
        %v10440 = vpop.f32.mrf.mxu0
        %v10441 = vadd.f32 %v10352, %v10440
        %10442 = vmatmul.bf16.gmra.mxu0 %v9574
        %v10443 = vpop.f32.mrf.mxu0
        %v10444 = vadd.f32 %v10355, %v10443
        %v10445 = vpop.f32.mrf.mxu0
        %v10446 = vadd.f32 %v10357, %v10445
        %10447 = vmatmul.bf16.gmra.mxu0 %v9583
        %v10448 = vpop.f32.mrf.mxu0
        %v10449 = vadd.f32 %v10360, %v10448
        %v10450 = vpop.f32.mrf.mxu0
        %v10451 = vadd.f32 %v10362, %v10450
        %10452 = vmatmul.bf16.gmra.mxu0 %v9592
        %v10453 = vpop.f32.mrf.mxu0
        %v10454 = vadd.f32 %v10365, %v10453
        %v10455 = vpop.f32.mrf.mxu0
        %v10456 = vadd.f32 %v10367, %v10455
        %10457 = vmatmul.bf16.gmra.mxu0 %v9601
        %v10458 = vpop.f32.mrf.mxu0
        %v10459 = vadd.f32 %v10370, %v10458
        %v10460 = vpop.f32.mrf.mxu0
        %v10461 = vadd.f32 %v10372, %v10460
        %10462 = vmatmul.bf16.gmra.mxu0 %v9610
        %v10463 = vpop.f32.mrf.mxu0
        %v10464 = vadd.f32 %v10375, %v10463
        %v10465 = vpop.f32.mrf.mxu0
        %v10466 = vadd.f32 %v10377, %v10465
        %10467 = vmatmul.bf16.gmra.mxu0 %v9619
        %v10468 = vpop.f32.mrf.mxu0
        %v10469 = vadd.f32 %v10380, %v10468
        %v10470 = vpop.f32.mrf.mxu0
        %v10471 = vadd.f32 %v10382, %v10470
        %10472 = vmatmul.bf16.gmra.mxu0 %v9628
        %v10473 = vpop.f32.mrf.mxu0
        %v10474 = vadd.f32 %v10385, %v10473
        %v10475 = vpop.f32.mrf.mxu0
        %v10476 = vadd.f32 %v10387, %v10475
        %10477 = vdwg.mxu0
        %10478 = vmatpush.bf16.msra.mxu0 %v10098
        %10479 = vmatpush.bf16.msra.mxu0 %v10097
        %10480 = vmatpush.bf16.msra.mxu0 %v10096
        %10481 = vmatpush.bf16.msra.mxu0 %v10095
        %10482 = vmatpush.bf16.msra.mxu0 %v10094
        %10483 = vmatpush.bf16.msra.mxu0 %v10093
        %10484 = vmatpush.bf16.msra.mxu0 %v10092
        %10485 = vmatpush.bf16.msra.mxu0 %v10091
        %10486 = vmatmul.bf16.gmra.mxu0 %v9494
        %v10487 = vpop.f32.mrf.mxu0
        %v10488 = vadd.f32 %v10399, %v10487
        %v10489 = vpop.f32.mrf.mxu0
        %v10490 = vadd.f32 %v10401, %v10489
        %10491 = vmatmul.bf16.gmra.mxu0 %v9503
        %v10492 = vpop.f32.mrf.mxu0
        %v10493 = vadd.f32 %v10404, %v10492
        %v10494 = vpop.f32.mrf.mxu0
        %v10495 = vadd.f32 %v10406, %v10494
        %10496 = vmatmul.bf16.gmra.mxu0 %v9512
        %v10497 = vpop.f32.mrf.mxu0
        %v10498 = vadd.f32 %v10409, %v10497
        %v10499 = vpop.f32.mrf.mxu0
        %v10500 = vadd.f32 %v10411, %v10499
        %10501 = vmatmul.bf16.gmra.mxu0 %v9521
        %v10502 = vpop.f32.mrf.mxu0
        %v10503 = vadd.f32 %v10414, %v10502
        %v10504 = vpop.f32.mrf.mxu0
        %v10505 = vadd.f32 %v10416, %v10504
        %10506 = vmatmul.bf16.gmra.mxu0 %v9530
        %v10507 = vpop.f32.mrf.mxu0
        %v10508 = vadd.f32 %v10419, %v10507
        %v10509 = vpop.f32.mrf.mxu0
        %v10510 = vadd.f32 %v10421, %v10509
        %10511 = vmatmul.bf16.gmra.mxu0 %v9539
        %v10512 = vpop.f32.mrf.mxu0
        %v10513 = vadd.f32 %v10424, %v10512
        %v10514 = vpop.f32.mrf.mxu0
        %v10515 = vadd.f32 %v10426, %v10514
        %10516 = vmatmul.bf16.gmra.mxu0 %v9548
        %v10517 = vpop.f32.mrf.mxu0
        %v10518 = vadd.f32 %v10429, %v10517
        %v10519 = vpop.f32.mrf.mxu0
        %v10520 = vadd.f32 %v10431, %v10519
        %10521 = vmatmul.bf16.gmra.mxu0 %v9557
        %v10522 = vpop.f32.mrf.mxu0
        %v10523 = vadd.f32 %v10434, %v10522
        %v10524 = vpop.f32.mrf.mxu0
        %v10525 = vadd.f32 %v10436, %v10524
        %10526 = vmatmul.bf16.gmra.mxu0 %v9566
        %v10527 = vpop.f32.mrf.mxu0
        %v10528 = vadd.f32 %v10439, %v10527
        %v10529 = vpop.f32.mrf.mxu0
        %v10530 = vadd.f32 %v10441, %v10529
        %10531 = vmatmul.bf16.gmra.mxu0 %v9575
        %v10532 = vpop.f32.mrf.mxu0
        %v10533 = vadd.f32 %v10444, %v10532
        %v10534 = vpop.f32.mrf.mxu0
        %v10535 = vadd.f32 %v10446, %v10534
        %10536 = vmatmul.bf16.gmra.mxu0 %v9584
        %v10537 = vpop.f32.mrf.mxu0
        %v10538 = vadd.f32 %v10449, %v10537
        %v10539 = vpop.f32.mrf.mxu0
        %v10540 = vadd.f32 %v10451, %v10539
        %10541 = vmatmul.bf16.gmra.mxu0 %v9593
        %v10542 = vpop.f32.mrf.mxu0
        %v10543 = vadd.f32 %v10454, %v10542
        %v10544 = vpop.f32.mrf.mxu0
        %v10545 = vadd.f32 %v10456, %v10544
        %10546 = vmatmul.bf16.gmra.mxu0 %v9602
        %v10547 = vpop.f32.mrf.mxu0
        %v10548 = vadd.f32 %v10459, %v10547
        %v10549 = vpop.f32.mrf.mxu0
        %v10550 = vadd.f32 %v10461, %v10549
        %10551 = vmatmul.bf16.gmra.mxu0 %v9611
        %v10552 = vpop.f32.mrf.mxu0
        %v10553 = vadd.f32 %v10464, %v10552
        %v10554 = vpop.f32.mrf.mxu0
        %v10555 = vadd.f32 %v10466, %v10554
        %10556 = vmatmul.bf16.gmra.mxu0 %v9620
        %v10557 = vpop.f32.mrf.mxu0
        %v10558 = vadd.f32 %v10469, %v10557
        %v10559 = vpop.f32.mrf.mxu0
        %v10560 = vadd.f32 %v10471, %v10559
        %10561 = vmatmul.bf16.gmra.mxu0 %v9629
        %v10562 = vpop.f32.mrf.mxu0
        %v10563 = vadd.f32 %v10474, %v10562
        %v10564 = vpop.f32.mrf.mxu0
        %v10565 = vadd.f32 %v10476, %v10564
        %10566 = vdwg.mxu0
        %10567 = vmatpush.bf16.msra.mxu0 %v10106
        %10568 = vmatpush.bf16.msra.mxu0 %v10105
        %10569 = vmatpush.bf16.msra.mxu0 %v10104
        %10570 = vmatpush.bf16.msra.mxu0 %v10103
        %10571 = vmatpush.bf16.msra.mxu0 %v10102
        %10572 = vmatpush.bf16.msra.mxu0 %v10101
        %10573 = vmatpush.bf16.msra.mxu0 %v10100
        %10574 = vmatpush.bf16.msra.mxu0 %v10099
        %10575 = vmatmul.bf16.gmra.mxu0 %v9495
        %v10576 = vpop.f32.mrf.mxu0
        %v10577 = vadd.f32 %v10488, %v10576
        %v10578 = vpop.f32.mrf.mxu0
        %v10579 = vadd.f32 %v10490, %v10578
        %10580 = vmatmul.bf16.gmra.mxu0 %v9504
        %v10581 = vpop.f32.mrf.mxu0
        %v10582 = vadd.f32 %v10493, %v10581
        %v10583 = vpop.f32.mrf.mxu0
        %v10584 = vadd.f32 %v10495, %v10583
        %10585 = vmatmul.bf16.gmra.mxu0 %v9513
        %v10586 = vpop.f32.mrf.mxu0
        %v10587 = vadd.f32 %v10498, %v10586
        %v10588 = vpop.f32.mrf.mxu0
        %v10589 = vadd.f32 %v10500, %v10588
        %10590 = vmatmul.bf16.gmra.mxu0 %v9522
        %v10591 = vpop.f32.mrf.mxu0
        %v10592 = vadd.f32 %v10503, %v10591
        %v10593 = vpop.f32.mrf.mxu0
        %v10594 = vadd.f32 %v10505, %v10593
        %10595 = vmatmul.bf16.gmra.mxu0 %v9531
        %v10596 = vpop.f32.mrf.mxu0
        %v10597 = vadd.f32 %v10508, %v10596
        %v10598 = vpop.f32.mrf.mxu0
        %v10599 = vadd.f32 %v10510, %v10598
        %10600 = vmatmul.bf16.gmra.mxu0 %v9540
        %v10601 = vpop.f32.mrf.mxu0
        %v10602 = vadd.f32 %v10513, %v10601
        %v10603 = vpop.f32.mrf.mxu0
        %v10604 = vadd.f32 %v10515, %v10603
        %10605 = vmatmul.bf16.gmra.mxu0 %v9549
        %v10606 = vpop.f32.mrf.mxu0
        %v10607 = vadd.f32 %v10518, %v10606
        %v10608 = vpop.f32.mrf.mxu0
        %v10609 = vadd.f32 %v10520, %v10608
        %10610 = vmatmul.bf16.gmra.mxu0 %v9558
        %v10611 = vpop.f32.mrf.mxu0
        %v10612 = vadd.f32 %v10523, %v10611
        %v10613 = vpop.f32.mrf.mxu0
        %v10614 = vadd.f32 %v10525, %v10613
        %10615 = vmatmul.bf16.gmra.mxu0 %v9567
        %v10616 = vpop.f32.mrf.mxu0
        %v10617 = vadd.f32 %v10528, %v10616
        %v10618 = vpop.f32.mrf.mxu0
        %v10619 = vadd.f32 %v10530, %v10618
        %10620 = vmatmul.bf16.gmra.mxu0 %v9576
        %v10621 = vpop.f32.mrf.mxu0
        %v10622 = vadd.f32 %v10533, %v10621
        %v10623 = vpop.f32.mrf.mxu0
        %v10624 = vadd.f32 %v10535, %v10623
        %10625 = vmatmul.bf16.gmra.mxu0 %v9585
        %v10626 = vpop.f32.mrf.mxu0
        %v10627 = vadd.f32 %v10538, %v10626
        %v10628 = vpop.f32.mrf.mxu0
        %v10629 = vadd.f32 %v10540, %v10628
        %10630 = vmatmul.bf16.gmra.mxu0 %v9594
        %v10631 = vpop.f32.mrf.mxu0
        %v10632 = vadd.f32 %v10543, %v10631
        %v10633 = vpop.f32.mrf.mxu0
        %v10634 = vadd.f32 %v10545, %v10633
        %10635 = vmatmul.bf16.gmra.mxu0 %v9603
        %v10636 = vpop.f32.mrf.mxu0
        %v10637 = vadd.f32 %v10548, %v10636
        %v10638 = vpop.f32.mrf.mxu0
        %v10639 = vadd.f32 %v10550, %v10638
        %10640 = vmatmul.bf16.gmra.mxu0 %v9612
        %v10641 = vpop.f32.mrf.mxu0
        %v10642 = vadd.f32 %v10553, %v10641
        %v10643 = vpop.f32.mrf.mxu0
        %v10644 = vadd.f32 %v10555, %v10643
        %10645 = vmatmul.bf16.gmra.mxu0 %v9621
        %v10646 = vpop.f32.mrf.mxu0
        %v10647 = vadd.f32 %v10558, %v10646
        %v10648 = vpop.f32.mrf.mxu0
        %v10649 = vadd.f32 %v10560, %v10648
        %10650 = vmatmul.bf16.gmra.mxu0 %v9630
        %v10651 = vpop.f32.mrf.mxu0
        %v10652 = vadd.f32 %v10563, %v10651
        %v10653 = vpop.f32.mrf.mxu0
        %v10654 = vadd.f32 %v10565, %v10653
        %10655 = vdwg.mxu0
        %10656 = vmatpush.bf16.msra.mxu0 %v10114
        %10657 = vmatpush.bf16.msra.mxu0 %v10113
        %10658 = vmatpush.bf16.msra.mxu0 %v10112
        %10659 = vmatpush.bf16.msra.mxu0 %v10111
        %10660 = vmatpush.bf16.msra.mxu0 %v10110
        %10661 = vmatpush.bf16.msra.mxu0 %v10109
        %10662 = vmatpush.bf16.msra.mxu0 %v10108
        %10663 = vmatpush.bf16.msra.mxu0 %v10107
        %10664 = vmatmul.bf16.gmra.mxu0 %v9496
        %v10665 = vpop.f32.mrf.mxu0
        %v10666 = vadd.f32 %v10577, %v10665
        %v10667 = vpop.f32.mrf.mxu0
        %v10668 = vadd.f32 %v10579, %v10667
        %10669 = vmatmul.bf16.gmra.mxu0 %v9505
        %v10670 = vpop.f32.mrf.mxu0
        %v10671 = vadd.f32 %v10582, %v10670
        %v10672 = vpop.f32.mrf.mxu0
        %v10673 = vadd.f32 %v10584, %v10672
        %10674 = vmatmul.bf16.gmra.mxu0 %v9514
        %v10675 = vpop.f32.mrf.mxu0
        %v10676 = vadd.f32 %v10587, %v10675
        %v10677 = vpop.f32.mrf.mxu0
        %v10678 = vadd.f32 %v10589, %v10677
        %10679 = vmatmul.bf16.gmra.mxu0 %v9523
        %v10680 = vpop.f32.mrf.mxu0
        %v10681 = vadd.f32 %v10592, %v10680
        %v10682 = vpop.f32.mrf.mxu0
        %v10683 = vadd.f32 %v10594, %v10682
        %10684 = vmatmul.bf16.gmra.mxu0 %v9532
        %v10685 = vpop.f32.mrf.mxu0
        %v10686 = vadd.f32 %v10597, %v10685
        %v10687 = vpop.f32.mrf.mxu0
        %v10688 = vadd.f32 %v10599, %v10687
        %10689 = vmatmul.bf16.gmra.mxu0 %v9541
        %v10690 = vpop.f32.mrf.mxu0
        %v10691 = vadd.f32 %v10602, %v10690
        %v10692 = vpop.f32.mrf.mxu0
        %v10693 = vadd.f32 %v10604, %v10692
        %10694 = vmatmul.bf16.gmra.mxu0 %v9550
        %v10695 = vpop.f32.mrf.mxu0
        %v10696 = vadd.f32 %v10607, %v10695
        %v10697 = vpop.f32.mrf.mxu0
        %v10698 = vadd.f32 %v10609, %v10697
        %10699 = vmatmul.bf16.gmra.mxu0 %v9559
        %v10700 = vpop.f32.mrf.mxu0
        %v10701 = vadd.f32 %v10612, %v10700
        %v10702 = vpop.f32.mrf.mxu0
        %v10703 = vadd.f32 %v10614, %v10702
        %10704 = vmatmul.bf16.gmra.mxu0 %v9568
        %v10705 = vpop.f32.mrf.mxu0
        %v10706 = vadd.f32 %v10617, %v10705
        %v10707 = vpop.f32.mrf.mxu0
        %v10708 = vadd.f32 %v10619, %v10707
        %10709 = vmatmul.bf16.gmra.mxu0 %v9577
        %v10710 = vpop.f32.mrf.mxu0
        %v10711 = vadd.f32 %v10622, %v10710
        %v10712 = vpop.f32.mrf.mxu0
        %v10713 = vadd.f32 %v10624, %v10712
        %10714 = vmatmul.bf16.gmra.mxu0 %v9586
        %v10715 = vpop.f32.mrf.mxu0
        %v10716 = vadd.f32 %v10627, %v10715
        %v10717 = vpop.f32.mrf.mxu0
        %v10718 = vadd.f32 %v10629, %v10717
        %10719 = vmatmul.bf16.gmra.mxu0 %v9595
        %v10720 = vpop.f32.mrf.mxu0
        %v10721 = vadd.f32 %v10632, %v10720
        %v10722 = vpop.f32.mrf.mxu0
        %v10723 = vadd.f32 %v10634, %v10722
        %10724 = vmatmul.bf16.gmra.mxu0 %v9604
        %v10725 = vpop.f32.mrf.mxu0
        %v10726 = vadd.f32 %v10637, %v10725
        %v10727 = vpop.f32.mrf.mxu0
        %v10728 = vadd.f32 %v10639, %v10727
        %10729 = vmatmul.bf16.gmra.mxu0 %v9613
        %v10730 = vpop.f32.mrf.mxu0
        %v10731 = vadd.f32 %v10642, %v10730
        %v10732 = vpop.f32.mrf.mxu0
        %v10733 = vadd.f32 %v10644, %v10732
        %10734 = vmatmul.bf16.gmra.mxu0 %v9622
        %v10735 = vpop.f32.mrf.mxu0
        %v10736 = vadd.f32 %v10647, %v10735
        %v10737 = vpop.f32.mrf.mxu0
        %v10738 = vadd.f32 %v10649, %v10737
        %10739 = vmatmul.bf16.gmra.mxu0 %v9631
        %v10740 = vpop.f32.mrf.mxu0
        %v10741 = vadd.f32 %v10652, %v10740
        %v10742 = vpop.f32.mrf.mxu0
        %v10743 = vadd.f32 %v10654, %v10742
        %10744 = vdwg.mxu0
        %10745 = vmatpush.bf16.msra.mxu0 %v10122
        %10746 = vmatpush.bf16.msra.mxu0 %v10121
        %10747 = vmatpush.bf16.msra.mxu0 %v10120
        %10748 = vmatpush.bf16.msra.mxu0 %v10119
        %10749 = vmatpush.bf16.msra.mxu0 %v10118
        %10750 = vmatpush.bf16.msra.mxu0 %v10117
        %10751 = vmatpush.bf16.msra.mxu0 %v10116
        %10752 = vmatpush.bf16.msra.mxu0 %v10115
        %10753 = vmatmul.bf16.gmra.mxu0 %v9497
        %v10754 = vpop.f32.mrf.mxu0
        %v10755 = vadd.f32 %v10666, %v10754
        %v10756 = vpop.f32.mrf.mxu0
        %v10757 = vadd.f32 %v10668, %v10756
        %10758 = vmatmul.bf16.gmra.mxu0 %v9506
        %v10759 = vpop.f32.mrf.mxu0
        %v10760 = vadd.f32 %v10671, %v10759
        %v10761 = vpop.f32.mrf.mxu0
        %v10762 = vadd.f32 %v10673, %v10761
        %10763 = vmatmul.bf16.gmra.mxu0 %v9515
        %v10764 = vpop.f32.mrf.mxu0
        %v10765 = vadd.f32 %v10676, %v10764
        %v10766 = vpop.f32.mrf.mxu0
        %v10767 = vadd.f32 %v10678, %v10766
        %10768 = vmatmul.bf16.gmra.mxu0 %v9524
        %v10769 = vpop.f32.mrf.mxu0
        %v10770 = vadd.f32 %v10681, %v10769
        %v10771 = vpop.f32.mrf.mxu0
        %v10772 = vadd.f32 %v10683, %v10771
        %10773 = vmatmul.bf16.gmra.mxu0 %v9533
        %v10774 = vpop.f32.mrf.mxu0
        %v10775 = vadd.f32 %v10686, %v10774
        %v10776 = vpop.f32.mrf.mxu0
        %v10777 = vadd.f32 %v10688, %v10776
        %10778 = vmatmul.bf16.gmra.mxu0 %v9542
        %v10779 = vpop.f32.mrf.mxu0
        %v10780 = vadd.f32 %v10691, %v10779
        %v10781 = vpop.f32.mrf.mxu0
        %v10782 = vadd.f32 %v10693, %v10781
        %10783 = vmatmul.bf16.gmra.mxu0 %v9551
        %v10784 = vpop.f32.mrf.mxu0
        %v10785 = vadd.f32 %v10696, %v10784
        %v10786 = vpop.f32.mrf.mxu0
        %v10787 = vadd.f32 %v10698, %v10786
        %10788 = vmatmul.bf16.gmra.mxu0 %v9560
        %v10789 = vpop.f32.mrf.mxu0
        %v10790 = vadd.f32 %v10701, %v10789
        %v10791 = vpop.f32.mrf.mxu0
        %v10792 = vadd.f32 %v10703, %v10791
        %10793 = vmatmul.bf16.gmra.mxu0 %v9569
        %v10794 = vpop.f32.mrf.mxu0
        %v10795 = vadd.f32 %v10706, %v10794
        %v10796 = vpop.f32.mrf.mxu0
        %v10797 = vadd.f32 %v10708, %v10796
        %10798 = vmatmul.bf16.gmra.mxu0 %v9578
        %v10799 = vpop.f32.mrf.mxu0
        %v10800 = vadd.f32 %v10711, %v10799
        %v10801 = vpop.f32.mrf.mxu0
        %v10802 = vadd.f32 %v10713, %v10801
        %10803 = vmatmul.bf16.gmra.mxu0 %v9587
        %v10804 = vpop.f32.mrf.mxu0
        %v10805 = vadd.f32 %v10716, %v10804
        %v10806 = vpop.f32.mrf.mxu0
        %v10807 = vadd.f32 %v10718, %v10806
        %10808 = vmatmul.bf16.gmra.mxu0 %v9596
        %v10809 = vpop.f32.mrf.mxu0
        %v10810 = vadd.f32 %v10721, %v10809
        %v10811 = vpop.f32.mrf.mxu0
        %v10812 = vadd.f32 %v10723, %v10811
        %10813 = vmatmul.bf16.gmra.mxu0 %v9605
        %v10814 = vpop.f32.mrf.mxu0
        %v10815 = vadd.f32 %v10726, %v10814
        %v10816 = vpop.f32.mrf.mxu0
        %v10817 = vadd.f32 %v10728, %v10816
        %10818 = vmatmul.bf16.gmra.mxu0 %v9614
        %v10819 = vpop.f32.mrf.mxu0
        %v10820 = vadd.f32 %v10731, %v10819
        %v10821 = vpop.f32.mrf.mxu0
        %v10822 = vadd.f32 %v10733, %v10821
        %10823 = vmatmul.bf16.gmra.mxu0 %v9623
        %v10824 = vpop.f32.mrf.mxu0
        %v10825 = vadd.f32 %v10736, %v10824
        %v10826 = vpop.f32.mrf.mxu0
        %v10827 = vadd.f32 %v10738, %v10826
        %10828 = vmatmul.bf16.gmra.mxu0 %v9632
        %v10829 = vpop.f32.mrf.mxu0
        %v10830 = vadd.f32 %v10741, %v10829
        %v10831 = vpop.f32.mrf.mxu0
        %v10832 = vadd.f32 %v10743, %v10831
        %10833 = vdwg.mxu0
        %10834 = vmatpush.bf16.msra.mxu0 %v10130
        %10835 = vmatpush.bf16.msra.mxu0 %v10129
        %10836 = vmatpush.bf16.msra.mxu0 %v10128
        %10837 = vmatpush.bf16.msra.mxu0 %v10127
        %10838 = vmatpush.bf16.msra.mxu0 %v10126
        %10839 = vmatpush.bf16.msra.mxu0 %v10125
        %10840 = vmatpush.bf16.msra.mxu0 %v10124
        %10841 = vmatpush.bf16.msra.mxu0 %v10123
        %10842 = vmatmul.bf16.gmra.mxu0 %v9498
        %v10843 = vpop.f32.mrf.mxu0
        %v10844 = vadd.f32 %v10755, %v10843
        %v10845 = vpop.f32.mrf.mxu0
        %v10846 = vadd.f32 %v10757, %v10845
        %10847 = vmatmul.bf16.gmra.mxu0 %v9507
        %v10848 = vpop.f32.mrf.mxu0
        %v10849 = vadd.f32 %v10760, %v10848
        %v10850 = vpop.f32.mrf.mxu0
        %v10851 = vadd.f32 %v10762, %v10850
        %10852 = vmatmul.bf16.gmra.mxu0 %v9516
        %v10853 = vpop.f32.mrf.mxu0
        %v10854 = vadd.f32 %v10765, %v10853
        %v10855 = vpop.f32.mrf.mxu0
        %v10856 = vadd.f32 %v10767, %v10855
        %10857 = vmatmul.bf16.gmra.mxu0 %v9525
        %v10858 = vpop.f32.mrf.mxu0
        %v10859 = vadd.f32 %v10770, %v10858
        %v10860 = vpop.f32.mrf.mxu0
        %v10861 = vadd.f32 %v10772, %v10860
        %10862 = vmatmul.bf16.gmra.mxu0 %v9534
        %v10863 = vpop.f32.mrf.mxu0
        %v10864 = vadd.f32 %v10775, %v10863
        %v10865 = vpop.f32.mrf.mxu0
        %v10866 = vadd.f32 %v10777, %v10865
        %10867 = vmatmul.bf16.gmra.mxu0 %v9543
        %v10868 = vpop.f32.mrf.mxu0
        %v10869 = vadd.f32 %v10780, %v10868
        %v10870 = vpop.f32.mrf.mxu0
        %v10871 = vadd.f32 %v10782, %v10870
        %10872 = vmatmul.bf16.gmra.mxu0 %v9552
        %v10873 = vpop.f32.mrf.mxu0
        %v10874 = vadd.f32 %v10785, %v10873
        %v10875 = vpop.f32.mrf.mxu0
        %v10876 = vadd.f32 %v10787, %v10875
        %10877 = vmatmul.bf16.gmra.mxu0 %v9561
        %v10878 = vpop.f32.mrf.mxu0
        %v10879 = vadd.f32 %v10790, %v10878
        %v10880 = vpop.f32.mrf.mxu0
        %v10881 = vadd.f32 %v10792, %v10880
        %10882 = vmatmul.bf16.gmra.mxu0 %v9570
        %v10883 = vpop.f32.mrf.mxu0
        %v10884 = vadd.f32 %v10795, %v10883
        %v10885 = vpop.f32.mrf.mxu0
        %v10886 = vadd.f32 %v10797, %v10885
        %10887 = vmatmul.bf16.gmra.mxu0 %v9579
        %v10888 = vpop.f32.mrf.mxu0
        %v10889 = vadd.f32 %v10800, %v10888
        %v10890 = vpop.f32.mrf.mxu0
        %v10891 = vadd.f32 %v10802, %v10890
        %10892 = vmatmul.bf16.gmra.mxu0 %v9588
        %v10893 = vpop.f32.mrf.mxu0
        %v10894 = vadd.f32 %v10805, %v10893
        %v10895 = vpop.f32.mrf.mxu0
        %v10896 = vadd.f32 %v10807, %v10895
        %10897 = vmatmul.bf16.gmra.mxu0 %v9597
        %v10898 = vpop.f32.mrf.mxu0
        %v10899 = vadd.f32 %v10810, %v10898
        %v10900 = vpop.f32.mrf.mxu0
        %v10901 = vadd.f32 %v10812, %v10900
        %10902 = vmatmul.bf16.gmra.mxu0 %v9606
        %v10903 = vpop.f32.mrf.mxu0
        %v10904 = vadd.f32 %v10815, %v10903
        %v10905 = vpop.f32.mrf.mxu0
        %v10906 = vadd.f32 %v10817, %v10905
        %10907 = vmatmul.bf16.gmra.mxu0 %v9615
        %v10908 = vpop.f32.mrf.mxu0
        %v10909 = vadd.f32 %v10820, %v10908
        %v10910 = vpop.f32.mrf.mxu0
        %v10911 = vadd.f32 %v10822, %v10910
        %10912 = vmatmul.bf16.gmra.mxu0 %v9624
        %v10913 = vpop.f32.mrf.mxu0
        %v10914 = vadd.f32 %v10825, %v10913
        %v10915 = vpop.f32.mrf.mxu0
        %v10916 = vadd.f32 %v10827, %v10915
        %10917 = vmatmul.bf16.gmra.mxu0 %v9633
        %v10918 = vpop.f32.mrf.mxu0
        %v10919 = vadd.f32 %v10830, %v10918
        %v10920 = vpop.f32.mrf.mxu0
        %v10921 = vadd.f32 %v10832, %v10920
        %10922 = vdwg.mxu0
        %10923 = vmatpush.bf16.msra.mxu0 %v10138
        %10924 = vmatpush.bf16.msra.mxu0 %v10137
        %10925 = vmatpush.bf16.msra.mxu0 %v10136
        %10926 = vmatpush.bf16.msra.mxu0 %v10135
        %10927 = vmatpush.bf16.msra.mxu0 %v10134
        %10928 = vmatpush.bf16.msra.mxu0 %v10133
        %10929 = vmatpush.bf16.msra.mxu0 %v10132
        %10930 = vmatpush.bf16.msra.mxu0 %v10131
        %10931 = vmatmul.bf16.gmra.mxu0 %v9499
        %v10932 = vpop.f32.mrf.mxu0
        %v10933 = vadd.f32 %v10844, %v10932
        %v10934 = vpop.f32.mrf.mxu0
        %v10935 = vadd.f32 %v10846, %v10934
        %10936 = vmatmul.bf16.gmra.mxu0 %v9508
        %v10937 = vpop.f32.mrf.mxu0
        %v10938 = vadd.f32 %v10849, %v10937
        %v10939 = vpop.f32.mrf.mxu0
        %v10940 = vadd.f32 %v10851, %v10939
        %10941 = vmatmul.bf16.gmra.mxu0 %v9517
        %v10942 = vpop.f32.mrf.mxu0
        %v10943 = vadd.f32 %v10854, %v10942
        %v10944 = vpop.f32.mrf.mxu0
        %v10945 = vadd.f32 %v10856, %v10944
        %10946 = vmatmul.bf16.gmra.mxu0 %v9526
        %v10947 = vpop.f32.mrf.mxu0
        %v10948 = vadd.f32 %v10859, %v10947
        %v10949 = vpop.f32.mrf.mxu0
        %v10950 = vadd.f32 %v10861, %v10949
        %10951 = vmatmul.bf16.gmra.mxu0 %v9535
        %v10952 = vpop.f32.mrf.mxu0
        %v10953 = vadd.f32 %v10864, %v10952
        %v10954 = vpop.f32.mrf.mxu0
        %v10955 = vadd.f32 %v10866, %v10954
        %10956 = vmatmul.bf16.gmra.mxu0 %v9544
        %v10957 = vpop.f32.mrf.mxu0
        %v10958 = vadd.f32 %v10869, %v10957
        %v10959 = vpop.f32.mrf.mxu0
        %v10960 = vadd.f32 %v10871, %v10959
        %10961 = vmatmul.bf16.gmra.mxu0 %v9553
        %v10962 = vpop.f32.mrf.mxu0
        %v10963 = vadd.f32 %v10874, %v10962
        %v10964 = vpop.f32.mrf.mxu0
        %v10965 = vadd.f32 %v10876, %v10964
        %10966 = vmatmul.bf16.gmra.mxu0 %v9562
        %v10967 = vpop.f32.mrf.mxu0
        %v10968 = vadd.f32 %v10879, %v10967
        %v10969 = vpop.f32.mrf.mxu0
        %v10970 = vadd.f32 %v10881, %v10969
        %10971 = vmatmul.bf16.gmra.mxu0 %v9571
        %v10972 = vpop.f32.mrf.mxu0
        %v10973 = vadd.f32 %v10884, %v10972
        %v10974 = vpop.f32.mrf.mxu0
        %v10975 = vadd.f32 %v10886, %v10974
        %10976 = vmatmul.bf16.gmra.mxu0 %v9580
        %v10977 = vpop.f32.mrf.mxu0
        %v10978 = vadd.f32 %v10889, %v10977
        %v10979 = vpop.f32.mrf.mxu0
        %v10980 = vadd.f32 %v10891, %v10979
        %10981 = vmatmul.bf16.gmra.mxu0 %v9589
        %v10982 = vpop.f32.mrf.mxu0
        %v10983 = vadd.f32 %v10894, %v10982
        %v10984 = vpop.f32.mrf.mxu0
        %v10985 = vadd.f32 %v10896, %v10984
        %10986 = vmatmul.bf16.gmra.mxu0 %v9598
        %v10987 = vpop.f32.mrf.mxu0
        %v10988 = vadd.f32 %v10899, %v10987
        %v10989 = vpop.f32.mrf.mxu0
        %v10990 = vadd.f32 %v10901, %v10989
        %10991 = vmatmul.bf16.gmra.mxu0 %v9607
        %v10992 = vpop.f32.mrf.mxu0
        %v10993 = vadd.f32 %v10904, %v10992
        %v10994 = vpop.f32.mrf.mxu0
        %v10995 = vadd.f32 %v10906, %v10994
        %10996 = vmatmul.bf16.gmra.mxu0 %v9616
        %v10997 = vpop.f32.mrf.mxu0
        %v10998 = vadd.f32 %v10909, %v10997
        %v10999 = vpop.f32.mrf.mxu0
        %v11000 = vadd.f32 %v10911, %v10999
        %11001 = vmatmul.bf16.gmra.mxu0 %v9625
        %v11002 = vpop.f32.mrf.mxu0
        %v11003 = vadd.f32 %v10914, %v11002
        %v11004 = vpop.f32.mrf.mxu0
        %v11005 = vadd.f32 %v10916, %v11004
        %11006 = vmatmul.bf16.gmra.mxu0 %v9634
        %v11007 = vpop.f32.mrf.mxu0
        %v11008 = vadd.f32 %v10919, %v11007
        %v11009 = vpop.f32.mrf.mxu0
        %v11010 = vadd.f32 %v10921, %v11009
        %11011 = vdwg.mxu0
        %v11012 = vld [vmem:[%s5] sm:$0x1]
        %v11014 = vperm.slane %v11012, 0
        %v11016 = vmul.f32 %v10933, %v11014
        %v11017 = vmul.f32 %v10935, %v11014
        %v11018 = vmul.f32 %v10938, %v11014
        %v11019 = vmul.f32 %v10940, %v11014
        %v11020 = vmul.f32 %v10943, %v11014
        %v11021 = vmul.f32 %v10945, %v11014
        %v11022 = vmul.f32 %v10948, %v11014
        %v11023 = vmul.f32 %v10950, %v11014
        %v11024 = vmul.f32 %v10953, %v11014
        %v11025 = vmul.f32 %v10955, %v11014
        %v11026 = vmul.f32 %v10958, %v11014
        %v11027 = vmul.f32 %v10960, %v11014
        %v11028 = vmul.f32 %v10963, %v11014
        %v11029 = vmul.f32 %v10965, %v11014
        %v11030 = vmul.f32 %v10968, %v11014
        %v11031 = vmul.f32 %v10970, %v11014
        %v11032 = vmul.f32 %v10973, %v11014
        %v11033 = vmul.f32 %v10975, %v11014
        %v11034 = vmul.f32 %v10978, %v11014
        %v11035 = vmul.f32 %v10980, %v11014
        %v11036 = vmul.f32 %v10983, %v11014
        %v11037 = vmul.f32 %v10985, %v11014
        %v11038 = vmul.f32 %v10988, %v11014
        %v11039 = vmul.f32 %v10990, %v11014
        %v11040 = vmul.f32 %v10993, %v11014
        %v11041 = vmul.f32 %v10995, %v11014
        %v11042 = vmul.f32 %v10998, %v11014
        %v11043 = vmul.f32 %v11000, %v11014
        %v11044 = vmul.f32 %v11003, %v11014
        %v11045 = vmul.f32 %v11005, %v11014
        %v11046 = vmul.f32 %v11008, %v11014
        %v11047 = vmul.f32 %v11010, %v11014
        %v11048 = vld [vmem:[%s6] sm:$0x1]
        %v11050 = vperm.slane %v11048, 0
        %v11052 = vadd.f32 %v11016, %v11050
        %v11053 = vadd.f32 %v11017, %v11050
        %v11054 = vadd.f32 %v11018, %v11050
        %v11055 = vadd.f32 %v11019, %v11050
        %v11056 = vadd.f32 %v11020, %v11050
        %v11057 = vadd.f32 %v11021, %v11050
        %v11058 = vadd.f32 %v11022, %v11050
        %v11059 = vadd.f32 %v11023, %v11050
        %v11060 = vadd.f32 %v11024, %v11050
        %v11061 = vadd.f32 %v11025, %v11050
        %v11062 = vadd.f32 %v11026, %v11050
        %v11063 = vadd.f32 %v11027, %v11050
        %v11064 = vadd.f32 %v11028, %v11050
        %v11065 = vadd.f32 %v11029, %v11050
        %v11066 = vadd.f32 %v11030, %v11050
        %v11067 = vadd.f32 %v11031, %v11050
        %v11068 = vadd.f32 %v11032, %v11050
        %v11069 = vadd.f32 %v11033, %v11050
        %v11070 = vadd.f32 %v11034, %v11050
        %v11071 = vadd.f32 %v11035, %v11050
        %v11072 = vadd.f32 %v11036, %v11050
        %v11073 = vadd.f32 %v11037, %v11050
        %v11074 = vadd.f32 %v11038, %v11050
        %v11075 = vadd.f32 %v11039, %v11050
        %v11076 = vadd.f32 %v11040, %v11050
        %v11077 = vadd.f32 %v11041, %v11050
        %v11078 = vadd.f32 %v11042, %v11050
        %v11079 = vadd.f32 %v11043, %v11050
        %v11080 = vadd.f32 %v11044, %v11050
        %v11081 = vadd.f32 %v11045, %v11050
        %v11082 = vadd.f32 %v11046, %v11050
        %v11083 = vadd.f32 %v11047, %v11050
        %v11084 = vadd.f32 %v11052, %v398
        %v11085 = vadd.f32 %v11053, %v399
        %v11086 = vadd.f32 %v11054, %v400
        %v11087 = vadd.f32 %v11055, %v401
        %v11088 = vadd.f32 %v11056, %v402
        %v11089 = vadd.f32 %v11057, %v403
        %v11090 = vadd.f32 %v11058, %v404
        %v11091 = vadd.f32 %v11059, %v405
        %v11092 = vadd.f32 %v11060, %v406
        %v11093 = vadd.f32 %v11061, %v407
        %v11094 = vadd.f32 %v11062, %v408
        %v11095 = vadd.f32 %v11063, %v409
        %v11096 = vadd.f32 %v11064, %v410
        %v11097 = vadd.f32 %v11065, %v411
        %v11098 = vadd.f32 %v11066, %v412
        %v11099 = vadd.f32 %v11067, %v413
        %v11100 = vadd.f32 %v11068, %v414
        %v11101 = vadd.f32 %v11069, %v415
        %v11102 = vadd.f32 %v11070, %v416
        %v11103 = vadd.f32 %v11071, %v417
        %v11104 = vadd.f32 %v11072, %v418
        %v11105 = vadd.f32 %v11073, %v419
        %v11106 = vadd.f32 %v11074, %v420
        %v11107 = vadd.f32 %v11075, %v421
        %v11108 = vadd.f32 %v11076, %v422
        %v11109 = vadd.f32 %v11077, %v423
        %v11110 = vadd.f32 %v11078, %v424
        %v11111 = vadd.f32 %v11079, %v425
        %v11112 = vadd.f32 %v11080, %v426
        %v11113 = vadd.f32 %v11081, %v427
        %v11114 = vadd.f32 %v11082, %v428
        %v11115 = vadd.f32 %v11083, %v429
        %v11116 = vmax.f32 %v11084, 0.0
        %v11117 = vmax.f32 %v11085, 0.0
        %v11118 = vmax.f32 %v11086, 0.0
        %v11119 = vmax.f32 %v11087, 0.0
        %v11120 = vmax.f32 %v11088, 0.0
        %v11121 = vmax.f32 %v11089, 0.0
        %v11122 = vmax.f32 %v11090, 0.0
        %v11123 = vmax.f32 %v11091, 0.0
        %v11124 = vmax.f32 %v11092, 0.0
        %v11125 = vmax.f32 %v11093, 0.0
        %v11126 = vmax.f32 %v11094, 0.0
        %v11127 = vmax.f32 %v11095, 0.0
        %v11128 = vmax.f32 %v11096, 0.0
        %v11129 = vmax.f32 %v11097, 0.0
        %v11130 = vmax.f32 %v11098, 0.0
        %v11131 = vmax.f32 %v11099, 0.0
        %v11132 = vmax.f32 %v11100, 0.0
        %v11133 = vmax.f32 %v11101, 0.0
        %v11134 = vmax.f32 %v11102, 0.0
        %v11135 = vmax.f32 %v11103, 0.0
        %v11136 = vmax.f32 %v11104, 0.0
        %v11137 = vmax.f32 %v11105, 0.0
        %v11138 = vmax.f32 %v11106, 0.0
        %v11139 = vmax.f32 %v11107, 0.0
        %v11140 = vmax.f32 %v11108, 0.0
        %v11141 = vmax.f32 %v11109, 0.0
        %v11142 = vmax.f32 %v11110, 0.0
        %v11143 = vmax.f32 %v11111, 0.0
        %v11144 = vmax.f32 %v11112, 0.0
        %v11145 = vmax.f32 %v11113, 0.0
        %v11146 = vmax.f32 %v11114, 0.0
        %v11147 = vmax.f32 %v11115, 0.0
        %11148 = vst [vmem:[%s271] sm:$0xff] %v11116
        %11149 = vst [vmem:[%s271 + $0x8] sm:$0xff] %v11117
        %11150 = vst [vmem:[%s271 + $0x10] sm:$0xff] %v11118
        %11151 = vst [vmem:[%s271 + $0x18] sm:$0xff] %v11119
        %11152 = vst [vmem:[%s271 + $0x20] sm:$0xff] %v11120
        %11153 = vst [vmem:[%s271 + $0x28] sm:$0xff] %v11121
        %11154 = vst [vmem:[%s271 + $0x30] sm:$0xff] %v11122
        %11155 = vst [vmem:[%s271 + $0x38] sm:$0xff] %v11123
        %11156 = vst [vmem:[%s271 + $0x40] sm:$0xff] %v11124
        %11157 = vst [vmem:[%s271 + $0x48] sm:$0xff] %v11125
        %11158 = vst [vmem:[%s271 + $0x50] sm:$0xff] %v11126
        %11159 = vst [vmem:[%s271 + $0x58] sm:$0xff] %v11127
        %11160 = vst [vmem:[%s271 + $0x60] sm:$0xff] %v11128
        %11161 = vst [vmem:[%s271 + $0x68] sm:$0xff] %v11129
        %11162 = vst [vmem:[%s271 + $0x70] sm:$0xff] %v11130
        %11163 = vst [vmem:[%s271 + $0x78] sm:$0xff] %v11131
        %11164 = vst [vmem:[%s271 + $0x80] sm:$0xff] %v11132
        %11165 = vst [vmem:[%s271 + $0x88] sm:$0xff] %v11133
        %11166 = vst [vmem:[%s271 + $0x90] sm:$0xff] %v11134
        %11167 = vst [vmem:[%s271 + $0x98] sm:$0xff] %v11135
        %11168 = vst [vmem:[%s271 + $0xa0] sm:$0xff] %v11136
        %11169 = vst [vmem:[%s271 + $0xa8] sm:$0xff] %v11137
        %11170 = vst [vmem:[%s271 + $0xb0] sm:$0xff] %v11138
        %11171 = vst [vmem:[%s271 + $0xb8] sm:$0xff] %v11139
        %11172 = vst [vmem:[%s271 + $0xc0] sm:$0xff] %v11140
        %11173 = vst [vmem:[%s271 + $0xc8] sm:$0xff] %v11141
        %11174 = vst [vmem:[%s271 + $0xd0] sm:$0xff] %v11142
        %11175 = vst [vmem:[%s271 + $0xd8] sm:$0xff] %v11143
        %11176 = vst [vmem:[%s271 + $0xe0] sm:$0xff] %v11144
        %11177 = vst [vmem:[%s271 + $0xe8] sm:$0xff] %v11145
        %11178 = vst [vmem:[%s271 + $0xf0] sm:$0xff] %v11146
        %11179 = vst [vmem:[%s271 + $0xf8] sm:$0xff] %v11147
        %s11180 = sand.u32 %s181, 1
        %s11181 = scalar_lea.sflag [#allocation5], %s11180
        %s11182 = sand.u32 %s181, 1
        %s11183 = smul.addr %s11182, 256
        %s11184 = scalar_lea.vmem [#allocation4], %s11183
        // Predicated region
        $region49: #{basic_block.1} parent=47 // pred_check
          %p11185 = pneg %p191
        $region50: #{basic_block.1} parent=47 // pred_check_branch
          %11187 = sbr.rel (%p11185) target = $region52
        $region51: #{basic_block.1} parent=47 // pred_region
          %11189 = vsyncadd %s11181, 0
          %s11190 = smul.addr %s21, 32
          %s11191 = smul.addr %s11190, 8
          %s11192 = scalar_lea.hbm %s7, %s11191
          %s11193 = sshll.u32 %s11184, 4
          %s11194 = int_to_ptr.vmem [resolvable:$true] %s11193
          %s11195 = sshll.u32 %s11192, 4
          %s11196 = int_to_ptr.hbm [resolvable:$true] %s11195
          %11201 = dma.vmem_to_hbm [thread:$0]  %s11194, 4096, %s11196, %s11181, 128, 128, 8
        $region52: #{basic_block.1} parent=47 // pred_fallthru
          _
      $region48: #{basic_block.1} parent=5 // pred_fallthru
        _
      %p11202 = scmp.le.s32.totalorder 2, %s16
      // Predicated region
      $region53: #{basic_block.1} parent=5 // pred_check
        %p11203 = pneg %p11202
      $region54: #{basic_block.1} parent=5 // pred_check_branch
        %11205 = sbr.rel (%p11203) target = $region56
      $region55: #{basic_block.1} parent=5 // pred_region
        %s11206 = ssub.s32 %s16, 2
        // Predicated region
        $region57: #{basic_block.1} parent=55 // pred_check
          %p11207 = pneg %p197
        $region58: #{basic_block.1} parent=55 // pred_check_branch
          %11209 = sbr.rel (%p11207) target = $region60
        $region59: #{basic_block.1} parent=55 // pred_region
          %s11210 = sand.u32 %s182, 1
          %s11211 = scalar_lea.sflag [#allocation5], %s11210
          %s11212 = sand.u32 %s182, 1
          %s11213 = smul.addr %s11212, 256
          %s11214 = scalar_lea.vmem [#allocation4], %s11213
          %11216 = dma.done %s11211, 4096
        $region60: #{basic_block.1} parent=55 // pred_fallthru
          _
      $region56: #{basic_block.1} parent=5 // pred_fallthru
        _
    $region6: #{basic_block.1} parent=1 // loop_footer
      %s20 = sadd.s32 1, %s16
    $region7: #{basic_block.1} parent=1 // loop_footer_branch
      %15 = sbr.rel target = $region3
    $region8: #{basic_block.1} parent=1 // loop_exit
      _
    %11217 = vsyncpa [#allocation5], 1
    %s11218 = scalar_lea.sflag [#allocation5], 1
    %11219 = vsyncpa %s11218, 1

</llo_original>
